<compile_context>
chip_gen: v5e
topology: v5e:2x2
jax: 0.10.0
libtpu: 0.0.40
codegen_flags: <defaults>
</compile_context>

<pallas_src>
import functools

import jax
import jax.numpy as jnp
from jax import lax
from jax.experimental import pallas as pl
from jax.experimental.pallas import tpu as pltpu


# Safe scoped-VMEM budget across generations (v7x has 64 MiB per TensorCore).
_VMEM_LIMIT = 48 * 1024 * 1024


def _round_up(x, m):
    return (x + m - 1) // m * m


def _pick_tile(total, target):
    """Largest divisor of `total` that is <= target (>= 1)."""
    t = max(1, min(target, total))
    while total % t:
        t -= 1
    return t


# ---------------------------------------------------------------------------
# 3x3 "SAME" conv: in-kernel patch formation (no im2col in HBM).
#   grid = (batch, row_tiles)
#   x block  : (1, H+2, W+2, Cin)  -- full padded image, resident across rows
#   w block  : (3, 3, Cin, Cout)   -- resident weights
#   out block: (1, tile_rows, W, Cout) -- lane-dense store
# ---------------------------------------------------------------------------
def _conv3x3_kernel(x_ref, w_ref, b_ref, o_ref, *, tile_rows, width, apply_relu):
    cin = x_ref.shape[-1]
    cout = o_ref.shape[-1]
    row0 = pl.multiple_of(pl.program_id(1) * tile_rows, tile_rows)

    acc = jnp.zeros((tile_rows * width, cout), jnp.float32)
    for dh in range(3):
        for dw in range(3):
            xt = x_ref[0, pl.ds(row0 + dh, tile_rows), pl.ds(dw, width), :]
            xt = xt.reshape(tile_rows * width, cin)
            acc = acc + jnp.dot(xt, w_ref[dh, dw],
                                preferred_element_type=jnp.float32)

    acc = acc + b_ref[...].astype(jnp.float32)
    if apply_relu:
        acc = jnp.maximum(acc, 0.0)           # ReLU rides free in the VPU slot
    o_ref[0] = acc.reshape(tile_rows, width, cout).astype(o_ref.dtype)


def conv3x3_relu(x_nhwc, w_hwio, bias, *, target_rows=8):
    N, H, W, Cin = x_nhwc.shape
    KH, KW, Cin_w, Cout = w_hwio.shape
    assert (KH, KW) == (3, 3) and Cin_w == Cin

    # Pad input channels (contraction dim) to a multiple of 8 (zeros => exact).
    cpad = (-Cin) % 8
    if cpad:
        x_nhwc = jnp.pad(x_nhwc, ((0, 0), (0, 0), (0, 0), (0, cpad)))
        w_hwio = jnp.pad(w_hwio, ((0, 0), (0, 0), (0, cpad), (0, 0)))
        Cin += cpad

    # SAME halo once in HBM (~2% overhead), instead of a 9x im2col blowup.
    x_pad = jnp.pad(x_nhwc, ((0, 0), (1, 1), (1, 1), (0, 0)))
    tile_rows = _pick_tile(H, target_rows)
    grid = (N, H // tile_rows)

    return pl.pallas_call(
        functools.partial(_conv3x3_kernel, tile_rows=tile_rows, width=W,
                          apply_relu=True),
        out_shape=jax.ShapeDtypeStruct((N, H, W, Cout), jnp.bfloat16),
        grid_spec=pltpu.PrefetchScalarGridSpec(
            num_scalar_prefetch=0,
            grid=grid,
            in_specs=[
                # Full padded image per batch element; same block index across
                # the row axis => loaded once, resident in VMEM.
                pl.BlockSpec((1, H + 2, W + 2, Cin), lambda b, r: (b, 0, 0, 0)),
                # Resident weights (constant block index).
                pl.BlockSpec((3, 3, Cin, Cout), lambda b, r: (0, 0, 0, 0)),
                pl.BlockSpec((1, Cout), lambda b, r: (0, 0)),
            ],
            out_specs=pl.BlockSpec((1, tile_rows, W, Cout),
                                   lambda b, r: (b, r, 0, 0)),
        ),
        compiler_params=pltpu.CompilerParams(
            dimension_semantics=("parallel", "arbitrary"),
            vmem_limit_bytes=_VMEM_LIMIT,
        ),
    )(x_pad, w_hwio.astype(jnp.bfloat16),
      bias.reshape(1, Cout).astype(jnp.bfloat16))


# ---------------------------------------------------------------------------
# 2x2 max-pool: gridded kernel over row tiles, reading NHWC directly.
# Wrapper does a FREE contiguous reshape (N,H,W,C) -> (N,H,W/2,2C) so adjacent
# column pairs land on the lane axis; the kernel is pure VPU max.
# ---------------------------------------------------------------------------
def _maxpool2x2_kernel(x_ref, o_ref):
    two_tr, wo, c2 = x_ref.shape[1], x_ref.shape[2], x_ref.shape[3]
    c = c2 // 2
    x = x_ref[0]                                   # (2*tr, Wo, 2C)
    x = x.reshape(two_tr // 2, 2, wo, c2)          # split leading rows only
    x = jnp.max(x, axis=1)                         # max over row pairs
    o_ref[0] = jnp.maximum(x[:, :, :c], x[:, :, c:])  # max over column pairs


def maxpool2x2(x_nhwc, *, target_rows=8):
    N, H, W, C = x_nhwc.shape
    assert H % 2 == 0 and W % 2 == 0
    Ho, Wo = H // 2, W // 2
    xr = x_nhwc.reshape(N, H, Wo, 2 * C)           # contiguous => free in XLA
    tile_rows = _pick_tile(Ho, target_rows)
    grid = (N, Ho // tile_rows)

    return pl.pallas_call(
        _maxpool2x2_kernel,
        out_shape=jax.ShapeDtypeStruct((N, Ho, Wo, C), x_nhwc.dtype),
        grid_spec=pltpu.PrefetchScalarGridSpec(
            num_scalar_prefetch=0,
            grid=grid,
            in_specs=[pl.BlockSpec((1, 2 * tile_rows, Wo, 2 * C),
                                   lambda b, r: (b, r, 0, 0))],
            out_specs=pl.BlockSpec((1, tile_rows, Wo, C),
                                   lambda b, r: (b, r, 0, 0)),
        ),
        compiler_params=pltpu.CompilerParams(
            dimension_semantics=("parallel", "parallel"),
            vmem_limit_bytes=_VMEM_LIMIT,
        ),
    )(xr)


# ---------------------------------------------------------------------------
# Tiled GEMM: bf16 x bf16 -> f32 VMEM accumulator (MXU), fused bias + ReLU.
# K-last reduction grid, pl.when init/finalize. Wrapper pads M (>=16 rows for
# bf16 sublane packing) and M/K/N up to tile multiples so any shape works.
# ---------------------------------------------------------------------------
def _gemm_bias_act_kernel(a_ref, b_ref, bias_ref, o_ref, acc_ref, *, apply_relu):
    @pl.when(pl.program_id(2) == 0)
    def _():
        acc_ref[...] = jnp.zeros_like(acc_ref)

    acc_ref[...] += jnp.dot(a_ref[...], b_ref[...],
                            preferred_element_type=jnp.float32)

    @pl.when(pl.program_id(2) == pl.num_programs(2) - 1)
    def _():
        r = acc_ref[...] + bias_ref[...].astype(jnp.float32)
        if apply_relu:
            r = jnp.maximum(r, 0.0)
        o_ref[...] = r.astype(o_ref.dtype)


def gemm_bias_act(a, b, bias, *, tm=256, tn=256, tk=2048, apply_relu, out_dtype):
    M, K = a.shape
    K2, N = b.shape
    assert K == K2
    bias = bias.reshape(1, N)

    tm = min(tm, _round_up(M, 16))
    tn = min(tn, _round_up(N, 128))
    tk = min(tk, _round_up(K, 128))
    Mp, Np, Kp = _round_up(M, tm), _round_up(N, tn), _round_up(K, tk)

    a_p = jnp.pad(a, ((0, Mp - M), (0, Kp - K)))
    b_p = jnp.pad(b, ((0, Kp - K), (0, Np - N)))
    bias_p = jnp.pad(bias, ((0, 0), (0, Np - N)))

    grid = (Mp // tm, Np // tn, Kp // tk)
    out = pl.pallas_call(
        functools.partial(_gemm_bias_act_kernel, apply_relu=apply_relu),
        out_shape=jax.ShapeDtypeStruct((Mp, Np), out_dtype),
        grid_spec=pltpu.PrefetchScalarGridSpec(
            num_scalar_prefetch=0,
            grid=grid,
            in_specs=[
                pl.BlockSpec((tm, tk), lambda i, j, k: (i, k)),
                pl.BlockSpec((tk, tn), lambda i, j, k: (k, j)),
                pl.BlockSpec((1, tn), lambda i, j, k: (0, j)),
            ],
            out_specs=pl.BlockSpec((tm, tn), lambda i, j, k: (i, j)),
            scratch_shapes=[pltpu.VMEM((tm, tn), jnp.float32)],
        ),
        compiler_params=pltpu.CompilerParams(
            dimension_semantics=("parallel", "parallel", "arbitrary"),
            vmem_limit_bytes=_VMEM_LIMIT,
        ),
    )(a_p, b_p, bias_p)
    return out[:M, :N] if (Mp, Np) != (M, N) else out


# ---------------------------------------------------------------------------
# VGG16-style block + classifier head (Pallas path) and pure-JAX reference.
# ---------------------------------------------------------------------------
def vgg16_block_forward(x_nhwc, params, num_classes=10):
    w1, b1, w2, b2, wfc1, bfc1, wfc2, bfc2 = params       # all bf16
    x = x_nhwc.astype(jnp.bfloat16)
    y = conv3x3_relu(x, w1, b1)
    y = conv3x3_relu(y, w2, b2)
    y = maxpool2x2(y)
    n = y.shape[0]
    flat = y.reshape(n, -1)
    h = gemm_bias_act(flat, wfc1, bfc1, apply_relu=True, out_dtype=jnp.bfloat16)
    logits = gemm_bias_act(h, wfc2, bfc2, apply_relu=False, out_dtype=jnp.float32)
    return logits[:, :num_classes]


def vgg16_block_reference(x_nhwc, params, num_classes=10):
    f32 = jnp.float32
    w1, b1, w2, b2, wfc1, bfc1, wfc2, bfc2 = [p.astype(f32) for p in params]
    x = x_nhwc.astype(jnp.bfloat16).astype(f32)

    def conv(x, w, b):
        y = lax.conv_general_dilated(
            x, w, (1, 1), "SAME", dimension_numbers=("NHWC", "HWIO", "NHWC"))
        # mirror the Pallas pipeline's bf16 activation storage
        return jnp.maximum(y + b, 0.0).astype(jnp.bfloat16).astype(f32)

    y = conv(x, w1, b1)
    y = conv(y, w2, b2)
    n, hh, ww, c = y.shape
    y = y.reshape(n, hh // 2, 2, ww // 2, 2, c).max(axis=(2, 4))
    flat = y.reshape(n, -1).astype(jnp.bfloat16).astype(f32)
    hid = jnp.maximum(flat @ wfc1 + bfc1, 0.0).astype(jnp.bfloat16).astype(f32)
    logits = hid @ wfc2 + bfc2
    return logits[:, :num_classes]


class VGG16:
    """JAX/Pallas mirror of the (empty) PyTorch VGG16 module."""

    def __init__(self):
        # Reference __init__ defines no parameters.
        pass

    def forward(self):
        # Exact semantics of the reference: no inputs, no compute, returns None.
        return None

    def __call__(self):
        return self.forward()


if __name__ == "__main__":
    # 1) Preserve the (empty) reference forward semantics.
    model = VGG16()
    assert model() is None

    # 2) Run the Pallas VGG-style pipeline at small deterministic shapes.
    key = jax.random.PRNGKey(0)
    kx, k1, k2, k3, k4, kb1, kb2, kb3, kb4 = jax.random.split(key, 9)

    N, H, W, CIN = 2, 16, 16, 4       # small NHWC input
    C1 = C2 = 128                     # lane-dense conv channels
    HIDDEN = 128
    NUM_CLASSES = 10                  # wrapper pads the head to 128 lanes

    x = jax.random.normal(kx, (N, H, W, CIN), jnp.float32)
    w1 = jax.random.normal(k1, (3, 3, CIN, C1), jnp.float32) / jnp.sqrt(9 * CIN)
    w2 = jax.random.normal(k2, (3, 3, C1, C2), jnp.float32) / jnp.sqrt(9 * C1)
    kdim = (H // 2) * (W // 2) * C2
    wfc1 = jax.random.normal(k3, (kdim, HIDDEN), jnp.float32) / jnp.sqrt(kdim)
    wfc2 = jax.random.normal(k4, (HIDDEN, NUM_CLASSES), jnp.float32) / jnp.sqrt(HIDDEN)
    b1 = 0.1 * jax.random.normal(kb1, (C1,), jnp.float32)
    b2 = 0.1 * jax.random.normal(kb2, (C2,), jnp.float32)
    bfc1 = 0.1 * jax.random.normal(kb3, (HIDDEN,), jnp.float32)
    bfc2 = 0.1 * jax.random.normal(kb4, (NUM_CLASSES,), jnp.float32)

    params = tuple(p.astype(jnp.bfloat16)
                   for p in (w1, b1, w2, b2, wfc1, bfc1, wfc2, bfc2))

    fwd = jax.jit(functools.partial(vgg16_block_forward, num_classes=NUM_CLASSES))
    logits = fwd(x, params)
    jax.block_until_ready(logits)

    ref = jax.jit(functools.partial(vgg16_block_reference, num_classes=NUM_CLASSES))
    logits_ref = ref(x, params)
    jax.block_until_ready(logits_ref)

    assert logits.shape == (N, NUM_CLASSES)
    assert jnp.allclose(logits, logits_ref, rtol=5e-2, atol=5e-2), (
        "Pallas VGG block mismatch vs reference: "
        f"max abs diff {float(jnp.max(jnp.abs(logits - logits_ref)))}")
    print("KERNEL_OK")
</pallas_src>

<mosaic_0001>
module attributes {stable_mosaic.version = 11 : i64} {
  func.func @_conv3x3_kernel(%arg0: i32, %arg1: i32, %arg2: memref<1x18x18x8xbf16, #tpu.memory_space<vmem>>, %arg3: memref<3x3x8x128xbf16, #tpu.memory_space<vmem>>, %arg4: memref<1x128xbf16, #tpu.memory_space<vmem>>, %arg5: memref<1x8x16x128xbf16, #tpu.memory_space<vmem>>) attributes {dimension_semantics = [#tpu.dimension_semantics<parallel>, #tpu.dimension_semantics<arbitrary>], iteration_bounds = array<i64: 2, 2>, scalar_prefetch = 0 : i64, scratch_operands = 0 : i64, tpu.core_type = #tpu.core_type<tc>, window_params = [{transform_indices = @transform_0, window_bounds = array<i64: 1, 18, 18, 8>}, {pipeline_mode = #tpu.pipeline_mode<synchronous>, transform_indices = @transform_1, window_bounds = array<i64: 3, 3, 8, 128>}, {pipeline_mode = #tpu.pipeline_mode<synchronous>, transform_indices = @transform_2, window_bounds = array<i64: 1, 128>}, {transform_indices = @transform_3, window_bounds = array<i64: 1, 8, 16, 128>}]} {
    %c8_i32 = arith.constant 8 : i32
    %0 = arith.muli %arg1, %c8_i32 : i32
    %1 = tpu.assume_multiple %0, 8 : i32
    %cst = arith.constant 0.000000e+00 : f32
    %2 = vector.broadcast %cst : f32 to vector<128x128xf32>
    %c0_i32 = arith.constant 0 : i32
    %3 = arith.addi %1, %c0_i32 : i32
    %c0 = arith.constant 0 : index
    %4 = arith.index_cast %3 : i32 to index
    %c0_0 = arith.constant 0 : index
    %c0_1 = arith.constant 0 : index
    %5 = vector.load %arg2[%c0, %4, %c0_0, %c0_1] : memref<1x18x18x8xbf16, #tpu.memory_space<vmem>>, vector<1x8x16x8xbf16>
    %6 = vector.shape_cast %5 : vector<1x8x16x8xbf16> to vector<8x16x8xbf16>
    %7 = vector.shape_cast %6 : vector<8x16x8xbf16> to vector<128x8xbf16>
    %c0_2 = arith.constant 0 : index
    %c0_3 = arith.constant 0 : index
    %c0_4 = arith.constant 0 : index
    %c0_5 = arith.constant 0 : index
    %8 = vector.load %arg3[%c0_2, %c0_3, %c0_4, %c0_5] : memref<3x3x8x128xbf16, #tpu.memory_space<vmem>>, vector<1x1x8x128xbf16>
    %9 = vector.shape_cast %8 : vector<1x1x8x128xbf16> to vector<8x128xbf16>
    %cst_6 = arith.constant dense<0.000000e+00> : vector<128x128xf32>
    %10 = tpu.matmul %7, %9, %cst_6 {dimension_numbers = #tpu.dot_dimension_numbers<[1], [0], [0], [1], [0, 0, 1, 1], [], []>} : vector<128x8xbf16>, vector<8x128xbf16>, vector<128x128xf32> -> vector<128x128xf32>
    %11 = arith.addf %2, %10 : vector<128x128xf32>
    %c0_i32_7 = arith.constant 0 : i32
    %12 = arith.addi %1, %c0_i32_7 : i32
    %c0_8 = arith.constant 0 : index
    %13 = arith.index_cast %12 : i32 to index
    %c1 = arith.constant 1 : index
    %c0_9 = arith.constant 0 : index
    %14 = vector.load %arg2[%c0_8, %13, %c1, %c0_9] : memref<1x18x18x8xbf16, #tpu.memory_space<vmem>>, vector<1x8x16x8xbf16>
    %15 = vector.shape_cast %14 : vector<1x8x16x8xbf16> to vector<8x16x8xbf16>
    %16 = vector.shape_cast %15 : vector<8x16x8xbf16> to vector<128x8xbf16>
    %c0_10 = arith.constant 0 : index
    %c1_11 = arith.constant 1 : index
    %c0_12 = arith.constant 0 : index
    %c0_13 = arith.constant 0 : index
    %17 = vector.load %arg3[%c0_10, %c1_11, %c0_12, %c0_13] : memref<3x3x8x128xbf16, #tpu.memory_space<vmem>>, vector<1x1x8x128xbf16>
    %18 = vector.shape_cast %17 : vector<1x1x8x128xbf16> to vector<8x128xbf16>
    %cst_14 = arith.constant dense<0.000000e+00> : vector<128x128xf32>
    %19 = tpu.matmul %16, %18, %cst_14 {dimension_numbers = #tpu.dot_dimension_numbers<[1], [0], [0], [1], [0, 0, 1, 1], [], []>} : vector<128x8xbf16>, vector<8x128xbf16>, vector<128x128xf32> -> vector<128x128xf32>
    %20 = arith.addf %11, %19 : vector<128x128xf32>
    %c0_i32_15 = arith.constant 0 : i32
    %21 = arith.addi %1, %c0_i32_15 : i32
    %c0_16 = arith.constant 0 : index
    %22 = arith.index_cast %21 : i32 to index
    %c2 = arith.constant 2 : index
    %c0_17 = arith.constant 0 : index
    %23 = vector.load %arg2[%c0_16, %22, %c2, %c0_17] : memref<1x18x18x8xbf16, #tpu.memory_space<vmem>>, vector<1x8x16x8xbf16>
    %24 = vector.shape_cast %23 : vector<1x8x16x8xbf16> to vector<8x16x8xbf16>
    %25 = vector.shape_cast %24 : vector<8x16x8xbf16> to vector<128x8xbf16>
    %c0_18 = arith.constant 0 : index
    %c2_19 = arith.constant 2 : index
    %c0_20 = arith.constant 0 : index
    %c0_21 = arith.constant 0 : index
    %26 = vector.load %arg3[%c0_18, %c2_19, %c0_20, %c0_21] : memref<3x3x8x128xbf16, #tpu.memory_space<vmem>>, vector<1x1x8x128xbf16>
    %27 = vector.shape_cast %26 : vector<1x1x8x128xbf16> to vector<8x128xbf16>
    %cst_22 = arith.constant dense<0.000000e+00> : vector<128x128xf32>
    %28 = tpu.matmul %25, %27, %cst_22 {dimension_numbers = #tpu.dot_dimension_numbers<[1], [0], [0], [1], [0, 0, 1, 1], [], []>} : vector<128x8xbf16>, vector<8x128xbf16>, vector<128x128xf32> -> vector<128x128xf32>
    %29 = arith.addf %20, %28 : vector<128x128xf32>
    %c1_i32 = arith.constant 1 : i32
    %30 = arith.addi %1, %c1_i32 : i32
    %c0_23 = arith.constant 0 : index
    %31 = arith.index_cast %30 : i32 to index
    %c0_24 = arith.constant 0 : index
    %c0_25 = arith.constant 0 : index
    %32 = vector.load %arg2[%c0_23, %31, %c0_24, %c0_25] : memref<1x18x18x8xbf16, #tpu.memory_space<vmem>>, vector<1x8x16x8xbf16>
    %33 = vector.shape_cast %32 : vector<1x8x16x8xbf16> to vector<8x16x8xbf16>
    %34 = vector.shape_cast %33 : vector<8x16x8xbf16> to vector<128x8xbf16>
    %c1_26 = arith.constant 1 : index
    %c0_27 = arith.constant 0 : index
    %c0_28 = arith.constant 0 : index
    %c0_29 = arith.constant 0 : index
    %35 = vector.load %arg3[%c1_26, %c0_27, %c0_28, %c0_29] : memref<3x3x8x128xbf16, #tpu.memory_space<vmem>>, vector<1x1x8x128xbf16>
    %36 = vector.shape_cast %35 : vector<1x1x8x128xbf16> to vector<8x128xbf16>
    %cst_30 = arith.constant dense<0.000000e+00> : vector<128x128xf32>
    %37 = tpu.matmul %34, %36, %cst_30 {dimension_numbers = #tpu.dot_dimension_numbers<[1], [0], [0], [1], [0, 0, 1, 1], [], []>} : vector<128x8xbf16>, vector<8x128xbf16>, vector<128x128xf32> -> vector<128x128xf32>
    %38 = arith.addf %29, %37 : vector<128x128xf32>
    %c1_i32_31 = arith.constant 1 : i32
    %39 = arith.addi %1, %c1_i32_31 : i32
    %c0_32 = arith.constant 0 : index
    %40 = arith.index_cast %39 : i32 to index
    %c1_33 = arith.constant 1 : index
    %c0_34 = arith.constant 0 : index
    %41 = vector.load %arg2[%c0_32, %40, %c1_33, %c0_34] : memref<1x18x18x8xbf16, #tpu.memory_space<vmem>>, vector<1x8x16x8xbf16>
    %42 = vector.shape_cast %41 : vector<1x8x16x8xbf16> to vector<8x16x8xbf16>
    %43 = vector.shape_cast %42 : vector<8x16x8xbf16> to vector<128x8xbf16>
    %c1_35 = arith.constant 1 : index
    %c1_36 = arith.constant 1 : index
    %c0_37 = arith.constant 0 : index
    %c0_38 = arith.constant 0 : index
    %44 = vector.load %arg3[%c1_35, %c1_36, %c0_37, %c0_38] : memref<3x3x8x128xbf16, #tpu.memory_space<vmem>>, vector<1x1x8x128xbf16>
    %45 = vector.shape_cast %44 : vector<1x1x8x128xbf16> to vector<8x128xbf16>
    %cst_39 = arith.constant dense<0.000000e+00> : vector<128x128xf32>
    %46 = tpu.matmul %43, %45, %cst_39 {dimension_numbers = #tpu.dot_dimension_numbers<[1], [0], [0], [1], [0, 0, 1, 1], [], []>} : vector<128x8xbf16>, vector<8x128xbf16>, vector<128x128xf32> -> vector<128x128xf32>
    %47 = arith.addf %38, %46 : vector<128x128xf32>
    %c1_i32_40 = arith.constant 1 : i32
    %48 = arith.addi %1, %c1_i32_40 : i32
    %c0_41 = arith.constant 0 : index
    %49 = arith.index_cast %48 : i32 to index
    %c2_42 = arith.constant 2 : index
    %c0_43 = arith.constant 0 : index
    %50 = vector.load %arg2[%c0_41, %49, %c2_42, %c0_43] : memref<1x18x18x8xbf16, #tpu.memory_space<vmem>>, vector<1x8x16x8xbf16>
    %51 = vector.shape_cast %50 : vector<1x8x16x8xbf16> to vector<8x16x8xbf16>
    %52 = vector.shape_cast %51 : vector<8x16x8xbf16> to vector<128x8xbf16>
    %c1_44 = arith.constant 1 : index
    %c2_45 = arith.constant 2 : index
    %c0_46 = arith.constant 0 : index
    %c0_47 = arith.constant 0 : index
    %53 = vector.load %arg3[%c1_44, %c2_45, %c0_46, %c0_47] : memref<3x3x8x128xbf16, #tpu.memory_space<vmem>>, vector<1x1x8x128xbf16>
    %54 = vector.shape_cast %53 : vector<1x1x8x128xbf16> to vector<8x128xbf16>
    %cst_48 = arith.constant dense<0.000000e+00> : vector<128x128xf32>
    %55 = tpu.matmul %52, %54, %cst_48 {dimension_numbers = #tpu.dot_dimension_numbers<[1], [0], [0], [1], [0, 0, 1, 1], [], []>} : vector<128x8xbf16>, vector<8x128xbf16>, vector<128x128xf32> -> vector<128x128xf32>
    %56 = arith.addf %47, %55 : vector<128x128xf32>
    %c2_i32 = arith.constant 2 : i32
    %57 = arith.addi %1, %c2_i32 : i32
    %c0_49 = arith.constant 0 : index
    %58 = arith.index_cast %57 : i32 to index
    %c0_50 = arith.constant 0 : index
    %c0_51 = arith.constant 0 : index
    %59 = vector.load %arg2[%c0_49, %58, %c0_50, %c0_51] : memref<1x18x18x8xbf16, #tpu.memory_space<vmem>>, vector<1x8x16x8xbf16>
    %60 = vector.shape_cast %59 : vector<1x8x16x8xbf16> to vector<8x16x8xbf16>
    %61 = vector.shape_cast %60 : vector<8x16x8xbf16> to vector<128x8xbf16>
    %c2_52 = arith.constant 2 : index
    %c0_53 = arith.constant 0 : index
    %c0_54 = arith.constant 0 : index
    %c0_55 = arith.constant 0 : index
    %62 = vector.load %arg3[%c2_52, %c0_53, %c0_54, %c0_55] : memref<3x3x8x128xbf16, #tpu.memory_space<vmem>>, vector<1x1x8x128xbf16>
    %63 = vector.shape_cast %62 : vector<1x1x8x128xbf16> to vector<8x128xbf16>
    %cst_56 = arith.constant dense<0.000000e+00> : vector<128x128xf32>
    %64 = tpu.matmul %61, %63, %cst_56 {dimension_numbers = #tpu.dot_dimension_numbers<[1], [0], [0], [1], [0, 0, 1, 1], [], []>} : vector<128x8xbf16>, vector<8x128xbf16>, vector<128x128xf32> -> vector<128x128xf32>
    %65 = arith.addf %56, %64 : vector<128x128xf32>
    %c2_i32_57 = arith.constant 2 : i32
    %66 = arith.addi %1, %c2_i32_57 : i32
    %c0_58 = arith.constant 0 : index
    %67 = arith.index_cast %66 : i32 to index
    %c1_59 = arith.constant 1 : index
    %c0_60 = arith.constant 0 : index
    %68 = vector.load %arg2[%c0_58, %67, %c1_59, %c0_60] : memref<1x18x18x8xbf16, #tpu.memory_space<vmem>>, vector<1x8x16x8xbf16>
    %69 = vector.shape_cast %68 : vector<1x8x16x8xbf16> to vector<8x16x8xbf16>
    %70 = vector.shape_cast %69 : vector<8x16x8xbf16> to vector<128x8xbf16>
    %c2_61 = arith.constant 2 : index
    %c1_62 = arith.constant 1 : index
    %c0_63 = arith.constant 0 : index
    %c0_64 = arith.constant 0 : index
    %71 = vector.load %arg3[%c2_61, %c1_62, %c0_63, %c0_64] : memref<3x3x8x128xbf16, #tpu.memory_space<vmem>>, vector<1x1x8x128xbf16>
    %72 = vector.shape_cast %71 : vector<1x1x8x128xbf16> to vector<8x128xbf16>
    %cst_65 = arith.constant dense<0.000000e+00> : vector<128x128xf32>
    %73 = tpu.matmul %70, %72, %cst_65 {dimension_numbers = #tpu.dot_dimension_numbers<[1], [0], [0], [1], [0, 0, 1, 1], [], []>} : vector<128x8xbf16>, vector<8x128xbf16>, vector<128x128xf32> -> vector<128x128xf32>
    %74 = arith.addf %65, %73 : vector<128x128xf32>
    %c2_i32_66 = arith.constant 2 : i32
    %75 = arith.addi %1, %c2_i32_66 : i32
    %c0_67 = arith.constant 0 : index
    %76 = arith.index_cast %75 : i32 to index
    %c2_68 = arith.constant 2 : index
    %c0_69 = arith.constant 0 : index
    %77 = vector.load %arg2[%c0_67, %76, %c2_68, %c0_69] : memref<1x18x18x8xbf16, #tpu.memory_space<vmem>>, vector<1x8x16x8xbf16>
    %78 = vector.shape_cast %77 : vector<1x8x16x8xbf16> to vector<8x16x8xbf16>
    %79 = vector.shape_cast %78 : vector<8x16x8xbf16> to vector<128x8xbf16>
    %c2_70 = arith.constant 2 : index
    %c2_71 = arith.constant 2 : index
    %c0_72 = arith.constant 0 : index
    %c0_73 = arith.constant 0 : index
    %80 = vector.load %arg3[%c2_70, %c2_71, %c0_72, %c0_73] : memref<3x3x8x128xbf16, #tpu.memory_space<vmem>>, vector<1x1x8x128xbf16>
    %81 = vector.shape_cast %80 : vector<1x1x8x128xbf16> to vector<8x128xbf16>
    %cst_74 = arith.constant dense<0.000000e+00> : vector<128x128xf32>
    %82 = tpu.matmul %79, %81, %cst_74 {dimension_numbers = #tpu.dot_dimension_numbers<[1], [0], [0], [1], [0, 0, 1, 1], [], []>} : vector<128x8xbf16>, vector<8x128xbf16>, vector<128x128xf32> -> vector<128x128xf32>
    %83 = arith.addf %74, %82 : vector<128x128xf32>
    %c0_75 = arith.constant 0 : index
    %c0_76 = arith.constant 0 : index
    %84 = vector.load %arg4[%c0_75, %c0_76] : memref<1x128xbf16, #tpu.memory_space<vmem>>, vector<1x128xbf16>
    %85 = arith.extf %84 : vector<1x128xbf16> to vector<1x128xf32>
    %86 = vector.broadcast %85 : vector<1x128xf32> to vector<128x128xf32>
    %87 = arith.addf %83, %86 : vector<128x128xf32>
    %cst_77 = arith.constant 0.000000e+00 : f32
    %88 = vector.broadcast %cst_77 : f32 to vector<128x128xf32>
    %89 = arith.maximumf %87, %88 : vector<128x128xf32>
    %90 = vector.shape_cast %89 : vector<128x128xf32> to vector<8x16x128xf32>
    %91 = arith.truncf %90 : vector<8x16x128xf32> to vector<8x16x128xbf16>
    %c0_78 = arith.constant 0 : index
    %c0_79 = arith.constant 0 : index
    %c0_80 = arith.constant 0 : index
    %c0_81 = arith.constant 0 : index
    %92 = vector.load %arg5[%c0_78, %c0_79, %c0_80, %c0_81] : memref<1x8x16x128xbf16, #tpu.memory_space<vmem>>, vector<1x8x16x128xbf16>
    %93 = vector.shape_cast %92 : vector<1x8x16x128xbf16> to vector<8x16x128xbf16>
    %94 = vector.shape_cast %91 : vector<8x16x128xbf16> to vector<1x8x16x128xbf16>
    tpu.vector_store %arg5[%c0_78, %c0_79, %c0_80, %c0_81], %94 {strides = array<i32>} : memref<1x8x16x128xbf16, #tpu.memory_space<vmem>>, vector<1x8x16x128xbf16>,
    return
  }
  func.func @transform_0(%arg0: i32, %arg1: i32) -> (i32, i32, i32, i32) {
    %c0_i32 = arith.constant 0 : i32
    %c0_i32_0 = arith.constant 0 : i32
    %c0_i32_1 = arith.constant 0 : i32
    %c0_i32_2 = arith.constant 0 : i32
    return %arg0, %c0_i32, %c0_i32_0, %c0_i32_1 : i32, i32, i32, i32
  }
  func.func @transform_1(%arg0: i32, %arg1: i32) -> (i32, i32, i32, i32) {
    %c0_i32 = arith.constant 0 : i32
    %c0_i32_0 = arith.constant 0 : i32
    %c0_i32_1 = arith.constant 0 : i32
    %c0_i32_2 = arith.constant 0 : i32
    %c0_i32_3 = arith.constant 0 : i32
    return %c0_i32, %c0_i32_0, %c0_i32_1, %c0_i32_2 : i32, i32, i32, i32
  }
  func.func @transform_2(%arg0: i32, %arg1: i32) -> (i32, i32) {
    %c0_i32 = arith.constant 0 : i32
    %c0_i32_0 = arith.constant 0 : i32
    %c0_i32_1 = arith.constant 0 : i32
    return %c0_i32, %c0_i32_0 : i32, i32
  }
  func.func @transform_3(%arg0: i32, %arg1: i32) -> (i32, i32, i32, i32) {
    %c0_i32 = arith.constant 0 : i32
    %c0_i32_0 = arith.constant 0 : i32
    %c0_i32_1 = arith.constant 0 : i32
    return %arg0, %arg1, %c0_i32, %c0_i32_0 : i32, i32, i32, i32
  }
}

module attributes {stable_mosaic.version = 11 : i64} {
  func.func @_conv3x3_kernel(%arg0: i32, %arg1: i32, %arg2: memref<1x18x18x128xbf16, #tpu.memory_space<vmem>>, %arg3: memref<3x3x128x128xbf16, #tpu.memory_space<vmem>>, %arg4: memref<1x128xbf16, #tpu.memory_space<vmem>>, %arg5: memref<1x8x16x128xbf16, #tpu.memory_space<vmem>>) attributes {dimension_semantics = [#tpu.dimension_semantics<parallel>, #tpu.dimension_semantics<arbitrary>], iteration_bounds = array<i64: 2, 2>, scalar_prefetch = 0 : i64, scratch_operands = 0 : i64, tpu.core_type = #tpu.core_type<tc>, window_params = [{transform_indices = @transform_0, window_bounds = array<i64: 1, 18, 18, 128>}, {pipeline_mode = #tpu.pipeline_mode<synchronous>, transform_indices = @transform_1, window_bounds = array<i64: 3, 3, 128, 128>}, {pipeline_mode = #tpu.pipeline_mode<synchronous>, transform_indices = @transform_2, window_bounds = array<i64: 1, 128>}, {transform_indices = @transform_3, window_bounds = array<i64: 1, 8, 16, 128>}]} {
    %c8_i32 = arith.constant 8 : i32
    %0 = arith.muli %arg1, %c8_i32 : i32
    %1 = tpu.assume_multiple %0, 8 : i32
    %cst = arith.constant 0.000000e+00 : f32
    %2 = vector.broadcast %cst : f32 to vector<128x128xf32>
    %c0_i32 = arith.constant 0 : i32
    %3 = arith.addi %1, %c0_i32 : i32
    %c0 = arith.constant 0 : index
    %4 = arith.index_cast %3 : i32 to index
    %c0_0 = arith.constant 0 : index
    %c0_1 = arith.constant 0 : index
    %5 = vector.load %arg2[%c0, %4, %c0_0, %c0_1] : memref<1x18x18x128xbf16, #tpu.memory_space<vmem>>, vector<1x8x16x128xbf16>
    %6 = vector.shape_cast %5 : vector<1x8x16x128xbf16> to vector<8x16x128xbf16>
    %7 = vector.shape_cast %6 : vector<8x16x128xbf16> to vector<128x128xbf16>
    %c0_2 = arith.constant 0 : index
    %c0_3 = arith.constant 0 : index
    %c0_4 = arith.constant 0 : index
    %c0_5 = arith.constant 0 : index
    %8 = vector.load %arg3[%c0_2, %c0_3, %c0_4, %c0_5] : memref<3x3x128x128xbf16, #tpu.memory_space<vmem>>, vector<1x1x128x128xbf16>
    %9 = vector.shape_cast %8 : vector<1x1x128x128xbf16> to vector<128x128xbf16>
    %cst_6 = arith.constant dense<0.000000e+00> : vector<128x128xf32>
    %10 = tpu.matmul %7, %9, %cst_6 {dimension_numbers = #tpu.dot_dimension_numbers<[1], [0], [0], [1], [0, 0, 1, 1], [], []>} : vector<128x128xbf16>, vector<128x128xbf16>, vector<128x128xf32> -> vector<128x128xf32>
    %11 = arith.addf %2, %10 : vector<128x128xf32>
    %c0_i32_7 = arith.constant 0 : i32
    %12 = arith.addi %1, %c0_i32_7 : i32
    %c0_8 = arith.constant 0 : index
    %13 = arith.index_cast %12 : i32 to index
    %c1 = arith.constant 1 : index
    %c0_9 = arith.constant 0 : index
    %14 = vector.load %arg2[%c0_8, %13, %c1, %c0_9] : memref<1x18x18x128xbf16, #tpu.memory_space<vmem>>, vector<1x8x16x128xbf16>
    %15 = vector.shape_cast %14 : vector<1x8x16x128xbf16> to vector<8x16x128xbf16>
    %16 = vector.shape_cast %15 : vector<8x16x128xbf16> to vector<128x128xbf16>
    %c0_10 = arith.constant 0 : index
    %c1_11 = arith.constant 1 : index
    %c0_12 = arith.constant 0 : index
    %c0_13 = arith.constant 0 : index
    %17 = vector.load %arg3[%c0_10, %c1_11, %c0_12, %c0_13] : memref<3x3x128x128xbf16, #tpu.memory_space<vmem>>, vector<1x1x128x128xbf16>
    %18 = vector.shape_cast %17 : vector<1x1x128x128xbf16> to vector<128x128xbf16>
    %cst_14 = arith.constant dense<0.000000e+00> : vector<128x128xf32>
    %19 = tpu.matmul %16, %18, %cst_14 {dimension_numbers = #tpu.dot_dimension_numbers<[1], [0], [0], [1], [0, 0, 1, 1], [], []>} : vector<128x128xbf16>, vector<128x128xbf16>, vector<128x128xf32> -> vector<128x128xf32>
    %20 = arith.addf %11, %19 : vector<128x128xf32>
    %c0_i32_15 = arith.constant 0 : i32
    %21 = arith.addi %1, %c0_i32_15 : i32
    %c0_16 = arith.constant 0 : index
    %22 = arith.index_cast %21 : i32 to index
    %c2 = arith.constant 2 : index
    %c0_17 = arith.constant 0 : index
    %23 = vector.load %arg2[%c0_16, %22, %c2, %c0_17] : memref<1x18x18x128xbf16, #tpu.memory_space<vmem>>, vector<1x8x16x128xbf16>
    %24 = vector.shape_cast %23 : vector<1x8x16x128xbf16> to vector<8x16x128xbf16>
    %25 = vector.shape_cast %24 : vector<8x16x128xbf16> to vector<128x128xbf16>
    %c0_18 = arith.constant 0 : index
    %c2_19 = arith.constant 2 : index
    %c0_20 = arith.constant 0 : index
    %c0_21 = arith.constant 0 : index
    %26 = vector.load %arg3[%c0_18, %c2_19, %c0_20, %c0_21] : memref<3x3x128x128xbf16, #tpu.memory_space<vmem>>, vector<1x1x128x128xbf16>
    %27 = vector.shape_cast %26 : vector<1x1x128x128xbf16> to vector<128x128xbf16>
    %cst_22 = arith.constant dense<0.000000e+00> : vector<128x128xf32>
    %28 = tpu.matmul %25, %27, %cst_22 {dimension_numbers = #tpu.dot_dimension_numbers<[1], [0], [0], [1], [0, 0, 1, 1], [], []>} : vector<128x128xbf16>, vector<128x128xbf16>, vector<128x128xf32> -> vector<128x128xf32>
    %29 = arith.addf %20, %28 : vector<128x128xf32>
    %c1_i32 = arith.constant 1 : i32
    %30 = arith.addi %1, %c1_i32 : i32
    %c0_23 = arith.constant 0 : index
    %31 = arith.index_cast %30 : i32 to index
    %c0_24 = arith.constant 0 : index
    %c0_25 = arith.constant 0 : index
    %32 = vector.load %arg2[%c0_23, %31, %c0_24, %c0_25] : memref<1x18x18x128xbf16, #tpu.memory_space<vmem>>, vector<1x8x16x128xbf16>
    %33 = vector.shape_cast %32 : vector<1x8x16x128xbf16> to vector<8x16x128xbf16>
    %34 = vector.shape_cast %33 : vector<8x16x128xbf16> to vector<128x128xbf16>
    %c1_26 = arith.constant 1 : index
    %c0_27 = arith.constant 0 : index
    %c0_28 = arith.constant 0 : index
    %c0_29 = arith.constant 0 : index
    %35 = vector.load %arg3[%c1_26, %c0_27, %c0_28, %c0_29] : memref<3x3x128x128xbf16, #tpu.memory_space<vmem>>, vector<1x1x128x128xbf16>
    %36 = vector.shape_cast %35 : vector<1x1x128x128xbf16> to vector<128x128xbf16>
    %cst_30 = arith.constant dense<0.000000e+00> : vector<128x128xf32>
    %37 = tpu.matmul %34, %36, %cst_30 {dimension_numbers = #tpu.dot_dimension_numbers<[1], [0], [0], [1], [0, 0, 1, 1], [], []>} : vector<128x128xbf16>, vector<128x128xbf16>, vector<128x128xf32> -> vector<128x128xf32>
    %38 = arith.addf %29, %37 : vector<128x128xf32>
    %c1_i32_31 = arith.constant 1 : i32
    %39 = arith.addi %1, %c1_i32_31 : i32
    %c0_32 = arith.constant 0 : index
    %40 = arith.index_cast %39 : i32 to index
    %c1_33 = arith.constant 1 : index
    %c0_34 = arith.constant 0 : index
    %41 = vector.load %arg2[%c0_32, %40, %c1_33, %c0_34] : memref<1x18x18x128xbf16, #tpu.memory_space<vmem>>, vector<1x8x16x128xbf16>
    %42 = vector.shape_cast %41 : vector<1x8x16x128xbf16> to vector<8x16x128xbf16>
    %43 = vector.shape_cast %42 : vector<8x16x128xbf16> to vector<128x128xbf16>
    %c1_35 = arith.constant 1 : index
    %c1_36 = arith.constant 1 : index
    %c0_37 = arith.constant 0 : index
    %c0_38 = arith.constant 0 : index
    %44 = vector.load %arg3[%c1_35, %c1_36, %c0_37, %c0_38] : memref<3x3x128x128xbf16, #tpu.memory_space<vmem>>, vector<1x1x128x128xbf16>
    %45 = vector.shape_cast %44 : vector<1x1x128x128xbf16> to vector<128x128xbf16>
    %cst_39 = arith.constant dense<0.000000e+00> : vector<128x128xf32>
    %46 = tpu.matmul %43, %45, %cst_39 {dimension_numbers = #tpu.dot_dimension_numbers<[1], [0], [0], [1], [0, 0, 1, 1], [], []>} : vector<128x128xbf16>, vector<128x128xbf16>, vector<128x128xf32> -> vector<128x128xf32>
    %47 = arith.addf %38, %46 : vector<128x128xf32>
    %c1_i32_40 = arith.constant 1 : i32
    %48 = arith.addi %1, %c1_i32_40 : i32
    %c0_41 = arith.constant 0 : index
    %49 = arith.index_cast %48 : i32 to index
    %c2_42 = arith.constant 2 : index
    %c0_43 = arith.constant 0 : index
    %50 = vector.load %arg2[%c0_41, %49, %c2_42, %c0_43] : memref<1x18x18x128xbf16, #tpu.memory_space<vmem>>, vector<1x8x16x128xbf16>
    %51 = vector.shape_cast %50 : vector<1x8x16x128xbf16> to vector<8x16x128xbf16>
    %52 = vector.shape_cast %51 : vector<8x16x128xbf16> to vector<128x128xbf16>
    %c1_44 = arith.constant 1 : index
    %c2_45 = arith.constant 2 : index
    %c0_46 = arith.constant 0 : index
    %c0_47 = arith.constant 0 : index
    %53 = vector.load %arg3[%c1_44, %c2_45, %c0_46, %c0_47] : memref<3x3x128x128xbf16, #tpu.memory_space<vmem>>, vector<1x1x128x128xbf16>
    %54 = vector.shape_cast %53 : vector<1x1x128x128xbf16> to vector<128x128xbf16>
    %cst_48 = arith.constant dense<0.000000e+00> : vector<128x128xf32>
    %55 = tpu.matmul %52, %54, %cst_48 {dimension_numbers = #tpu.dot_dimension_numbers<[1], [0], [0], [1], [0, 0, 1, 1], [], []>} : vector<128x128xbf16>, vector<128x128xbf16>, vector<128x128xf32> -> vector<128x128xf32>
    %56 = arith.addf %47, %55 : vector<128x128xf32>
    %c2_i32 = arith.constant 2 : i32
    %57 = arith.addi %1, %c2_i32 : i32
    %c0_49 = arith.constant 0 : index
    %58 = arith.index_cast %57 : i32 to index
    %c0_50 = arith.constant 0 : index
    %c0_51 = arith.constant 0 : index
    %59 = vector.load %arg2[%c0_49, %58, %c0_50, %c0_51] : memref<1x18x18x128xbf16, #tpu.memory_space<vmem>>, vector<1x8x16x128xbf16>
    %60 = vector.shape_cast %59 : vector<1x8x16x128xbf16> to vector<8x16x128xbf16>
    %61 = vector.shape_cast %60 : vector<8x16x128xbf16> to vector<128x128xbf16>
    %c2_52 = arith.constant 2 : index
    %c0_53 = arith.constant 0 : index
    %c0_54 = arith.constant 0 : index
    %c0_55 = arith.constant 0 : index
    %62 = vector.load %arg3[%c2_52, %c0_53, %c0_54, %c0_55] : memref<3x3x128x128xbf16, #tpu.memory_space<vmem>>, vector<1x1x128x128xbf16>
    %63 = vector.shape_cast %62 : vector<1x1x128x128xbf16> to vector<128x128xbf16>
    %cst_56 = arith.constant dense<0.000000e+00> : vector<128x128xf32>
    %64 = tpu.matmul %61, %63, %cst_56 {dimension_numbers = #tpu.dot_dimension_numbers<[1], [0], [0], [1], [0, 0, 1, 1], [], []>} : vector<128x128xbf16>, vector<128x128xbf16>, vector<128x128xf32> -> vector<128x128xf32>
    %65 = arith.addf %56, %64 : vector<128x128xf32>
    %c2_i32_57 = arith.constant 2 : i32
    %66 = arith.addi %1, %c2_i32_57 : i32
    %c0_58 = arith.constant 0 : index
    %67 = arith.index_cast %66 : i32 to index
    %c1_59 = arith.constant 1 : index
    %c0_60 = arith.constant 0 : index
    %68 = vector.load %arg2[%c0_58, %67, %c1_59, %c0_60] : memref<1x18x18x128xbf16, #tpu.memory_space<vmem>>, vector<1x8x16x128xbf16>
    %69 = vector.shape_cast %68 : vector<1x8x16x128xbf16> to vector<8x16x128xbf16>
    %70 = vector.shape_cast %69 : vector<8x16x128xbf16> to vector<128x128xbf16>
    %c2_61 = arith.constant 2 : index
    %c1_62 = arith.constant 1 : index
    %c0_63 = arith.constant 0 : index
    %c0_64 = arith.constant 0 : index
    %71 = vector.load %arg3[%c2_61, %c1_62, %c0_63, %c0_64] : memref<3x3x128x128xbf16, #tpu.memory_space<vmem>>, vector<1x1x128x128xbf16>
    %72 = vector.shape_cast %71 : vector<1x1x128x128xbf16> to vector<128x128xbf16>
    %cst_65 = arith.constant dense<0.000000e+00> : vector<128x128xf32>
    %73 = tpu.matmul %70, %72, %cst_65 {dimension_numbers = #tpu.dot_dimension_numbers<[1], [0], [0], [1], [0, 0, 1, 1], [], []>} : vector<128x128xbf16>, vector<128x128xbf16>, vector<128x128xf32> -> vector<128x128xf32>
    %74 = arith.addf %65, %73 : vector<128x128xf32>
    %c2_i32_66 = arith.constant 2 : i32
    %75 = arith.addi %1, %c2_i32_66 : i32
    %c0_67 = arith.constant 0 : index
    %76 = arith.index_cast %75 : i32 to index
    %c2_68 = arith.constant 2 : index
    %c0_69 = arith.constant 0 : index
    %77 = vector.load %arg2[%c0_67, %76, %c2_68, %c0_69] : memref<1x18x18x128xbf16, #tpu.memory_space<vmem>>, vector<1x8x16x128xbf16>
    %78 = vector.shape_cast %77 : vector<1x8x16x128xbf16> to vector<8x16x128xbf16>
    %79 = vector.shape_cast %78 : vector<8x16x128xbf16> to vector<128x128xbf16>
    %c2_70 = arith.constant 2 : index
    %c2_71 = arith.constant 2 : index
    %c0_72 = arith.constant 0 : index
    %c0_73 = arith.constant 0 : index
    %80 = vector.load %arg3[%c2_70, %c2_71, %c0_72, %c0_73] : memref<3x3x128x128xbf16, #tpu.memory_space<vmem>>, vector<1x1x128x128xbf16>
    %81 = vector.shape_cast %80 : vector<1x1x128x128xbf16> to vector<128x128xbf16>
    %cst_74 = arith.constant dense<0.000000e+00> : vector<128x128xf32>
    %82 = tpu.matmul %79, %81, %cst_74 {dimension_numbers = #tpu.dot_dimension_numbers<[1], [0], [0], [1], [0, 0, 1, 1], [], []>} : vector<128x128xbf16>, vector<128x128xbf16>, vector<128x128xf32> -> vector<128x128xf32>
    %83 = arith.addf %74, %82 : vector<128x128xf32>
    %c0_75 = arith.constant 0 : index
    %c0_76 = arith.constant 0 : index
    %84 = vector.load %arg4[%c0_75, %c0_76] : memref<1x128xbf16, #tpu.memory_space<vmem>>, vector<1x128xbf16>
    %85 = arith.extf %84 : vector<1x128xbf16> to vector<1x128xf32>
    %86 = vector.broadcast %85 : vector<1x128xf32> to vector<128x128xf32>
    %87 = arith.addf %83, %86 : vector<128x128xf32>
    %cst_77 = arith.constant 0.000000e+00 : f32
    %88 = vector.broadcast %cst_77 : f32 to vector<128x128xf32>
    %89 = arith.maximumf %87, %88 : vector<128x128xf32>
    %90 = vector.shape_cast %89 : vector<128x128xf32> to vector<8x16x128xf32>
    %91 = arith.truncf %90 : vector<8x16x128xf32> to vector<8x16x128xbf16>
    %c0_78 = arith.constant 0 : index
    %c0_79 = arith.constant 0 : index
    %c0_80 = arith.constant 0 : index
    %c0_81 = arith.constant 0 : index
    %92 = vector.load %arg5[%c0_78, %c0_79, %c0_80, %c0_81] : memref<1x8x16x128xbf16, #tpu.memory_space<vmem>>, vector<1x8x16x128xbf16>
    %93 = vector.shape_cast %92 : vector<1x8x16x128xbf16> to vector<8x16x128xbf16>
    %94 = vector.shape_cast %91 : vector<8x16x128xbf16> to vector<1x8x16x128xbf16>
    tpu.vector_store %arg5[%c0_78, %c0_79, %c0_80, %c0_81], %94 {strides = array<i32>} : memref<1x8x16x128xbf16, #tpu.memory_space<vmem>>, vector<1x8x16x128xbf16>,
    return
  }
  func.func @transform_0(%arg0: i32, %arg1: i32) -> (i32, i32, i32, i32) {
    %c0_i32 = arith.constant 0 : i32
    %c0_i32_0 = arith.constant 0 : i32
    %c0_i32_1 = arith.constant 0 : i32
    %c0_i32_2 = arith.constant 0 : i32
    return %arg0, %c0_i32, %c0_i32_0, %c0_i32_1 : i32, i32, i32, i32
  }
  func.func @transform_1(%arg0: i32, %arg1: i32) -> (i32, i32, i32, i32) {
    %c0_i32 = arith.constant 0 : i32
    %c0_i32_0 = arith.constant 0 : i32
    %c0_i32_1 = arith.constant 0 : i32
    %c0_i32_2 = arith.constant 0 : i32
    %c0_i32_3 = arith.constant 0 : i32
    return %c0_i32, %c0_i32_0, %c0_i32_1, %c0_i32_2 : i32, i32, i32, i32
  }
  func.func @transform_2(%arg0: i32, %arg1: i32) -> (i32, i32) {
    %c0_i32 = arith.constant 0 : i32
    %c0_i32_0 = arith.constant 0 : i32
    %c0_i32_1 = arith.constant 0 : i32
    return %c0_i32, %c0_i32_0 : i32, i32
  }
  func.func @transform_3(%arg0: i32, %arg1: i32) -> (i32, i32, i32, i32) {
    %c0_i32 = arith.constant 0 : i32
    %c0_i32_0 = arith.constant 0 : i32
    %c0_i32_1 = arith.constant 0 : i32
    return %arg0, %arg1, %c0_i32, %c0_i32_0 : i32, i32, i32, i32
  }
}

module attributes {stable_mosaic.version = 11 : i64} {
  func.func @_maxpool2x2_kernel(%arg0: i32, %arg1: i32, %arg2: memref<1x16x8x256xbf16, #tpu.memory_space<vmem>>, %arg3: memref<1x8x8x128xbf16, #tpu.memory_space<vmem>>) attributes {dimension_semantics = [#tpu.dimension_semantics<parallel>, #tpu.dimension_semantics<parallel>], iteration_bounds = array<i64: 2, 1>, scalar_prefetch = 0 : i64, scratch_operands = 0 : i64, tpu.core_type = #tpu.core_type<tc>, window_params = [{transform_indices = @transform_0, window_bounds = array<i64: 1, 16, 8, 256>}, {transform_indices = @transform_1, window_bounds = array<i64: 1, 8, 8, 128>}]} {
    %c0 = arith.constant 0 : index
    %c0_0 = arith.constant 0 : index
    %c0_1 = arith.constant 0 : index
    %c0_2 = arith.constant 0 : index
    %0 = vector.load %arg2[%c0, %c0_0, %c0_1, %c0_2] : memref<1x16x8x256xbf16, #tpu.memory_space<vmem>>, vector<1x16x8x256xbf16>
    %1 = vector.shape_cast %0 : vector<1x16x8x256xbf16> to vector<16x8x256xbf16>
    %2 = vector.shape_cast %1 : vector<16x8x256xbf16> to vector<8x2x8x256xbf16>
    %cst = arith.constant dense<0xFF80> : vector<8x8x256xbf16>
    %3 = vector.multi_reduction <maximumf>, %2, %cst [1] : vector<8x2x8x256xbf16> to vector<8x8x256xbf16>
    %4 = vector.extract_strided_slice %3 {offsets = [0, 0, 0], sizes = [8, 8, 128], strides = [1, 1, 1]} : vector<8x8x256xbf16> to vector<8x8x128xbf16>
    %5 = vector.extract_strided_slice %3 {offsets = [0, 0, 128], sizes = [8, 8, 128], strides = [1, 1, 1]} : vector<8x8x256xbf16> to vector<8x8x128xbf16>
    %6 = arith.maximumf %4, %5 : vector<8x8x128xbf16>
    %c0_3 = arith.constant 0 : index
    %c0_4 = arith.constant 0 : index
    %c0_5 = arith.constant 0 : index
    %c0_6 = arith.constant 0 : index
    %7 = vector.load %arg3[%c0_3, %c0_4, %c0_5, %c0_6] : memref<1x8x8x128xbf16, #tpu.memory_space<vmem>>, vector<1x8x8x128xbf16>
    %8 = vector.shape_cast %7 : vector<1x8x8x128xbf16> to vector<8x8x128xbf16>
    %9 = vector.shape_cast %6 : vector<8x8x128xbf16> to vector<1x8x8x128xbf16>
    tpu.vector_store %arg3[%c0_3, %c0_4, %c0_5, %c0_6], %9 {strides = array<i32>} : memref<1x8x8x128xbf16, #tpu.memory_space<vmem>>, vector<1x8x8x128xbf16>,
    return
  }
  func.func @transform_0(%arg0: i32, %arg1: i32) -> (i32, i32, i32, i32) {
    %c0_i32 = arith.constant 0 : i32
    %c0_i32_0 = arith.constant 0 : i32
    %c0_i32_1 = arith.constant 0 : i32
    return %arg0, %arg1, %c0_i32, %c0_i32_0 : i32, i32, i32, i32
  }
  func.func @transform_1(%arg0: i32, %arg1: i32) -> (i32, i32, i32, i32) {
    %c0_i32 = arith.constant 0 : i32
    %c0_i32_0 = arith.constant 0 : i32
    %c0_i32_1 = arith.constant 0 : i32
    return %arg0, %arg1, %c0_i32, %c0_i32_0 : i32, i32, i32, i32
  }
}

module attributes {stable_mosaic.version = 11 : i64} {
  func.func @_gemm_bias_act_kernel(%arg0: i32, %arg1: i32, %arg2: i32, %arg3: memref<16x2048xbf16, #tpu.memory_space<vmem>>, %arg4: memref<2048x128xbf16, #tpu.memory_space<vmem>>, %arg5: memref<1x128xbf16, #tpu.memory_space<vmem>>, %arg6: memref<16x128xbf16, #tpu.memory_space<vmem>>, %arg7: memref<16x128xf32, #tpu.memory_space<vmem>>) attributes {dimension_semantics = [#tpu.dimension_semantics<parallel>, #tpu.dimension_semantics<parallel>, #tpu.dimension_semantics<arbitrary>], iteration_bounds = array<i64: 1, 1, 4>, scalar_prefetch = 0 : i64, scratch_operands = 1 : i64, tpu.core_type = #tpu.core_type<tc>, window_params = [{transform_indices = @transform_0, window_bounds = array<i64: 16, 2048>}, {transform_indices = @transform_1, window_bounds = array<i64: 2048, 128>}, {transform_indices = @transform_2, window_bounds = array<i64: 1, 128>}, {transform_indices = @transform_3, window_bounds = array<i64: 16, 128>}]} {
    %c0_i32 = arith.constant 0 : i32
    %0 = arith.cmpi eq, %arg2, %c0_i32 : i32
    %1 = arith.extui %0 : i1 to i32
    %c0_i32_0 = arith.constant 0 : i32
    %2 = arith.cmpi ne, %1, %c0_i32_0 : i32
    scf.if %2 {
      %cst_9 = arith.constant 0.000000e+00 : f32
      %12 = vector.broadcast %cst_9 : f32 to vector<16x128xf32>
      %c0_10 = arith.constant 0 : index
      %c0_11 = arith.constant 0 : index
      %13 = vector.load %arg7[%c0_10, %c0_11] : memref<16x128xf32, #tpu.memory_space<vmem>>, vector<16x128xf32>
      tpu.vector_store %arg7[%c0_10, %c0_11], %12 {strides = array<i32>} : memref<16x128xf32, #tpu.memory_space<vmem>>, vector<16x128xf32>,
    } else {
    }
    %c0 = arith.constant 0 : index
    %c0_1 = arith.constant 0 : index
    %3 = vector.load %arg7[%c0, %c0_1] : memref<16x128xf32, #tpu.memory_space<vmem>>, vector<16x128xf32>
    %c0_2 = arith.constant 0 : index
    %c0_3 = arith.constant 0 : index
    %4 = vector.load %arg3[%c0_2, %c0_3] : memref<16x2048xbf16, #tpu.memory_space<vmem>>, vector<16x2048xbf16>
    %c0_4 = arith.constant 0 : index
    %c0_5 = arith.constant 0 : index
    %5 = vector.load %arg4[%c0_4, %c0_5] : memref<2048x128xbf16, #tpu.memory_space<vmem>>, vector<2048x128xbf16>
    %cst = arith.constant dense<0.000000e+00> : vector<16x128xf32>
    %6 = tpu.matmul %4, %5, %cst {dimension_numbers = #tpu.dot_dimension_numbers<[1], [0], [0], [1], [0, 0, 1, 1], [], []>} : vector<16x2048xbf16>, vector<2048x128xbf16>, vector<16x128xf32> -> vector<16x128xf32>
    %7 = arith.addf %3, %6 : vector<16x128xf32>
    %c0_6 = arith.constant 0 : index
    %c0_7 = arith.constant 0 : index
    %8 = vector.load %arg7[%c0_6, %c0_7] : memref<16x128xf32, #tpu.memory_space<vmem>>, vector<16x128xf32>
    tpu.vector_store %arg7[%c0_6, %c0_7], %7 {strides = array<i32>} : memref<16x128xf32, #tpu.memory_space<vmem>>, vector<16x128xf32>,
    %c3_i32 = arith.constant 3 : i32
    %9 = arith.cmpi eq, %arg2, %c3_i32 : i32
    %10 = arith.extui %9 : i1 to i32
    %c0_i32_8 = arith.constant 0 : i32
    %11 = arith.cmpi ne, %10, %c0_i32_8 : i32
    scf.if %11 {
      %c0_9 = arith.constant 0 : index
      %c0_10 = arith.constant 0 : index
      %12 = vector.load %arg7[%c0_9, %c0_10] : memref<16x128xf32, #tpu.memory_space<vmem>>, vector<16x128xf32>
      %c0_11 = arith.constant 0 : index
      %c0_12 = arith.constant 0 : index
      %13 = vector.load %arg5[%c0_11, %c0_12] : memref<1x128xbf16, #tpu.memory_space<vmem>>, vector<1x128xbf16>
      %14 = arith.extf %13 : vector<1x128xbf16> to vector<1x128xf32>
      %15 = vector.broadcast %14 : vector<1x128xf32> to vector<16x128xf32>
      %16 = arith.addf %12, %15 : vector<16x128xf32>
      %cst_13 = arith.constant 0.000000e+00 : f32
      %17 = vector.broadcast %cst_13 : f32 to vector<16x128xf32>
      %18 = arith.maximumf %16, %17 : vector<16x128xf32>
      %19 = arith.truncf %18 : vector<16x128xf32> to vector<16x128xbf16>
      %c0_14 = arith.constant 0 : index
      %c0_15 = arith.constant 0 : index
      %20 = vector.load %arg6[%c0_14, %c0_15] : memref<16x128xbf16, #tpu.memory_space<vmem>>, vector<16x128xbf16>
      tpu.vector_store %arg6[%c0_14, %c0_15], %19 {strides = array<i32>} : memref<16x128xbf16, #tpu.memory_space<vmem>>, vector<16x128xbf16>,
    } else {
    }
    return
  }
  func.func @transform_0(%arg0: i32, %arg1: i32, %arg2: i32) -> (i32, i32) {
    %c0_i32 = arith.constant 0 : i32
    return %arg0, %arg2 : i32, i32
  }
  func.func @transform_1(%arg0: i32, %arg1: i32, %arg2: i32) -> (i32, i32) {
    %c0_i32 = arith.constant 0 : i32
    return %arg2, %arg1 : i32, i32
  }
  func.func @transform_2(%arg0: i32, %arg1: i32, %arg2: i32) -> (i32, i32) {
    %c0_i32 = arith.constant 0 : i32
    %c0_i32_0 = arith.constant 0 : i32
    return %c0_i32, %arg1 : i32, i32
  }
  func.func @transform_3(%arg0: i32, %arg1: i32, %arg2: i32) -> (i32, i32) {
    %c0_i32 = arith.constant 0 : i32
    return %arg0, %arg1 : i32, i32
  }
}

module attributes {stable_mosaic.version = 11 : i64} {
  func.func @_gemm_bias_act_kernel(%arg0: i32, %arg1: i32, %arg2: i32, %arg3: memref<16x128xbf16, #tpu.memory_space<vmem>>, %arg4: memref<128x128xbf16, #tpu.memory_space<vmem>>, %arg5: memref<1x128xbf16, #tpu.memory_space<vmem>>, %arg6: memref<16x128xf32, #tpu.memory_space<vmem>>, %arg7: memref<16x128xf32, #tpu.memory_space<vmem>>) attributes {dimension_semantics = [#tpu.dimension_semantics<parallel>, #tpu.dimension_semantics<parallel>, #tpu.dimension_semantics<arbitrary>], iteration_bounds = array<i64: 1, 1, 1>, scalar_prefetch = 0 : i64, scratch_operands = 1 : i64, tpu.core_type = #tpu.core_type<tc>, window_params = [{transform_indices = @transform_0, window_bounds = array<i64: 16, 128>}, {transform_indices = @transform_1, window_bounds = array<i64: 128, 128>}, {transform_indices = @transform_2, window_bounds = array<i64: 1, 128>}, {transform_indices = @transform_3, window_bounds = array<i64: 16, 128>}]} {
    %c0_i32 = arith.constant 0 : i32
    %0 = arith.cmpi eq, %arg2, %c0_i32 : i32
    %1 = arith.extui %0 : i1 to i32
    %c0_i32_0 = arith.constant 0 : i32
    %2 = arith.cmpi ne, %1, %c0_i32_0 : i32
    scf.if %2 {
      %cst_10 = arith.constant 0.000000e+00 : f32
      %12 = vector.broadcast %cst_10 : f32 to vector<16x128xf32>
      %c0_11 = arith.constant 0 : index
      %c0_12 = arith.constant 0 : index
      %13 = vector.load %arg7[%c0_11, %c0_12] : memref<16x128xf32, #tpu.memory_space<vmem>>, vector<16x128xf32>
      tpu.vector_store %arg7[%c0_11, %c0_12], %12 {strides = array<i32>} : memref<16x128xf32, #tpu.memory_space<vmem>>, vector<16x128xf32>,
    } else {
    }
    %c0 = arith.constant 0 : index
    %c0_1 = arith.constant 0 : index
    %3 = vector.load %arg7[%c0, %c0_1] : memref<16x128xf32, #tpu.memory_space<vmem>>, vector<16x128xf32>
    %c0_2 = arith.constant 0 : index
    %c0_3 = arith.constant 0 : index
    %4 = vector.load %arg3[%c0_2, %c0_3] : memref<16x128xbf16, #tpu.memory_space<vmem>>, vector<16x128xbf16>
    %c0_4 = arith.constant 0 : index
    %c0_5 = arith.constant 0 : index
    %5 = vector.load %arg4[%c0_4, %c0_5] : memref<128x128xbf16, #tpu.memory_space<vmem>>, vector<128x128xbf16>
    %cst = arith.constant dense<0.000000e+00> : vector<16x128xf32>
    %6 = tpu.matmul %4, %5, %cst {dimension_numbers = #tpu.dot_dimension_numbers<[1], [0], [0], [1], [0, 0, 1, 1], [], []>} : vector<16x128xbf16>, vector<128x128xbf16>, vector<16x128xf32> -> vector<16x128xf32>
    %7 = arith.addf %3, %6 : vector<16x128xf32>
    %c0_6 = arith.constant 0 : index
    %c0_7 = arith.constant 0 : index
    %8 = vector.load %arg7[%c0_6, %c0_7] : memref<16x128xf32, #tpu.memory_space<vmem>>, vector<16x128xf32>
    tpu.vector_store %arg7[%c0_6, %c0_7], %7 {strides = array<i32>} : memref<16x128xf32, #tpu.memory_space<vmem>>, vector<16x128xf32>,
    %c0_i32_8 = arith.constant 0 : i32
    %9 = arith.cmpi eq, %arg2, %c0_i32_8 : i32
    %10 = arith.extui %9 : i1 to i32
    %c0_i32_9 = arith.constant 0 : i32
    %11 = arith.cmpi ne, %10, %c0_i32_9 : i32
    scf.if %11 {
      %c0_10 = arith.constant 0 : index
      %c0_11 = arith.constant 0 : index
      %12 = vector.load %arg7[%c0_10, %c0_11] : memref<16x128xf32, #tpu.memory_space<vmem>>, vector<16x128xf32>
      %c0_12 = arith.constant 0 : index
      %c0_13 = arith.constant 0 : index
      %13 = vector.load %arg5[%c0_12, %c0_13] : memref<1x128xbf16, #tpu.memory_space<vmem>>, vector<1x128xbf16>
      %14 = arith.extf %13 : vector<1x128xbf16> to vector<1x128xf32>
      %15 = vector.broadcast %14 : vector<1x128xf32> to vector<16x128xf32>
      %16 = arith.addf %12, %15 : vector<16x128xf32>
      %c0_14 = arith.constant 0 : index
      %c0_15 = arith.constant 0 : index
      %17 = vector.load %arg6[%c0_14, %c0_15] : memref<16x128xf32, #tpu.memory_space<vmem>>, vector<16x128xf32>
      tpu.vector_store %arg6[%c0_14, %c0_15], %16 {strides = array<i32>} : memref<16x128xf32, #tpu.memory_space<vmem>>, vector<16x128xf32>,
    } else {
    }
    return
  }
  func.func @transform_0(%arg0: i32, %arg1: i32, %arg2: i32) -> (i32, i32) {
    %c0_i32 = arith.constant 0 : i32
    return %arg0, %arg2 : i32, i32
  }
  func.func @transform_1(%arg0: i32, %arg1: i32, %arg2: i32) -> (i32, i32) {
    %c0_i32 = arith.constant 0 : i32
    return %arg2, %arg1 : i32, i32
  }
  func.func @transform_2(%arg0: i32, %arg1: i32, %arg2: i32) -> (i32, i32) {
    %c0_i32 = arith.constant 0 : i32
    %c0_i32_0 = arith.constant 0 : i32
    return %c0_i32, %arg1 : i32, i32
  }
  func.func @transform_3(%arg0: i32, %arg1: i32, %arg2: i32) -> (i32, i32) {
    %c0_i32 = arith.constant 0 : i32
    return %arg0, %arg1 : i32, i32
  }
}

</mosaic_0001>

<llo_original>
// kernel: vgg16_block_forward.7
$region0: #{vgg16_block_forward.7}
  #allocation0 [shape = 'u32[]', space=smem, size = 0x4, offset = 0x4, fixed_abs, tag = 'smem constant byte address 0x4 - core index']
  #allocation1 [shape = 'u32[72,128]{1,0:T(1,128)}', space=vmem, size = 0x9000, scoped, tag = 'internal scratch']
  %s0 = inlined_call_operand.vmem [shape: bf16[2,16,8,256], index: 0, kind: input, shape index: {}]
  %s1 = inlined_call_operand.vmem [shape: bf16[2,8,8,128], index: 1, kind: output, shape index: {}]
  %s2 = sld [smem:[#allocation0]]
  $region37: #{vgg16_block_forward.7} parent=0
    _
  %s4 = ssub.s32 1, %s2
  %s5 = scalar_select 0, %s4, %s2
  loop: start=0, step=1, limit=4
  $region2: #{vgg16_block_forward.7} parent=0 // loop_pre_header
    _
  $region3: #{vgg16_block_forward.7} parent=0 // loop_header
    %s7 = sphi 0, %s11
    %p8 = scmp.ge.s32.totalorder %s7, 4
    %s14 = sphi 0, %s26
    %s15 = sphi 0, %s22
    %s16 = sphi 0, %s14
    %s17 = sphi 0, %s15
    %s18 = sphi 0, %s16
    %s19 = sphi 0, %s17
    %s31 = sphi 0, %s33
    %s34 = sphi 0, %s31
    %s35 = sphi 0, %s34
    %s51 = sphi 0, %s35
    %s59 = sphi 0, %s61
    %s62 = sphi 0, %s59
    %s63 = sphi 0, %s62
    %s79 = sphi 0, %s63
  $region4: #{vgg16_block_forward.7} parent=0 // loop_header_branch
    %10 = sbr.rel (%p8) target = $region8
  $region5: #{vgg16_block_forward.7} parent=0 // loop_body
    %s12 = ssub.s32 %s7, 1
    %s13 = ssub.s32 %s7, 2
    %s20 = sadd.s32 1, %s15
    %p21 = scmp.ge.s32.totalorder %s20, 1
    %s22 = scalar_select %p21, 0, %s20
    %s23 = sadd.s32 1, %s14
    %s24 = scalar_select %p21, %s23, %s14
    %p25 = scmp.ge.s32.totalorder %s24, 2
    %s26 = scalar_select %p25, 0, %s24
    %s27 = ssub.s32 %s14, %s26
    %s28 = ssub.s32 %s15, %s22
    %s29 = sor.u32 %s27, %s28
    %p30 = scmp.eq.s32.totalorder %s29, 0
    %s32 = sadd.s32 %s31, 1
    %s33 = scalar_select %p30, %s31, %s32
    %p36 = pneg %p30
    %p37 = scmp.eq.s32.totalorder %s7, 1
    %p38 = por %p36, %p37
    %p39 = scmp.ne.s32.totalorder %s31, %s34
    %p40 = scmp.eq.s32.totalorder %s7, 0
    %p41 = por %p39, %p40
    %p42 = scmp.ne.s32.totalorder %s31, %s34
    %p43 = scmp.eq.s32.totalorder %s12, 1
    %p44 = por %p42, %p43
    %p45 = scmp.ne.s32.totalorder %s34, %s35
    %p46 = scmp.eq.s32.totalorder %s12, 0
    %p47 = por %p45, %p46
    %p48 = scmp.ne.s32.totalorder %s34, %s35
    %p49 = scmp.eq.s32.totalorder %s13, 1
    %p50 = por %p48, %p49
    %p52 = scmp.ne.s32.totalorder %s35, %s51
    %p53 = scmp.eq.s32.totalorder %s13, 0
    %p54 = por %p52, %p53
    %s55 = ssub.s32 %s14, %s26
    %s56 = ssub.s32 %s15, %s22
    %s57 = sor.u32 %s55, %s56
    %p58 = scmp.eq.s32.totalorder %s57, 0
    %s60 = sadd.s32 %s59, 1
    %s61 = scalar_select %p58, %s59, %s60
    %p64 = pneg %p58
    %p65 = scmp.eq.s32.totalorder %s7, 1
    %p66 = por %p64, %p65
    %p67 = scmp.ne.s32.totalorder %s59, %s62
    %p68 = scmp.eq.s32.totalorder %s7, 0
    %p69 = por %p67, %p68
    %p70 = scmp.ne.s32.totalorder %s59, %s62
    %p71 = scmp.eq.s32.totalorder %s12, 1
    %p72 = por %p70, %p71
    %p73 = scmp.ne.s32.totalorder %s62, %s63
    %p74 = scmp.eq.s32.totalorder %s12, 0
    %p75 = por %p73, %p74
    %p76 = scmp.ne.s32.totalorder %s62, %s63
    %p77 = scmp.eq.s32.totalorder %s13, 1
    %p78 = por %p76, %p77
    %p80 = scmp.ne.s32.totalorder %s63, %s79
    %p81 = scmp.eq.s32.totalorder %s13, 0
    %p82 = por %p80, %p81
    %p83 = scmp.le.s32.totalorder 1, %s7
    %p84 = scmp.lt.s32.totalorder %s7, 3
    %p85 = pnand %p83, %p84
    %p86 = pneg %p85
    // Predicated region
    $region9: #{vgg16_block_forward.7} parent=5 // pred_check
      _
    $region10: #{vgg16_block_forward.7} parent=5 // pred_check_branch
      %88 = sbr.rel (%p85) target = $region12
    $region11: #{vgg16_block_forward.7} parent=5 // pred_region
      %s89 = ssub.s32 %s7, 1
    $region12: #{vgg16_block_forward.7} parent=5 // pred_fallthru
      _
    %p90 = scmp.lt.s32.totalorder %s7, 2
    // Predicated region
    $region13: #{vgg16_block_forward.7} parent=5 // pred_check
      %p91 = pneg %p90
    $region14: #{vgg16_block_forward.7} parent=5 // pred_check_branch
      %93 = sbr.rel (%p91) target = $region16
    $region15: #{vgg16_block_forward.7} parent=5 // pred_region
      // Predicated region
      $region17: #{vgg16_block_forward.7} parent=15 // pred_check
        %p94 = pneg %p41
      $region18: #{vgg16_block_forward.7} parent=15 // pred_check_branch
        %96 = sbr.rel (%p94) target = $region20
      $region19: #{vgg16_block_forward.7} parent=15 // pred_region
        %s97 = smul.u32 16, %s15
        %p98 = scmp.lt.s32.totalorder %s14, 1
        %s99 = scalar_select %p98, %s14, 1
        %p100 = scmp.lt.s32.totalorder %s97, 15
        %s101 = scalar_select %p100, %s97, 15
        %s102 = smul.addr %s101, 2
        %s103 = smul.addr %s99, 32
        %s104 = sadd.s32 %s102, %s103
        %s105 = smul.addr %s104, 4
        %s106 = scalar_lea.vmem %s0, %s105
        %s107 = smul.u32 16, %s15
      $region20: #{vgg16_block_forward.7} parent=15 // pred_fallthru
        _
    $region16: #{vgg16_block_forward.7} parent=5 // pred_fallthru
      _
    %p108 = scmp.le.s32.totalorder 1, %s7
    %p109 = scmp.lt.s32.totalorder %s7, 3
    %p110 = pnand %p108, %p109
    %p111 = pneg %p110
    // Predicated region
    $region21: #{vgg16_block_forward.7} parent=5 // pred_check
      _
    $region22: #{vgg16_block_forward.7} parent=5 // pred_check_branch
      %113 = sbr.rel (%p110) target = $region24
    $region23: #{vgg16_block_forward.7} parent=5 // pred_region
      %s114 = ssub.s32 %s7, 1
      %s115 = smul.u32 16, %s17
      %p116 = scmp.lt.s32.totalorder %s16, 1
      %s117 = scalar_select %p116, %s16, 1
      %p118 = scmp.lt.s32.totalorder %s115, 15
      %s119 = scalar_select %p118, %s115, 15
      %s120 = smul.addr %s119, 2
      %s121 = smul.addr %s117, 32
      %s122 = sadd.s32 %s120, %s121
      %s123 = smul.addr %s122, 4
      %s124 = scalar_lea.vmem %s0, %s123
      %p125 = pneg %p47
      %p126 = pneg %p44
      %p127 = pneg %p75
      %p128 = pneg %p72
      %s129 = smul.u32 8, %s17
      %p130 = scmp.lt.s32.totalorder %s16, 1
      %s131 = scalar_select %p130, %s16, 1
      %p132 = scmp.lt.s32.totalorder %s129, 7
      %s133 = scalar_select %p132, %s129, 7
      %s134 = smul.addr %s131, 8
      %s135 = sadd.s32 %s133, %s134
      %s136 = smul.addr %s135, 4
      %s137 = scalar_lea.vmem %s1, %s136
      %s138 = smul.u32 16, %s17
      %p139 = scmp.lt.s32.totalorder %s16, 1
      %s140 = scalar_select %p139, %s16, 1
      %p141 = scmp.lt.s32.totalorder %s138, 15
      %s142 = scalar_select %p141, %s138, 15
      %s143 = smul.addr %s142, 2
      %s144 = smul.addr %s140, 32
      %s145 = sadd.s32 %s143, %s144
      %s146 = smul.addr %s145, 4
      %s147 = scalar_lea.vmem %s0, %s146
      %s148 = smul.u32 16, %s17
      %s149 = smul.u32 8, %s17
      %p150 = scmp.lt.s32.totalorder %s16, 1
      %s151 = scalar_select %p150, %s16, 1
      %p152 = scmp.lt.s32.totalorder %s149, 7
      %s153 = scalar_select %p152, %s149, 7
      %s154 = smul.addr %s151, 8
      %s155 = sadd.s32 %s153, %s154
      %s156 = smul.addr %s155, 4
      %s157 = scalar_lea.vmem %s1, %s156
      %s158 = smul.u32 8, %s17
      %v159 = vld [vmem:[%s147] sm:$0xff]
      %v160 = vld [vmem:[%s147 + $0x8] sm:$0xff]
      %v161 = vld [vmem:[%s147 + $0x10] sm:$0xff]
      %v162 = vld [vmem:[%s147 + $0x18] sm:$0xff]
      %v163 = vld [vmem:[%s147 + $0x20] sm:$0xff]
      %v164 = vld [vmem:[%s147 + $0x28] sm:$0xff]
      %v165 = vld [vmem:[%s147 + $0x30] sm:$0xff]
      %v166 = vld [vmem:[%s147 + $0x38] sm:$0xff]
      %v167 = vld [vmem:[%s147 + $0x40] sm:$0xff]
      %v168 = vld [vmem:[%s147 + $0x48] sm:$0xff]
      %v169 = vld [vmem:[%s147 + $0x50] sm:$0xff]
      %v170 = vld [vmem:[%s147 + $0x58] sm:$0xff]
      %v171 = vld [vmem:[%s147 + $0x60] sm:$0xff]
      %v172 = vld [vmem:[%s147 + $0x68] sm:$0xff]
      %v173 = vld [vmem:[%s147 + $0x70] sm:$0xff]
      %v174 = vld [vmem:[%s147 + $0x78] sm:$0xff]
      %v175 = vunpack.c.l.bf16 %v159
      %v176 = vunpack.c.h.bf16 %v159
      %v177 = vunpack.c.l.bf16 %v160
      %v178 = vunpack.c.h.bf16 %v160
      %v179 = vunpack.c.l.bf16 %v161
      %v180 = vunpack.c.h.bf16 %v161
      %v181 = vunpack.c.l.bf16 %v162
      %v182 = vunpack.c.h.bf16 %v162
      %v183 = vunpack.c.l.bf16 %v163
      %v184 = vunpack.c.h.bf16 %v163
      %v185 = vunpack.c.l.bf16 %v164
      %v186 = vunpack.c.h.bf16 %v164
      %v187 = vunpack.c.l.bf16 %v165
      %v188 = vunpack.c.h.bf16 %v165
      %v189 = vunpack.c.l.bf16 %v166
      %v190 = vunpack.c.h.bf16 %v166
      %v191 = vunpack.c.l.bf16 %v167
      %v192 = vunpack.c.h.bf16 %v167
      %v193 = vunpack.c.l.bf16 %v168
      %v194 = vunpack.c.h.bf16 %v168
      %v195 = vunpack.c.l.bf16 %v169
      %v196 = vunpack.c.h.bf16 %v169
      %v197 = vunpack.c.l.bf16 %v170
      %v198 = vunpack.c.h.bf16 %v170
      %v199 = vunpack.c.l.bf16 %v171
      %v200 = vunpack.c.h.bf16 %v171
      %v201 = vunpack.c.l.bf16 %v172
      %v202 = vunpack.c.h.bf16 %v172
      %v203 = vunpack.c.l.bf16 %v173
      %v204 = vunpack.c.h.bf16 %v173
      %v205 = vunpack.c.l.bf16 %v174
      %v206 = vunpack.c.h.bf16 %v174
      %v207 = vmax.f32 %v175, %v177
      %v208 = vmax.f32 %v176, %v178
      %v209 = vmax.f32 %v179, %v181
      %v210 = vmax.f32 %v180, %v182
      %v211 = vmax.f32 %v183, %v185
      %v212 = vmax.f32 %v184, %v186
      %v213 = vmax.f32 %v187, %v189
      %v214 = vmax.f32 %v188, %v190
      %v215 = vmax.f32 %v191, %v193
      %v216 = vmax.f32 %v192, %v194
      %v217 = vmax.f32 %v195, %v197
      %v218 = vmax.f32 %v196, %v198
      %v219 = vmax.f32 %v199, %v201
      %v220 = vmax.f32 %v200, %v202
      %v221 = vmax.f32 %v203, %v205
      %v222 = vmax.f32 %v204, %v206
      %v223 = vpack.c.bf16 %v208, %v207
      %v224 = vpack.c.bf16 %v210, %v209
      %v225 = vpack.c.bf16 %v212, %v211
      %v226 = vpack.c.bf16 %v214, %v213
      %v227 = vpack.c.bf16 %v216, %v215
      %v228 = vpack.c.bf16 %v218, %v217
      %v229 = vpack.c.bf16 %v220, %v219
      %v230 = vpack.c.bf16 %v222, %v221
      %v231 = vunpack.c.l.bf16 %v223
      %v232 = vunpack.c.l.bf16 %v224
      %v233 = vunpack.c.l.bf16 %v225
      %v234 = vunpack.c.l.bf16 %v226
      %v235 = vunpack.c.l.bf16 %v227
      %v236 = vunpack.c.l.bf16 %v228
      %v237 = vunpack.c.l.bf16 %v229
      %v238 = vunpack.c.l.bf16 %v230
      %v247 = vrot.slane %v223, 4
      %v248 = vrot.slane %v224, 4
      %v249 = vrot.slane %v225, 4
      %v250 = vrot.slane %v226, 4
      %v251 = vrot.slane %v227, 4
      %v252 = vrot.slane %v228, 4
      %v253 = vrot.slane %v229, 4
      %v254 = vrot.slane %v230, 4
      %v263 = vunpack.c.l.bf16 %v247
      %v264 = vunpack.c.l.bf16 %v248
      %v265 = vunpack.c.l.bf16 %v249
      %v266 = vunpack.c.l.bf16 %v250
      %v267 = vunpack.c.l.bf16 %v251
      %v268 = vunpack.c.l.bf16 %v252
      %v269 = vunpack.c.l.bf16 %v253
      %v270 = vunpack.c.l.bf16 %v254
      %v271 = vmax.f32 %v231, %v263
      %v272 = vmax.f32 %v232, %v264
      %v273 = vmax.f32 %v233, %v265
      %v274 = vmax.f32 %v234, %v266
      %v275 = vmax.f32 %v235, %v267
      %v276 = vmax.f32 %v236, %v268
      %v277 = vmax.f32 %v237, %v269
      %v278 = vmax.f32 %v238, %v270
      %v279 = vpack.c.bf16 %v271, %v271
      %v280 = vpack.c.bf16 %v272, %v272
      %v281 = vpack.c.bf16 %v273, %v273
      %v282 = vpack.c.bf16 %v274, %v274
      %v283 = vpack.c.bf16 %v275, %v275
      %v284 = vpack.c.bf16 %v276, %v276
      %v285 = vpack.c.bf16 %v277, %v277
      %v286 = vpack.c.bf16 %v278, %v278
      %287 = vst [vmem:[%s157] sm:$0xf] %v279
      %288 = vst [vmem:[%s157 + $0x4] sm:$0xf] %v280
      %289 = vst [vmem:[%s157 + $0x8] sm:$0xf] %v281
      %290 = vst [vmem:[%s157 + $0xc] sm:$0xf] %v282
      %291 = vst [vmem:[%s157 + $0x10] sm:$0xf] %v283
      %292 = vst [vmem:[%s157 + $0x14] sm:$0xf] %v284
      %293 = vst [vmem:[%s157 + $0x18] sm:$0xf] %v285
      %294 = vst [vmem:[%s157 + $0x1c] sm:$0xf] %v286
      %s295 = smul.u32 8, %s17
      %p296 = scmp.lt.s32.totalorder %s16, 1
      %s297 = scalar_select %p296, %s16, 1
      %p298 = scmp.lt.s32.totalorder %s295, 7
      %s299 = scalar_select %p298, %s295, 7
      %s300 = smul.addr %s297, 8
      %s301 = sadd.s32 %s299, %s300
      %s302 = smul.addr %s301, 4
      %s303 = scalar_lea.vmem %s1, %s302
      // Predicated region
      $region25: #{vgg16_block_forward.7} parent=23 // pred_check
        %p304 = pneg %p72
      $region26: #{vgg16_block_forward.7} parent=23 // pred_check_branch
        %306 = sbr.rel (%p304) target = $region28
      $region27: #{vgg16_block_forward.7} parent=23 // pred_region
        %s307 = smul.u32 8, %s17
      $region28: #{vgg16_block_forward.7} parent=23 // pred_fallthru
        _
    $region24: #{vgg16_block_forward.7} parent=5 // pred_fallthru
      _
    %p308 = scmp.le.s32.totalorder 2, %s7
    // Predicated region
    $region29: #{vgg16_block_forward.7} parent=5 // pred_check
      %p309 = pneg %p308
    $region30: #{vgg16_block_forward.7} parent=5 // pred_check_branch
      %311 = sbr.rel (%p309) target = $region32
    $region31: #{vgg16_block_forward.7} parent=5 // pred_region
      %s312 = ssub.s32 %s7, 2
      // Predicated region
      $region33: #{vgg16_block_forward.7} parent=31 // pred_check
        %p313 = pneg %p78
      $region34: #{vgg16_block_forward.7} parent=31 // pred_check_branch
        %315 = sbr.rel (%p313) target = $region36
      $region35: #{vgg16_block_forward.7} parent=31 // pred_region
        %s316 = smul.u32 8, %s19
        %p317 = scmp.lt.s32.totalorder %s18, 1
        %s318 = scalar_select %p317, %s18, 1
        %p319 = scmp.lt.s32.totalorder %s316, 7
        %s320 = scalar_select %p319, %s316, 7
        %s321 = smul.addr %s318, 8
        %s322 = sadd.s32 %s320, %s321
        %s323 = smul.addr %s322, 4
        %s324 = scalar_lea.vmem %s1, %s323
      $region36: #{vgg16_block_forward.7} parent=31 // pred_fallthru
        _
    $region32: #{vgg16_block_forward.7} parent=5 // pred_fallthru
      _
  $region6: #{vgg16_block_forward.7} parent=0 // loop_footer
    %s11 = sadd.s32 1, %s7
  $region7: #{vgg16_block_forward.7} parent=0 // loop_footer_branch
    %6 = sbr.rel target = $region3
  $region8: #{vgg16_block_forward.7} parent=0 // loop_exit
    _

// kernel: vgg16_block_forward.5
$region0: #{vgg16_block_forward.5}
  #allocation0 [shape = 'u32[]', space=smem, size = 0x4, offset = 0x4, fixed_abs, tag = 'smem constant byte address 0x4 - core index']
  #allocation1 [shape = 'u32[72,128]{1,0:T(1,128)}', space=vmem, size = 0x9000, scoped, tag = 'internal scratch']
  %s0 = inlined_call_operand.vmem [shape: bf16[2,18,18,8], index: 0, kind: input, shape index: {}]
  %s1 = inlined_call_operand.vmem [shape: bf16[3,3,8,128], index: 1, kind: input, shape index: {}]
  %s2 = inlined_call_operand.hbm [shape: bf16[1,128], index: 2, kind: input, shape index: {}]
  %s3 = inlined_call_operand.vmem [shape: bf16[2,16,16,128], index: 3, kind: output, shape index: {}]
  %s4 = sld [smem:[#allocation0]]
  $region49: #{vgg16_block_forward.5} parent=0
    _
  %s6 = ssub.s32 1, %s4
  %s7 = scalar_select 0, %s6, %s4
  $region1: #{vgg16_block_forward.5} parent=0
    #allocation2 [shape = 'u8[512]{0}', space=vmem, size = 0x400, scoped, tag = 'input window, operand 2, single buffered']
    #allocation3 [shape = 's32[2]{0}', space=sflag, size = 0x8, scoped, tag = 'scoped memory for vgg16_block_forward.5']
    %8 = vsyncpa [#allocation3], 0
    loop: start=0, step=1, limit=6
    $region2: #{vgg16_block_forward.5} parent=1 // loop_pre_header
      _
    $region3: #{vgg16_block_forward.5} parent=1 // loop_header
      %s10 = sphi 0, %s14
      %p11 = scmp.ge.s32.totalorder %s10, 6
      %s17 = sphi 0, %s29
      %s18 = sphi 0, %s25
      %s19 = sphi 0, %s17
      %s20 = sphi 0, %s18
      %s21 = sphi 0, %s19
      %s22 = sphi 0, %s20
      %s32 = sphi 0, %s34
      %s35 = sphi 0, %s32
      %s36 = sphi 0, %s35
      %s52 = sphi 0, %s36
      %s56 = sphi 0, %s56
      %s58 = sphi 0, %s56
      %s59 = sphi 0, %s58
      %s73 = sphi 0, %s59
      %s77 = sphi 0, %s77
      %s79 = sphi 0, %s77
      %s80 = sphi 0, %s79
      %s94 = sphi 0, %s80
      %s102 = sphi 0, %s104
      %s105 = sphi 0, %s102
      %s106 = sphi 0, %s105
      %s122 = sphi 0, %s106
    $region4: #{vgg16_block_forward.5} parent=1 // loop_header_branch
      %13 = sbr.rel (%p11) target = $region8
    $region5: #{vgg16_block_forward.5} parent=1 // loop_body
      %s15 = ssub.s32 %s10, 1
      %s16 = ssub.s32 %s10, 2
      %s23 = sadd.s32 1, %s18
      %p24 = scmp.ge.s32.totalorder %s23, 2
      %s25 = scalar_select %p24, 0, %s23
      %s26 = sadd.s32 1, %s17
      %s27 = scalar_select %p24, %s26, %s17
      %p28 = scmp.ge.s32.totalorder %s27, 2
      %s29 = scalar_select %p28, 0, %s27
      %s30 = ssub.s32 %s17, %s29
      %p31 = scmp.eq.s32.totalorder %s30, 0
      %s33 = sadd.s32 %s32, 1
      %s34 = scalar_select %p31, %s32, %s33
      %p37 = pneg %p31
      %p38 = scmp.eq.s32.totalorder %s10, 3
      %p39 = por %p37, %p38
      %p40 = scmp.ne.s32.totalorder %s32, %s35
      %p41 = scmp.eq.s32.totalorder %s10, 0
      %p42 = por %p40, %p41
      %p43 = scmp.ne.s32.totalorder %s32, %s35
      %p44 = scmp.eq.s32.totalorder %s15, 3
      %p45 = por %p43, %p44
      %p46 = scmp.ne.s32.totalorder %s35, %s36
      %p47 = scmp.eq.s32.totalorder %s15, 0
      %p48 = por %p46, %p47
      %p49 = scmp.ne.s32.totalorder %s35, %s36
      %p50 = scmp.eq.s32.totalorder %s16, 3
      %p51 = por %p49, %p50
      %p53 = scmp.ne.s32.totalorder %s36, %s52
      %p54 = scmp.eq.s32.totalorder %s16, 0
      %p55 = por %p53, %p54
      %s57 = sadd.s32 %s56, 1
      %p60 = scmp.eq.s32.totalorder %s10, 3
      %p61 = scmp.ne.s32.totalorder %s56, %s58
      %p62 = scmp.eq.s32.totalorder %s10, 0
      %p63 = por %p61, %p62
      %p64 = scmp.ne.s32.totalorder %s56, %s58
      %p65 = scmp.eq.s32.totalorder %s15, 3
      %p66 = por %p64, %p65
      %p67 = scmp.ne.s32.totalorder %s58, %s59
      %p68 = scmp.eq.s32.totalorder %s15, 0
      %p69 = por %p67, %p68
      %p70 = scmp.ne.s32.totalorder %s58, %s59
      %p71 = scmp.eq.s32.totalorder %s16, 3
      %p72 = por %p70, %p71
      %p74 = scmp.ne.s32.totalorder %s59, %s73
      %p75 = scmp.eq.s32.totalorder %s16, 0
      %p76 = por %p74, %p75
      %s78 = sadd.s32 %s77, 1
      %p81 = scmp.eq.s32.totalorder %s10, 3
      %p82 = scmp.ne.s32.totalorder %s77, %s79
      %p83 = scmp.eq.s32.totalorder %s10, 0
      %p84 = por %p82, %p83
      %p85 = scmp.ne.s32.totalorder %s77, %s79
      %p86 = scmp.eq.s32.totalorder %s15, 3
      %p87 = por %p85, %p86
      %p88 = scmp.ne.s32.totalorder %s79, %s80
      %p89 = scmp.eq.s32.totalorder %s15, 0
      %p90 = por %p88, %p89
      %p91 = scmp.ne.s32.totalorder %s79, %s80
      %p92 = scmp.eq.s32.totalorder %s16, 3
      %p93 = por %p91, %p92
      %p95 = scmp.ne.s32.totalorder %s80, %s94
      %p96 = scmp.eq.s32.totalorder %s16, 0
      %p97 = por %p95, %p96
      %s98 = ssub.s32 %s17, %s29
      %s99 = ssub.s32 %s18, %s25
      %s100 = sor.u32 %s98, %s99
      %p101 = scmp.eq.s32.totalorder %s100, 0
      %s103 = sadd.s32 %s102, 1
      %s104 = scalar_select %p101, %s102, %s103
      %p107 = pneg %p101
      %p108 = scmp.eq.s32.totalorder %s10, 3
      %p109 = por %p107, %p108
      %p110 = scmp.ne.s32.totalorder %s102, %s105
      %p111 = scmp.eq.s32.totalorder %s10, 0
      %p112 = por %p110, %p111
      %p113 = scmp.ne.s32.totalorder %s102, %s105
      %p114 = scmp.eq.s32.totalorder %s15, 3
      %p115 = por %p113, %p114
      %p116 = scmp.ne.s32.totalorder %s105, %s106
      %p117 = scmp.eq.s32.totalorder %s15, 0
      %p118 = por %p116, %p117
      %p119 = scmp.ne.s32.totalorder %s105, %s106
      %p120 = scmp.eq.s32.totalorder %s16, 3
      %p121 = por %p119, %p120
      %p123 = scmp.ne.s32.totalorder %s106, %s122
      %p124 = scmp.eq.s32.totalorder %s16, 0
      %p125 = por %p123, %p124
      %p126 = scmp.le.s32.totalorder 1, %s10
      %p127 = scmp.lt.s32.totalorder %s10, 5
      %p128 = pnand %p126, %p127
      %p129 = pneg %p128
      // Predicated region
      $region9: #{vgg16_block_forward.5} parent=5 // pred_check
        _
      $region10: #{vgg16_block_forward.5} parent=5 // pred_check_branch
        %131 = sbr.rel (%p128) target = $region12
      $region11: #{vgg16_block_forward.5} parent=5 // pred_region
        %s132 = ssub.s32 %s10, 1
        // Predicated region
        $region13: #{vgg16_block_forward.5} parent=11 // pred_check
          %p133 = pneg %p69
        $region14: #{vgg16_block_forward.5} parent=11 // pred_check_branch
          %135 = sbr.rel (%p133) target = $region16
        $region15: #{vgg16_block_forward.5} parent=11 // pred_region
          _
        $region16: #{vgg16_block_forward.5} parent=11 // pred_fallthru
          _
        // Predicated region
        $region17: #{vgg16_block_forward.5} parent=11 // pred_check
          %p136 = pneg %p90
        $region18: #{vgg16_block_forward.5} parent=11 // pred_check_branch
          %138 = sbr.rel (%p136) target = $region20
        $region19: #{vgg16_block_forward.5} parent=11 // pred_region
          %140 = vsyncadd [#allocation3], 0
          %s142 = sshll.u32 %s2, 4
          %s143 = int_to_ptr.hbm [resolvable:$true] %s142
          %s144 = sshll.u32 [#allocation2], 4
          %s145 = int_to_ptr.vmem [resolvable:$true] %s144
          %147 = dma.hbm_to_vmem [thread:$0]  %s143, 16, %s145, [#allocation3]
        $region20: #{vgg16_block_forward.5} parent=11 // pred_fallthru
          _
      $region12: #{vgg16_block_forward.5} parent=5 // pred_fallthru
        _
      %p148 = scmp.lt.s32.totalorder %s10, 4
      // Predicated region
      $region21: #{vgg16_block_forward.5} parent=5 // pred_check
        %p149 = pneg %p148
      $region22: #{vgg16_block_forward.5} parent=5 // pred_check_branch
        %151 = sbr.rel (%p149) target = $region24
      $region23: #{vgg16_block_forward.5} parent=5 // pred_region
        // Predicated region
        $region25: #{vgg16_block_forward.5} parent=23 // pred_check
          %p152 = pneg %p42
        $region26: #{vgg16_block_forward.5} parent=23 // pred_check_branch
          %154 = sbr.rel (%p152) target = $region28
        $region27: #{vgg16_block_forward.5} parent=23 // pred_region
          %p155 = scmp.lt.s32.totalorder %s17, 1
          %s156 = scalar_select %p155, %s17, 1
          %s157 = smul.addr %s156, 54
          %s158 = smul.addr %s157, 4
          %s159 = scalar_lea.vmem %s0, %s158
        $region28: #{vgg16_block_forward.5} parent=23 // pred_fallthru
          _
      $region24: #{vgg16_block_forward.5} parent=5 // pred_fallthru
        _
      %p160 = scmp.le.s32.totalorder 1, %s10
      %p161 = scmp.lt.s32.totalorder %s10, 5
      %p162 = pnand %p160, %p161
      %p163 = pneg %p162
      // Predicated region
      $region29: #{vgg16_block_forward.5} parent=5 // pred_check
        _
      $region30: #{vgg16_block_forward.5} parent=5 // pred_check_branch
        %165 = sbr.rel (%p162) target = $region32
      $region31: #{vgg16_block_forward.5} parent=5 // pred_region
        %s166 = ssub.s32 %s10, 1
        // Predicated region
        $region33: #{vgg16_block_forward.5} parent=31 // pred_check
          %p167 = pneg %p90
        $region34: #{vgg16_block_forward.5} parent=31 // pred_check_branch
          %169 = sbr.rel (%p167) target = $region36
        $region35: #{vgg16_block_forward.5} parent=31 // pred_region
          %171 = dma.done [#allocation3], 16
        $region36: #{vgg16_block_forward.5} parent=31 // pred_fallthru
          _
        %p172 = scmp.lt.s32.totalorder %s19, 1
        %s173 = scalar_select %p172, %s19, 1
        %s174 = smul.addr %s173, 54
        %s175 = smul.addr %s174, 4
        %s176 = scalar_lea.vmem %s0, %s175
        %p177 = pneg %p48
        %p178 = pneg %p45
        %p179 = pneg %p69
        %p180 = pneg %p66
        %p181 = pneg %p90
        %p182 = pneg %p87
        %p183 = pneg %p118
        %p184 = pneg %p115
        %s185 = smul.u32 8, %s20
        %p186 = scmp.lt.s32.totalorder %s19, 1
        %s187 = scalar_select %p186, %s19, 1
        %p188 = scmp.lt.s32.totalorder %s185, 15
        %s189 = scalar_select %p188, %s185, 15
        %s190 = smul.addr %s189, 2
        %s191 = smul.addr %s187, 32
        %s192 = sadd.s32 %s190, %s191
        %s193 = smul.addr %s192, 4
        %s194 = scalar_lea.vmem %s3, %s193
        %p195 = scmp.lt.s32.totalorder %s19, 1
        %s196 = scalar_select %p195, %s19, 1
        %s197 = smul.addr %s196, 54
        %s198 = smul.addr %s197, 4
        %s199 = scalar_lea.vmem %s0, %s198
        %s200 = smul.u32 8, %s20
        %p201 = scmp.lt.s32.totalorder %s19, 1
        %s202 = scalar_select %p201, %s19, 1
        %p203 = scmp.lt.s32.totalorder %s200, 15
        %s204 = scalar_select %p203, %s200, 15
        %s205 = smul.addr %s204, 2
        %s206 = smul.addr %s202, 32
        %s207 = sadd.s32 %s205, %s206
        %s208 = smul.addr %s207, 4
        %s209 = scalar_lea.vmem %s3, %s208
        %s210 = smul.u32 8, %s20
        %s212 = smul.u32 %s20, 8
        %s213 = smul.u32 %s212, 3
        %s214 = smul.addr %s213, 4
        %s215 = scalar_lea.vmem %s199, %s214
        %v216 = vld [vmem:[%s215] sm:$0xf]
        %v217 = vld [vmem:[%s215 + $0x4] sm:$0xf]
        %v218 = vld [vmem:[%s215 + $0xc] sm:$0xf]
        %v219 = vld [vmem:[%s215 + $0x10] sm:$0xf]
        %v220 = vld [vmem:[%s215 + $0x18] sm:$0xf]
        %v221 = vld [vmem:[%s215 + $0x1c] sm:$0xf]
        %v222 = vld [vmem:[%s215 + $0x24] sm:$0xf]
        %v223 = vld [vmem:[%s215 + $0x28] sm:$0xf]
        %v224 = vld [vmem:[%s215 + $0x30] sm:$0xf]
        %v225 = vld [vmem:[%s215 + $0x34] sm:$0xf]
        %v226 = vld [vmem:[%s215 + $0x3c] sm:$0xf]
        %v227 = vld [vmem:[%s215 + $0x40] sm:$0xf]
        %v228 = vld [vmem:[%s215 + $0x48] sm:$0xf]
        %v229 = vld [vmem:[%s215 + $0x4c] sm:$0xf]
        %v230 = vld [vmem:[%s215 + $0x54] sm:$0xf]
        %v231 = vld [vmem:[%s215 + $0x58] sm:$0xf]
        %v232 = vld [vmem:[%s1] sm:$0xf]
        %v233 = vld [vmem:[%s215 + $0x8] sm:$0x1]
        %v234 = vld [vmem:[%s215 + $0x14] sm:$0x1]
        %v235 = vld [vmem:[%s215 + $0x20] sm:$0x1]
        %v236 = vld [vmem:[%s215 + $0x2c] sm:$0x1]
        %v237 = vld [vmem:[%s215 + $0x38] sm:$0x1]
        %v238 = vld [vmem:[%s215 + $0x44] sm:$0x1]
        %v239 = vld [vmem:[%s215 + $0x50] sm:$0x1]
        %v240 = vld [vmem:[%s215 + $0x5c] sm:$0x1]
        %vm241 = vsmask.f32 3328
        %vm242 = vsmask.f32 7440
        %vm243 = vmor %vm241, %vm242
        %v245 = vshrl.u32 %v216, 16
        %v247 = vrot.slane %v245, 4
        %v248 = vshll.u32 %v216, 16
        %v250 = vrot.slane %v248, 5
        %v251 = vor.u32 %v247, %v250
        %v252 = vrot.slane %v251, 4
        %v254 = vshll.u32 %v217, 16
        %v256 = vrot.slane %v254, 5
        %v257 = vsel %vm243, %v252, %v256
        %v258 = vshrl.u32 %v217, 16
        %v260 = vrot.slane %v258, 4
        %v261 = vor.u32 %v260, %v256
        %v262 = vrot.slane %v261, 4
        %v264 = vshll.u32 %v233, 16
        %v266 = vrot.slane %v264, 5
        %v267 = vsel %vm243, %v262, %v266
        %v269 = vshrl.u32 %v218, 16
        %v271 = vrot.slane %v269, 4
        %v272 = vshll.u32 %v218, 16
        %v274 = vrot.slane %v272, 5
        %v275 = vor.u32 %v271, %v274
        %v276 = vrot.slane %v275, 4
        %v278 = vshll.u32 %v219, 16
        %v280 = vrot.slane %v278, 5
        %v281 = vsel %vm243, %v276, %v280
        %v282 = vshrl.u32 %v219, 16
        %v284 = vrot.slane %v282, 4
        %v285 = vor.u32 %v284, %v280
        %v286 = vrot.slane %v285, 4
        %v288 = vshll.u32 %v234, 16
        %v290 = vrot.slane %v288, 5
        %v291 = vsel %vm243, %v286, %v290
        %v293 = vshrl.u32 %v220, 16
        %v295 = vrot.slane %v293, 4
        %v296 = vshll.u32 %v220, 16
        %v298 = vrot.slane %v296, 5
        %v299 = vor.u32 %v295, %v298
        %v300 = vrot.slane %v299, 4
        %v302 = vshll.u32 %v221, 16
        %v304 = vrot.slane %v302, 5
        %v305 = vsel %vm243, %v300, %v304
        %v306 = vshrl.u32 %v221, 16
        %v308 = vrot.slane %v306, 4
        %v309 = vor.u32 %v308, %v304
        %v310 = vrot.slane %v309, 4
        %v312 = vshll.u32 %v235, 16
        %v314 = vrot.slane %v312, 5
        %v315 = vsel %vm243, %v310, %v314
        %v317 = vshrl.u32 %v222, 16
        %v319 = vrot.slane %v317, 4
        %v320 = vshll.u32 %v222, 16
        %v322 = vrot.slane %v320, 5
        %v323 = vor.u32 %v319, %v322
        %v324 = vrot.slane %v323, 4
        %v326 = vshll.u32 %v223, 16
        %v328 = vrot.slane %v326, 5
        %v329 = vsel %vm243, %v324, %v328
        %v330 = vshrl.u32 %v223, 16
        %v332 = vrot.slane %v330, 4
        %v333 = vor.u32 %v332, %v328
        %v334 = vrot.slane %v333, 4
        %v336 = vshll.u32 %v236, 16
        %v338 = vrot.slane %v336, 5
        %v339 = vsel %vm243, %v334, %v338
        %v341 = vshrl.u32 %v224, 16
        %v343 = vrot.slane %v341, 4
        %v344 = vshll.u32 %v224, 16
        %v346 = vrot.slane %v344, 5
        %v347 = vor.u32 %v343, %v346
        %v348 = vrot.slane %v347, 4
        %v350 = vshll.u32 %v225, 16
        %v352 = vrot.slane %v350, 5
        %v353 = vsel %vm243, %v348, %v352
        %v354 = vshrl.u32 %v225, 16
        %v356 = vrot.slane %v354, 4
        %v357 = vor.u32 %v356, %v352
        %v358 = vrot.slane %v357, 4
        %v360 = vshll.u32 %v237, 16
        %v362 = vrot.slane %v360, 5
        %v363 = vsel %vm243, %v358, %v362
        %v365 = vshrl.u32 %v226, 16
        %v367 = vrot.slane %v365, 4
        %v368 = vshll.u32 %v226, 16
        %v370 = vrot.slane %v368, 5
        %v371 = vor.u32 %v367, %v370
        %v372 = vrot.slane %v371, 4
        %v374 = vshll.u32 %v227, 16
        %v376 = vrot.slane %v374, 5
        %v377 = vsel %vm243, %v372, %v376
        %v378 = vshrl.u32 %v227, 16
        %v380 = vrot.slane %v378, 4
        %v381 = vor.u32 %v380, %v376
        %v382 = vrot.slane %v381, 4
        %v384 = vshll.u32 %v238, 16
        %v386 = vrot.slane %v384, 5
        %v387 = vsel %vm243, %v382, %v386
        %v389 = vshrl.u32 %v228, 16
        %v391 = vrot.slane %v389, 4
        %v392 = vshll.u32 %v228, 16
        %v394 = vrot.slane %v392, 5
        %v395 = vor.u32 %v391, %v394
        %v396 = vrot.slane %v395, 4
        %v398 = vshll.u32 %v229, 16
        %v400 = vrot.slane %v398, 5
        %v401 = vsel %vm243, %v396, %v400
        %v402 = vshrl.u32 %v229, 16
        %v404 = vrot.slane %v402, 4
        %v405 = vor.u32 %v404, %v400
        %v406 = vrot.slane %v405, 4
        %v408 = vshll.u32 %v239, 16
        %v410 = vrot.slane %v408, 5
        %v411 = vsel %vm243, %v406, %v410
        %v413 = vshrl.u32 %v230, 16
        %v415 = vrot.slane %v413, 4
        %v416 = vshll.u32 %v230, 16
        %v418 = vrot.slane %v416, 5
        %v419 = vor.u32 %v415, %v418
        %v420 = vrot.slane %v419, 4
        %v422 = vshll.u32 %v231, 16
        %v424 = vrot.slane %v422, 5
        %v425 = vsel %vm243, %v420, %v424
        %v426 = vshrl.u32 %v231, 16
        %v428 = vrot.slane %v426, 4
        %v429 = vor.u32 %v428, %v424
        %v430 = vrot.slane %v429, 4
        %v432 = vshll.u32 %v240, 16
        %v434 = vrot.slane %v432, 5
        %v435 = vsel %vm243, %v430, %v434
        %s436 = scalar_lea.vmem %s1, 4
        %v437 = vld [vmem:[%s436] sm:$0xf]
        %v438 = vunpack.c.l.b16 %v257
        %v439 = vunpack.c.l.b16 %v267
        %v440 = vunpack.c.l.b16 %v281
        %v441 = vunpack.c.l.b16 %v291
        %v442 = vunpack.c.l.b16 %v305
        %v443 = vunpack.c.l.b16 %v315
        %v444 = vunpack.c.l.b16 %v329
        %v445 = vunpack.c.l.b16 %v339
        %v446 = vunpack.c.l.b16 %v353
        %v447 = vunpack.c.l.b16 %v363
        %v448 = vunpack.c.l.b16 %v377
        %v449 = vunpack.c.l.b16 %v387
        %v450 = vunpack.c.l.b16 %v401
        %v451 = vunpack.c.l.b16 %v411
        %v452 = vunpack.c.l.b16 %v425
        %v453 = vunpack.c.l.b16 %v435
        %v454 = vpack.c.b16 %v439, %v438
        %v455 = vpack.c.b16 %v441, %v440
        %v456 = vpack.c.b16 %v443, %v442
        %v457 = vpack.c.b16 %v445, %v444
        %v458 = vpack.c.b16 %v447, %v446
        %v459 = vpack.c.b16 %v449, %v448
        %v460 = vpack.c.b16 %v451, %v450
        %v461 = vpack.c.b16 %v453, %v452
        %vm462 = vcmask 64512
        %v464 = vsel %vm462, %v454, 0
        %v467 = vsel %vm462, %v455, 0
        %v470 = vsel %vm462, %v456, 0
        %v473 = vsel %vm462, %v457, 0
        %v476 = vsel %vm462, %v458, 0
        %v479 = vsel %vm462, %v459, 0
        %v482 = vsel %vm462, %v460, 0
        %v485 = vsel %vm462, %v461, 0
        %vm487 = vcmask 1043456
        %v489 = vsel %vm487, %v437, 0
        %491 = vmatpush.bf16.msra.mxu0 0
        %492 = vmatpush.bf16.msra.mxu0 0
        %493 = vmatpush.bf16.msra.mxu0 0
        %494 = vmatpush.bf16.msra.mxu0 0
        %495 = vmatpush.bf16.msra.mxu0 0
        %496 = vmatpush.bf16.msra.mxu0 0
        %497 = vmatpush.bf16.msra.mxu0 0
        %498 = vmatpush.bf16.msra.mxu0 %v489
        %499 = vmatmul.bf16.gmra.mxu0 %v464
        %v500 = vpop.f32.mrf.mxu0
        %v501 = vadd.f32 0.0, %v500
        %v502 = vpop.f32.mrf.mxu0
        %v503 = vadd.f32 0.0, %v502
        %504 = vmatmul.bf16.gmra.mxu0 %v467
        %v505 = vpop.f32.mrf.mxu0
        %v506 = vadd.f32 0.0, %v505
        %v507 = vpop.f32.mrf.mxu0
        %v508 = vadd.f32 0.0, %v507
        %509 = vmatmul.bf16.gmra.mxu0 %v470
        %v510 = vpop.f32.mrf.mxu0
        %v511 = vadd.f32 0.0, %v510
        %v512 = vpop.f32.mrf.mxu0
        %v513 = vadd.f32 0.0, %v512
        %514 = vmatmul.bf16.gmra.mxu0 %v473
        %v515 = vpop.f32.mrf.mxu0
        %v516 = vadd.f32 0.0, %v515
        %v517 = vpop.f32.mrf.mxu0
        %v518 = vadd.f32 0.0, %v517
        %519 = vmatmul.bf16.gmra.mxu0 %v476
        %v520 = vpop.f32.mrf.mxu0
        %v521 = vadd.f32 0.0, %v520
        %v522 = vpop.f32.mrf.mxu0
        %v523 = vadd.f32 0.0, %v522
        %524 = vmatmul.bf16.gmra.mxu0 %v479
        %v525 = vpop.f32.mrf.mxu0
        %v526 = vadd.f32 0.0, %v525
        %v527 = vpop.f32.mrf.mxu0
        %v528 = vadd.f32 0.0, %v527
        %529 = vmatmul.bf16.gmra.mxu0 %v482
        %v530 = vpop.f32.mrf.mxu0
        %v531 = vadd.f32 0.0, %v530
        %v532 = vpop.f32.mrf.mxu0
        %v533 = vadd.f32 0.0, %v532
        %534 = vmatmul.bf16.gmra.mxu0 %v485
        %v535 = vpop.f32.mrf.mxu0
        %v536 = vadd.f32 0.0, %v535
        %v537 = vpop.f32.mrf.mxu0
        %v538 = vadd.f32 0.0, %v537
        %539 = vdwg.mxu0
        %v556 = vunpack.c.l.b16 %v216
        %v557 = vunpack.c.l.b16 %v217
        %v558 = vunpack.c.l.b16 %v218
        %v559 = vunpack.c.l.b16 %v219
        %v560 = vunpack.c.l.b16 %v220
        %v561 = vunpack.c.l.b16 %v221
        %v562 = vunpack.c.l.b16 %v222
        %v563 = vunpack.c.l.b16 %v223
        %v564 = vunpack.c.l.b16 %v224
        %v565 = vunpack.c.l.b16 %v225
        %v566 = vunpack.c.l.b16 %v226
        %v567 = vunpack.c.l.b16 %v227
        %v568 = vunpack.c.l.b16 %v228
        %v569 = vunpack.c.l.b16 %v229
        %v570 = vunpack.c.l.b16 %v230
        %v571 = vunpack.c.l.b16 %v231
        %v572 = vpack.c.b16 %v557, %v556
        %v573 = vpack.c.b16 %v559, %v558
        %v574 = vpack.c.b16 %v561, %v560
        %v575 = vpack.c.b16 %v563, %v562
        %v576 = vpack.c.b16 %v565, %v564
        %v577 = vpack.c.b16 %v567, %v566
        %v578 = vpack.c.b16 %v569, %v568
        %v579 = vpack.c.b16 %v571, %v570
        %v581 = vsel %vm462, %v572, 0
        %v584 = vsel %vm462, %v573, 0
        %v587 = vsel %vm462, %v574, 0
        %v590 = vsel %vm462, %v575, 0
        %v593 = vsel %vm462, %v576, 0
        %v596 = vsel %vm462, %v577, 0
        %v599 = vsel %vm462, %v578, 0
        %v602 = vsel %vm462, %v579, 0
        %v605 = vsel %vm487, %v232, 0
        %607 = vmatpush.bf16.msra.mxu0 0
        %608 = vmatpush.bf16.msra.mxu0 0
        %609 = vmatpush.bf16.msra.mxu0 0
        %610 = vmatpush.bf16.msra.mxu0 0
        %611 = vmatpush.bf16.msra.mxu0 0
        %612 = vmatpush.bf16.msra.mxu0 0
        %613 = vmatpush.bf16.msra.mxu0 0
        %614 = vmatpush.bf16.msra.mxu0 %v605
        %615 = vmatmul.bf16.gmra.mxu0 %v581
        %v616 = vpop.f32.mrf.mxu0
        %v617 = vadd.f32 %v501, %v616
        %v618 = vpop.f32.mrf.mxu0
        %v619 = vadd.f32 %v503, %v618
        %620 = vmatmul.bf16.gmra.mxu0 %v584
        %v621 = vpop.f32.mrf.mxu0
        %v622 = vadd.f32 %v506, %v621
        %v623 = vpop.f32.mrf.mxu0
        %v624 = vadd.f32 %v508, %v623
        %625 = vmatmul.bf16.gmra.mxu0 %v587
        %v626 = vpop.f32.mrf.mxu0
        %v627 = vadd.f32 %v511, %v626
        %v628 = vpop.f32.mrf.mxu0
        %v629 = vadd.f32 %v513, %v628
        %630 = vmatmul.bf16.gmra.mxu0 %v590
        %v631 = vpop.f32.mrf.mxu0
        %v632 = vadd.f32 %v516, %v631
        %v633 = vpop.f32.mrf.mxu0
        %v634 = vadd.f32 %v518, %v633
        %635 = vmatmul.bf16.gmra.mxu0 %v593
        %v636 = vpop.f32.mrf.mxu0
        %v637 = vadd.f32 %v521, %v636
        %v638 = vpop.f32.mrf.mxu0
        %v639 = vadd.f32 %v523, %v638
        %640 = vmatmul.bf16.gmra.mxu0 %v596
        %v641 = vpop.f32.mrf.mxu0
        %v642 = vadd.f32 %v526, %v641
        %v643 = vpop.f32.mrf.mxu0
        %v644 = vadd.f32 %v528, %v643
        %645 = vmatmul.bf16.gmra.mxu0 %v599
        %v646 = vpop.f32.mrf.mxu0
        %v647 = vadd.f32 %v531, %v646
        %v648 = vpop.f32.mrf.mxu0
        %v649 = vadd.f32 %v533, %v648
        %650 = vmatmul.bf16.gmra.mxu0 %v602
        %v651 = vpop.f32.mrf.mxu0
        %v652 = vadd.f32 %v536, %v651
        %v653 = vpop.f32.mrf.mxu0
        %v654 = vadd.f32 %v538, %v653
        %655 = vdwg.mxu0
        %v656 = vld [vmem:[%s215] sm:$0xe]
        %v657 = vld [vmem:[%s215 + $0xc] sm:$0xe]
        %v658 = vld [vmem:[%s215 + $0x18] sm:$0xe]
        %v659 = vld [vmem:[%s215 + $0x24] sm:$0xe]
        %v660 = vld [vmem:[%s215 + $0x30] sm:$0xe]
        %v661 = vld [vmem:[%s215 + $0x3c] sm:$0xe]
        %v662 = vld [vmem:[%s215 + $0x48] sm:$0xe]
        %v663 = vld [vmem:[%s215 + $0x54] sm:$0xe]
        %vm680 = vcmask 1042432
        %vm681 = vcmask 1046532
        %vm682 = vmor %vm680, %vm681
        %v683 = vrot.slane %v656, 5
        %v684 = vrot.slane %v683, 4
        %v685 = vrot.slane %v217, 5
        %v686 = vsel %vm682, %v684, %v685
        %v687 = vrot.slane %v685, 4
        %v688 = vrot.slane %v233, 5
        %v689 = vsel %vm682, %v687, %v688
        %v690 = vrot.slane %v657, 5
        %v691 = vrot.slane %v690, 4
        %v692 = vrot.slane %v219, 5
        %v693 = vsel %vm682, %v691, %v692
        %v694 = vrot.slane %v692, 4
        %v695 = vrot.slane %v234, 5
        %v696 = vsel %vm682, %v694, %v695
        %v697 = vrot.slane %v658, 5
        %v698 = vrot.slane %v697, 4
        %v699 = vrot.slane %v221, 5
        %v700 = vsel %vm682, %v698, %v699
        %v701 = vrot.slane %v699, 4
        %v702 = vrot.slane %v235, 5
        %v703 = vsel %vm682, %v701, %v702
        %v704 = vrot.slane %v659, 5
        %v705 = vrot.slane %v704, 4
        %v706 = vrot.slane %v223, 5
        %v707 = vsel %vm682, %v705, %v706
        %v708 = vrot.slane %v706, 4
        %v709 = vrot.slane %v236, 5
        %v710 = vsel %vm682, %v708, %v709
        %v711 = vrot.slane %v660, 5
        %v712 = vrot.slane %v711, 4
        %v713 = vrot.slane %v225, 5
        %v714 = vsel %vm682, %v712, %v713
        %v715 = vrot.slane %v713, 4
        %v716 = vrot.slane %v237, 5
        %v717 = vsel %vm682, %v715, %v716
        %v718 = vrot.slane %v661, 5
        %v719 = vrot.slane %v718, 4
        %v720 = vrot.slane %v227, 5
        %v721 = vsel %vm682, %v719, %v720
        %v722 = vrot.slane %v720, 4
        %v723 = vrot.slane %v238, 5
        %v724 = vsel %vm682, %v722, %v723
        %v725 = vrot.slane %v662, 5
        %v726 = vrot.slane %v725, 4
        %v727 = vrot.slane %v229, 5
        %v728 = vsel %vm682, %v726, %v727
        %v729 = vrot.slane %v727, 4
        %v730 = vrot.slane %v239, 5
        %v731 = vsel %vm682, %v729, %v730
        %v732 = vrot.slane %v663, 5
        %v733 = vrot.slane %v732, 4
        %v734 = vrot.slane %v231, 5
        %v735 = vsel %vm682, %v733, %v734
        %v736 = vrot.slane %v734, 4
        %v737 = vrot.slane %v240, 5
        %v738 = vsel %vm682, %v736, %v737
        %s739 = scalar_lea.vmem %s1, 8
        %v740 = vld [vmem:[%s739] sm:$0xf]
        %v741 = vunpack.c.l.b16 %v686
        %v742 = vunpack.c.l.b16 %v689
        %v743 = vunpack.c.l.b16 %v693
        %v744 = vunpack.c.l.b16 %v696
        %v745 = vunpack.c.l.b16 %v700
        %v746 = vunpack.c.l.b16 %v703
        %v747 = vunpack.c.l.b16 %v707
        %v748 = vunpack.c.l.b16 %v710
        %v749 = vunpack.c.l.b16 %v714
        %v750 = vunpack.c.l.b16 %v717
        %v751 = vunpack.c.l.b16 %v721
        %v752 = vunpack.c.l.b16 %v724
        %v753 = vunpack.c.l.b16 %v728
        %v754 = vunpack.c.l.b16 %v731
        %v755 = vunpack.c.l.b16 %v735
        %v756 = vunpack.c.l.b16 %v738
        %v757 = vpack.c.b16 %v742, %v741
        %v758 = vpack.c.b16 %v744, %v743
        %v759 = vpack.c.b16 %v746, %v745
        %v760 = vpack.c.b16 %v748, %v747
        %v761 = vpack.c.b16 %v750, %v749
        %v762 = vpack.c.b16 %v752, %v751
        %v763 = vpack.c.b16 %v754, %v753
        %v764 = vpack.c.b16 %v756, %v755
        %v766 = vsel %vm462, %v757, 0
        %v769 = vsel %vm462, %v758, 0
        %v772 = vsel %vm462, %v759, 0
        %v775 = vsel %vm462, %v760, 0
        %v778 = vsel %vm462, %v761, 0
        %v781 = vsel %vm462, %v762, 0
        %v784 = vsel %vm462, %v763, 0
        %v787 = vsel %vm462, %v764, 0
        %v790 = vsel %vm487, %v740, 0
        %792 = vmatpush.bf16.msra.mxu0 0
        %793 = vmatpush.bf16.msra.mxu0 0
        %794 = vmatpush.bf16.msra.mxu0 0
        %795 = vmatpush.bf16.msra.mxu0 0
        %796 = vmatpush.bf16.msra.mxu0 0
        %797 = vmatpush.bf16.msra.mxu0 0
        %798 = vmatpush.bf16.msra.mxu0 0
        %799 = vmatpush.bf16.msra.mxu0 %v790
        %800 = vmatmul.bf16.gmra.mxu0 %v766
        %v801 = vpop.f32.mrf.mxu0
        %v802 = vadd.f32 0.0, %v801
        %v803 = vpop.f32.mrf.mxu0
        %v804 = vadd.f32 0.0, %v803
        %805 = vmatmul.bf16.gmra.mxu0 %v769
        %v806 = vpop.f32.mrf.mxu0
        %v807 = vadd.f32 0.0, %v806
        %v808 = vpop.f32.mrf.mxu0
        %v809 = vadd.f32 0.0, %v808
        %810 = vmatmul.bf16.gmra.mxu0 %v772
        %v811 = vpop.f32.mrf.mxu0
        %v812 = vadd.f32 0.0, %v811
        %v813 = vpop.f32.mrf.mxu0
        %v814 = vadd.f32 0.0, %v813
        %815 = vmatmul.bf16.gmra.mxu0 %v775
        %v816 = vpop.f32.mrf.mxu0
        %v817 = vadd.f32 0.0, %v816
        %v818 = vpop.f32.mrf.mxu0
        %v819 = vadd.f32 0.0, %v818
        %820 = vmatmul.bf16.gmra.mxu0 %v778
        %v821 = vpop.f32.mrf.mxu0
        %v822 = vadd.f32 0.0, %v821
        %v823 = vpop.f32.mrf.mxu0
        %v824 = vadd.f32 0.0, %v823
        %825 = vmatmul.bf16.gmra.mxu0 %v781
        %v826 = vpop.f32.mrf.mxu0
        %v827 = vadd.f32 0.0, %v826
        %v828 = vpop.f32.mrf.mxu0
        %v829 = vadd.f32 0.0, %v828
        %830 = vmatmul.bf16.gmra.mxu0 %v784
        %v831 = vpop.f32.mrf.mxu0
        %v832 = vadd.f32 0.0, %v831
        %v833 = vpop.f32.mrf.mxu0
        %v834 = vadd.f32 0.0, %v833
        %835 = vmatmul.bf16.gmra.mxu0 %v787
        %v836 = vpop.f32.mrf.mxu0
        %v837 = vadd.f32 0.0, %v836
        %v838 = vpop.f32.mrf.mxu0
        %v839 = vadd.f32 0.0, %v838
        %840 = vdwg.mxu0
        %v841 = vadd.f32 %v617, %v802
        %v842 = vadd.f32 %v619, %v804
        %v843 = vadd.f32 %v622, %v807
        %v844 = vadd.f32 %v624, %v809
        %v845 = vadd.f32 %v627, %v812
        %v846 = vadd.f32 %v629, %v814
        %v847 = vadd.f32 %v632, %v817
        %v848 = vadd.f32 %v634, %v819
        %v849 = vadd.f32 %v637, %v822
        %v850 = vadd.f32 %v639, %v824
        %v851 = vadd.f32 %v642, %v827
        %v852 = vadd.f32 %v644, %v829
        %v853 = vadd.f32 %v647, %v832
        %v854 = vadd.f32 %v649, %v834
        %v855 = vadd.f32 %v652, %v837
        %v856 = vadd.f32 %v654, %v839
        %s857 = sadd.s32 %s212, 1
        %s858 = smul.u32 %s857, 3
        %s859 = smul.addr %s858, 4
        %s860 = scalar_lea.vmem %s199, %s859
        %v861 = vld [vmem:[%s860] sm:$0xf]
        %v862 = vld [vmem:[%s860 + $0x4] sm:$0xf]
        %v863 = vld [vmem:[%s860 + $0xc] sm:$0xf]
        %v864 = vld [vmem:[%s860 + $0x10] sm:$0xf]
        %v865 = vld [vmem:[%s860 + $0x18] sm:$0xf]
        %v866 = vld [vmem:[%s860 + $0x1c] sm:$0xf]
        %v867 = vld [vmem:[%s860 + $0x24] sm:$0xf]
        %v868 = vld [vmem:[%s860 + $0x28] sm:$0xf]
        %v869 = vld [vmem:[%s860 + $0x30] sm:$0xf]
        %v870 = vld [vmem:[%s860 + $0x34] sm:$0xf]
        %v871 = vld [vmem:[%s860 + $0x3c] sm:$0xf]
        %v872 = vld [vmem:[%s860 + $0x40] sm:$0xf]
        %v873 = vld [vmem:[%s860 + $0x48] sm:$0xf]
        %v874 = vld [vmem:[%s860 + $0x4c] sm:$0xf]
        %v875 = vld [vmem:[%s860 + $0x54] sm:$0xf]
        %v876 = vld [vmem:[%s860 + $0x58] sm:$0xf]
        %s877 = scalar_lea.vmem %s1, 12
        %v878 = vld [vmem:[%s877] sm:$0xf]
        %v895 = vunpack.c.l.b16 %v861
        %v896 = vunpack.c.l.b16 %v862
        %v897 = vunpack.c.l.b16 %v863
        %v898 = vunpack.c.l.b16 %v864
        %v899 = vunpack.c.l.b16 %v865
        %v900 = vunpack.c.l.b16 %v866
        %v901 = vunpack.c.l.b16 %v867
        %v902 = vunpack.c.l.b16 %v868
        %v903 = vunpack.c.l.b16 %v869
        %v904 = vunpack.c.l.b16 %v870
        %v905 = vunpack.c.l.b16 %v871
        %v906 = vunpack.c.l.b16 %v872
        %v907 = vunpack.c.l.b16 %v873
        %v908 = vunpack.c.l.b16 %v874
        %v909 = vunpack.c.l.b16 %v875
        %v910 = vunpack.c.l.b16 %v876
        %v911 = vpack.c.b16 %v896, %v895
        %v912 = vpack.c.b16 %v898, %v897
        %v913 = vpack.c.b16 %v900, %v899
        %v914 = vpack.c.b16 %v902, %v901
        %v915 = vpack.c.b16 %v904, %v903
        %v916 = vpack.c.b16 %v906, %v905
        %v917 = vpack.c.b16 %v908, %v907
        %v918 = vpack.c.b16 %v910, %v909
        %v920 = vsel %vm462, %v911, 0
        %v923 = vsel %vm462, %v912, 0
        %v926 = vsel %vm462, %v913, 0
        %v929 = vsel %vm462, %v914, 0
        %v932 = vsel %vm462, %v915, 0
        %v935 = vsel %vm462, %v916, 0
        %v938 = vsel %vm462, %v917, 0
        %v941 = vsel %vm462, %v918, 0
        %v944 = vsel %vm487, %v878, 0
        %946 = vmatpush.bf16.msra.mxu0 0
        %947 = vmatpush.bf16.msra.mxu0 0
        %948 = vmatpush.bf16.msra.mxu0 0
        %949 = vmatpush.bf16.msra.mxu0 0
        %950 = vmatpush.bf16.msra.mxu0 0
        %951 = vmatpush.bf16.msra.mxu0 0
        %952 = vmatpush.bf16.msra.mxu0 0
        %953 = vmatpush.bf16.msra.mxu0 %v944
        %954 = vmatmul.bf16.gmra.mxu0 %v920
        %v955 = vpop.f32.mrf.mxu0
        %v956 = vadd.f32 0.0, %v955
        %v957 = vpop.f32.mrf.mxu0
        %v958 = vadd.f32 0.0, %v957
        %959 = vmatmul.bf16.gmra.mxu0 %v923
        %v960 = vpop.f32.mrf.mxu0
        %v961 = vadd.f32 0.0, %v960
        %v962 = vpop.f32.mrf.mxu0
        %v963 = vadd.f32 0.0, %v962
        %964 = vmatmul.bf16.gmra.mxu0 %v926
        %v965 = vpop.f32.mrf.mxu0
        %v966 = vadd.f32 0.0, %v965
        %v967 = vpop.f32.mrf.mxu0
        %v968 = vadd.f32 0.0, %v967
        %969 = vmatmul.bf16.gmra.mxu0 %v929
        %v970 = vpop.f32.mrf.mxu0
        %v971 = vadd.f32 0.0, %v970
        %v972 = vpop.f32.mrf.mxu0
        %v973 = vadd.f32 0.0, %v972
        %974 = vmatmul.bf16.gmra.mxu0 %v932
        %v975 = vpop.f32.mrf.mxu0
        %v976 = vadd.f32 0.0, %v975
        %v977 = vpop.f32.mrf.mxu0
        %v978 = vadd.f32 0.0, %v977
        %979 = vmatmul.bf16.gmra.mxu0 %v935
        %v980 = vpop.f32.mrf.mxu0
        %v981 = vadd.f32 0.0, %v980
        %v982 = vpop.f32.mrf.mxu0
        %v983 = vadd.f32 0.0, %v982
        %984 = vmatmul.bf16.gmra.mxu0 %v938
        %v985 = vpop.f32.mrf.mxu0
        %v986 = vadd.f32 0.0, %v985
        %v987 = vpop.f32.mrf.mxu0
        %v988 = vadd.f32 0.0, %v987
        %989 = vmatmul.bf16.gmra.mxu0 %v941
        %v990 = vpop.f32.mrf.mxu0
        %v991 = vadd.f32 0.0, %v990
        %v992 = vpop.f32.mrf.mxu0
        %v993 = vadd.f32 0.0, %v992
        %994 = vdwg.mxu0
        %v995 = vadd.f32 %v841, %v956
        %v996 = vadd.f32 %v842, %v958
        %v997 = vadd.f32 %v843, %v961
        %v998 = vadd.f32 %v844, %v963
        %v999 = vadd.f32 %v845, %v966
        %v1000 = vadd.f32 %v846, %v968
        %v1001 = vadd.f32 %v847, %v971
        %v1002 = vadd.f32 %v848, %v973
        %v1003 = vadd.f32 %v849, %v976
        %v1004 = vadd.f32 %v850, %v978
        %v1005 = vadd.f32 %v851, %v981
        %v1006 = vadd.f32 %v852, %v983
        %v1007 = vadd.f32 %v853, %v986
        %v1008 = vadd.f32 %v854, %v988
        %v1009 = vadd.f32 %v855, %v991
        %v1010 = vadd.f32 %v856, %v993
        %v1011 = vld [vmem:[%s860] sm:$0xf]
        %v1012 = vld [vmem:[%s860 + $0x4] sm:$0xf]
        %v1013 = vld [vmem:[%s860 + $0x8] sm:$0x1]
        %v1014 = vld [vmem:[%s860 + $0xc] sm:$0xf]
        %v1015 = vld [vmem:[%s860 + $0x10] sm:$0xf]
        %v1016 = vld [vmem:[%s860 + $0x14] sm:$0x1]
        %v1017 = vld [vmem:[%s860 + $0x18] sm:$0xf]
        %v1018 = vld [vmem:[%s860 + $0x1c] sm:$0xf]
        %v1019 = vld [vmem:[%s860 + $0x20] sm:$0x1]
        %v1020 = vld [vmem:[%s860 + $0x24] sm:$0xf]
        %v1021 = vld [vmem:[%s860 + $0x28] sm:$0xf]
        %v1022 = vld [vmem:[%s860 + $0x2c] sm:$0x1]
        %v1023 = vld [vmem:[%s860 + $0x30] sm:$0xf]
        %v1024 = vld [vmem:[%s860 + $0x34] sm:$0xf]
        %v1025 = vld [vmem:[%s860 + $0x38] sm:$0x1]
        %v1026 = vld [vmem:[%s860 + $0x3c] sm:$0xf]
        %v1027 = vld [vmem:[%s860 + $0x40] sm:$0xf]
        %v1028 = vld [vmem:[%s860 + $0x44] sm:$0x1]
        %v1029 = vld [vmem:[%s860 + $0x48] sm:$0xf]
        %v1030 = vld [vmem:[%s860 + $0x4c] sm:$0xf]
        %v1031 = vld [vmem:[%s860 + $0x50] sm:$0x1]
        %v1032 = vld [vmem:[%s860 + $0x54] sm:$0xf]
        %v1033 = vld [vmem:[%s860 + $0x58] sm:$0xf]
        %v1034 = vld [vmem:[%s860 + $0x5c] sm:$0x1]
        %v1036 = vshrl.u32 %v1011, 16
        %v1038 = vrot.slane %v1036, 4
        %v1039 = vshll.u32 %v1011, 16
        %v1041 = vrot.slane %v1039, 5
        %v1042 = vor.u32 %v1038, %v1041
        %v1043 = vrot.slane %v1042, 4
        %v1045 = vshll.u32 %v1012, 16
        %v1047 = vrot.slane %v1045, 5
        %v1048 = vsel %vm243, %v1043, %v1047
        %v1049 = vshrl.u32 %v1012, 16
        %v1051 = vrot.slane %v1049, 4
        %v1052 = vor.u32 %v1051, %v1047
        %v1053 = vrot.slane %v1052, 4
        %v1055 = vshll.u32 %v1013, 16
        %v1057 = vrot.slane %v1055, 5
        %v1058 = vsel %vm243, %v1053, %v1057
        %v1060 = vshrl.u32 %v1014, 16
        %v1062 = vrot.slane %v1060, 4
        %v1063 = vshll.u32 %v1014, 16
        %v1065 = vrot.slane %v1063, 5
        %v1066 = vor.u32 %v1062, %v1065
        %v1067 = vrot.slane %v1066, 4
        %v1069 = vshll.u32 %v1015, 16
        %v1071 = vrot.slane %v1069, 5
        %v1072 = vsel %vm243, %v1067, %v1071
        %v1073 = vshrl.u32 %v1015, 16
        %v1075 = vrot.slane %v1073, 4
        %v1076 = vor.u32 %v1075, %v1071
        %v1077 = vrot.slane %v1076, 4
        %v1079 = vshll.u32 %v1016, 16
        %v1081 = vrot.slane %v1079, 5
        %v1082 = vsel %vm243, %v1077, %v1081
        %v1084 = vshrl.u32 %v1017, 16
        %v1086 = vrot.slane %v1084, 4
        %v1087 = vshll.u32 %v1017, 16
        %v1089 = vrot.slane %v1087, 5
        %v1090 = vor.u32 %v1086, %v1089
        %v1091 = vrot.slane %v1090, 4
        %v1093 = vshll.u32 %v1018, 16
        %v1095 = vrot.slane %v1093, 5
        %v1096 = vsel %vm243, %v1091, %v1095
        %v1097 = vshrl.u32 %v1018, 16
        %v1099 = vrot.slane %v1097, 4
        %v1100 = vor.u32 %v1099, %v1095
        %v1101 = vrot.slane %v1100, 4
        %v1103 = vshll.u32 %v1019, 16
        %v1105 = vrot.slane %v1103, 5
        %v1106 = vsel %vm243, %v1101, %v1105
        %v1108 = vshrl.u32 %v1020, 16
        %v1110 = vrot.slane %v1108, 4
        %v1111 = vshll.u32 %v1020, 16
        %v1113 = vrot.slane %v1111, 5
        %v1114 = vor.u32 %v1110, %v1113
        %v1115 = vrot.slane %v1114, 4
        %v1117 = vshll.u32 %v1021, 16
        %v1119 = vrot.slane %v1117, 5
        %v1120 = vsel %vm243, %v1115, %v1119
        %v1121 = vshrl.u32 %v1021, 16
        %v1123 = vrot.slane %v1121, 4
        %v1124 = vor.u32 %v1123, %v1119
        %v1125 = vrot.slane %v1124, 4
        %v1127 = vshll.u32 %v1022, 16
        %v1129 = vrot.slane %v1127, 5
        %v1130 = vsel %vm243, %v1125, %v1129
        %v1132 = vshrl.u32 %v1023, 16
        %v1134 = vrot.slane %v1132, 4
        %v1135 = vshll.u32 %v1023, 16
        %v1137 = vrot.slane %v1135, 5
        %v1138 = vor.u32 %v1134, %v1137
        %v1139 = vrot.slane %v1138, 4
        %v1141 = vshll.u32 %v1024, 16
        %v1143 = vrot.slane %v1141, 5
        %v1144 = vsel %vm243, %v1139, %v1143
        %v1145 = vshrl.u32 %v1024, 16
        %v1147 = vrot.slane %v1145, 4
        %v1148 = vor.u32 %v1147, %v1143
        %v1149 = vrot.slane %v1148, 4
        %v1151 = vshll.u32 %v1025, 16
        %v1153 = vrot.slane %v1151, 5
        %v1154 = vsel %vm243, %v1149, %v1153
        %v1156 = vshrl.u32 %v1026, 16
        %v1158 = vrot.slane %v1156, 4
        %v1159 = vshll.u32 %v1026, 16
        %v1161 = vrot.slane %v1159, 5
        %v1162 = vor.u32 %v1158, %v1161
        %v1163 = vrot.slane %v1162, 4
        %v1165 = vshll.u32 %v1027, 16
        %v1167 = vrot.slane %v1165, 5
        %v1168 = vsel %vm243, %v1163, %v1167
        %v1169 = vshrl.u32 %v1027, 16
        %v1171 = vrot.slane %v1169, 4
        %v1172 = vor.u32 %v1171, %v1167
        %v1173 = vrot.slane %v1172, 4
        %v1175 = vshll.u32 %v1028, 16
        %v1177 = vrot.slane %v1175, 5
        %v1178 = vsel %vm243, %v1173, %v1177
        %v1180 = vshrl.u32 %v1029, 16
        %v1182 = vrot.slane %v1180, 4
        %v1183 = vshll.u32 %v1029, 16
        %v1185 = vrot.slane %v1183, 5
        %v1186 = vor.u32 %v1182, %v1185
        %v1187 = vrot.slane %v1186, 4
        %v1189 = vshll.u32 %v1030, 16
        %v1191 = vrot.slane %v1189, 5
        %v1192 = vsel %vm243, %v1187, %v1191
        %v1193 = vshrl.u32 %v1030, 16
        %v1195 = vrot.slane %v1193, 4
        %v1196 = vor.u32 %v1195, %v1191
        %v1197 = vrot.slane %v1196, 4
        %v1199 = vshll.u32 %v1031, 16
        %v1201 = vrot.slane %v1199, 5
        %v1202 = vsel %vm243, %v1197, %v1201
        %v1204 = vshrl.u32 %v1032, 16
        %v1206 = vrot.slane %v1204, 4
        %v1207 = vshll.u32 %v1032, 16
        %v1209 = vrot.slane %v1207, 5
        %v1210 = vor.u32 %v1206, %v1209
        %v1211 = vrot.slane %v1210, 4
        %v1213 = vshll.u32 %v1033, 16
        %v1215 = vrot.slane %v1213, 5
        %v1216 = vsel %vm243, %v1211, %v1215
        %v1217 = vshrl.u32 %v1033, 16
        %v1219 = vrot.slane %v1217, 4
        %v1220 = vor.u32 %v1219, %v1215
        %v1221 = vrot.slane %v1220, 4
        %v1223 = vshll.u32 %v1034, 16
        %v1225 = vrot.slane %v1223, 5
        %v1226 = vsel %vm243, %v1221, %v1225
        %s1227 = scalar_lea.vmem %s1, 16
        %v1228 = vld [vmem:[%s1227] sm:$0xf]
        %v1229 = vunpack.c.l.b16 %v1048
        %v1230 = vunpack.c.l.b16 %v1058
        %v1231 = vunpack.c.l.b16 %v1072
        %v1232 = vunpack.c.l.b16 %v1082
        %v1233 = vunpack.c.l.b16 %v1096
        %v1234 = vunpack.c.l.b16 %v1106
        %v1235 = vunpack.c.l.b16 %v1120
        %v1236 = vunpack.c.l.b16 %v1130
        %v1237 = vunpack.c.l.b16 %v1144
        %v1238 = vunpack.c.l.b16 %v1154
        %v1239 = vunpack.c.l.b16 %v1168
        %v1240 = vunpack.c.l.b16 %v1178
        %v1241 = vunpack.c.l.b16 %v1192
        %v1242 = vunpack.c.l.b16 %v1202
        %v1243 = vunpack.c.l.b16 %v1216
        %v1244 = vunpack.c.l.b16 %v1226
        %v1245 = vpack.c.b16 %v1230, %v1229
        %v1246 = vpack.c.b16 %v1232, %v1231
        %v1247 = vpack.c.b16 %v1234, %v1233
        %v1248 = vpack.c.b16 %v1236, %v1235
        %v1249 = vpack.c.b16 %v1238, %v1237
        %v1250 = vpack.c.b16 %v1240, %v1239
        %v1251 = vpack.c.b16 %v1242, %v1241
        %v1252 = vpack.c.b16 %v1244, %v1243
        %v1254 = vsel %vm462, %v1245, 0
        %v1257 = vsel %vm462, %v1246, 0
        %v1260 = vsel %vm462, %v1247, 0
        %v1263 = vsel %vm462, %v1248, 0
        %v1266 = vsel %vm462, %v1249, 0
        %v1269 = vsel %vm462, %v1250, 0
        %v1272 = vsel %vm462, %v1251, 0
        %v1275 = vsel %vm462, %v1252, 0
        %v1278 = vsel %vm487, %v1228, 0
        %1280 = vmatpush.bf16.msra.mxu0 0
        %1281 = vmatpush.bf16.msra.mxu0 0
        %1282 = vmatpush.bf16.msra.mxu0 0
        %1283 = vmatpush.bf16.msra.mxu0 0
        %1284 = vmatpush.bf16.msra.mxu0 0
        %1285 = vmatpush.bf16.msra.mxu0 0
        %1286 = vmatpush.bf16.msra.mxu0 0
        %1287 = vmatpush.bf16.msra.mxu0 %v1278
        %1288 = vmatmul.bf16.gmra.mxu0 %v1254
        %v1289 = vpop.f32.mrf.mxu0
        %v1290 = vadd.f32 0.0, %v1289
        %v1291 = vpop.f32.mrf.mxu0
        %v1292 = vadd.f32 0.0, %v1291
        %1293 = vmatmul.bf16.gmra.mxu0 %v1257
        %v1294 = vpop.f32.mrf.mxu0
        %v1295 = vadd.f32 0.0, %v1294
        %v1296 = vpop.f32.mrf.mxu0
        %v1297 = vadd.f32 0.0, %v1296
        %1298 = vmatmul.bf16.gmra.mxu0 %v1260
        %v1299 = vpop.f32.mrf.mxu0
        %v1300 = vadd.f32 0.0, %v1299
        %v1301 = vpop.f32.mrf.mxu0
        %v1302 = vadd.f32 0.0, %v1301
        %1303 = vmatmul.bf16.gmra.mxu0 %v1263
        %v1304 = vpop.f32.mrf.mxu0
        %v1305 = vadd.f32 0.0, %v1304
        %v1306 = vpop.f32.mrf.mxu0
        %v1307 = vadd.f32 0.0, %v1306
        %1308 = vmatmul.bf16.gmra.mxu0 %v1266
        %v1309 = vpop.f32.mrf.mxu0
        %v1310 = vadd.f32 0.0, %v1309
        %v1311 = vpop.f32.mrf.mxu0
        %v1312 = vadd.f32 0.0, %v1311
        %1313 = vmatmul.bf16.gmra.mxu0 %v1269
        %v1314 = vpop.f32.mrf.mxu0
        %v1315 = vadd.f32 0.0, %v1314
        %v1316 = vpop.f32.mrf.mxu0
        %v1317 = vadd.f32 0.0, %v1316
        %1318 = vmatmul.bf16.gmra.mxu0 %v1272
        %v1319 = vpop.f32.mrf.mxu0
        %v1320 = vadd.f32 0.0, %v1319
        %v1321 = vpop.f32.mrf.mxu0
        %v1322 = vadd.f32 0.0, %v1321
        %1323 = vmatmul.bf16.gmra.mxu0 %v1275
        %v1324 = vpop.f32.mrf.mxu0
        %v1325 = vadd.f32 0.0, %v1324
        %v1326 = vpop.f32.mrf.mxu0
        %v1327 = vadd.f32 0.0, %v1326
        %1328 = vdwg.mxu0
        %v1329 = vadd.f32 %v995, %v1290
        %v1330 = vadd.f32 %v996, %v1292
        %v1331 = vadd.f32 %v997, %v1295
        %v1332 = vadd.f32 %v998, %v1297
        %v1333 = vadd.f32 %v999, %v1300
        %v1334 = vadd.f32 %v1000, %v1302
        %v1335 = vadd.f32 %v1001, %v1305
        %v1336 = vadd.f32 %v1002, %v1307
        %v1337 = vadd.f32 %v1003, %v1310
        %v1338 = vadd.f32 %v1004, %v1312
        %v1339 = vadd.f32 %v1005, %v1315
        %v1340 = vadd.f32 %v1006, %v1317
        %v1341 = vadd.f32 %v1007, %v1320
        %v1342 = vadd.f32 %v1008, %v1322
        %v1343 = vadd.f32 %v1009, %v1325
        %v1344 = vadd.f32 %v1010, %v1327
        %v1345 = vld [vmem:[%s860] sm:$0xe]
        %v1346 = vld [vmem:[%s860 + $0xc] sm:$0xe]
        %v1347 = vld [vmem:[%s860 + $0x18] sm:$0xe]
        %v1348 = vld [vmem:[%s860 + $0x24] sm:$0xe]
        %v1349 = vld [vmem:[%s860 + $0x30] sm:$0xe]
        %v1350 = vld [vmem:[%s860 + $0x3c] sm:$0xe]
        %v1351 = vld [vmem:[%s860 + $0x48] sm:$0xe]
        %v1352 = vld [vmem:[%s860 + $0x54] sm:$0xe]
        %v1377 = vrot.slane %v1345, 5
        %v1378 = vrot.slane %v1377, 4
        %v1379 = vrot.slane %v1012, 5
        %v1380 = vsel %vm682, %v1378, %v1379
        %v1381 = vrot.slane %v1379, 4
        %v1382 = vrot.slane %v1013, 5
        %v1383 = vsel %vm682, %v1381, %v1382
        %v1384 = vrot.slane %v1346, 5
        %v1385 = vrot.slane %v1384, 4
        %v1386 = vrot.slane %v1015, 5
        %v1387 = vsel %vm682, %v1385, %v1386
        %v1388 = vrot.slane %v1386, 4
        %v1389 = vrot.slane %v1016, 5
        %v1390 = vsel %vm682, %v1388, %v1389
        %v1391 = vrot.slane %v1347, 5
        %v1392 = vrot.slane %v1391, 4
        %v1393 = vrot.slane %v1018, 5
        %v1394 = vsel %vm682, %v1392, %v1393
        %v1395 = vrot.slane %v1393, 4
        %v1396 = vrot.slane %v1019, 5
        %v1397 = vsel %vm682, %v1395, %v1396
        %v1398 = vrot.slane %v1348, 5
        %v1399 = vrot.slane %v1398, 4
        %v1400 = vrot.slane %v1021, 5
        %v1401 = vsel %vm682, %v1399, %v1400
        %v1402 = vrot.slane %v1400, 4
        %v1403 = vrot.slane %v1022, 5
        %v1404 = vsel %vm682, %v1402, %v1403
        %v1405 = vrot.slane %v1349, 5
        %v1406 = vrot.slane %v1405, 4
        %v1407 = vrot.slane %v1024, 5
        %v1408 = vsel %vm682, %v1406, %v1407
        %v1409 = vrot.slane %v1407, 4
        %v1410 = vrot.slane %v1025, 5
        %v1411 = vsel %vm682, %v1409, %v1410
        %v1412 = vrot.slane %v1350, 5
        %v1413 = vrot.slane %v1412, 4
        %v1414 = vrot.slane %v1027, 5
        %v1415 = vsel %vm682, %v1413, %v1414
        %v1416 = vrot.slane %v1414, 4
        %v1417 = vrot.slane %v1028, 5
        %v1418 = vsel %vm682, %v1416, %v1417
        %v1419 = vrot.slane %v1351, 5
        %v1420 = vrot.slane %v1419, 4
        %v1421 = vrot.slane %v1030, 5
        %v1422 = vsel %vm682, %v1420, %v1421
        %v1423 = vrot.slane %v1421, 4
        %v1424 = vrot.slane %v1031, 5
        %v1425 = vsel %vm682, %v1423, %v1424
        %v1426 = vrot.slane %v1352, 5
        %v1427 = vrot.slane %v1426, 4
        %v1428 = vrot.slane %v1033, 5
        %v1429 = vsel %vm682, %v1427, %v1428
        %v1430 = vrot.slane %v1428, 4
        %v1431 = vrot.slane %v1034, 5
        %v1432 = vsel %vm682, %v1430, %v1431
        %s1433 = scalar_lea.vmem %s1, 20
        %v1434 = vld [vmem:[%s1433] sm:$0xf]
        %v1435 = vunpack.c.l.b16 %v1380
        %v1436 = vunpack.c.l.b16 %v1383
        %v1437 = vunpack.c.l.b16 %v1387
        %v1438 = vunpack.c.l.b16 %v1390
        %v1439 = vunpack.c.l.b16 %v1394
        %v1440 = vunpack.c.l.b16 %v1397
        %v1441 = vunpack.c.l.b16 %v1401
        %v1442 = vunpack.c.l.b16 %v1404
        %v1443 = vunpack.c.l.b16 %v1408
        %v1444 = vunpack.c.l.b16 %v1411
        %v1445 = vunpack.c.l.b16 %v1415
        %v1446 = vunpack.c.l.b16 %v1418
        %v1447 = vunpack.c.l.b16 %v1422
        %v1448 = vunpack.c.l.b16 %v1425
        %v1449 = vunpack.c.l.b16 %v1429
        %v1450 = vunpack.c.l.b16 %v1432
        %v1451 = vpack.c.b16 %v1436, %v1435
        %v1452 = vpack.c.b16 %v1438, %v1437
        %v1453 = vpack.c.b16 %v1440, %v1439
        %v1454 = vpack.c.b16 %v1442, %v1441
        %v1455 = vpack.c.b16 %v1444, %v1443
        %v1456 = vpack.c.b16 %v1446, %v1445
        %v1457 = vpack.c.b16 %v1448, %v1447
        %v1458 = vpack.c.b16 %v1450, %v1449
        %v1460 = vsel %vm462, %v1451, 0
        %v1463 = vsel %vm462, %v1452, 0
        %v1466 = vsel %vm462, %v1453, 0
        %v1469 = vsel %vm462, %v1454, 0
        %v1472 = vsel %vm462, %v1455, 0
        %v1475 = vsel %vm462, %v1456, 0
        %v1478 = vsel %vm462, %v1457, 0
        %v1481 = vsel %vm462, %v1458, 0
        %v1484 = vsel %vm487, %v1434, 0
        %1486 = vmatpush.bf16.msra.mxu0 0
        %1487 = vmatpush.bf16.msra.mxu0 0
        %1488 = vmatpush.bf16.msra.mxu0 0
        %1489 = vmatpush.bf16.msra.mxu0 0
        %1490 = vmatpush.bf16.msra.mxu0 0
        %1491 = vmatpush.bf16.msra.mxu0 0
        %1492 = vmatpush.bf16.msra.mxu0 0
        %1493 = vmatpush.bf16.msra.mxu0 %v1484
        %1494 = vmatmul.bf16.gmra.mxu0 %v1460
        %v1495 = vpop.f32.mrf.mxu0
        %v1496 = vadd.f32 0.0, %v1495
        %v1497 = vpop.f32.mrf.mxu0
        %v1498 = vadd.f32 0.0, %v1497
        %1499 = vmatmul.bf16.gmra.mxu0 %v1463
        %v1500 = vpop.f32.mrf.mxu0
        %v1501 = vadd.f32 0.0, %v1500
        %v1502 = vpop.f32.mrf.mxu0
        %v1503 = vadd.f32 0.0, %v1502
        %1504 = vmatmul.bf16.gmra.mxu0 %v1466
        %v1505 = vpop.f32.mrf.mxu0
        %v1506 = vadd.f32 0.0, %v1505
        %v1507 = vpop.f32.mrf.mxu0
        %v1508 = vadd.f32 0.0, %v1507
        %1509 = vmatmul.bf16.gmra.mxu0 %v1469
        %v1510 = vpop.f32.mrf.mxu0
        %v1511 = vadd.f32 0.0, %v1510
        %v1512 = vpop.f32.mrf.mxu0
        %v1513 = vadd.f32 0.0, %v1512
        %1514 = vmatmul.bf16.gmra.mxu0 %v1472
        %v1515 = vpop.f32.mrf.mxu0
        %v1516 = vadd.f32 0.0, %v1515
        %v1517 = vpop.f32.mrf.mxu0
        %v1518 = vadd.f32 0.0, %v1517
        %1519 = vmatmul.bf16.gmra.mxu0 %v1475
        %v1520 = vpop.f32.mrf.mxu0
        %v1521 = vadd.f32 0.0, %v1520
        %v1522 = vpop.f32.mrf.mxu0
        %v1523 = vadd.f32 0.0, %v1522
        %1524 = vmatmul.bf16.gmra.mxu0 %v1478
        %v1525 = vpop.f32.mrf.mxu0
        %v1526 = vadd.f32 0.0, %v1525
        %v1527 = vpop.f32.mrf.mxu0
        %v1528 = vadd.f32 0.0, %v1527
        %1529 = vmatmul.bf16.gmra.mxu0 %v1481
        %v1530 = vpop.f32.mrf.mxu0
        %v1531 = vadd.f32 0.0, %v1530
        %v1532 = vpop.f32.mrf.mxu0
        %v1533 = vadd.f32 0.0, %v1532
        %1534 = vdwg.mxu0
        %v1535 = vadd.f32 %v1329, %v1496
        %v1536 = vadd.f32 %v1330, %v1498
        %v1537 = vadd.f32 %v1331, %v1501
        %v1538 = vadd.f32 %v1332, %v1503
        %v1539 = vadd.f32 %v1333, %v1506
        %v1540 = vadd.f32 %v1334, %v1508
        %v1541 = vadd.f32 %v1335, %v1511
        %v1542 = vadd.f32 %v1336, %v1513
        %v1543 = vadd.f32 %v1337, %v1516
        %v1544 = vadd.f32 %v1338, %v1518
        %v1545 = vadd.f32 %v1339, %v1521
        %v1546 = vadd.f32 %v1340, %v1523
        %v1547 = vadd.f32 %v1341, %v1526
        %v1548 = vadd.f32 %v1342, %v1528
        %v1549 = vadd.f32 %v1343, %v1531
        %v1550 = vadd.f32 %v1344, %v1533
        %s1551 = sadd.s32 %s212, 2
        %s1552 = smul.u32 %s1551, 3
        %s1553 = smul.addr %s1552, 4
        %s1554 = scalar_lea.vmem %s199, %s1553
        %v1555 = vld [vmem:[%s1554] sm:$0xf]
        %v1556 = vld [vmem:[%s1554 + $0x4] sm:$0xf]
        %v1557 = vld [vmem:[%s1554 + $0xc] sm:$0xf]
        %v1558 = vld [vmem:[%s1554 + $0x10] sm:$0xf]
        %v1559 = vld [vmem:[%s1554 + $0x18] sm:$0xf]
        %v1560 = vld [vmem:[%s1554 + $0x1c] sm:$0xf]
        %v1561 = vld [vmem:[%s1554 + $0x24] sm:$0xf]
        %v1562 = vld [vmem:[%s1554 + $0x28] sm:$0xf]
        %v1563 = vld [vmem:[%s1554 + $0x30] sm:$0xf]
        %v1564 = vld [vmem:[%s1554 + $0x34] sm:$0xf]
        %v1565 = vld [vmem:[%s1554 + $0x3c] sm:$0xf]
        %v1566 = vld [vmem:[%s1554 + $0x40] sm:$0xf]
        %v1567 = vld [vmem:[%s1554 + $0x48] sm:$0xf]
        %v1568 = vld [vmem:[%s1554 + $0x4c] sm:$0xf]
        %v1569 = vld [vmem:[%s1554 + $0x54] sm:$0xf]
        %v1570 = vld [vmem:[%s1554 + $0x58] sm:$0xf]
        %s1571 = scalar_lea.vmem %s1, 24
        %v1572 = vld [vmem:[%s1571] sm:$0xf]
        %v1589 = vunpack.c.l.b16 %v1555
        %v1590 = vunpack.c.l.b16 %v1556
        %v1591 = vunpack.c.l.b16 %v1557
        %v1592 = vunpack.c.l.b16 %v1558
        %v1593 = vunpack.c.l.b16 %v1559
        %v1594 = vunpack.c.l.b16 %v1560
        %v1595 = vunpack.c.l.b16 %v1561
        %v1596 = vunpack.c.l.b16 %v1562
        %v1597 = vunpack.c.l.b16 %v1563
        %v1598 = vunpack.c.l.b16 %v1564
        %v1599 = vunpack.c.l.b16 %v1565
        %v1600 = vunpack.c.l.b16 %v1566
        %v1601 = vunpack.c.l.b16 %v1567
        %v1602 = vunpack.c.l.b16 %v1568
        %v1603 = vunpack.c.l.b16 %v1569
        %v1604 = vunpack.c.l.b16 %v1570
        %v1605 = vpack.c.b16 %v1590, %v1589
        %v1606 = vpack.c.b16 %v1592, %v1591
        %v1607 = vpack.c.b16 %v1594, %v1593
        %v1608 = vpack.c.b16 %v1596, %v1595
        %v1609 = vpack.c.b16 %v1598, %v1597
        %v1610 = vpack.c.b16 %v1600, %v1599
        %v1611 = vpack.c.b16 %v1602, %v1601
        %v1612 = vpack.c.b16 %v1604, %v1603
        %v1614 = vsel %vm462, %v1605, 0
        %v1617 = vsel %vm462, %v1606, 0
        %v1620 = vsel %vm462, %v1607, 0
        %v1623 = vsel %vm462, %v1608, 0
        %v1626 = vsel %vm462, %v1609, 0
        %v1629 = vsel %vm462, %v1610, 0
        %v1632 = vsel %vm462, %v1611, 0
        %v1635 = vsel %vm462, %v1612, 0
        %v1638 = vsel %vm487, %v1572, 0
        %1640 = vmatpush.bf16.msra.mxu0 0
        %1641 = vmatpush.bf16.msra.mxu0 0
        %1642 = vmatpush.bf16.msra.mxu0 0
        %1643 = vmatpush.bf16.msra.mxu0 0
        %1644 = vmatpush.bf16.msra.mxu0 0
        %1645 = vmatpush.bf16.msra.mxu0 0
        %1646 = vmatpush.bf16.msra.mxu0 0
        %1647 = vmatpush.bf16.msra.mxu0 %v1638
        %1648 = vmatmul.bf16.gmra.mxu0 %v1614
        %v1649 = vpop.f32.mrf.mxu0
        %v1650 = vadd.f32 0.0, %v1649
        %v1651 = vpop.f32.mrf.mxu0
        %v1652 = vadd.f32 0.0, %v1651
        %1653 = vmatmul.bf16.gmra.mxu0 %v1617
        %v1654 = vpop.f32.mrf.mxu0
        %v1655 = vadd.f32 0.0, %v1654
        %v1656 = vpop.f32.mrf.mxu0
        %v1657 = vadd.f32 0.0, %v1656
        %1658 = vmatmul.bf16.gmra.mxu0 %v1620
        %v1659 = vpop.f32.mrf.mxu0
        %v1660 = vadd.f32 0.0, %v1659
        %v1661 = vpop.f32.mrf.mxu0
        %v1662 = vadd.f32 0.0, %v1661
        %1663 = vmatmul.bf16.gmra.mxu0 %v1623
        %v1664 = vpop.f32.mrf.mxu0
        %v1665 = vadd.f32 0.0, %v1664
        %v1666 = vpop.f32.mrf.mxu0
        %v1667 = vadd.f32 0.0, %v1666
        %1668 = vmatmul.bf16.gmra.mxu0 %v1626
        %v1669 = vpop.f32.mrf.mxu0
        %v1670 = vadd.f32 0.0, %v1669
        %v1671 = vpop.f32.mrf.mxu0
        %v1672 = vadd.f32 0.0, %v1671
        %1673 = vmatmul.bf16.gmra.mxu0 %v1629
        %v1674 = vpop.f32.mrf.mxu0
        %v1675 = vadd.f32 0.0, %v1674
        %v1676 = vpop.f32.mrf.mxu0
        %v1677 = vadd.f32 0.0, %v1676
        %1678 = vmatmul.bf16.gmra.mxu0 %v1632
        %v1679 = vpop.f32.mrf.mxu0
        %v1680 = vadd.f32 0.0, %v1679
        %v1681 = vpop.f32.mrf.mxu0
        %v1682 = vadd.f32 0.0, %v1681
        %1683 = vmatmul.bf16.gmra.mxu0 %v1635
        %v1684 = vpop.f32.mrf.mxu0
        %v1685 = vadd.f32 0.0, %v1684
        %v1686 = vpop.f32.mrf.mxu0
        %v1687 = vadd.f32 0.0, %v1686
        %1688 = vdwg.mxu0
        %v1689 = vadd.f32 %v1535, %v1650
        %v1690 = vadd.f32 %v1536, %v1652
        %v1691 = vadd.f32 %v1537, %v1655
        %v1692 = vadd.f32 %v1538, %v1657
        %v1693 = vadd.f32 %v1539, %v1660
        %v1694 = vadd.f32 %v1540, %v1662
        %v1695 = vadd.f32 %v1541, %v1665
        %v1696 = vadd.f32 %v1542, %v1667
        %v1697 = vadd.f32 %v1543, %v1670
        %v1698 = vadd.f32 %v1544, %v1672
        %v1699 = vadd.f32 %v1545, %v1675
        %v1700 = vadd.f32 %v1546, %v1677
        %v1701 = vadd.f32 %v1547, %v1680
        %v1702 = vadd.f32 %v1548, %v1682
        %v1703 = vadd.f32 %v1549, %v1685
        %v1704 = vadd.f32 %v1550, %v1687
        %v1705 = vld [vmem:[%s1554] sm:$0xf]
        %v1706 = vld [vmem:[%s1554 + $0x4] sm:$0xf]
        %v1707 = vld [vmem:[%s1554 + $0x8] sm:$0x1]
        %v1708 = vld [vmem:[%s1554 + $0xc] sm:$0xf]
        %v1709 = vld [vmem:[%s1554 + $0x10] sm:$0xf]
        %v1710 = vld [vmem:[%s1554 + $0x14] sm:$0x1]
        %v1711 = vld [vmem:[%s1554 + $0x18] sm:$0xf]
        %v1712 = vld [vmem:[%s1554 + $0x1c] sm:$0xf]
        %v1713 = vld [vmem:[%s1554 + $0x20] sm:$0x1]
        %v1714 = vld [vmem:[%s1554 + $0x24] sm:$0xf]
        %v1715 = vld [vmem:[%s1554 + $0x28] sm:$0xf]
        %v1716 = vld [vmem:[%s1554 + $0x2c] sm:$0x1]
        %v1717 = vld [vmem:[%s1554 + $0x30] sm:$0xf]
        %v1718 = vld [vmem:[%s1554 + $0x34] sm:$0xf]
        %v1719 = vld [vmem:[%s1554 + $0x38] sm:$0x1]
        %v1720 = vld [vmem:[%s1554 + $0x3c] sm:$0xf]
        %v1721 = vld [vmem:[%s1554 + $0x40] sm:$0xf]
        %v1722 = vld [vmem:[%s1554 + $0x44] sm:$0x1]
        %v1723 = vld [vmem:[%s1554 + $0x48] sm:$0xf]
        %v1724 = vld [vmem:[%s1554 + $0x4c] sm:$0xf]
        %v1725 = vld [vmem:[%s1554 + $0x50] sm:$0x1]
        %v1726 = vld [vmem:[%s1554 + $0x54] sm:$0xf]
        %v1727 = vld [vmem:[%s1554 + $0x58] sm:$0xf]
        %v1728 = vld [vmem:[%s1554 + $0x5c] sm:$0x1]
        %v1730 = vshrl.u32 %v1705, 16
        %v1732 = vrot.slane %v1730, 4
        %v1733 = vshll.u32 %v1705, 16
        %v1735 = vrot.slane %v1733, 5
        %v1736 = vor.u32 %v1732, %v1735
        %v1737 = vrot.slane %v1736, 4
        %v1739 = vshll.u32 %v1706, 16
        %v1741 = vrot.slane %v1739, 5
        %v1742 = vsel %vm243, %v1737, %v1741
        %v1743 = vshrl.u32 %v1706, 16
        %v1745 = vrot.slane %v1743, 4
        %v1746 = vor.u32 %v1745, %v1741
        %v1747 = vrot.slane %v1746, 4
        %v1749 = vshll.u32 %v1707, 16
        %v1751 = vrot.slane %v1749, 5
        %v1752 = vsel %vm243, %v1747, %v1751
        %v1754 = vshrl.u32 %v1708, 16
        %v1756 = vrot.slane %v1754, 4
        %v1757 = vshll.u32 %v1708, 16
        %v1759 = vrot.slane %v1757, 5
        %v1760 = vor.u32 %v1756, %v1759
        %v1761 = vrot.slane %v1760, 4
        %v1763 = vshll.u32 %v1709, 16
        %v1765 = vrot.slane %v1763, 5
        %v1766 = vsel %vm243, %v1761, %v1765
        %v1767 = vshrl.u32 %v1709, 16
        %v1769 = vrot.slane %v1767, 4
        %v1770 = vor.u32 %v1769, %v1765
        %v1771 = vrot.slane %v1770, 4
        %v1773 = vshll.u32 %v1710, 16
        %v1775 = vrot.slane %v1773, 5
        %v1776 = vsel %vm243, %v1771, %v1775
        %v1778 = vshrl.u32 %v1711, 16
        %v1780 = vrot.slane %v1778, 4
        %v1781 = vshll.u32 %v1711, 16
        %v1783 = vrot.slane %v1781, 5
        %v1784 = vor.u32 %v1780, %v1783
        %v1785 = vrot.slane %v1784, 4
        %v1787 = vshll.u32 %v1712, 16
        %v1789 = vrot.slane %v1787, 5
        %v1790 = vsel %vm243, %v1785, %v1789
        %v1791 = vshrl.u32 %v1712, 16
        %v1793 = vrot.slane %v1791, 4
        %v1794 = vor.u32 %v1793, %v1789
        %v1795 = vrot.slane %v1794, 4
        %v1797 = vshll.u32 %v1713, 16
        %v1799 = vrot.slane %v1797, 5
        %v1800 = vsel %vm243, %v1795, %v1799
        %v1802 = vshrl.u32 %v1714, 16
        %v1804 = vrot.slane %v1802, 4
        %v1805 = vshll.u32 %v1714, 16
        %v1807 = vrot.slane %v1805, 5
        %v1808 = vor.u32 %v1804, %v1807
        %v1809 = vrot.slane %v1808, 4
        %v1811 = vshll.u32 %v1715, 16
        %v1813 = vrot.slane %v1811, 5
        %v1814 = vsel %vm243, %v1809, %v1813
        %v1815 = vshrl.u32 %v1715, 16
        %v1817 = vrot.slane %v1815, 4
        %v1818 = vor.u32 %v1817, %v1813
        %v1819 = vrot.slane %v1818, 4
        %v1821 = vshll.u32 %v1716, 16
        %v1823 = vrot.slane %v1821, 5
        %v1824 = vsel %vm243, %v1819, %v1823
        %v1826 = vshrl.u32 %v1717, 16
        %v1828 = vrot.slane %v1826, 4
        %v1829 = vshll.u32 %v1717, 16
        %v1831 = vrot.slane %v1829, 5
        %v1832 = vor.u32 %v1828, %v1831
        %v1833 = vrot.slane %v1832, 4
        %v1835 = vshll.u32 %v1718, 16
        %v1837 = vrot.slane %v1835, 5
        %v1838 = vsel %vm243, %v1833, %v1837
        %v1839 = vshrl.u32 %v1718, 16
        %v1841 = vrot.slane %v1839, 4
        %v1842 = vor.u32 %v1841, %v1837
        %v1843 = vrot.slane %v1842, 4
        %v1845 = vshll.u32 %v1719, 16
        %v1847 = vrot.slane %v1845, 5
        %v1848 = vsel %vm243, %v1843, %v1847
        %v1850 = vshrl.u32 %v1720, 16
        %v1852 = vrot.slane %v1850, 4
        %v1853 = vshll.u32 %v1720, 16
        %v1855 = vrot.slane %v1853, 5
        %v1856 = vor.u32 %v1852, %v1855
        %v1857 = vrot.slane %v1856, 4
        %v1859 = vshll.u32 %v1721, 16
        %v1861 = vrot.slane %v1859, 5
        %v1862 = vsel %vm243, %v1857, %v1861
        %v1863 = vshrl.u32 %v1721, 16
        %v1865 = vrot.slane %v1863, 4
        %v1866 = vor.u32 %v1865, %v1861
        %v1867 = vrot.slane %v1866, 4
        %v1869 = vshll.u32 %v1722, 16
        %v1871 = vrot.slane %v1869, 5
        %v1872 = vsel %vm243, %v1867, %v1871
        %v1874 = vshrl.u32 %v1723, 16
        %v1876 = vrot.slane %v1874, 4
        %v1877 = vshll.u32 %v1723, 16
        %v1879 = vrot.slane %v1877, 5
        %v1880 = vor.u32 %v1876, %v1879
        %v1881 = vrot.slane %v1880, 4
        %v1883 = vshll.u32 %v1724, 16
        %v1885 = vrot.slane %v1883, 5
        %v1886 = vsel %vm243, %v1881, %v1885
        %v1887 = vshrl.u32 %v1724, 16
        %v1889 = vrot.slane %v1887, 4
        %v1890 = vor.u32 %v1889, %v1885
        %v1891 = vrot.slane %v1890, 4
        %v1893 = vshll.u32 %v1725, 16
        %v1895 = vrot.slane %v1893, 5
        %v1896 = vsel %vm243, %v1891, %v1895
        %v1898 = vshrl.u32 %v1726, 16
        %v1900 = vrot.slane %v1898, 4
        %v1901 = vshll.u32 %v1726, 16
        %v1903 = vrot.slane %v1901, 5
        %v1904 = vor.u32 %v1900, %v1903
        %v1905 = vrot.slane %v1904, 4
        %v1907 = vshll.u32 %v1727, 16
        %v1909 = vrot.slane %v1907, 5
        %v1910 = vsel %vm243, %v1905, %v1909
        %v1911 = vshrl.u32 %v1727, 16
        %v1913 = vrot.slane %v1911, 4
        %v1914 = vor.u32 %v1913, %v1909
        %v1915 = vrot.slane %v1914, 4
        %v1917 = vshll.u32 %v1728, 16
        %v1919 = vrot.slane %v1917, 5
        %v1920 = vsel %vm243, %v1915, %v1919
        %s1921 = scalar_lea.vmem %s1, 28
        %v1922 = vld [vmem:[%s1921] sm:$0xf]
        %v1923 = vunpack.c.l.b16 %v1742
        %v1924 = vunpack.c.l.b16 %v1752
        %v1925 = vunpack.c.l.b16 %v1766
        %v1926 = vunpack.c.l.b16 %v1776
        %v1927 = vunpack.c.l.b16 %v1790
        %v1928 = vunpack.c.l.b16 %v1800
        %v1929 = vunpack.c.l.b16 %v1814
        %v1930 = vunpack.c.l.b16 %v1824
        %v1931 = vunpack.c.l.b16 %v1838
        %v1932 = vunpack.c.l.b16 %v1848
        %v1933 = vunpack.c.l.b16 %v1862
        %v1934 = vunpack.c.l.b16 %v1872
        %v1935 = vunpack.c.l.b16 %v1886
        %v1936 = vunpack.c.l.b16 %v1896
        %v1937 = vunpack.c.l.b16 %v1910
        %v1938 = vunpack.c.l.b16 %v1920
        %v1939 = vpack.c.b16 %v1924, %v1923
        %v1940 = vpack.c.b16 %v1926, %v1925
        %v1941 = vpack.c.b16 %v1928, %v1927
        %v1942 = vpack.c.b16 %v1930, %v1929
        %v1943 = vpack.c.b16 %v1932, %v1931
        %v1944 = vpack.c.b16 %v1934, %v1933
        %v1945 = vpack.c.b16 %v1936, %v1935
        %v1946 = vpack.c.b16 %v1938, %v1937
        %v1948 = vsel %vm462, %v1939, 0
        %v1951 = vsel %vm462, %v1940, 0
        %v1954 = vsel %vm462, %v1941, 0
        %v1957 = vsel %vm462, %v1942, 0
        %v1960 = vsel %vm462, %v1943, 0
        %v1963 = vsel %vm462, %v1944, 0
        %v1966 = vsel %vm462, %v1945, 0
        %v1969 = vsel %vm462, %v1946, 0
        %v1972 = vsel %vm487, %v1922, 0
        %1974 = vmatpush.bf16.msra.mxu0 0
        %1975 = vmatpush.bf16.msra.mxu0 0
        %1976 = vmatpush.bf16.msra.mxu0 0
        %1977 = vmatpush.bf16.msra.mxu0 0
        %1978 = vmatpush.bf16.msra.mxu0 0
        %1979 = vmatpush.bf16.msra.mxu0 0
        %1980 = vmatpush.bf16.msra.mxu0 0
        %1981 = vmatpush.bf16.msra.mxu0 %v1972
        %1982 = vmatmul.bf16.gmra.mxu0 %v1948
        %v1983 = vpop.f32.mrf.mxu0
        %v1984 = vadd.f32 0.0, %v1983
        %v1985 = vpop.f32.mrf.mxu0
        %v1986 = vadd.f32 0.0, %v1985
        %1987 = vmatmul.bf16.gmra.mxu0 %v1951
        %v1988 = vpop.f32.mrf.mxu0
        %v1989 = vadd.f32 0.0, %v1988
        %v1990 = vpop.f32.mrf.mxu0
        %v1991 = vadd.f32 0.0, %v1990
        %1992 = vmatmul.bf16.gmra.mxu0 %v1954
        %v1993 = vpop.f32.mrf.mxu0
        %v1994 = vadd.f32 0.0, %v1993
        %v1995 = vpop.f32.mrf.mxu0
        %v1996 = vadd.f32 0.0, %v1995
        %1997 = vmatmul.bf16.gmra.mxu0 %v1957
        %v1998 = vpop.f32.mrf.mxu0
        %v1999 = vadd.f32 0.0, %v1998
        %v2000 = vpop.f32.mrf.mxu0
        %v2001 = vadd.f32 0.0, %v2000
        %2002 = vmatmul.bf16.gmra.mxu0 %v1960
        %v2003 = vpop.f32.mrf.mxu0
        %v2004 = vadd.f32 0.0, %v2003
        %v2005 = vpop.f32.mrf.mxu0
        %v2006 = vadd.f32 0.0, %v2005
        %2007 = vmatmul.bf16.gmra.mxu0 %v1963
        %v2008 = vpop.f32.mrf.mxu0
        %v2009 = vadd.f32 0.0, %v2008
        %v2010 = vpop.f32.mrf.mxu0
        %v2011 = vadd.f32 0.0, %v2010
        %2012 = vmatmul.bf16.gmra.mxu0 %v1966
        %v2013 = vpop.f32.mrf.mxu0
        %v2014 = vadd.f32 0.0, %v2013
        %v2015 = vpop.f32.mrf.mxu0
        %v2016 = vadd.f32 0.0, %v2015
        %2017 = vmatmul.bf16.gmra.mxu0 %v1969
        %v2018 = vpop.f32.mrf.mxu0
        %v2019 = vadd.f32 0.0, %v2018
        %v2020 = vpop.f32.mrf.mxu0
        %v2021 = vadd.f32 0.0, %v2020
        %2022 = vdwg.mxu0
        %v2023 = vadd.f32 %v1689, %v1984
        %v2024 = vadd.f32 %v1690, %v1986
        %v2025 = vadd.f32 %v1691, %v1989
        %v2026 = vadd.f32 %v1692, %v1991
        %v2027 = vadd.f32 %v1693, %v1994
        %v2028 = vadd.f32 %v1694, %v1996
        %v2029 = vadd.f32 %v1695, %v1999
        %v2030 = vadd.f32 %v1696, %v2001
        %v2031 = vadd.f32 %v1697, %v2004
        %v2032 = vadd.f32 %v1698, %v2006
        %v2033 = vadd.f32 %v1699, %v2009
        %v2034 = vadd.f32 %v1700, %v2011
        %v2035 = vadd.f32 %v1701, %v2014
        %v2036 = vadd.f32 %v1702, %v2016
        %v2037 = vadd.f32 %v1703, %v2019
        %v2038 = vadd.f32 %v1704, %v2021
        %v2039 = vld [vmem:[%s1554] sm:$0xe]
        %v2040 = vld [vmem:[%s1554 + $0xc] sm:$0xe]
        %v2041 = vld [vmem:[%s1554 + $0x18] sm:$0xe]
        %v2042 = vld [vmem:[%s1554 + $0x24] sm:$0xe]
        %v2043 = vld [vmem:[%s1554 + $0x30] sm:$0xe]
        %v2044 = vld [vmem:[%s1554 + $0x3c] sm:$0xe]
        %v2045 = vld [vmem:[%s1554 + $0x48] sm:$0xe]
        %v2046 = vld [vmem:[%s1554 + $0x54] sm:$0xe]
        %v2071 = vrot.slane %v2039, 5
        %v2072 = vrot.slane %v2071, 4
        %v2073 = vrot.slane %v1706, 5
        %v2074 = vsel %vm682, %v2072, %v2073
        %v2075 = vrot.slane %v2073, 4
        %v2076 = vrot.slane %v1707, 5
        %v2077 = vsel %vm682, %v2075, %v2076
        %v2078 = vrot.slane %v2040, 5
        %v2079 = vrot.slane %v2078, 4
        %v2080 = vrot.slane %v1709, 5
        %v2081 = vsel %vm682, %v2079, %v2080
        %v2082 = vrot.slane %v2080, 4
        %v2083 = vrot.slane %v1710, 5
        %v2084 = vsel %vm682, %v2082, %v2083
        %v2085 = vrot.slane %v2041, 5
        %v2086 = vrot.slane %v2085, 4
        %v2087 = vrot.slane %v1712, 5
        %v2088 = vsel %vm682, %v2086, %v2087
        %v2089 = vrot.slane %v2087, 4
        %v2090 = vrot.slane %v1713, 5
        %v2091 = vsel %vm682, %v2089, %v2090
        %v2092 = vrot.slane %v2042, 5
        %v2093 = vrot.slane %v2092, 4
        %v2094 = vrot.slane %v1715, 5
        %v2095 = vsel %vm682, %v2093, %v2094
        %v2096 = vrot.slane %v2094, 4
        %v2097 = vrot.slane %v1716, 5
        %v2098 = vsel %vm682, %v2096, %v2097
        %v2099 = vrot.slane %v2043, 5
        %v2100 = vrot.slane %v2099, 4
        %v2101 = vrot.slane %v1718, 5
        %v2102 = vsel %vm682, %v2100, %v2101
        %v2103 = vrot.slane %v2101, 4
        %v2104 = vrot.slane %v1719, 5
        %v2105 = vsel %vm682, %v2103, %v2104
        %v2106 = vrot.slane %v2044, 5
        %v2107 = vrot.slane %v2106, 4
        %v2108 = vrot.slane %v1721, 5
        %v2109 = vsel %vm682, %v2107, %v2108
        %v2110 = vrot.slane %v2108, 4
        %v2111 = vrot.slane %v1722, 5
        %v2112 = vsel %vm682, %v2110, %v2111
        %v2113 = vrot.slane %v2045, 5
        %v2114 = vrot.slane %v2113, 4
        %v2115 = vrot.slane %v1724, 5
        %v2116 = vsel %vm682, %v2114, %v2115
        %v2117 = vrot.slane %v2115, 4
        %v2118 = vrot.slane %v1725, 5
        %v2119 = vsel %vm682, %v2117, %v2118
        %v2120 = vrot.slane %v2046, 5
        %v2121 = vrot.slane %v2120, 4
        %v2122 = vrot.slane %v1727, 5
        %v2123 = vsel %vm682, %v2121, %v2122
        %v2124 = vrot.slane %v2122, 4
        %v2125 = vrot.slane %v1728, 5
        %v2126 = vsel %vm682, %v2124, %v2125
        %s2127 = scalar_lea.vmem %s1, 32
        %v2128 = vld [vmem:[%s2127] sm:$0xf]
        %v2129 = vunpack.c.l.b16 %v2074
        %v2130 = vunpack.c.l.b16 %v2077
        %v2131 = vunpack.c.l.b16 %v2081
        %v2132 = vunpack.c.l.b16 %v2084
        %v2133 = vunpack.c.l.b16 %v2088
        %v2134 = vunpack.c.l.b16 %v2091
        %v2135 = vunpack.c.l.b16 %v2095
        %v2136 = vunpack.c.l.b16 %v2098
        %v2137 = vunpack.c.l.b16 %v2102
        %v2138 = vunpack.c.l.b16 %v2105
        %v2139 = vunpack.c.l.b16 %v2109
        %v2140 = vunpack.c.l.b16 %v2112
        %v2141 = vunpack.c.l.b16 %v2116
        %v2142 = vunpack.c.l.b16 %v2119
        %v2143 = vunpack.c.l.b16 %v2123
        %v2144 = vunpack.c.l.b16 %v2126
        %v2145 = vpack.c.b16 %v2130, %v2129
        %v2146 = vpack.c.b16 %v2132, %v2131
        %v2147 = vpack.c.b16 %v2134, %v2133
        %v2148 = vpack.c.b16 %v2136, %v2135
        %v2149 = vpack.c.b16 %v2138, %v2137
        %v2150 = vpack.c.b16 %v2140, %v2139
        %v2151 = vpack.c.b16 %v2142, %v2141
        %v2152 = vpack.c.b16 %v2144, %v2143
        %v2154 = vsel %vm462, %v2145, 0
        %v2157 = vsel %vm462, %v2146, 0
        %v2160 = vsel %vm462, %v2147, 0
        %v2163 = vsel %vm462, %v2148, 0
        %v2166 = vsel %vm462, %v2149, 0
        %v2169 = vsel %vm462, %v2150, 0
        %v2172 = vsel %vm462, %v2151, 0
        %v2175 = vsel %vm462, %v2152, 0
        %v2178 = vsel %vm487, %v2128, 0
        %2180 = vmatpush.bf16.msra.mxu0 0
        %2181 = vmatpush.bf16.msra.mxu0 0
        %2182 = vmatpush.bf16.msra.mxu0 0
        %2183 = vmatpush.bf16.msra.mxu0 0
        %2184 = vmatpush.bf16.msra.mxu0 0
        %2185 = vmatpush.bf16.msra.mxu0 0
        %2186 = vmatpush.bf16.msra.mxu0 0
        %2187 = vmatpush.bf16.msra.mxu0 %v2178
        %2188 = vmatmul.bf16.gmra.mxu0 %v2154
        %v2189 = vpop.f32.mrf.mxu0
        %v2190 = vadd.f32 0.0, %v2189
        %v2191 = vpop.f32.mrf.mxu0
        %v2192 = vadd.f32 0.0, %v2191
        %2193 = vmatmul.bf16.gmra.mxu0 %v2157
        %v2194 = vpop.f32.mrf.mxu0
        %v2195 = vadd.f32 0.0, %v2194
        %v2196 = vpop.f32.mrf.mxu0
        %v2197 = vadd.f32 0.0, %v2196
        %2198 = vmatmul.bf16.gmra.mxu0 %v2160
        %v2199 = vpop.f32.mrf.mxu0
        %v2200 = vadd.f32 0.0, %v2199
        %v2201 = vpop.f32.mrf.mxu0
        %v2202 = vadd.f32 0.0, %v2201
        %2203 = vmatmul.bf16.gmra.mxu0 %v2163
        %v2204 = vpop.f32.mrf.mxu0
        %v2205 = vadd.f32 0.0, %v2204
        %v2206 = vpop.f32.mrf.mxu0
        %v2207 = vadd.f32 0.0, %v2206
        %2208 = vmatmul.bf16.gmra.mxu0 %v2166
        %v2209 = vpop.f32.mrf.mxu0
        %v2210 = vadd.f32 0.0, %v2209
        %v2211 = vpop.f32.mrf.mxu0
        %v2212 = vadd.f32 0.0, %v2211
        %2213 = vmatmul.bf16.gmra.mxu0 %v2169
        %v2214 = vpop.f32.mrf.mxu0
        %v2215 = vadd.f32 0.0, %v2214
        %v2216 = vpop.f32.mrf.mxu0
        %v2217 = vadd.f32 0.0, %v2216
        %2218 = vmatmul.bf16.gmra.mxu0 %v2172
        %v2219 = vpop.f32.mrf.mxu0
        %v2220 = vadd.f32 0.0, %v2219
        %v2221 = vpop.f32.mrf.mxu0
        %v2222 = vadd.f32 0.0, %v2221
        %2223 = vmatmul.bf16.gmra.mxu0 %v2175
        %v2224 = vpop.f32.mrf.mxu0
        %v2225 = vadd.f32 0.0, %v2224
        %v2226 = vpop.f32.mrf.mxu0
        %v2227 = vadd.f32 0.0, %v2226
        %2228 = vdwg.mxu0
        %v2229 = vadd.f32 %v2023, %v2190
        %v2230 = vadd.f32 %v2024, %v2192
        %v2231 = vadd.f32 %v2025, %v2195
        %v2232 = vadd.f32 %v2026, %v2197
        %v2233 = vadd.f32 %v2027, %v2200
        %v2234 = vadd.f32 %v2028, %v2202
        %v2235 = vadd.f32 %v2029, %v2205
        %v2236 = vadd.f32 %v2030, %v2207
        %v2237 = vadd.f32 %v2031, %v2210
        %v2238 = vadd.f32 %v2032, %v2212
        %v2239 = vadd.f32 %v2033, %v2215
        %v2240 = vadd.f32 %v2034, %v2217
        %v2241 = vadd.f32 %v2035, %v2220
        %v2242 = vadd.f32 %v2036, %v2222
        %v2243 = vadd.f32 %v2037, %v2225
        %v2244 = vadd.f32 %v2038, %v2227
        %v2245 = vld [vmem:[#allocation2] sm:$0x1]
        %v2246 = vunpack.c.l.bf16 %v2245
        %v2247 = vperm.slane %v2246, 0
        %v2248 = vadd.f32 %v2229, %v2247
        %v2249 = vadd.f32 %v2230, %v2247
        %v2250 = vadd.f32 %v2231, %v2247
        %v2251 = vadd.f32 %v2232, %v2247
        %v2252 = vadd.f32 %v2233, %v2247
        %v2253 = vadd.f32 %v2234, %v2247
        %v2254 = vadd.f32 %v2235, %v2247
        %v2255 = vadd.f32 %v2236, %v2247
        %v2256 = vadd.f32 %v2237, %v2247
        %v2257 = vadd.f32 %v2238, %v2247
        %v2258 = vadd.f32 %v2239, %v2247
        %v2259 = vadd.f32 %v2240, %v2247
        %v2260 = vadd.f32 %v2241, %v2247
        %v2261 = vadd.f32 %v2242, %v2247
        %v2262 = vadd.f32 %v2243, %v2247
        %v2263 = vadd.f32 %v2244, %v2247
        %v2264 = vmax.f32 %v2248, 0.0
        %v2265 = vmax.f32 %v2249, 0.0
        %v2266 = vmax.f32 %v2250, 0.0
        %v2267 = vmax.f32 %v2251, 0.0
        %v2268 = vmax.f32 %v2252, 0.0
        %v2269 = vmax.f32 %v2253, 0.0
        %v2270 = vmax.f32 %v2254, 0.0
        %v2271 = vmax.f32 %v2255, 0.0
        %v2272 = vmax.f32 %v2256, 0.0
        %v2273 = vmax.f32 %v2257, 0.0
        %v2274 = vmax.f32 %v2258, 0.0
        %v2275 = vmax.f32 %v2259, 0.0
        %v2276 = vmax.f32 %v2260, 0.0
        %v2277 = vmax.f32 %v2261, 0.0
        %v2278 = vmax.f32 %v2262, 0.0
        %v2279 = vmax.f32 %v2263, 0.0
        %v2280 = vpack.c.bf16 %v2264, %v2264
        %v2281 = vpack.c.bf16 %v2265, %v2265
        %v2282 = vpack.c.bf16 %v2266, %v2266
        %v2283 = vpack.c.bf16 %v2267, %v2267
        %v2284 = vpack.c.bf16 %v2268, %v2268
        %v2285 = vpack.c.bf16 %v2269, %v2269
        %v2286 = vpack.c.bf16 %v2270, %v2270
        %v2287 = vpack.c.bf16 %v2271, %v2271
        %v2288 = vpack.c.bf16 %v2272, %v2272
        %v2289 = vpack.c.bf16 %v2273, %v2273
        %v2290 = vpack.c.bf16 %v2274, %v2274
        %v2291 = vpack.c.bf16 %v2275, %v2275
        %v2292 = vpack.c.bf16 %v2276, %v2276
        %v2293 = vpack.c.bf16 %v2277, %v2277
        %v2294 = vpack.c.bf16 %v2278, %v2278
        %v2295 = vpack.c.bf16 %v2279, %v2279
        %2296 = vst [vmem:[%s209] sm:$0xf] %v2280
        %2297 = vst [vmem:[%s209 + $0x4] sm:$0xf] %v2281
        %2298 = vst [vmem:[%s209 + $0x8] sm:$0xf] %v2282
        %2299 = vst [vmem:[%s209 + $0xc] sm:$0xf] %v2283
        %2300 = vst [vmem:[%s209 + $0x10] sm:$0xf] %v2284
        %2301 = vst [vmem:[%s209 + $0x14] sm:$0xf] %v2285
        %2302 = vst [vmem:[%s209 + $0x18] sm:$0xf] %v2286
        %2303 = vst [vmem:[%s209 + $0x1c] sm:$0xf] %v2287
        %2304 = vst [vmem:[%s209 + $0x20] sm:$0xf] %v2288
        %2305 = vst [vmem:[%s209 + $0x24] sm:$0xf] %v2289
        %2306 = vst [vmem:[%s209 + $0x28] sm:$0xf] %v2290
        %2307 = vst [vmem:[%s209 + $0x2c] sm:$0xf] %v2291
        %2308 = vst [vmem:[%s209 + $0x30] sm:$0xf] %v2292
        %2309 = vst [vmem:[%s209 + $0x34] sm:$0xf] %v2293
        %2310 = vst [vmem:[%s209 + $0x38] sm:$0xf] %v2294
        %2311 = vst [vmem:[%s209 + $0x3c] sm:$0xf] %v2295
        %s2312 = smul.u32 8, %s20
        %p2313 = scmp.lt.s32.totalorder %s19, 1
        %s2314 = scalar_select %p2313, %s19, 1
        %p2315 = scmp.lt.s32.totalorder %s2312, 15
        %s2316 = scalar_select %p2315, %s2312, 15
        %s2317 = smul.addr %s2316, 2
        %s2318 = smul.addr %s2314, 32
        %s2319 = sadd.s32 %s2317, %s2318
        %s2320 = smul.addr %s2319, 4
        %s2321 = scalar_lea.vmem %s3, %s2320
        // Predicated region
        $region37: #{vgg16_block_forward.5} parent=31 // pred_check
          %p2322 = pneg %p115
        $region38: #{vgg16_block_forward.5} parent=31 // pred_check_branch
          %2324 = sbr.rel (%p2322) target = $region40
        $region39: #{vgg16_block_forward.5} parent=31 // pred_region
          %s2325 = smul.u32 8, %s20
        $region40: #{vgg16_block_forward.5} parent=31 // pred_fallthru
          _
      $region32: #{vgg16_block_forward.5} parent=5 // pred_fallthru
        _
      %p2326 = scmp.le.s32.totalorder 2, %s10
      // Predicated region
      $region41: #{vgg16_block_forward.5} parent=5 // pred_check
        %p2327 = pneg %p2326
      $region42: #{vgg16_block_forward.5} parent=5 // pred_check_branch
        %2329 = sbr.rel (%p2327) target = $region44
      $region43: #{vgg16_block_forward.5} parent=5 // pred_region
        %s2330 = ssub.s32 %s10, 2
        // Predicated region
        $region45: #{vgg16_block_forward.5} parent=43 // pred_check
          %p2331 = pneg %p121
        $region46: #{vgg16_block_forward.5} parent=43 // pred_check_branch
          %2333 = sbr.rel (%p2331) target = $region48
        $region47: #{vgg16_block_forward.5} parent=43 // pred_region
          %s2334 = smul.u32 8, %s22
          %p2335 = scmp.lt.s32.totalorder %s21, 1
          %s2336 = scalar_select %p2335, %s21, 1
          %p2337 = scmp.lt.s32.totalorder %s2334, 15
          %s2338 = scalar_select %p2337, %s2334, 15
          %s2339 = smul.addr %s2338, 2
          %s2340 = smul.addr %s2336, 32
          %s2341 = sadd.s32 %s2339, %s2340
          %s2342 = smul.addr %s2341, 4
          %s2343 = scalar_lea.vmem %s3, %s2342
        $region48: #{vgg16_block_forward.5} parent=43 // pred_fallthru
          _
      $region44: #{vgg16_block_forward.5} parent=5 // pred_fallthru
        _
    $region6: #{vgg16_block_forward.5} parent=1 // loop_footer
      %s14 = sadd.s32 1, %s10
    $region7: #{vgg16_block_forward.5} parent=1 // loop_footer_branch
      %9 = sbr.rel target = $region3
    $region8: #{vgg16_block_forward.5} parent=1 // loop_exit
      _
    %2344 = vsyncpa [#allocation3], 1
    %s2345 = scalar_lea.sflag [#allocation3], 1
    %2346 = vsyncpa %s2345, 1

// kernel: vgg16_block_forward.9
$region0: #{vgg16_block_forward.9}
  #allocation0 [shape = 'u32[]', space=smem, size = 0x4, offset = 0x4, fixed_abs, tag = 'smem constant byte address 0x4 - core index']
  #allocation1 [shape = 'u32[72,128]{1,0:T(1,128)}', space=vmem, size = 0x9000, scoped, tag = 'internal scratch']
  #allocation2 [shape = 'f32[16,128]{1,0:T(8,128)}', space=vmem, size = 0x2000, scoped, tag = 'scratch operand']
  %s0 = inlined_call_operand.vmem [shape: bf16[16,128], index: 0, kind: input, shape index: {}]
  %s1 = inlined_call_operand.vmem [shape: bf16[128,128], index: 1, kind: input, shape index: {}]
  %s2 = inlined_call_operand.vmem [shape: bf16[1,128], index: 2, kind: input, shape index: {}]
  %s3 = inlined_call_operand.vmem [shape: f32[16,128], index: 3, kind: output, shape index: {}]
  %s4 = sld [smem:[#allocation0]]
  $region30: #{vgg16_block_forward.9} parent=0
    _
  %s6 = ssub.s32 1, %s4
  %s7 = scalar_select 0, %s6, %s4
  // Predicated region
  $region2: #{vgg16_block_forward.9} parent=0 // pred_check
    _
  $region3: #{vgg16_block_forward.9} parent=0 // pred_check_branch
    %9 = sbr.rel (0) target = $region5
  $region4: #{vgg16_block_forward.9} parent=0 // pred_region
    _
  $region5: #{vgg16_block_forward.9} parent=0 // pred_fallthru
    _
  // Predicated region
  $region6: #{vgg16_block_forward.9} parent=0 // pred_check
    _
  $region7: #{vgg16_block_forward.9} parent=0 // pred_check_branch
    %11 = sbr.rel (0) target = $region9
  $region8: #{vgg16_block_forward.9} parent=0 // pred_region
    _
  $region9: #{vgg16_block_forward.9} parent=0 // pred_fallthru
    _
  // Predicated region
  $region10: #{vgg16_block_forward.9} parent=0 // pred_check
    _
  $region11: #{vgg16_block_forward.9} parent=0 // pred_check_branch
    %13 = sbr.rel (0) target = $region13
  $region12: #{vgg16_block_forward.9} parent=0 // pred_region
    _
  $region13: #{vgg16_block_forward.9} parent=0 // pred_fallthru
    _
  %p14 = scmp.eq.s32.totalorder 0, 0
  // Predicated region
  $region14: #{vgg16_block_forward.9} parent=0 // pred_check
    %p15 = pneg %p14
  $region15: #{vgg16_block_forward.9} parent=0 // pred_check_branch
    %17 = sbr.rel (%p15) target = $region17
  $region16: #{vgg16_block_forward.9} parent=0 // pred_region
    %18 = vst [vmem:[#allocation2] sm:$0xff] 0.0
    %19 = vst [vmem:[#allocation2 + $0x8] sm:$0xff] 0.0
  $region17: #{vgg16_block_forward.9} parent=0 // pred_fallthru
    _
  %v20 = vld [vmem:[#allocation2] sm:$0xff]
  %v21 = vld [vmem:[#allocation2 + $0x8] sm:$0xff]
  %v22 = vld [vmem:[%s0] sm:$0xf]
  %v23 = vld [vmem:[%s0 + $0x4] sm:$0xf]
  %v24 = vld [vmem:[%s1] sm:$0xf]
  %v25 = vld [vmem:[%s1 + $0x4] sm:$0xf]
  %v26 = vld [vmem:[%s1 + $0x8] sm:$0xf]
  %v27 = vld [vmem:[%s1 + $0xc] sm:$0xf]
  %v28 = vld [vmem:[%s1 + $0x10] sm:$0xf]
  %v29 = vld [vmem:[%s1 + $0x14] sm:$0xf]
  %v30 = vld [vmem:[%s1 + $0x18] sm:$0xf]
  %v31 = vld [vmem:[%s1 + $0x1c] sm:$0xf]
  %v32 = vld [vmem:[%s1 + $0x20] sm:$0xf]
  %v33 = vld [vmem:[%s1 + $0x24] sm:$0xf]
  %v34 = vld [vmem:[%s1 + $0x28] sm:$0xf]
  %v35 = vld [vmem:[%s1 + $0x2c] sm:$0xf]
  %v36 = vld [vmem:[%s1 + $0x30] sm:$0xf]
  %v37 = vld [vmem:[%s1 + $0x34] sm:$0xf]
  %v38 = vld [vmem:[%s1 + $0x38] sm:$0xf]
  %v39 = vld [vmem:[%s1 + $0x3c] sm:$0xf]
  %v42 = vunpack.c.l.b16 %v22
  %v43 = vunpack.c.l.b16 %v23
  %v44 = vpack.c.b16 %v43, %v42
  %v62 = vunpack.c.l.b16 %v24
  %v63 = vunpack.c.l.b16 %v25
  %v64 = vunpack.c.l.b16 %v26
  %v65 = vunpack.c.l.b16 %v27
  %v66 = vunpack.c.l.b16 %v28
  %v67 = vunpack.c.l.b16 %v29
  %v68 = vunpack.c.l.b16 %v30
  %v69 = vunpack.c.l.b16 %v31
  %v70 = vunpack.c.l.b16 %v32
  %v71 = vunpack.c.l.b16 %v33
  %v72 = vunpack.c.l.b16 %v34
  %v73 = vunpack.c.l.b16 %v35
  %v74 = vunpack.c.l.b16 %v36
  %v75 = vunpack.c.l.b16 %v37
  %v76 = vunpack.c.l.b16 %v38
  %v77 = vunpack.c.l.b16 %v39
  %v78 = vpack.c.b16 %v63, %v62
  %v79 = vpack.c.b16 %v65, %v64
  %v80 = vpack.c.b16 %v67, %v66
  %v81 = vpack.c.b16 %v69, %v68
  %v82 = vpack.c.b16 %v71, %v70
  %v83 = vpack.c.b16 %v73, %v72
  %v84 = vpack.c.b16 %v75, %v74
  %v85 = vpack.c.b16 %v77, %v76
  %94 = vmatpush.bf16.msra.mxu0 %v85
  %95 = vmatpush.bf16.msra.mxu0 %v84
  %96 = vmatpush.bf16.msra.mxu0 %v83
  %97 = vmatpush.bf16.msra.mxu0 %v82
  %98 = vmatpush.bf16.msra.mxu0 %v81
  %99 = vmatpush.bf16.msra.mxu0 %v80
  %100 = vmatpush.bf16.msra.mxu0 %v79
  %101 = vmatpush.bf16.msra.mxu0 %v78
  %102 = vmatmul.bf16.gmra.mxu0 %v44
  %v103 = vpop.f32.mrf.mxu0
  %v104 = vadd.f32 0.0, %v103
  %v105 = vpop.f32.mrf.mxu0
  %v106 = vadd.f32 0.0, %v105
  %107 = vdwg.mxu0
  %v108 = vadd.f32 %v20, %v104
  %v109 = vadd.f32 %v21, %v106
  %110 = vst [vmem:[#allocation2] sm:$0xff] %v108
  %111 = vst [vmem:[#allocation2 + $0x8] sm:$0xff] %v109
  // Predicated region
  $region18: #{vgg16_block_forward.9} parent=0 // pred_check
    %p112 = pneg %p14
  $region19: #{vgg16_block_forward.9} parent=0 // pred_check_branch
    %114 = sbr.rel (%p112) target = $region21
  $region20: #{vgg16_block_forward.9} parent=0 // pred_region
    %v115 = vld [vmem:[#allocation2] sm:$0xff]
    %v116 = vld [vmem:[#allocation2 + $0x8] sm:$0xff]
    %v117 = vld [vmem:[%s2] sm:$0x1]
    %v118 = vunpack.c.l.bf16 %v117
    %v119 = vperm.slane %v118, 0
    %v120 = vadd.f32 %v115, %v119
    %v121 = vadd.f32 %v116, %v119
    %122 = vst [vmem:[%s3] sm:$0xff] %v120
    %123 = vst [vmem:[%s3 + $0x8] sm:$0xff] %v121
  $region21: #{vgg16_block_forward.9} parent=0 // pred_fallthru
    _
  // Predicated region
  $region22: #{vgg16_block_forward.9} parent=0 // pred_check
    _
  $region23: #{vgg16_block_forward.9} parent=0 // pred_check_branch
    %125 = sbr.rel (0) target = $region25
  $region24: #{vgg16_block_forward.9} parent=0 // pred_region
    _
  $region25: #{vgg16_block_forward.9} parent=0 // pred_fallthru
    _
  // Predicated region
  $region26: #{vgg16_block_forward.9} parent=0 // pred_check
    _
  $region27: #{vgg16_block_forward.9} parent=0 // pred_check_branch
    %127 = sbr.rel (0) target = $region29
  $region28: #{vgg16_block_forward.9} parent=0 // pred_region
    _
  $region29: #{vgg16_block_forward.9} parent=0 // pred_fallthru
    _

// kernel: vgg16_block_forward.6
$region0: #{vgg16_block_forward.6}
  #allocation0 [shape = 'u32[]', space=smem, size = 0x4, offset = 0x4, fixed_abs, tag = 'smem constant byte address 0x4 - core index']
  #allocation1 [shape = 'u32[72,128]{1,0:T(1,128)}', space=vmem, size = 0x9000, scoped, tag = 'internal scratch']
  %s0 = inlined_call_operand.vmem [shape: bf16[2,18,18,128], index: 0, kind: input, shape index: {}]
  %s1 = inlined_call_operand.hbm [shape: bf16[3,3,128,128], index: 1, kind: input, shape index: {}]
  %s2 = inlined_call_operand.hbm [shape: bf16[1,128], index: 2, kind: input, shape index: {}]
  %s3 = inlined_call_operand.vmem [shape: bf16[2,16,16,128], index: 3, kind: output, shape index: {}]
  %s4 = sld [smem:[#allocation0]]
  $region53: #{vgg16_block_forward.6} parent=0
    _
  %s6 = ssub.s32 1, %s4
  %s7 = scalar_select 0, %s6, %s4
  $region1: #{vgg16_block_forward.6} parent=0
    #allocation2 [shape = 'u8[294912]{0}', space=vmem, size = 0x48000, scoped, tag = 'input window, operand 1, single buffered']
    #allocation3 [shape = 's32[2]{0}', space=sflag, size = 0x8, scoped, tag = 'scoped memory for vgg16_block_forward.6']
    #allocation4 [shape = 'u8[512]{0}', space=vmem, size = 0x400, scoped, tag = 'input window, operand 2, single buffered']
    #allocation5 [shape = 's32[1]{0}', space=sflag, size = 0x4, scoped, tag = 'scoped memory for vgg16_block_forward.6']
    %8 = vsyncpa [#allocation3], 0
    %9 = vsyncpa [#allocation5], 0
    loop: start=0, step=1, limit=6
    $region2: #{vgg16_block_forward.6} parent=1 // loop_pre_header
      _
    $region3: #{vgg16_block_forward.6} parent=1 // loop_header
      %s11 = sphi 0, %s15
      %p12 = scmp.ge.s32.totalorder %s11, 6
      %s18 = sphi 0, %s30
      %s19 = sphi 0, %s26
      %s20 = sphi 0, %s18
      %s21 = sphi 0, %s19
      %s22 = sphi 0, %s20
      %s23 = sphi 0, %s21
      %s33 = sphi 0, %s35
      %s36 = sphi 0, %s33
      %s37 = sphi 0, %s36
      %s53 = sphi 0, %s37
      %s57 = sphi 0, %s57
      %s59 = sphi 0, %s57
      %s60 = sphi 0, %s59
      %s74 = sphi 0, %s60
      %s78 = sphi 0, %s78
      %s80 = sphi 0, %s78
      %s81 = sphi 0, %s80
      %s95 = sphi 0, %s81
      %s103 = sphi 0, %s105
      %s106 = sphi 0, %s103
      %s107 = sphi 0, %s106
      %s123 = sphi 0, %s107
    $region4: #{vgg16_block_forward.6} parent=1 // loop_header_branch
      %14 = sbr.rel (%p12) target = $region8
    $region5: #{vgg16_block_forward.6} parent=1 // loop_body
      %s16 = ssub.s32 %s11, 1
      %s17 = ssub.s32 %s11, 2
      %s24 = sadd.s32 1, %s19
      %p25 = scmp.ge.s32.totalorder %s24, 2
      %s26 = scalar_select %p25, 0, %s24
      %s27 = sadd.s32 1, %s18
      %s28 = scalar_select %p25, %s27, %s18
      %p29 = scmp.ge.s32.totalorder %s28, 2
      %s30 = scalar_select %p29, 0, %s28
      %s31 = ssub.s32 %s18, %s30
      %p32 = scmp.eq.s32.totalorder %s31, 0
      %s34 = sadd.s32 %s33, 1
      %s35 = scalar_select %p32, %s33, %s34
      %p38 = pneg %p32
      %p39 = scmp.eq.s32.totalorder %s11, 3
      %p40 = por %p38, %p39
      %p41 = scmp.ne.s32.totalorder %s33, %s36
      %p42 = scmp.eq.s32.totalorder %s11, 0
      %p43 = por %p41, %p42
      %p44 = scmp.ne.s32.totalorder %s33, %s36
      %p45 = scmp.eq.s32.totalorder %s16, 3
      %p46 = por %p44, %p45
      %p47 = scmp.ne.s32.totalorder %s36, %s37
      %p48 = scmp.eq.s32.totalorder %s16, 0
      %p49 = por %p47, %p48
      %p50 = scmp.ne.s32.totalorder %s36, %s37
      %p51 = scmp.eq.s32.totalorder %s17, 3
      %p52 = por %p50, %p51
      %p54 = scmp.ne.s32.totalorder %s37, %s53
      %p55 = scmp.eq.s32.totalorder %s17, 0
      %p56 = por %p54, %p55
      %s58 = sadd.s32 %s57, 1
      %p61 = scmp.eq.s32.totalorder %s11, 3
      %p62 = scmp.ne.s32.totalorder %s57, %s59
      %p63 = scmp.eq.s32.totalorder %s11, 0
      %p64 = por %p62, %p63
      %p65 = scmp.ne.s32.totalorder %s57, %s59
      %p66 = scmp.eq.s32.totalorder %s16, 3
      %p67 = por %p65, %p66
      %p68 = scmp.ne.s32.totalorder %s59, %s60
      %p69 = scmp.eq.s32.totalorder %s16, 0
      %p70 = por %p68, %p69
      %p71 = scmp.ne.s32.totalorder %s59, %s60
      %p72 = scmp.eq.s32.totalorder %s17, 3
      %p73 = por %p71, %p72
      %p75 = scmp.ne.s32.totalorder %s60, %s74
      %p76 = scmp.eq.s32.totalorder %s17, 0
      %p77 = por %p75, %p76
      %s79 = sadd.s32 %s78, 1
      %p82 = scmp.eq.s32.totalorder %s11, 3
      %p83 = scmp.ne.s32.totalorder %s78, %s80
      %p84 = scmp.eq.s32.totalorder %s11, 0
      %p85 = por %p83, %p84
      %p86 = scmp.ne.s32.totalorder %s78, %s80
      %p87 = scmp.eq.s32.totalorder %s16, 3
      %p88 = por %p86, %p87
      %p89 = scmp.ne.s32.totalorder %s80, %s81
      %p90 = scmp.eq.s32.totalorder %s16, 0
      %p91 = por %p89, %p90
      %p92 = scmp.ne.s32.totalorder %s80, %s81
      %p93 = scmp.eq.s32.totalorder %s17, 3
      %p94 = por %p92, %p93
      %p96 = scmp.ne.s32.totalorder %s81, %s95
      %p97 = scmp.eq.s32.totalorder %s17, 0
      %p98 = por %p96, %p97
      %s99 = ssub.s32 %s18, %s30
      %s100 = ssub.s32 %s19, %s26
      %s101 = sor.u32 %s99, %s100
      %p102 = scmp.eq.s32.totalorder %s101, 0
      %s104 = sadd.s32 %s103, 1
      %s105 = scalar_select %p102, %s103, %s104
      %p108 = pneg %p102
      %p109 = scmp.eq.s32.totalorder %s11, 3
      %p110 = por %p108, %p109
      %p111 = scmp.ne.s32.totalorder %s103, %s106
      %p112 = scmp.eq.s32.totalorder %s11, 0
      %p113 = por %p111, %p112
      %p114 = scmp.ne.s32.totalorder %s103, %s106
      %p115 = scmp.eq.s32.totalorder %s16, 3
      %p116 = por %p114, %p115
      %p117 = scmp.ne.s32.totalorder %s106, %s107
      %p118 = scmp.eq.s32.totalorder %s16, 0
      %p119 = por %p117, %p118
      %p120 = scmp.ne.s32.totalorder %s106, %s107
      %p121 = scmp.eq.s32.totalorder %s17, 3
      %p122 = por %p120, %p121
      %p124 = scmp.ne.s32.totalorder %s107, %s123
      %p125 = scmp.eq.s32.totalorder %s17, 0
      %p126 = por %p124, %p125
      %p127 = scmp.le.s32.totalorder 1, %s11
      %p128 = scmp.lt.s32.totalorder %s11, 5
      %p129 = pnand %p127, %p128
      %p130 = pneg %p129
      // Predicated region
      $region9: #{vgg16_block_forward.6} parent=5 // pred_check
        _
      $region10: #{vgg16_block_forward.6} parent=5 // pred_check_branch
        %132 = sbr.rel (%p129) target = $region12
      $region11: #{vgg16_block_forward.6} parent=5 // pred_region
        %s133 = ssub.s32 %s11, 1
        // Predicated region
        $region13: #{vgg16_block_forward.6} parent=11 // pred_check
          %p134 = pneg %p70
        $region14: #{vgg16_block_forward.6} parent=11 // pred_check_branch
          %136 = sbr.rel (%p134) target = $region16
        $region15: #{vgg16_block_forward.6} parent=11 // pred_region
          %138 = vsyncadd [#allocation3], 0
          %s139 = sshll.u32 %s1, 4
          %s140 = int_to_ptr.hbm [resolvable:$true] %s139
          %s141 = sshll.u32 [#allocation2], 4
          %s142 = int_to_ptr.vmem [resolvable:$true] %s141
          %147 = dma.hbm_to_vmem [thread:$0]  %s140, 9216, %s142, [#allocation3], 64, 64, 4
        $region16: #{vgg16_block_forward.6} parent=11 // pred_fallthru
          _
        // Predicated region
        $region17: #{vgg16_block_forward.6} parent=11 // pred_check
          %p148 = pneg %p91
        $region18: #{vgg16_block_forward.6} parent=11 // pred_check_branch
          %150 = sbr.rel (%p148) target = $region20
        $region19: #{vgg16_block_forward.6} parent=11 // pred_region
          %152 = vsyncadd [#allocation5], 0
          %s154 = sshll.u32 %s2, 4
          %s155 = int_to_ptr.hbm [resolvable:$true] %s154
          %s156 = sshll.u32 [#allocation4], 4
          %s157 = int_to_ptr.vmem [resolvable:$true] %s156
          %159 = dma.hbm_to_vmem [thread:$0]  %s155, 16, %s157, [#allocation5]
        $region20: #{vgg16_block_forward.6} parent=11 // pred_fallthru
          _
      $region12: #{vgg16_block_forward.6} parent=5 // pred_fallthru
        _
      %p160 = scmp.lt.s32.totalorder %s11, 4
      // Predicated region
      $region21: #{vgg16_block_forward.6} parent=5 // pred_check
        %p161 = pneg %p160
      $region22: #{vgg16_block_forward.6} parent=5 // pred_check_branch
        %163 = sbr.rel (%p161) target = $region24
      $region23: #{vgg16_block_forward.6} parent=5 // pred_region
        // Predicated region
        $region25: #{vgg16_block_forward.6} parent=23 // pred_check
          %p164 = pneg %p43
        $region26: #{vgg16_block_forward.6} parent=23 // pred_check_branch
          %166 = sbr.rel (%p164) target = $region28
        $region27: #{vgg16_block_forward.6} parent=23 // pred_region
          %p167 = scmp.lt.s32.totalorder %s18, 1
          %s168 = scalar_select %p167, %s18, 1
          %s169 = smul.addr %s168, 54
          %s170 = smul.addr %s169, 4
          %s171 = scalar_lea.vmem %s0, %s170
        $region28: #{vgg16_block_forward.6} parent=23 // pred_fallthru
          _
      $region24: #{vgg16_block_forward.6} parent=5 // pred_fallthru
        _
      %p172 = scmp.le.s32.totalorder 1, %s11
      %p173 = scmp.lt.s32.totalorder %s11, 5
      %p174 = pnand %p172, %p173
      %p175 = pneg %p174
      // Predicated region
      $region29: #{vgg16_block_forward.6} parent=5 // pred_check
        _
      $region30: #{vgg16_block_forward.6} parent=5 // pred_check_branch
        %177 = sbr.rel (%p174) target = $region32
      $region31: #{vgg16_block_forward.6} parent=5 // pred_region
        %s178 = ssub.s32 %s11, 1
        // Predicated region
        $region33: #{vgg16_block_forward.6} parent=31 // pred_check
          %p179 = pneg %p70
        $region34: #{vgg16_block_forward.6} parent=31 // pred_check_branch
          %181 = sbr.rel (%p179) target = $region36
        $region35: #{vgg16_block_forward.6} parent=31 // pred_region
          %183 = dma.done [#allocation3], 9216
        $region36: #{vgg16_block_forward.6} parent=31 // pred_fallthru
          _
        // Predicated region
        $region37: #{vgg16_block_forward.6} parent=31 // pred_check
          %p184 = pneg %p91
        $region38: #{vgg16_block_forward.6} parent=31 // pred_check_branch
          %186 = sbr.rel (%p184) target = $region40
        $region39: #{vgg16_block_forward.6} parent=31 // pred_region
          %188 = dma.done [#allocation5], 16
        $region40: #{vgg16_block_forward.6} parent=31 // pred_fallthru
          _
        %p189 = scmp.lt.s32.totalorder %s20, 1
        %s190 = scalar_select %p189, %s20, 1
        %s191 = smul.addr %s190, 54
        %s192 = smul.addr %s191, 4
        %s193 = scalar_lea.vmem %s0, %s192
        %p194 = pneg %p49
        %p195 = pneg %p46
        %p196 = pneg %p70
        %p197 = pneg %p67
        %p198 = pneg %p91
        %p199 = pneg %p88
        %p200 = pneg %p119
        %p201 = pneg %p116
        %s202 = smul.u32 8, %s21
        %p203 = scmp.lt.s32.totalorder %s20, 1
        %s204 = scalar_select %p203, %s20, 1
        %p205 = scmp.lt.s32.totalorder %s202, 15
        %s206 = scalar_select %p205, %s202, 15
        %s207 = smul.addr %s206, 2
        %s208 = smul.addr %s204, 32
        %s209 = sadd.s32 %s207, %s208
        %s210 = smul.addr %s209, 4
        %s211 = scalar_lea.vmem %s3, %s210
        %p212 = scmp.lt.s32.totalorder %s20, 1
        %s213 = scalar_select %p212, %s20, 1
        %s214 = smul.addr %s213, 54
        %s215 = smul.addr %s214, 4
        %s216 = scalar_lea.vmem %s0, %s215
        %s217 = smul.u32 8, %s21
        %p218 = scmp.lt.s32.totalorder %s20, 1
        %s219 = scalar_select %p218, %s20, 1
        %p220 = scmp.lt.s32.totalorder %s217, 15
        %s221 = scalar_select %p220, %s217, 15
        %s222 = smul.addr %s221, 2
        %s223 = smul.addr %s219, 32
        %s224 = sadd.s32 %s222, %s223
        %s225 = smul.addr %s224, 4
        %s226 = scalar_lea.vmem %s3, %s225
        %s227 = smul.u32 8, %s21
        %s228 = smul.u32 %s21, 8
        %s229 = smul.u32 %s228, 3
        %s230 = smul.addr %s229, 4
        %s231 = scalar_lea.vmem %s216, %s230
        %v232 = vld [vmem:[%s231] sm:$0xf]
        %v233 = vld [vmem:[%s231 + $0x4] sm:$0xf]
        %v234 = vld [vmem:[%s231 + $0xc] sm:$0xf]
        %v235 = vld [vmem:[%s231 + $0x10] sm:$0xf]
        %v236 = vld [vmem:[%s231 + $0x18] sm:$0xf]
        %v237 = vld [vmem:[%s231 + $0x1c] sm:$0xf]
        %v238 = vld [vmem:[%s231 + $0x24] sm:$0xf]
        %v239 = vld [vmem:[%s231 + $0x28] sm:$0xf]
        %v240 = vld [vmem:[%s231 + $0x30] sm:$0xf]
        %v241 = vld [vmem:[%s231 + $0x34] sm:$0xf]
        %v242 = vld [vmem:[%s231 + $0x3c] sm:$0xf]
        %v243 = vld [vmem:[%s231 + $0x40] sm:$0xf]
        %v244 = vld [vmem:[%s231 + $0x48] sm:$0xf]
        %v245 = vld [vmem:[%s231 + $0x4c] sm:$0xf]
        %v246 = vld [vmem:[%s231 + $0x54] sm:$0xf]
        %v247 = vld [vmem:[%s231 + $0x58] sm:$0xf]
        %v248 = vld [vmem:[#allocation2] sm:$0xf]
        %v249 = vld [vmem:[#allocation2 + $0x4] sm:$0xf]
        %v250 = vld [vmem:[#allocation2 + $0x8] sm:$0xf]
        %v251 = vld [vmem:[#allocation2 + $0xc] sm:$0xf]
        %v252 = vld [vmem:[#allocation2 + $0x10] sm:$0xf]
        %v253 = vld [vmem:[#allocation2 + $0x14] sm:$0xf]
        %v254 = vld [vmem:[#allocation2 + $0x18] sm:$0xf]
        %v255 = vld [vmem:[#allocation2 + $0x1c] sm:$0xf]
        %v256 = vld [vmem:[#allocation2 + $0x20] sm:$0xf]
        %v257 = vld [vmem:[#allocation2 + $0x24] sm:$0xf]
        %v258 = vld [vmem:[#allocation2 + $0x28] sm:$0xf]
        %v259 = vld [vmem:[#allocation2 + $0x2c] sm:$0xf]
        %v260 = vld [vmem:[#allocation2 + $0x30] sm:$0xf]
        %v261 = vld [vmem:[#allocation2 + $0x34] sm:$0xf]
        %v262 = vld [vmem:[#allocation2 + $0x38] sm:$0xf]
        %v263 = vld [vmem:[#allocation2 + $0x3c] sm:$0xf]
        %v264 = vld [vmem:[%s231 + $0x8] sm:$0x1]
        %v265 = vld [vmem:[%s231 + $0x14] sm:$0x1]
        %v266 = vld [vmem:[%s231 + $0x20] sm:$0x1]
        %v267 = vld [vmem:[%s231 + $0x2c] sm:$0x1]
        %v268 = vld [vmem:[%s231 + $0x38] sm:$0x1]
        %v269 = vld [vmem:[%s231 + $0x44] sm:$0x1]
        %v270 = vld [vmem:[%s231 + $0x50] sm:$0x1]
        %v271 = vld [vmem:[%s231 + $0x5c] sm:$0x1]
        %vm272 = vsmask.f32 3328
        %vm273 = vsmask.f32 7440
        %vm274 = vmor %vm272, %vm273
        %v276 = vshrl.u32 %v232, 16
        %v278 = vrot.slane %v276, 4
        %v279 = vshll.u32 %v232, 16
        %v281 = vrot.slane %v279, 5
        %v282 = vor.u32 %v278, %v281
        %v283 = vrot.slane %v282, 4
        %v285 = vshll.u32 %v233, 16
        %v287 = vrot.slane %v285, 5
        %v288 = vsel %vm274, %v283, %v287
        %v289 = vshrl.u32 %v233, 16
        %v291 = vrot.slane %v289, 4
        %v292 = vor.u32 %v291, %v287
        %v293 = vrot.slane %v292, 4
        %v295 = vshll.u32 %v264, 16
        %v297 = vrot.slane %v295, 5
        %v298 = vsel %vm274, %v293, %v297
        %v300 = vshrl.u32 %v234, 16
        %v302 = vrot.slane %v300, 4
        %v303 = vshll.u32 %v234, 16
        %v305 = vrot.slane %v303, 5
        %v306 = vor.u32 %v302, %v305
        %v307 = vrot.slane %v306, 4
        %v309 = vshll.u32 %v235, 16
        %v311 = vrot.slane %v309, 5
        %v312 = vsel %vm274, %v307, %v311
        %v313 = vshrl.u32 %v235, 16
        %v315 = vrot.slane %v313, 4
        %v316 = vor.u32 %v315, %v311
        %v317 = vrot.slane %v316, 4
        %v319 = vshll.u32 %v265, 16
        %v321 = vrot.slane %v319, 5
        %v322 = vsel %vm274, %v317, %v321
        %v324 = vshrl.u32 %v236, 16
        %v326 = vrot.slane %v324, 4
        %v327 = vshll.u32 %v236, 16
        %v329 = vrot.slane %v327, 5
        %v330 = vor.u32 %v326, %v329
        %v331 = vrot.slane %v330, 4
        %v333 = vshll.u32 %v237, 16
        %v335 = vrot.slane %v333, 5
        %v336 = vsel %vm274, %v331, %v335
        %v337 = vshrl.u32 %v237, 16
        %v339 = vrot.slane %v337, 4
        %v340 = vor.u32 %v339, %v335
        %v341 = vrot.slane %v340, 4
        %v343 = vshll.u32 %v266, 16
        %v345 = vrot.slane %v343, 5
        %v346 = vsel %vm274, %v341, %v345
        %v348 = vshrl.u32 %v238, 16
        %v350 = vrot.slane %v348, 4
        %v351 = vshll.u32 %v238, 16
        %v353 = vrot.slane %v351, 5
        %v354 = vor.u32 %v350, %v353
        %v355 = vrot.slane %v354, 4
        %v357 = vshll.u32 %v239, 16
        %v359 = vrot.slane %v357, 5
        %v360 = vsel %vm274, %v355, %v359
        %v361 = vshrl.u32 %v239, 16
        %v363 = vrot.slane %v361, 4
        %v364 = vor.u32 %v363, %v359
        %v365 = vrot.slane %v364, 4
        %v367 = vshll.u32 %v267, 16
        %v369 = vrot.slane %v367, 5
        %v370 = vsel %vm274, %v365, %v369
        %v372 = vshrl.u32 %v240, 16
        %v374 = vrot.slane %v372, 4
        %v375 = vshll.u32 %v240, 16
        %v377 = vrot.slane %v375, 5
        %v378 = vor.u32 %v374, %v377
        %v379 = vrot.slane %v378, 4
        %v381 = vshll.u32 %v241, 16
        %v383 = vrot.slane %v381, 5
        %v384 = vsel %vm274, %v379, %v383
        %v385 = vshrl.u32 %v241, 16
        %v387 = vrot.slane %v385, 4
        %v388 = vor.u32 %v387, %v383
        %v389 = vrot.slane %v388, 4
        %v391 = vshll.u32 %v268, 16
        %v393 = vrot.slane %v391, 5
        %v394 = vsel %vm274, %v389, %v393
        %v396 = vshrl.u32 %v242, 16
        %v398 = vrot.slane %v396, 4
        %v399 = vshll.u32 %v242, 16
        %v401 = vrot.slane %v399, 5
        %v402 = vor.u32 %v398, %v401
        %v403 = vrot.slane %v402, 4
        %v405 = vshll.u32 %v243, 16
        %v407 = vrot.slane %v405, 5
        %v408 = vsel %vm274, %v403, %v407
        %v409 = vshrl.u32 %v243, 16
        %v411 = vrot.slane %v409, 4
        %v412 = vor.u32 %v411, %v407
        %v413 = vrot.slane %v412, 4
        %v415 = vshll.u32 %v269, 16
        %v417 = vrot.slane %v415, 5
        %v418 = vsel %vm274, %v413, %v417
        %v420 = vshrl.u32 %v244, 16
        %v422 = vrot.slane %v420, 4
        %v423 = vshll.u32 %v244, 16
        %v425 = vrot.slane %v423, 5
        %v426 = vor.u32 %v422, %v425
        %v427 = vrot.slane %v426, 4
        %v429 = vshll.u32 %v245, 16
        %v431 = vrot.slane %v429, 5
        %v432 = vsel %vm274, %v427, %v431
        %v433 = vshrl.u32 %v245, 16
        %v435 = vrot.slane %v433, 4
        %v436 = vor.u32 %v435, %v431
        %v437 = vrot.slane %v436, 4
        %v439 = vshll.u32 %v270, 16
        %v441 = vrot.slane %v439, 5
        %v442 = vsel %vm274, %v437, %v441
        %v444 = vshrl.u32 %v246, 16
        %v446 = vrot.slane %v444, 4
        %v447 = vshll.u32 %v246, 16
        %v449 = vrot.slane %v447, 5
        %v450 = vor.u32 %v446, %v449
        %v451 = vrot.slane %v450, 4
        %v453 = vshll.u32 %v247, 16
        %v455 = vrot.slane %v453, 5
        %v456 = vsel %vm274, %v451, %v455
        %v457 = vshrl.u32 %v247, 16
        %v459 = vrot.slane %v457, 4
        %v460 = vor.u32 %v459, %v455
        %v461 = vrot.slane %v460, 4
        %v463 = vshll.u32 %v271, 16
        %v465 = vrot.slane %v463, 5
        %v466 = vsel %vm274, %v461, %v465
        %s467 = scalar_lea.vmem [#allocation2], 64
        %v468 = vld [vmem:[%s467] sm:$0xf]
        %v469 = vld [vmem:[%s467 + $0x4] sm:$0xf]
        %v470 = vld [vmem:[%s467 + $0x8] sm:$0xf]
        %v471 = vld [vmem:[%s467 + $0xc] sm:$0xf]
        %v472 = vld [vmem:[%s467 + $0x10] sm:$0xf]
        %v473 = vld [vmem:[%s467 + $0x14] sm:$0xf]
        %v474 = vld [vmem:[%s467 + $0x18] sm:$0xf]
        %v475 = vld [vmem:[%s467 + $0x1c] sm:$0xf]
        %v476 = vld [vmem:[%s467 + $0x20] sm:$0xf]
        %v477 = vld [vmem:[%s467 + $0x24] sm:$0xf]
        %v478 = vld [vmem:[%s467 + $0x28] sm:$0xf]
        %v479 = vld [vmem:[%s467 + $0x2c] sm:$0xf]
        %v480 = vld [vmem:[%s467 + $0x30] sm:$0xf]
        %v481 = vld [vmem:[%s467 + $0x34] sm:$0xf]
        %v482 = vld [vmem:[%s467 + $0x38] sm:$0xf]
        %v483 = vld [vmem:[%s467 + $0x3c] sm:$0xf]
        %v484 = vunpack.c.l.b16 %v288
        %v485 = vunpack.c.l.b16 %v298
        %v486 = vunpack.c.l.b16 %v312
        %v487 = vunpack.c.l.b16 %v322
        %v488 = vunpack.c.l.b16 %v336
        %v489 = vunpack.c.l.b16 %v346
        %v490 = vunpack.c.l.b16 %v360
        %v491 = vunpack.c.l.b16 %v370
        %v492 = vunpack.c.l.b16 %v384
        %v493 = vunpack.c.l.b16 %v394
        %v494 = vunpack.c.l.b16 %v408
        %v495 = vunpack.c.l.b16 %v418
        %v496 = vunpack.c.l.b16 %v432
        %v497 = vunpack.c.l.b16 %v442
        %v498 = vunpack.c.l.b16 %v456
        %v499 = vunpack.c.l.b16 %v466
        %v500 = vpack.c.b16 %v485, %v484
        %v501 = vpack.c.b16 %v487, %v486
        %v502 = vpack.c.b16 %v489, %v488
        %v503 = vpack.c.b16 %v491, %v490
        %v504 = vpack.c.b16 %v493, %v492
        %v505 = vpack.c.b16 %v495, %v494
        %v506 = vpack.c.b16 %v497, %v496
        %v507 = vpack.c.b16 %v499, %v498
        %v532 = vunpack.c.l.b16 %v468
        %v533 = vunpack.c.l.b16 %v469
        %v534 = vunpack.c.l.b16 %v470
        %v535 = vunpack.c.l.b16 %v471
        %v536 = vunpack.c.l.b16 %v472
        %v537 = vunpack.c.l.b16 %v473
        %v538 = vunpack.c.l.b16 %v474
        %v539 = vunpack.c.l.b16 %v475
        %v540 = vunpack.c.l.b16 %v476
        %v541 = vunpack.c.l.b16 %v477
        %v542 = vunpack.c.l.b16 %v478
        %v543 = vunpack.c.l.b16 %v479
        %v544 = vunpack.c.l.b16 %v480
        %v545 = vunpack.c.l.b16 %v481
        %v546 = vunpack.c.l.b16 %v482
        %v547 = vunpack.c.l.b16 %v483
        %v548 = vpack.c.b16 %v533, %v532
        %v549 = vpack.c.b16 %v535, %v534
        %v550 = vpack.c.b16 %v537, %v536
        %v551 = vpack.c.b16 %v539, %v538
        %v552 = vpack.c.b16 %v541, %v540
        %v553 = vpack.c.b16 %v543, %v542
        %v554 = vpack.c.b16 %v545, %v544
        %v555 = vpack.c.b16 %v547, %v546
        %564 = vmatpush.bf16.msra.mxu0 %v555
        %565 = vmatpush.bf16.msra.mxu0 %v554
        %566 = vmatpush.bf16.msra.mxu0 %v553
        %567 = vmatpush.bf16.msra.mxu0 %v552
        %568 = vmatpush.bf16.msra.mxu0 %v551
        %569 = vmatpush.bf16.msra.mxu0 %v550
        %570 = vmatpush.bf16.msra.mxu0 %v549
        %571 = vmatpush.bf16.msra.mxu0 %v548
        %572 = vmatmul.bf16.gmra.mxu0 %v500
        %v573 = vpop.f32.mrf.mxu0
        %v574 = vadd.f32 0.0, %v573
        %v575 = vpop.f32.mrf.mxu0
        %v576 = vadd.f32 0.0, %v575
        %577 = vmatmul.bf16.gmra.mxu0 %v501
        %v578 = vpop.f32.mrf.mxu0
        %v579 = vadd.f32 0.0, %v578
        %v580 = vpop.f32.mrf.mxu0
        %v581 = vadd.f32 0.0, %v580
        %582 = vmatmul.bf16.gmra.mxu0 %v502
        %v583 = vpop.f32.mrf.mxu0
        %v584 = vadd.f32 0.0, %v583
        %v585 = vpop.f32.mrf.mxu0
        %v586 = vadd.f32 0.0, %v585
        %587 = vmatmul.bf16.gmra.mxu0 %v503
        %v588 = vpop.f32.mrf.mxu0
        %v589 = vadd.f32 0.0, %v588
        %v590 = vpop.f32.mrf.mxu0
        %v591 = vadd.f32 0.0, %v590
        %592 = vmatmul.bf16.gmra.mxu0 %v504
        %v593 = vpop.f32.mrf.mxu0
        %v594 = vadd.f32 0.0, %v593
        %v595 = vpop.f32.mrf.mxu0
        %v596 = vadd.f32 0.0, %v595
        %597 = vmatmul.bf16.gmra.mxu0 %v505
        %v598 = vpop.f32.mrf.mxu0
        %v599 = vadd.f32 0.0, %v598
        %v600 = vpop.f32.mrf.mxu0
        %v601 = vadd.f32 0.0, %v600
        %602 = vmatmul.bf16.gmra.mxu0 %v506
        %v603 = vpop.f32.mrf.mxu0
        %v604 = vadd.f32 0.0, %v603
        %v605 = vpop.f32.mrf.mxu0
        %v606 = vadd.f32 0.0, %v605
        %607 = vmatmul.bf16.gmra.mxu0 %v507
        %v608 = vpop.f32.mrf.mxu0
        %v609 = vadd.f32 0.0, %v608
        %v610 = vpop.f32.mrf.mxu0
        %v611 = vadd.f32 0.0, %v610
        %612 = vdwg.mxu0
        %v629 = vunpack.c.l.b16 %v232
        %v630 = vunpack.c.l.b16 %v233
        %v631 = vunpack.c.l.b16 %v234
        %v632 = vunpack.c.l.b16 %v235
        %v633 = vunpack.c.l.b16 %v236
        %v634 = vunpack.c.l.b16 %v237
        %v635 = vunpack.c.l.b16 %v238
        %v636 = vunpack.c.l.b16 %v239
        %v637 = vunpack.c.l.b16 %v240
        %v638 = vunpack.c.l.b16 %v241
        %v639 = vunpack.c.l.b16 %v242
        %v640 = vunpack.c.l.b16 %v243
        %v641 = vunpack.c.l.b16 %v244
        %v642 = vunpack.c.l.b16 %v245
        %v643 = vunpack.c.l.b16 %v246
        %v644 = vunpack.c.l.b16 %v247
        %v645 = vpack.c.b16 %v630, %v629
        %v646 = vpack.c.b16 %v632, %v631
        %v647 = vpack.c.b16 %v634, %v633
        %v648 = vpack.c.b16 %v636, %v635
        %v649 = vpack.c.b16 %v638, %v637
        %v650 = vpack.c.b16 %v640, %v639
        %v651 = vpack.c.b16 %v642, %v641
        %v652 = vpack.c.b16 %v644, %v643
        %v677 = vunpack.c.l.b16 %v248
        %v678 = vunpack.c.l.b16 %v249
        %v679 = vunpack.c.l.b16 %v250
        %v680 = vunpack.c.l.b16 %v251
        %v681 = vunpack.c.l.b16 %v252
        %v682 = vunpack.c.l.b16 %v253
        %v683 = vunpack.c.l.b16 %v254
        %v684 = vunpack.c.l.b16 %v255
        %v685 = vunpack.c.l.b16 %v256
        %v686 = vunpack.c.l.b16 %v257
        %v687 = vunpack.c.l.b16 %v258
        %v688 = vunpack.c.l.b16 %v259
        %v689 = vunpack.c.l.b16 %v260
        %v690 = vunpack.c.l.b16 %v261
        %v691 = vunpack.c.l.b16 %v262
        %v692 = vunpack.c.l.b16 %v263
        %v693 = vpack.c.b16 %v678, %v677
        %v694 = vpack.c.b16 %v680, %v679
        %v695 = vpack.c.b16 %v682, %v681
        %v696 = vpack.c.b16 %v684, %v683
        %v697 = vpack.c.b16 %v686, %v685
        %v698 = vpack.c.b16 %v688, %v687
        %v699 = vpack.c.b16 %v690, %v689
        %v700 = vpack.c.b16 %v692, %v691
        %709 = vmatpush.bf16.msra.mxu0 %v700
        %710 = vmatpush.bf16.msra.mxu0 %v699
        %711 = vmatpush.bf16.msra.mxu0 %v698
        %712 = vmatpush.bf16.msra.mxu0 %v697
        %713 = vmatpush.bf16.msra.mxu0 %v696
        %714 = vmatpush.bf16.msra.mxu0 %v695
        %715 = vmatpush.bf16.msra.mxu0 %v694
        %716 = vmatpush.bf16.msra.mxu0 %v693
        %717 = vmatmul.bf16.gmra.mxu0 %v645
        %v718 = vpop.f32.mrf.mxu0
        %v719 = vadd.f32 %v574, %v718
        %v720 = vpop.f32.mrf.mxu0
        %v721 = vadd.f32 %v576, %v720
        %722 = vmatmul.bf16.gmra.mxu0 %v646
        %v723 = vpop.f32.mrf.mxu0
        %v724 = vadd.f32 %v579, %v723
        %v725 = vpop.f32.mrf.mxu0
        %v726 = vadd.f32 %v581, %v725
        %727 = vmatmul.bf16.gmra.mxu0 %v647
        %v728 = vpop.f32.mrf.mxu0
        %v729 = vadd.f32 %v584, %v728
        %v730 = vpop.f32.mrf.mxu0
        %v731 = vadd.f32 %v586, %v730
        %732 = vmatmul.bf16.gmra.mxu0 %v648
        %v733 = vpop.f32.mrf.mxu0
        %v734 = vadd.f32 %v589, %v733
        %v735 = vpop.f32.mrf.mxu0
        %v736 = vadd.f32 %v591, %v735
        %737 = vmatmul.bf16.gmra.mxu0 %v649
        %v738 = vpop.f32.mrf.mxu0
        %v739 = vadd.f32 %v594, %v738
        %v740 = vpop.f32.mrf.mxu0
        %v741 = vadd.f32 %v596, %v740
        %742 = vmatmul.bf16.gmra.mxu0 %v650
        %v743 = vpop.f32.mrf.mxu0
        %v744 = vadd.f32 %v599, %v743
        %v745 = vpop.f32.mrf.mxu0
        %v746 = vadd.f32 %v601, %v745
        %747 = vmatmul.bf16.gmra.mxu0 %v651
        %v748 = vpop.f32.mrf.mxu0
        %v749 = vadd.f32 %v604, %v748
        %v750 = vpop.f32.mrf.mxu0
        %v751 = vadd.f32 %v606, %v750
        %752 = vmatmul.bf16.gmra.mxu0 %v652
        %v753 = vpop.f32.mrf.mxu0
        %v754 = vadd.f32 %v609, %v753
        %v755 = vpop.f32.mrf.mxu0
        %v756 = vadd.f32 %v611, %v755
        %757 = vdwg.mxu0
        %v758 = vld [vmem:[%s231] sm:$0xe]
        %v759 = vld [vmem:[%s231 + $0xc] sm:$0xe]
        %v760 = vld [vmem:[%s231 + $0x18] sm:$0xe]
        %v761 = vld [vmem:[%s231 + $0x24] sm:$0xe]
        %v762 = vld [vmem:[%s231 + $0x30] sm:$0xe]
        %v763 = vld [vmem:[%s231 + $0x3c] sm:$0xe]
        %v764 = vld [vmem:[%s231 + $0x48] sm:$0xe]
        %v765 = vld [vmem:[%s231 + $0x54] sm:$0xe]
        %vm782 = vcmask 1042432
        %vm783 = vcmask 1046532
        %vm784 = vmor %vm782, %vm783
        %v785 = vrot.slane %v758, 5
        %v786 = vrot.slane %v785, 4
        %v787 = vrot.slane %v233, 5
        %v788 = vsel %vm784, %v786, %v787
        %v789 = vrot.slane %v787, 4
        %v790 = vrot.slane %v264, 5
        %v791 = vsel %vm784, %v789, %v790
        %v792 = vrot.slane %v759, 5
        %v793 = vrot.slane %v792, 4
        %v794 = vrot.slane %v235, 5
        %v795 = vsel %vm784, %v793, %v794
        %v796 = vrot.slane %v794, 4
        %v797 = vrot.slane %v265, 5
        %v798 = vsel %vm784, %v796, %v797
        %v799 = vrot.slane %v760, 5
        %v800 = vrot.slane %v799, 4
        %v801 = vrot.slane %v237, 5
        %v802 = vsel %vm784, %v800, %v801
        %v803 = vrot.slane %v801, 4
        %v804 = vrot.slane %v266, 5
        %v805 = vsel %vm784, %v803, %v804
        %v806 = vrot.slane %v761, 5
        %v807 = vrot.slane %v806, 4
        %v808 = vrot.slane %v239, 5
        %v809 = vsel %vm784, %v807, %v808
        %v810 = vrot.slane %v808, 4
        %v811 = vrot.slane %v267, 5
        %v812 = vsel %vm784, %v810, %v811
        %v813 = vrot.slane %v762, 5
        %v814 = vrot.slane %v813, 4
        %v815 = vrot.slane %v241, 5
        %v816 = vsel %vm784, %v814, %v815
        %v817 = vrot.slane %v815, 4
        %v818 = vrot.slane %v268, 5
        %v819 = vsel %vm784, %v817, %v818
        %v820 = vrot.slane %v763, 5
        %v821 = vrot.slane %v820, 4
        %v822 = vrot.slane %v243, 5
        %v823 = vsel %vm784, %v821, %v822
        %v824 = vrot.slane %v822, 4
        %v825 = vrot.slane %v269, 5
        %v826 = vsel %vm784, %v824, %v825
        %v827 = vrot.slane %v764, 5
        %v828 = vrot.slane %v827, 4
        %v829 = vrot.slane %v245, 5
        %v830 = vsel %vm784, %v828, %v829
        %v831 = vrot.slane %v829, 4
        %v832 = vrot.slane %v270, 5
        %v833 = vsel %vm784, %v831, %v832
        %v834 = vrot.slane %v765, 5
        %v835 = vrot.slane %v834, 4
        %v836 = vrot.slane %v247, 5
        %v837 = vsel %vm784, %v835, %v836
        %v838 = vrot.slane %v836, 4
        %v839 = vrot.slane %v271, 5
        %v840 = vsel %vm784, %v838, %v839
        %s841 = scalar_lea.vmem [#allocation2], 128
        %v842 = vld [vmem:[%s841] sm:$0xf]
        %v843 = vld [vmem:[%s841 + $0x4] sm:$0xf]
        %v844 = vld [vmem:[%s841 + $0x8] sm:$0xf]
        %v845 = vld [vmem:[%s841 + $0xc] sm:$0xf]
        %v846 = vld [vmem:[%s841 + $0x10] sm:$0xf]
        %v847 = vld [vmem:[%s841 + $0x14] sm:$0xf]
        %v848 = vld [vmem:[%s841 + $0x18] sm:$0xf]
        %v849 = vld [vmem:[%s841 + $0x1c] sm:$0xf]
        %v850 = vld [vmem:[%s841 + $0x20] sm:$0xf]
        %v851 = vld [vmem:[%s841 + $0x24] sm:$0xf]
        %v852 = vld [vmem:[%s841 + $0x28] sm:$0xf]
        %v853 = vld [vmem:[%s841 + $0x2c] sm:$0xf]
        %v854 = vld [vmem:[%s841 + $0x30] sm:$0xf]
        %v855 = vld [vmem:[%s841 + $0x34] sm:$0xf]
        %v856 = vld [vmem:[%s841 + $0x38] sm:$0xf]
        %v857 = vld [vmem:[%s841 + $0x3c] sm:$0xf]
        %v858 = vunpack.c.l.b16 %v788
        %v859 = vunpack.c.l.b16 %v791
        %v860 = vunpack.c.l.b16 %v795
        %v861 = vunpack.c.l.b16 %v798
        %v862 = vunpack.c.l.b16 %v802
        %v863 = vunpack.c.l.b16 %v805
        %v864 = vunpack.c.l.b16 %v809
        %v865 = vunpack.c.l.b16 %v812
        %v866 = vunpack.c.l.b16 %v816
        %v867 = vunpack.c.l.b16 %v819
        %v868 = vunpack.c.l.b16 %v823
        %v869 = vunpack.c.l.b16 %v826
        %v870 = vunpack.c.l.b16 %v830
        %v871 = vunpack.c.l.b16 %v833
        %v872 = vunpack.c.l.b16 %v837
        %v873 = vunpack.c.l.b16 %v840
        %v874 = vpack.c.b16 %v859, %v858
        %v875 = vpack.c.b16 %v861, %v860
        %v876 = vpack.c.b16 %v863, %v862
        %v877 = vpack.c.b16 %v865, %v864
        %v878 = vpack.c.b16 %v867, %v866
        %v879 = vpack.c.b16 %v869, %v868
        %v880 = vpack.c.b16 %v871, %v870
        %v881 = vpack.c.b16 %v873, %v872
        %v906 = vunpack.c.l.b16 %v842
        %v907 = vunpack.c.l.b16 %v843
        %v908 = vunpack.c.l.b16 %v844
        %v909 = vunpack.c.l.b16 %v845
        %v910 = vunpack.c.l.b16 %v846
        %v911 = vunpack.c.l.b16 %v847
        %v912 = vunpack.c.l.b16 %v848
        %v913 = vunpack.c.l.b16 %v849
        %v914 = vunpack.c.l.b16 %v850
        %v915 = vunpack.c.l.b16 %v851
        %v916 = vunpack.c.l.b16 %v852
        %v917 = vunpack.c.l.b16 %v853
        %v918 = vunpack.c.l.b16 %v854
        %v919 = vunpack.c.l.b16 %v855
        %v920 = vunpack.c.l.b16 %v856
        %v921 = vunpack.c.l.b16 %v857
        %v922 = vpack.c.b16 %v907, %v906
        %v923 = vpack.c.b16 %v909, %v908
        %v924 = vpack.c.b16 %v911, %v910
        %v925 = vpack.c.b16 %v913, %v912
        %v926 = vpack.c.b16 %v915, %v914
        %v927 = vpack.c.b16 %v917, %v916
        %v928 = vpack.c.b16 %v919, %v918
        %v929 = vpack.c.b16 %v921, %v920
        %938 = vmatpush.bf16.msra.mxu0 %v929
        %939 = vmatpush.bf16.msra.mxu0 %v928
        %940 = vmatpush.bf16.msra.mxu0 %v927
        %941 = vmatpush.bf16.msra.mxu0 %v926
        %942 = vmatpush.bf16.msra.mxu0 %v925
        %943 = vmatpush.bf16.msra.mxu0 %v924
        %944 = vmatpush.bf16.msra.mxu0 %v923
        %945 = vmatpush.bf16.msra.mxu0 %v922
        %946 = vmatmul.bf16.gmra.mxu0 %v874
        %v947 = vpop.f32.mrf.mxu0
        %v948 = vadd.f32 0.0, %v947
        %v949 = vpop.f32.mrf.mxu0
        %v950 = vadd.f32 0.0, %v949
        %951 = vmatmul.bf16.gmra.mxu0 %v875
        %v952 = vpop.f32.mrf.mxu0
        %v953 = vadd.f32 0.0, %v952
        %v954 = vpop.f32.mrf.mxu0
        %v955 = vadd.f32 0.0, %v954
        %956 = vmatmul.bf16.gmra.mxu0 %v876
        %v957 = vpop.f32.mrf.mxu0
        %v958 = vadd.f32 0.0, %v957
        %v959 = vpop.f32.mrf.mxu0
        %v960 = vadd.f32 0.0, %v959
        %961 = vmatmul.bf16.gmra.mxu0 %v877
        %v962 = vpop.f32.mrf.mxu0
        %v963 = vadd.f32 0.0, %v962
        %v964 = vpop.f32.mrf.mxu0
        %v965 = vadd.f32 0.0, %v964
        %966 = vmatmul.bf16.gmra.mxu0 %v878
        %v967 = vpop.f32.mrf.mxu0
        %v968 = vadd.f32 0.0, %v967
        %v969 = vpop.f32.mrf.mxu0
        %v970 = vadd.f32 0.0, %v969
        %971 = vmatmul.bf16.gmra.mxu0 %v879
        %v972 = vpop.f32.mrf.mxu0
        %v973 = vadd.f32 0.0, %v972
        %v974 = vpop.f32.mrf.mxu0
        %v975 = vadd.f32 0.0, %v974
        %976 = vmatmul.bf16.gmra.mxu0 %v880
        %v977 = vpop.f32.mrf.mxu0
        %v978 = vadd.f32 0.0, %v977
        %v979 = vpop.f32.mrf.mxu0
        %v980 = vadd.f32 0.0, %v979
        %981 = vmatmul.bf16.gmra.mxu0 %v881
        %v982 = vpop.f32.mrf.mxu0
        %v983 = vadd.f32 0.0, %v982
        %v984 = vpop.f32.mrf.mxu0
        %v985 = vadd.f32 0.0, %v984
        %986 = vdwg.mxu0
        %v987 = vadd.f32 %v719, %v948
        %v988 = vadd.f32 %v721, %v950
        %v989 = vadd.f32 %v724, %v953
        %v990 = vadd.f32 %v726, %v955
        %v991 = vadd.f32 %v729, %v958
        %v992 = vadd.f32 %v731, %v960
        %v993 = vadd.f32 %v734, %v963
        %v994 = vadd.f32 %v736, %v965
        %v995 = vadd.f32 %v739, %v968
        %v996 = vadd.f32 %v741, %v970
        %v997 = vadd.f32 %v744, %v973
        %v998 = vadd.f32 %v746, %v975
        %v999 = vadd.f32 %v749, %v978
        %v1000 = vadd.f32 %v751, %v980
        %v1001 = vadd.f32 %v754, %v983
        %v1002 = vadd.f32 %v756, %v985
        %s1003 = sadd.s32 %s228, 1
        %s1004 = smul.u32 %s1003, 3
        %s1005 = smul.addr %s1004, 4
        %s1006 = scalar_lea.vmem %s216, %s1005
        %v1007 = vld [vmem:[%s1006] sm:$0xf]
        %v1008 = vld [vmem:[%s1006 + $0x4] sm:$0xf]
        %v1009 = vld [vmem:[%s1006 + $0xc] sm:$0xf]
        %v1010 = vld [vmem:[%s1006 + $0x10] sm:$0xf]
        %v1011 = vld [vmem:[%s1006 + $0x18] sm:$0xf]
        %v1012 = vld [vmem:[%s1006 + $0x1c] sm:$0xf]
        %v1013 = vld [vmem:[%s1006 + $0x24] sm:$0xf]
        %v1014 = vld [vmem:[%s1006 + $0x28] sm:$0xf]
        %v1015 = vld [vmem:[%s1006 + $0x30] sm:$0xf]
        %v1016 = vld [vmem:[%s1006 + $0x34] sm:$0xf]
        %v1017 = vld [vmem:[%s1006 + $0x3c] sm:$0xf]
        %v1018 = vld [vmem:[%s1006 + $0x40] sm:$0xf]
        %v1019 = vld [vmem:[%s1006 + $0x48] sm:$0xf]
        %v1020 = vld [vmem:[%s1006 + $0x4c] sm:$0xf]
        %v1021 = vld [vmem:[%s1006 + $0x54] sm:$0xf]
        %v1022 = vld [vmem:[%s1006 + $0x58] sm:$0xf]
        %s1023 = scalar_lea.vmem [#allocation2], 192
        %v1024 = vld [vmem:[%s1023] sm:$0xf]
        %v1025 = vld [vmem:[%s1023 + $0x4] sm:$0xf]
        %v1026 = vld [vmem:[%s1023 + $0x8] sm:$0xf]
        %v1027 = vld [vmem:[%s1023 + $0xc] sm:$0xf]
        %v1028 = vld [vmem:[%s1023 + $0x10] sm:$0xf]
        %v1029 = vld [vmem:[%s1023 + $0x14] sm:$0xf]
        %v1030 = vld [vmem:[%s1023 + $0x18] sm:$0xf]
        %v1031 = vld [vmem:[%s1023 + $0x1c] sm:$0xf]
        %v1032 = vld [vmem:[%s1023 + $0x20] sm:$0xf]
        %v1033 = vld [vmem:[%s1023 + $0x24] sm:$0xf]
        %v1034 = vld [vmem:[%s1023 + $0x28] sm:$0xf]
        %v1035 = vld [vmem:[%s1023 + $0x2c] sm:$0xf]
        %v1036 = vld [vmem:[%s1023 + $0x30] sm:$0xf]
        %v1037 = vld [vmem:[%s1023 + $0x34] sm:$0xf]
        %v1038 = vld [vmem:[%s1023 + $0x38] sm:$0xf]
        %v1039 = vld [vmem:[%s1023 + $0x3c] sm:$0xf]
        %v1056 = vunpack.c.l.b16 %v1007
        %v1057 = vunpack.c.l.b16 %v1008
        %v1058 = vunpack.c.l.b16 %v1009
        %v1059 = vunpack.c.l.b16 %v1010
        %v1060 = vunpack.c.l.b16 %v1011
        %v1061 = vunpack.c.l.b16 %v1012
        %v1062 = vunpack.c.l.b16 %v1013
        %v1063 = vunpack.c.l.b16 %v1014
        %v1064 = vunpack.c.l.b16 %v1015
        %v1065 = vunpack.c.l.b16 %v1016
        %v1066 = vunpack.c.l.b16 %v1017
        %v1067 = vunpack.c.l.b16 %v1018
        %v1068 = vunpack.c.l.b16 %v1019
        %v1069 = vunpack.c.l.b16 %v1020
        %v1070 = vunpack.c.l.b16 %v1021
        %v1071 = vunpack.c.l.b16 %v1022
        %v1072 = vpack.c.b16 %v1057, %v1056
        %v1073 = vpack.c.b16 %v1059, %v1058
        %v1074 = vpack.c.b16 %v1061, %v1060
        %v1075 = vpack.c.b16 %v1063, %v1062
        %v1076 = vpack.c.b16 %v1065, %v1064
        %v1077 = vpack.c.b16 %v1067, %v1066
        %v1078 = vpack.c.b16 %v1069, %v1068
        %v1079 = vpack.c.b16 %v1071, %v1070
        %v1104 = vunpack.c.l.b16 %v1024
        %v1105 = vunpack.c.l.b16 %v1025
        %v1106 = vunpack.c.l.b16 %v1026
        %v1107 = vunpack.c.l.b16 %v1027
        %v1108 = vunpack.c.l.b16 %v1028
        %v1109 = vunpack.c.l.b16 %v1029
        %v1110 = vunpack.c.l.b16 %v1030
        %v1111 = vunpack.c.l.b16 %v1031
        %v1112 = vunpack.c.l.b16 %v1032
        %v1113 = vunpack.c.l.b16 %v1033
        %v1114 = vunpack.c.l.b16 %v1034
        %v1115 = vunpack.c.l.b16 %v1035
        %v1116 = vunpack.c.l.b16 %v1036
        %v1117 = vunpack.c.l.b16 %v1037
        %v1118 = vunpack.c.l.b16 %v1038
        %v1119 = vunpack.c.l.b16 %v1039
        %v1120 = vpack.c.b16 %v1105, %v1104
        %v1121 = vpack.c.b16 %v1107, %v1106
        %v1122 = vpack.c.b16 %v1109, %v1108
        %v1123 = vpack.c.b16 %v1111, %v1110
        %v1124 = vpack.c.b16 %v1113, %v1112
        %v1125 = vpack.c.b16 %v1115, %v1114
        %v1126 = vpack.c.b16 %v1117, %v1116
        %v1127 = vpack.c.b16 %v1119, %v1118
        %1136 = vmatpush.bf16.msra.mxu0 %v1127
        %1137 = vmatpush.bf16.msra.mxu0 %v1126
        %1138 = vmatpush.bf16.msra.mxu0 %v1125
        %1139 = vmatpush.bf16.msra.mxu0 %v1124
        %1140 = vmatpush.bf16.msra.mxu0 %v1123
        %1141 = vmatpush.bf16.msra.mxu0 %v1122
        %1142 = vmatpush.bf16.msra.mxu0 %v1121
        %1143 = vmatpush.bf16.msra.mxu0 %v1120
        %1144 = vmatmul.bf16.gmra.mxu0 %v1072
        %v1145 = vpop.f32.mrf.mxu0
        %v1146 = vadd.f32 0.0, %v1145
        %v1147 = vpop.f32.mrf.mxu0
        %v1148 = vadd.f32 0.0, %v1147
        %1149 = vmatmul.bf16.gmra.mxu0 %v1073
        %v1150 = vpop.f32.mrf.mxu0
        %v1151 = vadd.f32 0.0, %v1150
        %v1152 = vpop.f32.mrf.mxu0
        %v1153 = vadd.f32 0.0, %v1152
        %1154 = vmatmul.bf16.gmra.mxu0 %v1074
        %v1155 = vpop.f32.mrf.mxu0
        %v1156 = vadd.f32 0.0, %v1155
        %v1157 = vpop.f32.mrf.mxu0
        %v1158 = vadd.f32 0.0, %v1157
        %1159 = vmatmul.bf16.gmra.mxu0 %v1075
        %v1160 = vpop.f32.mrf.mxu0
        %v1161 = vadd.f32 0.0, %v1160
        %v1162 = vpop.f32.mrf.mxu0
        %v1163 = vadd.f32 0.0, %v1162
        %1164 = vmatmul.bf16.gmra.mxu0 %v1076
        %v1165 = vpop.f32.mrf.mxu0
        %v1166 = vadd.f32 0.0, %v1165
        %v1167 = vpop.f32.mrf.mxu0
        %v1168 = vadd.f32 0.0, %v1167
        %1169 = vmatmul.bf16.gmra.mxu0 %v1077
        %v1170 = vpop.f32.mrf.mxu0
        %v1171 = vadd.f32 0.0, %v1170
        %v1172 = vpop.f32.mrf.mxu0
        %v1173 = vadd.f32 0.0, %v1172
        %1174 = vmatmul.bf16.gmra.mxu0 %v1078
        %v1175 = vpop.f32.mrf.mxu0
        %v1176 = vadd.f32 0.0, %v1175
        %v1177 = vpop.f32.mrf.mxu0
        %v1178 = vadd.f32 0.0, %v1177
        %1179 = vmatmul.bf16.gmra.mxu0 %v1079
        %v1180 = vpop.f32.mrf.mxu0
        %v1181 = vadd.f32 0.0, %v1180
        %v1182 = vpop.f32.mrf.mxu0
        %v1183 = vadd.f32 0.0, %v1182
        %1184 = vdwg.mxu0
        %v1185 = vadd.f32 %v987, %v1146
        %v1186 = vadd.f32 %v988, %v1148
        %v1187 = vadd.f32 %v989, %v1151
        %v1188 = vadd.f32 %v990, %v1153
        %v1189 = vadd.f32 %v991, %v1156
        %v1190 = vadd.f32 %v992, %v1158
        %v1191 = vadd.f32 %v993, %v1161
        %v1192 = vadd.f32 %v994, %v1163
        %v1193 = vadd.f32 %v995, %v1166
        %v1194 = vadd.f32 %v996, %v1168
        %v1195 = vadd.f32 %v997, %v1171
        %v1196 = vadd.f32 %v998, %v1173
        %v1197 = vadd.f32 %v999, %v1176
        %v1198 = vadd.f32 %v1000, %v1178
        %v1199 = vadd.f32 %v1001, %v1181
        %v1200 = vadd.f32 %v1002, %v1183
        %v1201 = vld [vmem:[%s1006] sm:$0xf]
        %v1202 = vld [vmem:[%s1006 + $0x4] sm:$0xf]
        %v1203 = vld [vmem:[%s1006 + $0x8] sm:$0x1]
        %v1204 = vld [vmem:[%s1006 + $0xc] sm:$0xf]
        %v1205 = vld [vmem:[%s1006 + $0x10] sm:$0xf]
        %v1206 = vld [vmem:[%s1006 + $0x14] sm:$0x1]
        %v1207 = vld [vmem:[%s1006 + $0x18] sm:$0xf]
        %v1208 = vld [vmem:[%s1006 + $0x1c] sm:$0xf]
        %v1209 = vld [vmem:[%s1006 + $0x20] sm:$0x1]
        %v1210 = vld [vmem:[%s1006 + $0x24] sm:$0xf]
        %v1211 = vld [vmem:[%s1006 + $0x28] sm:$0xf]
        %v1212 = vld [vmem:[%s1006 + $0x2c] sm:$0x1]
        %v1213 = vld [vmem:[%s1006 + $0x30] sm:$0xf]
        %v1214 = vld [vmem:[%s1006 + $0x34] sm:$0xf]
        %v1215 = vld [vmem:[%s1006 + $0x38] sm:$0x1]
        %v1216 = vld [vmem:[%s1006 + $0x3c] sm:$0xf]
        %v1217 = vld [vmem:[%s1006 + $0x40] sm:$0xf]
        %v1218 = vld [vmem:[%s1006 + $0x44] sm:$0x1]
        %v1219 = vld [vmem:[%s1006 + $0x48] sm:$0xf]
        %v1220 = vld [vmem:[%s1006 + $0x4c] sm:$0xf]
        %v1221 = vld [vmem:[%s1006 + $0x50] sm:$0x1]
        %v1222 = vld [vmem:[%s1006 + $0x54] sm:$0xf]
        %v1223 = vld [vmem:[%s1006 + $0x58] sm:$0xf]
        %v1224 = vld [vmem:[%s1006 + $0x5c] sm:$0x1]
        %v1226 = vshrl.u32 %v1201, 16
        %v1228 = vrot.slane %v1226, 4
        %v1229 = vshll.u32 %v1201, 16
        %v1231 = vrot.slane %v1229, 5
        %v1232 = vor.u32 %v1228, %v1231
        %v1233 = vrot.slane %v1232, 4
        %v1235 = vshll.u32 %v1202, 16
        %v1237 = vrot.slane %v1235, 5
        %v1238 = vsel %vm274, %v1233, %v1237
        %v1239 = vshrl.u32 %v1202, 16
        %v1241 = vrot.slane %v1239, 4
        %v1242 = vor.u32 %v1241, %v1237
        %v1243 = vrot.slane %v1242, 4
        %v1245 = vshll.u32 %v1203, 16
        %v1247 = vrot.slane %v1245, 5
        %v1248 = vsel %vm274, %v1243, %v1247
        %v1250 = vshrl.u32 %v1204, 16
        %v1252 = vrot.slane %v1250, 4
        %v1253 = vshll.u32 %v1204, 16
        %v1255 = vrot.slane %v1253, 5
        %v1256 = vor.u32 %v1252, %v1255
        %v1257 = vrot.slane %v1256, 4
        %v1259 = vshll.u32 %v1205, 16
        %v1261 = vrot.slane %v1259, 5
        %v1262 = vsel %vm274, %v1257, %v1261
        %v1263 = vshrl.u32 %v1205, 16
        %v1265 = vrot.slane %v1263, 4
        %v1266 = vor.u32 %v1265, %v1261
        %v1267 = vrot.slane %v1266, 4
        %v1269 = vshll.u32 %v1206, 16
        %v1271 = vrot.slane %v1269, 5
        %v1272 = vsel %vm274, %v1267, %v1271
        %v1274 = vshrl.u32 %v1207, 16
        %v1276 = vrot.slane %v1274, 4
        %v1277 = vshll.u32 %v1207, 16
        %v1279 = vrot.slane %v1277, 5
        %v1280 = vor.u32 %v1276, %v1279
        %v1281 = vrot.slane %v1280, 4
        %v1283 = vshll.u32 %v1208, 16
        %v1285 = vrot.slane %v1283, 5
        %v1286 = vsel %vm274, %v1281, %v1285
        %v1287 = vshrl.u32 %v1208, 16
        %v1289 = vrot.slane %v1287, 4
        %v1290 = vor.u32 %v1289, %v1285
        %v1291 = vrot.slane %v1290, 4
        %v1293 = vshll.u32 %v1209, 16
        %v1295 = vrot.slane %v1293, 5
        %v1296 = vsel %vm274, %v1291, %v1295
        %v1298 = vshrl.u32 %v1210, 16
        %v1300 = vrot.slane %v1298, 4
        %v1301 = vshll.u32 %v1210, 16
        %v1303 = vrot.slane %v1301, 5
        %v1304 = vor.u32 %v1300, %v1303
        %v1305 = vrot.slane %v1304, 4
        %v1307 = vshll.u32 %v1211, 16
        %v1309 = vrot.slane %v1307, 5
        %v1310 = vsel %vm274, %v1305, %v1309
        %v1311 = vshrl.u32 %v1211, 16
        %v1313 = vrot.slane %v1311, 4
        %v1314 = vor.u32 %v1313, %v1309
        %v1315 = vrot.slane %v1314, 4
        %v1317 = vshll.u32 %v1212, 16
        %v1319 = vrot.slane %v1317, 5
        %v1320 = vsel %vm274, %v1315, %v1319
        %v1322 = vshrl.u32 %v1213, 16
        %v1324 = vrot.slane %v1322, 4
        %v1325 = vshll.u32 %v1213, 16
        %v1327 = vrot.slane %v1325, 5
        %v1328 = vor.u32 %v1324, %v1327
        %v1329 = vrot.slane %v1328, 4
        %v1331 = vshll.u32 %v1214, 16
        %v1333 = vrot.slane %v1331, 5
        %v1334 = vsel %vm274, %v1329, %v1333
        %v1335 = vshrl.u32 %v1214, 16
        %v1337 = vrot.slane %v1335, 4
        %v1338 = vor.u32 %v1337, %v1333
        %v1339 = vrot.slane %v1338, 4
        %v1341 = vshll.u32 %v1215, 16
        %v1343 = vrot.slane %v1341, 5
        %v1344 = vsel %vm274, %v1339, %v1343
        %v1346 = vshrl.u32 %v1216, 16
        %v1348 = vrot.slane %v1346, 4
        %v1349 = vshll.u32 %v1216, 16
        %v1351 = vrot.slane %v1349, 5
        %v1352 = vor.u32 %v1348, %v1351
        %v1353 = vrot.slane %v1352, 4
        %v1355 = vshll.u32 %v1217, 16
        %v1357 = vrot.slane %v1355, 5
        %v1358 = vsel %vm274, %v1353, %v1357
        %v1359 = vshrl.u32 %v1217, 16
        %v1361 = vrot.slane %v1359, 4
        %v1362 = vor.u32 %v1361, %v1357
        %v1363 = vrot.slane %v1362, 4
        %v1365 = vshll.u32 %v1218, 16
        %v1367 = vrot.slane %v1365, 5
        %v1368 = vsel %vm274, %v1363, %v1367
        %v1370 = vshrl.u32 %v1219, 16
        %v1372 = vrot.slane %v1370, 4
        %v1373 = vshll.u32 %v1219, 16
        %v1375 = vrot.slane %v1373, 5
        %v1376 = vor.u32 %v1372, %v1375
        %v1377 = vrot.slane %v1376, 4
        %v1379 = vshll.u32 %v1220, 16
        %v1381 = vrot.slane %v1379, 5
        %v1382 = vsel %vm274, %v1377, %v1381
        %v1383 = vshrl.u32 %v1220, 16
        %v1385 = vrot.slane %v1383, 4
        %v1386 = vor.u32 %v1385, %v1381
        %v1387 = vrot.slane %v1386, 4
        %v1389 = vshll.u32 %v1221, 16
        %v1391 = vrot.slane %v1389, 5
        %v1392 = vsel %vm274, %v1387, %v1391
        %v1394 = vshrl.u32 %v1222, 16
        %v1396 = vrot.slane %v1394, 4
        %v1397 = vshll.u32 %v1222, 16
        %v1399 = vrot.slane %v1397, 5
        %v1400 = vor.u32 %v1396, %v1399
        %v1401 = vrot.slane %v1400, 4
        %v1403 = vshll.u32 %v1223, 16
        %v1405 = vrot.slane %v1403, 5
        %v1406 = vsel %vm274, %v1401, %v1405
        %v1407 = vshrl.u32 %v1223, 16
        %v1409 = vrot.slane %v1407, 4
        %v1410 = vor.u32 %v1409, %v1405
        %v1411 = vrot.slane %v1410, 4
        %v1413 = vshll.u32 %v1224, 16
        %v1415 = vrot.slane %v1413, 5
        %v1416 = vsel %vm274, %v1411, %v1415
        %s1417 = scalar_lea.vmem [#allocation2], 256
        %v1418 = vld [vmem:[%s1417] sm:$0xf]
        %v1419 = vld [vmem:[%s1417 + $0x4] sm:$0xf]
        %v1420 = vld [vmem:[%s1417 + $0x8] sm:$0xf]
        %v1421 = vld [vmem:[%s1417 + $0xc] sm:$0xf]
        %v1422 = vld [vmem:[%s1417 + $0x10] sm:$0xf]
        %v1423 = vld [vmem:[%s1417 + $0x14] sm:$0xf]
        %v1424 = vld [vmem:[%s1417 + $0x18] sm:$0xf]
        %v1425 = vld [vmem:[%s1417 + $0x1c] sm:$0xf]
        %v1426 = vld [vmem:[%s1417 + $0x20] sm:$0xf]
        %v1427 = vld [vmem:[%s1417 + $0x24] sm:$0xf]
        %v1428 = vld [vmem:[%s1417 + $0x28] sm:$0xf]
        %v1429 = vld [vmem:[%s1417 + $0x2c] sm:$0xf]
        %v1430 = vld [vmem:[%s1417 + $0x30] sm:$0xf]
        %v1431 = vld [vmem:[%s1417 + $0x34] sm:$0xf]
        %v1432 = vld [vmem:[%s1417 + $0x38] sm:$0xf]
        %v1433 = vld [vmem:[%s1417 + $0x3c] sm:$0xf]
        %v1434 = vunpack.c.l.b16 %v1238
        %v1435 = vunpack.c.l.b16 %v1248
        %v1436 = vunpack.c.l.b16 %v1262
        %v1437 = vunpack.c.l.b16 %v1272
        %v1438 = vunpack.c.l.b16 %v1286
        %v1439 = vunpack.c.l.b16 %v1296
        %v1440 = vunpack.c.l.b16 %v1310
        %v1441 = vunpack.c.l.b16 %v1320
        %v1442 = vunpack.c.l.b16 %v1334
        %v1443 = vunpack.c.l.b16 %v1344
        %v1444 = vunpack.c.l.b16 %v1358
        %v1445 = vunpack.c.l.b16 %v1368
        %v1446 = vunpack.c.l.b16 %v1382
        %v1447 = vunpack.c.l.b16 %v1392
        %v1448 = vunpack.c.l.b16 %v1406
        %v1449 = vunpack.c.l.b16 %v1416
        %v1450 = vpack.c.b16 %v1435, %v1434
        %v1451 = vpack.c.b16 %v1437, %v1436
        %v1452 = vpack.c.b16 %v1439, %v1438
        %v1453 = vpack.c.b16 %v1441, %v1440
        %v1454 = vpack.c.b16 %v1443, %v1442
        %v1455 = vpack.c.b16 %v1445, %v1444
        %v1456 = vpack.c.b16 %v1447, %v1446
        %v1457 = vpack.c.b16 %v1449, %v1448
        %v1482 = vunpack.c.l.b16 %v1418
        %v1483 = vunpack.c.l.b16 %v1419
        %v1484 = vunpack.c.l.b16 %v1420
        %v1485 = vunpack.c.l.b16 %v1421
        %v1486 = vunpack.c.l.b16 %v1422
        %v1487 = vunpack.c.l.b16 %v1423
        %v1488 = vunpack.c.l.b16 %v1424
        %v1489 = vunpack.c.l.b16 %v1425
        %v1490 = vunpack.c.l.b16 %v1426
        %v1491 = vunpack.c.l.b16 %v1427
        %v1492 = vunpack.c.l.b16 %v1428
        %v1493 = vunpack.c.l.b16 %v1429
        %v1494 = vunpack.c.l.b16 %v1430
        %v1495 = vunpack.c.l.b16 %v1431
        %v1496 = vunpack.c.l.b16 %v1432
        %v1497 = vunpack.c.l.b16 %v1433
        %v1498 = vpack.c.b16 %v1483, %v1482
        %v1499 = vpack.c.b16 %v1485, %v1484
        %v1500 = vpack.c.b16 %v1487, %v1486
        %v1501 = vpack.c.b16 %v1489, %v1488
        %v1502 = vpack.c.b16 %v1491, %v1490
        %v1503 = vpack.c.b16 %v1493, %v1492
        %v1504 = vpack.c.b16 %v1495, %v1494
        %v1505 = vpack.c.b16 %v1497, %v1496
        %1514 = vmatpush.bf16.msra.mxu0 %v1505
        %1515 = vmatpush.bf16.msra.mxu0 %v1504
        %1516 = vmatpush.bf16.msra.mxu0 %v1503
        %1517 = vmatpush.bf16.msra.mxu0 %v1502
        %1518 = vmatpush.bf16.msra.mxu0 %v1501
        %1519 = vmatpush.bf16.msra.mxu0 %v1500
        %1520 = vmatpush.bf16.msra.mxu0 %v1499
        %1521 = vmatpush.bf16.msra.mxu0 %v1498
        %1522 = vmatmul.bf16.gmra.mxu0 %v1450
        %v1523 = vpop.f32.mrf.mxu0
        %v1524 = vadd.f32 0.0, %v1523
        %v1525 = vpop.f32.mrf.mxu0
        %v1526 = vadd.f32 0.0, %v1525
        %1527 = vmatmul.bf16.gmra.mxu0 %v1451
        %v1528 = vpop.f32.mrf.mxu0
        %v1529 = vadd.f32 0.0, %v1528
        %v1530 = vpop.f32.mrf.mxu0
        %v1531 = vadd.f32 0.0, %v1530
        %1532 = vmatmul.bf16.gmra.mxu0 %v1452
        %v1533 = vpop.f32.mrf.mxu0
        %v1534 = vadd.f32 0.0, %v1533
        %v1535 = vpop.f32.mrf.mxu0
        %v1536 = vadd.f32 0.0, %v1535
        %1537 = vmatmul.bf16.gmra.mxu0 %v1453
        %v1538 = vpop.f32.mrf.mxu0
        %v1539 = vadd.f32 0.0, %v1538
        %v1540 = vpop.f32.mrf.mxu0
        %v1541 = vadd.f32 0.0, %v1540
        %1542 = vmatmul.bf16.gmra.mxu0 %v1454
        %v1543 = vpop.f32.mrf.mxu0
        %v1544 = vadd.f32 0.0, %v1543
        %v1545 = vpop.f32.mrf.mxu0
        %v1546 = vadd.f32 0.0, %v1545
        %1547 = vmatmul.bf16.gmra.mxu0 %v1455
        %v1548 = vpop.f32.mrf.mxu0
        %v1549 = vadd.f32 0.0, %v1548
        %v1550 = vpop.f32.mrf.mxu0
        %v1551 = vadd.f32 0.0, %v1550
        %1552 = vmatmul.bf16.gmra.mxu0 %v1456
        %v1553 = vpop.f32.mrf.mxu0
        %v1554 = vadd.f32 0.0, %v1553
        %v1555 = vpop.f32.mrf.mxu0
        %v1556 = vadd.f32 0.0, %v1555
        %1557 = vmatmul.bf16.gmra.mxu0 %v1457
        %v1558 = vpop.f32.mrf.mxu0
        %v1559 = vadd.f32 0.0, %v1558
        %v1560 = vpop.f32.mrf.mxu0
        %v1561 = vadd.f32 0.0, %v1560
        %1562 = vdwg.mxu0
        %v1563 = vadd.f32 %v1185, %v1524
        %v1564 = vadd.f32 %v1186, %v1526
        %v1565 = vadd.f32 %v1187, %v1529
        %v1566 = vadd.f32 %v1188, %v1531
        %v1567 = vadd.f32 %v1189, %v1534
        %v1568 = vadd.f32 %v1190, %v1536
        %v1569 = vadd.f32 %v1191, %v1539
        %v1570 = vadd.f32 %v1192, %v1541
        %v1571 = vadd.f32 %v1193, %v1544
        %v1572 = vadd.f32 %v1194, %v1546
        %v1573 = vadd.f32 %v1195, %v1549
        %v1574 = vadd.f32 %v1196, %v1551
        %v1575 = vadd.f32 %v1197, %v1554
        %v1576 = vadd.f32 %v1198, %v1556
        %v1577 = vadd.f32 %v1199, %v1559
        %v1578 = vadd.f32 %v1200, %v1561
        %v1579 = vld [vmem:[%s1006] sm:$0xe]
        %v1580 = vld [vmem:[%s1006 + $0xc] sm:$0xe]
        %v1581 = vld [vmem:[%s1006 + $0x18] sm:$0xe]
        %v1582 = vld [vmem:[%s1006 + $0x24] sm:$0xe]
        %v1583 = vld [vmem:[%s1006 + $0x30] sm:$0xe]
        %v1584 = vld [vmem:[%s1006 + $0x3c] sm:$0xe]
        %v1585 = vld [vmem:[%s1006 + $0x48] sm:$0xe]
        %v1586 = vld [vmem:[%s1006 + $0x54] sm:$0xe]
        %v1611 = vrot.slane %v1579, 5
        %v1612 = vrot.slane %v1611, 4
        %v1613 = vrot.slane %v1202, 5
        %v1614 = vsel %vm784, %v1612, %v1613
        %v1615 = vrot.slane %v1613, 4
        %v1616 = vrot.slane %v1203, 5
        %v1617 = vsel %vm784, %v1615, %v1616
        %v1618 = vrot.slane %v1580, 5
        %v1619 = vrot.slane %v1618, 4
        %v1620 = vrot.slane %v1205, 5
        %v1621 = vsel %vm784, %v1619, %v1620
        %v1622 = vrot.slane %v1620, 4
        %v1623 = vrot.slane %v1206, 5
        %v1624 = vsel %vm784, %v1622, %v1623
        %v1625 = vrot.slane %v1581, 5
        %v1626 = vrot.slane %v1625, 4
        %v1627 = vrot.slane %v1208, 5
        %v1628 = vsel %vm784, %v1626, %v1627
        %v1629 = vrot.slane %v1627, 4
        %v1630 = vrot.slane %v1209, 5
        %v1631 = vsel %vm784, %v1629, %v1630
        %v1632 = vrot.slane %v1582, 5
        %v1633 = vrot.slane %v1632, 4
        %v1634 = vrot.slane %v1211, 5
        %v1635 = vsel %vm784, %v1633, %v1634
        %v1636 = vrot.slane %v1634, 4
        %v1637 = vrot.slane %v1212, 5
        %v1638 = vsel %vm784, %v1636, %v1637
        %v1639 = vrot.slane %v1583, 5
        %v1640 = vrot.slane %v1639, 4
        %v1641 = vrot.slane %v1214, 5
        %v1642 = vsel %vm784, %v1640, %v1641
        %v1643 = vrot.slane %v1641, 4
        %v1644 = vrot.slane %v1215, 5
        %v1645 = vsel %vm784, %v1643, %v1644
        %v1646 = vrot.slane %v1584, 5
        %v1647 = vrot.slane %v1646, 4
        %v1648 = vrot.slane %v1217, 5
        %v1649 = vsel %vm784, %v1647, %v1648
        %v1650 = vrot.slane %v1648, 4
        %v1651 = vrot.slane %v1218, 5
        %v1652 = vsel %vm784, %v1650, %v1651
        %v1653 = vrot.slane %v1585, 5
        %v1654 = vrot.slane %v1653, 4
        %v1655 = vrot.slane %v1220, 5
        %v1656 = vsel %vm784, %v1654, %v1655
        %v1657 = vrot.slane %v1655, 4
        %v1658 = vrot.slane %v1221, 5
        %v1659 = vsel %vm784, %v1657, %v1658
        %v1660 = vrot.slane %v1586, 5
        %v1661 = vrot.slane %v1660, 4
        %v1662 = vrot.slane %v1223, 5
        %v1663 = vsel %vm784, %v1661, %v1662
        %v1664 = vrot.slane %v1662, 4
        %v1665 = vrot.slane %v1224, 5
        %v1666 = vsel %vm784, %v1664, %v1665
        %s1667 = scalar_lea.vmem [#allocation2], 320
        %v1668 = vld [vmem:[%s1667] sm:$0xf]
        %v1669 = vld [vmem:[%s1667 + $0x4] sm:$0xf]
        %v1670 = vld [vmem:[%s1667 + $0x8] sm:$0xf]
        %v1671 = vld [vmem:[%s1667 + $0xc] sm:$0xf]
        %v1672 = vld [vmem:[%s1667 + $0x10] sm:$0xf]
        %v1673 = vld [vmem:[%s1667 + $0x14] sm:$0xf]
        %v1674 = vld [vmem:[%s1667 + $0x18] sm:$0xf]
        %v1675 = vld [vmem:[%s1667 + $0x1c] sm:$0xf]
        %v1676 = vld [vmem:[%s1667 + $0x20] sm:$0xf]
        %v1677 = vld [vmem:[%s1667 + $0x24] sm:$0xf]
        %v1678 = vld [vmem:[%s1667 + $0x28] sm:$0xf]
        %v1679 = vld [vmem:[%s1667 + $0x2c] sm:$0xf]
        %v1680 = vld [vmem:[%s1667 + $0x30] sm:$0xf]
        %v1681 = vld [vmem:[%s1667 + $0x34] sm:$0xf]
        %v1682 = vld [vmem:[%s1667 + $0x38] sm:$0xf]
        %v1683 = vld [vmem:[%s1667 + $0x3c] sm:$0xf]
        %v1684 = vunpack.c.l.b16 %v1614
        %v1685 = vunpack.c.l.b16 %v1617
        %v1686 = vunpack.c.l.b16 %v1621
        %v1687 = vunpack.c.l.b16 %v1624
        %v1688 = vunpack.c.l.b16 %v1628
        %v1689 = vunpack.c.l.b16 %v1631
        %v1690 = vunpack.c.l.b16 %v1635
        %v1691 = vunpack.c.l.b16 %v1638
        %v1692 = vunpack.c.l.b16 %v1642
        %v1693 = vunpack.c.l.b16 %v1645
        %v1694 = vunpack.c.l.b16 %v1649
        %v1695 = vunpack.c.l.b16 %v1652
        %v1696 = vunpack.c.l.b16 %v1656
        %v1697 = vunpack.c.l.b16 %v1659
        %v1698 = vunpack.c.l.b16 %v1663
        %v1699 = vunpack.c.l.b16 %v1666
        %v1700 = vpack.c.b16 %v1685, %v1684
        %v1701 = vpack.c.b16 %v1687, %v1686
        %v1702 = vpack.c.b16 %v1689, %v1688
        %v1703 = vpack.c.b16 %v1691, %v1690
        %v1704 = vpack.c.b16 %v1693, %v1692
        %v1705 = vpack.c.b16 %v1695, %v1694
        %v1706 = vpack.c.b16 %v1697, %v1696
        %v1707 = vpack.c.b16 %v1699, %v1698
        %v1732 = vunpack.c.l.b16 %v1668
        %v1733 = vunpack.c.l.b16 %v1669
        %v1734 = vunpack.c.l.b16 %v1670
        %v1735 = vunpack.c.l.b16 %v1671
        %v1736 = vunpack.c.l.b16 %v1672
        %v1737 = vunpack.c.l.b16 %v1673
        %v1738 = vunpack.c.l.b16 %v1674
        %v1739 = vunpack.c.l.b16 %v1675
        %v1740 = vunpack.c.l.b16 %v1676
        %v1741 = vunpack.c.l.b16 %v1677
        %v1742 = vunpack.c.l.b16 %v1678
        %v1743 = vunpack.c.l.b16 %v1679
        %v1744 = vunpack.c.l.b16 %v1680
        %v1745 = vunpack.c.l.b16 %v1681
        %v1746 = vunpack.c.l.b16 %v1682
        %v1747 = vunpack.c.l.b16 %v1683
        %v1748 = vpack.c.b16 %v1733, %v1732
        %v1749 = vpack.c.b16 %v1735, %v1734
        %v1750 = vpack.c.b16 %v1737, %v1736
        %v1751 = vpack.c.b16 %v1739, %v1738
        %v1752 = vpack.c.b16 %v1741, %v1740
        %v1753 = vpack.c.b16 %v1743, %v1742
        %v1754 = vpack.c.b16 %v1745, %v1744
        %v1755 = vpack.c.b16 %v1747, %v1746
        %1764 = vmatpush.bf16.msra.mxu0 %v1755
        %1765 = vmatpush.bf16.msra.mxu0 %v1754
        %1766 = vmatpush.bf16.msra.mxu0 %v1753
        %1767 = vmatpush.bf16.msra.mxu0 %v1752
        %1768 = vmatpush.bf16.msra.mxu0 %v1751
        %1769 = vmatpush.bf16.msra.mxu0 %v1750
        %1770 = vmatpush.bf16.msra.mxu0 %v1749
        %1771 = vmatpush.bf16.msra.mxu0 %v1748
        %1772 = vmatmul.bf16.gmra.mxu0 %v1700
        %v1773 = vpop.f32.mrf.mxu0
        %v1774 = vadd.f32 0.0, %v1773
        %v1775 = vpop.f32.mrf.mxu0
        %v1776 = vadd.f32 0.0, %v1775
        %1777 = vmatmul.bf16.gmra.mxu0 %v1701
        %v1778 = vpop.f32.mrf.mxu0
        %v1779 = vadd.f32 0.0, %v1778
        %v1780 = vpop.f32.mrf.mxu0
        %v1781 = vadd.f32 0.0, %v1780
        %1782 = vmatmul.bf16.gmra.mxu0 %v1702
        %v1783 = vpop.f32.mrf.mxu0
        %v1784 = vadd.f32 0.0, %v1783
        %v1785 = vpop.f32.mrf.mxu0
        %v1786 = vadd.f32 0.0, %v1785
        %1787 = vmatmul.bf16.gmra.mxu0 %v1703
        %v1788 = vpop.f32.mrf.mxu0
        %v1789 = vadd.f32 0.0, %v1788
        %v1790 = vpop.f32.mrf.mxu0
        %v1791 = vadd.f32 0.0, %v1790
        %1792 = vmatmul.bf16.gmra.mxu0 %v1704
        %v1793 = vpop.f32.mrf.mxu0
        %v1794 = vadd.f32 0.0, %v1793
        %v1795 = vpop.f32.mrf.mxu0
        %v1796 = vadd.f32 0.0, %v1795
        %1797 = vmatmul.bf16.gmra.mxu0 %v1705
        %v1798 = vpop.f32.mrf.mxu0
        %v1799 = vadd.f32 0.0, %v1798
        %v1800 = vpop.f32.mrf.mxu0
        %v1801 = vadd.f32 0.0, %v1800
        %1802 = vmatmul.bf16.gmra.mxu0 %v1706
        %v1803 = vpop.f32.mrf.mxu0
        %v1804 = vadd.f32 0.0, %v1803
        %v1805 = vpop.f32.mrf.mxu0
        %v1806 = vadd.f32 0.0, %v1805
        %1807 = vmatmul.bf16.gmra.mxu0 %v1707
        %v1808 = vpop.f32.mrf.mxu0
        %v1809 = vadd.f32 0.0, %v1808
        %v1810 = vpop.f32.mrf.mxu0
        %v1811 = vadd.f32 0.0, %v1810
        %1812 = vdwg.mxu0
        %v1813 = vadd.f32 %v1563, %v1774
        %v1814 = vadd.f32 %v1564, %v1776
        %v1815 = vadd.f32 %v1565, %v1779
        %v1816 = vadd.f32 %v1566, %v1781
        %v1817 = vadd.f32 %v1567, %v1784
        %v1818 = vadd.f32 %v1568, %v1786
        %v1819 = vadd.f32 %v1569, %v1789
        %v1820 = vadd.f32 %v1570, %v1791
        %v1821 = vadd.f32 %v1571, %v1794
        %v1822 = vadd.f32 %v1572, %v1796
        %v1823 = vadd.f32 %v1573, %v1799
        %v1824 = vadd.f32 %v1574, %v1801
        %v1825 = vadd.f32 %v1575, %v1804
        %v1826 = vadd.f32 %v1576, %v1806
        %v1827 = vadd.f32 %v1577, %v1809
        %v1828 = vadd.f32 %v1578, %v1811
        %s1829 = sadd.s32 %s228, 2
        %s1830 = smul.u32 %s1829, 3
        %s1831 = smul.addr %s1830, 4
        %s1832 = scalar_lea.vmem %s216, %s1831
        %v1833 = vld [vmem:[%s1832] sm:$0xf]
        %v1834 = vld [vmem:[%s1832 + $0x4] sm:$0xf]
        %v1835 = vld [vmem:[%s1832 + $0xc] sm:$0xf]
        %v1836 = vld [vmem:[%s1832 + $0x10] sm:$0xf]
        %v1837 = vld [vmem:[%s1832 + $0x18] sm:$0xf]
        %v1838 = vld [vmem:[%s1832 + $0x1c] sm:$0xf]
        %v1839 = vld [vmem:[%s1832 + $0x24] sm:$0xf]
        %v1840 = vld [vmem:[%s1832 + $0x28] sm:$0xf]
        %v1841 = vld [vmem:[%s1832 + $0x30] sm:$0xf]
        %v1842 = vld [vmem:[%s1832 + $0x34] sm:$0xf]
        %v1843 = vld [vmem:[%s1832 + $0x3c] sm:$0xf]
        %v1844 = vld [vmem:[%s1832 + $0x40] sm:$0xf]
        %v1845 = vld [vmem:[%s1832 + $0x48] sm:$0xf]
        %v1846 = vld [vmem:[%s1832 + $0x4c] sm:$0xf]
        %v1847 = vld [vmem:[%s1832 + $0x54] sm:$0xf]
        %v1848 = vld [vmem:[%s1832 + $0x58] sm:$0xf]
        %s1849 = scalar_lea.vmem [#allocation2], 384
        %v1850 = vld [vmem:[%s1849] sm:$0xf]
        %v1851 = vld [vmem:[%s1849 + $0x4] sm:$0xf]
        %v1852 = vld [vmem:[%s1849 + $0x8] sm:$0xf]
        %v1853 = vld [vmem:[%s1849 + $0xc] sm:$0xf]
        %v1854 = vld [vmem:[%s1849 + $0x10] sm:$0xf]
        %v1855 = vld [vmem:[%s1849 + $0x14] sm:$0xf]
        %v1856 = vld [vmem:[%s1849 + $0x18] sm:$0xf]
        %v1857 = vld [vmem:[%s1849 + $0x1c] sm:$0xf]
        %v1858 = vld [vmem:[%s1849 + $0x20] sm:$0xf]
        %v1859 = vld [vmem:[%s1849 + $0x24] sm:$0xf]
        %v1860 = vld [vmem:[%s1849 + $0x28] sm:$0xf]
        %v1861 = vld [vmem:[%s1849 + $0x2c] sm:$0xf]
        %v1862 = vld [vmem:[%s1849 + $0x30] sm:$0xf]
        %v1863 = vld [vmem:[%s1849 + $0x34] sm:$0xf]
        %v1864 = vld [vmem:[%s1849 + $0x38] sm:$0xf]
        %v1865 = vld [vmem:[%s1849 + $0x3c] sm:$0xf]
        %v1882 = vunpack.c.l.b16 %v1833
        %v1883 = vunpack.c.l.b16 %v1834
        %v1884 = vunpack.c.l.b16 %v1835
        %v1885 = vunpack.c.l.b16 %v1836
        %v1886 = vunpack.c.l.b16 %v1837
        %v1887 = vunpack.c.l.b16 %v1838
        %v1888 = vunpack.c.l.b16 %v1839
        %v1889 = vunpack.c.l.b16 %v1840
        %v1890 = vunpack.c.l.b16 %v1841
        %v1891 = vunpack.c.l.b16 %v1842
        %v1892 = vunpack.c.l.b16 %v1843
        %v1893 = vunpack.c.l.b16 %v1844
        %v1894 = vunpack.c.l.b16 %v1845
        %v1895 = vunpack.c.l.b16 %v1846
        %v1896 = vunpack.c.l.b16 %v1847
        %v1897 = vunpack.c.l.b16 %v1848
        %v1898 = vpack.c.b16 %v1883, %v1882
        %v1899 = vpack.c.b16 %v1885, %v1884
        %v1900 = vpack.c.b16 %v1887, %v1886
        %v1901 = vpack.c.b16 %v1889, %v1888
        %v1902 = vpack.c.b16 %v1891, %v1890
        %v1903 = vpack.c.b16 %v1893, %v1892
        %v1904 = vpack.c.b16 %v1895, %v1894
        %v1905 = vpack.c.b16 %v1897, %v1896
        %v1930 = vunpack.c.l.b16 %v1850
        %v1931 = vunpack.c.l.b16 %v1851
        %v1932 = vunpack.c.l.b16 %v1852
        %v1933 = vunpack.c.l.b16 %v1853
        %v1934 = vunpack.c.l.b16 %v1854
        %v1935 = vunpack.c.l.b16 %v1855
        %v1936 = vunpack.c.l.b16 %v1856
        %v1937 = vunpack.c.l.b16 %v1857
        %v1938 = vunpack.c.l.b16 %v1858
        %v1939 = vunpack.c.l.b16 %v1859
        %v1940 = vunpack.c.l.b16 %v1860
        %v1941 = vunpack.c.l.b16 %v1861
        %v1942 = vunpack.c.l.b16 %v1862
        %v1943 = vunpack.c.l.b16 %v1863
        %v1944 = vunpack.c.l.b16 %v1864
        %v1945 = vunpack.c.l.b16 %v1865
        %v1946 = vpack.c.b16 %v1931, %v1930
        %v1947 = vpack.c.b16 %v1933, %v1932
        %v1948 = vpack.c.b16 %v1935, %v1934
        %v1949 = vpack.c.b16 %v1937, %v1936
        %v1950 = vpack.c.b16 %v1939, %v1938
        %v1951 = vpack.c.b16 %v1941, %v1940
        %v1952 = vpack.c.b16 %v1943, %v1942
        %v1953 = vpack.c.b16 %v1945, %v1944
        %1962 = vmatpush.bf16.msra.mxu0 %v1953
        %1963 = vmatpush.bf16.msra.mxu0 %v1952
        %1964 = vmatpush.bf16.msra.mxu0 %v1951
        %1965 = vmatpush.bf16.msra.mxu0 %v1950
        %1966 = vmatpush.bf16.msra.mxu0 %v1949
        %1967 = vmatpush.bf16.msra.mxu0 %v1948
        %1968 = vmatpush.bf16.msra.mxu0 %v1947
        %1969 = vmatpush.bf16.msra.mxu0 %v1946
        %1970 = vmatmul.bf16.gmra.mxu0 %v1898
        %v1971 = vpop.f32.mrf.mxu0
        %v1972 = vadd.f32 0.0, %v1971
        %v1973 = vpop.f32.mrf.mxu0
        %v1974 = vadd.f32 0.0, %v1973
        %1975 = vmatmul.bf16.gmra.mxu0 %v1899
        %v1976 = vpop.f32.mrf.mxu0
        %v1977 = vadd.f32 0.0, %v1976
        %v1978 = vpop.f32.mrf.mxu0
        %v1979 = vadd.f32 0.0, %v1978
        %1980 = vmatmul.bf16.gmra.mxu0 %v1900
        %v1981 = vpop.f32.mrf.mxu0
        %v1982 = vadd.f32 0.0, %v1981
        %v1983 = vpop.f32.mrf.mxu0
        %v1984 = vadd.f32 0.0, %v1983
        %1985 = vmatmul.bf16.gmra.mxu0 %v1901
        %v1986 = vpop.f32.mrf.mxu0
        %v1987 = vadd.f32 0.0, %v1986
        %v1988 = vpop.f32.mrf.mxu0
        %v1989 = vadd.f32 0.0, %v1988
        %1990 = vmatmul.bf16.gmra.mxu0 %v1902
        %v1991 = vpop.f32.mrf.mxu0
        %v1992 = vadd.f32 0.0, %v1991
        %v1993 = vpop.f32.mrf.mxu0
        %v1994 = vadd.f32 0.0, %v1993
        %1995 = vmatmul.bf16.gmra.mxu0 %v1903
        %v1996 = vpop.f32.mrf.mxu0
        %v1997 = vadd.f32 0.0, %v1996
        %v1998 = vpop.f32.mrf.mxu0
        %v1999 = vadd.f32 0.0, %v1998
        %2000 = vmatmul.bf16.gmra.mxu0 %v1904
        %v2001 = vpop.f32.mrf.mxu0
        %v2002 = vadd.f32 0.0, %v2001
        %v2003 = vpop.f32.mrf.mxu0
        %v2004 = vadd.f32 0.0, %v2003
        %2005 = vmatmul.bf16.gmra.mxu0 %v1905
        %v2006 = vpop.f32.mrf.mxu0
        %v2007 = vadd.f32 0.0, %v2006
        %v2008 = vpop.f32.mrf.mxu0
        %v2009 = vadd.f32 0.0, %v2008
        %2010 = vdwg.mxu0
        %v2011 = vadd.f32 %v1813, %v1972
        %v2012 = vadd.f32 %v1814, %v1974
        %v2013 = vadd.f32 %v1815, %v1977
        %v2014 = vadd.f32 %v1816, %v1979
        %v2015 = vadd.f32 %v1817, %v1982
        %v2016 = vadd.f32 %v1818, %v1984
        %v2017 = vadd.f32 %v1819, %v1987
        %v2018 = vadd.f32 %v1820, %v1989
        %v2019 = vadd.f32 %v1821, %v1992
        %v2020 = vadd.f32 %v1822, %v1994
        %v2021 = vadd.f32 %v1823, %v1997
        %v2022 = vadd.f32 %v1824, %v1999
        %v2023 = vadd.f32 %v1825, %v2002
        %v2024 = vadd.f32 %v1826, %v2004
        %v2025 = vadd.f32 %v1827, %v2007
        %v2026 = vadd.f32 %v1828, %v2009
        %v2027 = vld [vmem:[%s1832] sm:$0xf]
        %v2028 = vld [vmem:[%s1832 + $0x4] sm:$0xf]
        %v2029 = vld [vmem:[%s1832 + $0x8] sm:$0x1]
        %v2030 = vld [vmem:[%s1832 + $0xc] sm:$0xf]
        %v2031 = vld [vmem:[%s1832 + $0x10] sm:$0xf]
        %v2032 = vld [vmem:[%s1832 + $0x14] sm:$0x1]
        %v2033 = vld [vmem:[%s1832 + $0x18] sm:$0xf]
        %v2034 = vld [vmem:[%s1832 + $0x1c] sm:$0xf]
        %v2035 = vld [vmem:[%s1832 + $0x20] sm:$0x1]
        %v2036 = vld [vmem:[%s1832 + $0x24] sm:$0xf]
        %v2037 = vld [vmem:[%s1832 + $0x28] sm:$0xf]
        %v2038 = vld [vmem:[%s1832 + $0x2c] sm:$0x1]
        %v2039 = vld [vmem:[%s1832 + $0x30] sm:$0xf]
        %v2040 = vld [vmem:[%s1832 + $0x34] sm:$0xf]
        %v2041 = vld [vmem:[%s1832 + $0x38] sm:$0x1]
        %v2042 = vld [vmem:[%s1832 + $0x3c] sm:$0xf]
        %v2043 = vld [vmem:[%s1832 + $0x40] sm:$0xf]
        %v2044 = vld [vmem:[%s1832 + $0x44] sm:$0x1]
        %v2045 = vld [vmem:[%s1832 + $0x48] sm:$0xf]
        %v2046 = vld [vmem:[%s1832 + $0x4c] sm:$0xf]
        %v2047 = vld [vmem:[%s1832 + $0x50] sm:$0x1]
        %v2048 = vld [vmem:[%s1832 + $0x54] sm:$0xf]
        %v2049 = vld [vmem:[%s1832 + $0x58] sm:$0xf]
        %v2050 = vld [vmem:[%s1832 + $0x5c] sm:$0x1]
        %v2052 = vshrl.u32 %v2027, 16
        %v2054 = vrot.slane %v2052, 4
        %v2055 = vshll.u32 %v2027, 16
        %v2057 = vrot.slane %v2055, 5
        %v2058 = vor.u32 %v2054, %v2057
        %v2059 = vrot.slane %v2058, 4
        %v2061 = vshll.u32 %v2028, 16
        %v2063 = vrot.slane %v2061, 5
        %v2064 = vsel %vm274, %v2059, %v2063
        %v2065 = vshrl.u32 %v2028, 16
        %v2067 = vrot.slane %v2065, 4
        %v2068 = vor.u32 %v2067, %v2063
        %v2069 = vrot.slane %v2068, 4
        %v2071 = vshll.u32 %v2029, 16
        %v2073 = vrot.slane %v2071, 5
        %v2074 = vsel %vm274, %v2069, %v2073
        %v2076 = vshrl.u32 %v2030, 16
        %v2078 = vrot.slane %v2076, 4
        %v2079 = vshll.u32 %v2030, 16
        %v2081 = vrot.slane %v2079, 5
        %v2082 = vor.u32 %v2078, %v2081
        %v2083 = vrot.slane %v2082, 4
        %v2085 = vshll.u32 %v2031, 16
        %v2087 = vrot.slane %v2085, 5
        %v2088 = vsel %vm274, %v2083, %v2087
        %v2089 = vshrl.u32 %v2031, 16
        %v2091 = vrot.slane %v2089, 4
        %v2092 = vor.u32 %v2091, %v2087
        %v2093 = vrot.slane %v2092, 4
        %v2095 = vshll.u32 %v2032, 16
        %v2097 = vrot.slane %v2095, 5
        %v2098 = vsel %vm274, %v2093, %v2097
        %v2100 = vshrl.u32 %v2033, 16
        %v2102 = vrot.slane %v2100, 4
        %v2103 = vshll.u32 %v2033, 16
        %v2105 = vrot.slane %v2103, 5
        %v2106 = vor.u32 %v2102, %v2105
        %v2107 = vrot.slane %v2106, 4
        %v2109 = vshll.u32 %v2034, 16
        %v2111 = vrot.slane %v2109, 5
        %v2112 = vsel %vm274, %v2107, %v2111
        %v2113 = vshrl.u32 %v2034, 16
        %v2115 = vrot.slane %v2113, 4
        %v2116 = vor.u32 %v2115, %v2111
        %v2117 = vrot.slane %v2116, 4
        %v2119 = vshll.u32 %v2035, 16
        %v2121 = vrot.slane %v2119, 5
        %v2122 = vsel %vm274, %v2117, %v2121
        %v2124 = vshrl.u32 %v2036, 16
        %v2126 = vrot.slane %v2124, 4
        %v2127 = vshll.u32 %v2036, 16
        %v2129 = vrot.slane %v2127, 5
        %v2130 = vor.u32 %v2126, %v2129
        %v2131 = vrot.slane %v2130, 4
        %v2133 = vshll.u32 %v2037, 16
        %v2135 = vrot.slane %v2133, 5
        %v2136 = vsel %vm274, %v2131, %v2135
        %v2137 = vshrl.u32 %v2037, 16
        %v2139 = vrot.slane %v2137, 4
        %v2140 = vor.u32 %v2139, %v2135
        %v2141 = vrot.slane %v2140, 4
        %v2143 = vshll.u32 %v2038, 16
        %v2145 = vrot.slane %v2143, 5
        %v2146 = vsel %vm274, %v2141, %v2145
        %v2148 = vshrl.u32 %v2039, 16
        %v2150 = vrot.slane %v2148, 4
        %v2151 = vshll.u32 %v2039, 16
        %v2153 = vrot.slane %v2151, 5
        %v2154 = vor.u32 %v2150, %v2153
        %v2155 = vrot.slane %v2154, 4
        %v2157 = vshll.u32 %v2040, 16
        %v2159 = vrot.slane %v2157, 5
        %v2160 = vsel %vm274, %v2155, %v2159
        %v2161 = vshrl.u32 %v2040, 16
        %v2163 = vrot.slane %v2161, 4
        %v2164 = vor.u32 %v2163, %v2159
        %v2165 = vrot.slane %v2164, 4
        %v2167 = vshll.u32 %v2041, 16
        %v2169 = vrot.slane %v2167, 5
        %v2170 = vsel %vm274, %v2165, %v2169
        %v2172 = vshrl.u32 %v2042, 16
        %v2174 = vrot.slane %v2172, 4
        %v2175 = vshll.u32 %v2042, 16
        %v2177 = vrot.slane %v2175, 5
        %v2178 = vor.u32 %v2174, %v2177
        %v2179 = vrot.slane %v2178, 4
        %v2181 = vshll.u32 %v2043, 16
        %v2183 = vrot.slane %v2181, 5
        %v2184 = vsel %vm274, %v2179, %v2183
        %v2185 = vshrl.u32 %v2043, 16
        %v2187 = vrot.slane %v2185, 4
        %v2188 = vor.u32 %v2187, %v2183
        %v2189 = vrot.slane %v2188, 4
        %v2191 = vshll.u32 %v2044, 16
        %v2193 = vrot.slane %v2191, 5
        %v2194 = vsel %vm274, %v2189, %v2193
        %v2196 = vshrl.u32 %v2045, 16
        %v2198 = vrot.slane %v2196, 4
        %v2199 = vshll.u32 %v2045, 16
        %v2201 = vrot.slane %v2199, 5
        %v2202 = vor.u32 %v2198, %v2201
        %v2203 = vrot.slane %v2202, 4
        %v2205 = vshll.u32 %v2046, 16
        %v2207 = vrot.slane %v2205, 5
        %v2208 = vsel %vm274, %v2203, %v2207
        %v2209 = vshrl.u32 %v2046, 16
        %v2211 = vrot.slane %v2209, 4
        %v2212 = vor.u32 %v2211, %v2207
        %v2213 = vrot.slane %v2212, 4
        %v2215 = vshll.u32 %v2047, 16
        %v2217 = vrot.slane %v2215, 5
        %v2218 = vsel %vm274, %v2213, %v2217
        %v2220 = vshrl.u32 %v2048, 16
        %v2222 = vrot.slane %v2220, 4
        %v2223 = vshll.u32 %v2048, 16
        %v2225 = vrot.slane %v2223, 5
        %v2226 = vor.u32 %v2222, %v2225
        %v2227 = vrot.slane %v2226, 4
        %v2229 = vshll.u32 %v2049, 16
        %v2231 = vrot.slane %v2229, 5
        %v2232 = vsel %vm274, %v2227, %v2231
        %v2233 = vshrl.u32 %v2049, 16
        %v2235 = vrot.slane %v2233, 4
        %v2236 = vor.u32 %v2235, %v2231
        %v2237 = vrot.slane %v2236, 4
        %v2239 = vshll.u32 %v2050, 16
        %v2241 = vrot.slane %v2239, 5
        %v2242 = vsel %vm274, %v2237, %v2241
        %s2243 = scalar_lea.vmem [#allocation2], 448
        %v2244 = vld [vmem:[%s2243] sm:$0xf]
        %v2245 = vld [vmem:[%s2243 + $0x4] sm:$0xf]
        %v2246 = vld [vmem:[%s2243 + $0x8] sm:$0xf]
        %v2247 = vld [vmem:[%s2243 + $0xc] sm:$0xf]
        %v2248 = vld [vmem:[%s2243 + $0x10] sm:$0xf]
        %v2249 = vld [vmem:[%s2243 + $0x14] sm:$0xf]
        %v2250 = vld [vmem:[%s2243 + $0x18] sm:$0xf]
        %v2251 = vld [vmem:[%s2243 + $0x1c] sm:$0xf]
        %v2252 = vld [vmem:[%s2243 + $0x20] sm:$0xf]
        %v2253 = vld [vmem:[%s2243 + $0x24] sm:$0xf]
        %v2254 = vld [vmem:[%s2243 + $0x28] sm:$0xf]
        %v2255 = vld [vmem:[%s2243 + $0x2c] sm:$0xf]
        %v2256 = vld [vmem:[%s2243 + $0x30] sm:$0xf]
        %v2257 = vld [vmem:[%s2243 + $0x34] sm:$0xf]
        %v2258 = vld [vmem:[%s2243 + $0x38] sm:$0xf]
        %v2259 = vld [vmem:[%s2243 + $0x3c] sm:$0xf]
        %v2260 = vunpack.c.l.b16 %v2064
        %v2261 = vunpack.c.l.b16 %v2074
        %v2262 = vunpack.c.l.b16 %v2088
        %v2263 = vunpack.c.l.b16 %v2098
        %v2264 = vunpack.c.l.b16 %v2112
        %v2265 = vunpack.c.l.b16 %v2122
        %v2266 = vunpack.c.l.b16 %v2136
        %v2267 = vunpack.c.l.b16 %v2146
        %v2268 = vunpack.c.l.b16 %v2160
        %v2269 = vunpack.c.l.b16 %v2170
        %v2270 = vunpack.c.l.b16 %v2184
        %v2271 = vunpack.c.l.b16 %v2194
        %v2272 = vunpack.c.l.b16 %v2208
        %v2273 = vunpack.c.l.b16 %v2218
        %v2274 = vunpack.c.l.b16 %v2232
        %v2275 = vunpack.c.l.b16 %v2242
        %v2276 = vpack.c.b16 %v2261, %v2260
        %v2277 = vpack.c.b16 %v2263, %v2262
        %v2278 = vpack.c.b16 %v2265, %v2264
        %v2279 = vpack.c.b16 %v2267, %v2266
        %v2280 = vpack.c.b16 %v2269, %v2268
        %v2281 = vpack.c.b16 %v2271, %v2270
        %v2282 = vpack.c.b16 %v2273, %v2272
        %v2283 = vpack.c.b16 %v2275, %v2274
        %v2308 = vunpack.c.l.b16 %v2244
        %v2309 = vunpack.c.l.b16 %v2245
        %v2310 = vunpack.c.l.b16 %v2246
        %v2311 = vunpack.c.l.b16 %v2247
        %v2312 = vunpack.c.l.b16 %v2248
        %v2313 = vunpack.c.l.b16 %v2249
        %v2314 = vunpack.c.l.b16 %v2250
        %v2315 = vunpack.c.l.b16 %v2251
        %v2316 = vunpack.c.l.b16 %v2252
        %v2317 = vunpack.c.l.b16 %v2253
        %v2318 = vunpack.c.l.b16 %v2254
        %v2319 = vunpack.c.l.b16 %v2255
        %v2320 = vunpack.c.l.b16 %v2256
        %v2321 = vunpack.c.l.b16 %v2257
        %v2322 = vunpack.c.l.b16 %v2258
        %v2323 = vunpack.c.l.b16 %v2259
        %v2324 = vpack.c.b16 %v2309, %v2308
        %v2325 = vpack.c.b16 %v2311, %v2310
        %v2326 = vpack.c.b16 %v2313, %v2312
        %v2327 = vpack.c.b16 %v2315, %v2314
        %v2328 = vpack.c.b16 %v2317, %v2316
        %v2329 = vpack.c.b16 %v2319, %v2318
        %v2330 = vpack.c.b16 %v2321, %v2320
        %v2331 = vpack.c.b16 %v2323, %v2322
        %2340 = vmatpush.bf16.msra.mxu0 %v2331
        %2341 = vmatpush.bf16.msra.mxu0 %v2330
        %2342 = vmatpush.bf16.msra.mxu0 %v2329
        %2343 = vmatpush.bf16.msra.mxu0 %v2328
        %2344 = vmatpush.bf16.msra.mxu0 %v2327
        %2345 = vmatpush.bf16.msra.mxu0 %v2326
        %2346 = vmatpush.bf16.msra.mxu0 %v2325
        %2347 = vmatpush.bf16.msra.mxu0 %v2324
        %2348 = vmatmul.bf16.gmra.mxu0 %v2276
        %v2349 = vpop.f32.mrf.mxu0
        %v2350 = vadd.f32 0.0, %v2349
        %v2351 = vpop.f32.mrf.mxu0
        %v2352 = vadd.f32 0.0, %v2351
        %2353 = vmatmul.bf16.gmra.mxu0 %v2277
        %v2354 = vpop.f32.mrf.mxu0
        %v2355 = vadd.f32 0.0, %v2354
        %v2356 = vpop.f32.mrf.mxu0
        %v2357 = vadd.f32 0.0, %v2356
        %2358 = vmatmul.bf16.gmra.mxu0 %v2278
        %v2359 = vpop.f32.mrf.mxu0
        %v2360 = vadd.f32 0.0, %v2359
        %v2361 = vpop.f32.mrf.mxu0
        %v2362 = vadd.f32 0.0, %v2361
        %2363 = vmatmul.bf16.gmra.mxu0 %v2279
        %v2364 = vpop.f32.mrf.mxu0
        %v2365 = vadd.f32 0.0, %v2364
        %v2366 = vpop.f32.mrf.mxu0
        %v2367 = vadd.f32 0.0, %v2366
        %2368 = vmatmul.bf16.gmra.mxu0 %v2280
        %v2369 = vpop.f32.mrf.mxu0
        %v2370 = vadd.f32 0.0, %v2369
        %v2371 = vpop.f32.mrf.mxu0
        %v2372 = vadd.f32 0.0, %v2371
        %2373 = vmatmul.bf16.gmra.mxu0 %v2281
        %v2374 = vpop.f32.mrf.mxu0
        %v2375 = vadd.f32 0.0, %v2374
        %v2376 = vpop.f32.mrf.mxu0
        %v2377 = vadd.f32 0.0, %v2376
        %2378 = vmatmul.bf16.gmra.mxu0 %v2282
        %v2379 = vpop.f32.mrf.mxu0
        %v2380 = vadd.f32 0.0, %v2379
        %v2381 = vpop.f32.mrf.mxu0
        %v2382 = vadd.f32 0.0, %v2381
        %2383 = vmatmul.bf16.gmra.mxu0 %v2283
        %v2384 = vpop.f32.mrf.mxu0
        %v2385 = vadd.f32 0.0, %v2384
        %v2386 = vpop.f32.mrf.mxu0
        %v2387 = vadd.f32 0.0, %v2386
        %2388 = vdwg.mxu0
        %v2389 = vadd.f32 %v2011, %v2350
        %v2390 = vadd.f32 %v2012, %v2352
        %v2391 = vadd.f32 %v2013, %v2355
        %v2392 = vadd.f32 %v2014, %v2357
        %v2393 = vadd.f32 %v2015, %v2360
        %v2394 = vadd.f32 %v2016, %v2362
        %v2395 = vadd.f32 %v2017, %v2365
        %v2396 = vadd.f32 %v2018, %v2367
        %v2397 = vadd.f32 %v2019, %v2370
        %v2398 = vadd.f32 %v2020, %v2372
        %v2399 = vadd.f32 %v2021, %v2375
        %v2400 = vadd.f32 %v2022, %v2377
        %v2401 = vadd.f32 %v2023, %v2380
        %v2402 = vadd.f32 %v2024, %v2382
        %v2403 = vadd.f32 %v2025, %v2385
        %v2404 = vadd.f32 %v2026, %v2387
        %v2405 = vld [vmem:[%s1832] sm:$0xe]
        %v2406 = vld [vmem:[%s1832 + $0xc] sm:$0xe]
        %v2407 = vld [vmem:[%s1832 + $0x18] sm:$0xe]
        %v2408 = vld [vmem:[%s1832 + $0x24] sm:$0xe]
        %v2409 = vld [vmem:[%s1832 + $0x30] sm:$0xe]
        %v2410 = vld [vmem:[%s1832 + $0x3c] sm:$0xe]
        %v2411 = vld [vmem:[%s1832 + $0x48] sm:$0xe]
        %v2412 = vld [vmem:[%s1832 + $0x54] sm:$0xe]
        %v2437 = vrot.slane %v2405, 5
        %v2438 = vrot.slane %v2437, 4
        %v2439 = vrot.slane %v2028, 5
        %v2440 = vsel %vm784, %v2438, %v2439
        %v2441 = vrot.slane %v2439, 4
        %v2442 = vrot.slane %v2029, 5
        %v2443 = vsel %vm784, %v2441, %v2442
        %v2444 = vrot.slane %v2406, 5
        %v2445 = vrot.slane %v2444, 4
        %v2446 = vrot.slane %v2031, 5
        %v2447 = vsel %vm784, %v2445, %v2446
        %v2448 = vrot.slane %v2446, 4
        %v2449 = vrot.slane %v2032, 5
        %v2450 = vsel %vm784, %v2448, %v2449
        %v2451 = vrot.slane %v2407, 5
        %v2452 = vrot.slane %v2451, 4
        %v2453 = vrot.slane %v2034, 5
        %v2454 = vsel %vm784, %v2452, %v2453
        %v2455 = vrot.slane %v2453, 4
        %v2456 = vrot.slane %v2035, 5
        %v2457 = vsel %vm784, %v2455, %v2456
        %v2458 = vrot.slane %v2408, 5
        %v2459 = vrot.slane %v2458, 4
        %v2460 = vrot.slane %v2037, 5
        %v2461 = vsel %vm784, %v2459, %v2460
        %v2462 = vrot.slane %v2460, 4
        %v2463 = vrot.slane %v2038, 5
        %v2464 = vsel %vm784, %v2462, %v2463
        %v2465 = vrot.slane %v2409, 5
        %v2466 = vrot.slane %v2465, 4
        %v2467 = vrot.slane %v2040, 5
        %v2468 = vsel %vm784, %v2466, %v2467
        %v2469 = vrot.slane %v2467, 4
        %v2470 = vrot.slane %v2041, 5
        %v2471 = vsel %vm784, %v2469, %v2470
        %v2472 = vrot.slane %v2410, 5
        %v2473 = vrot.slane %v2472, 4
        %v2474 = vrot.slane %v2043, 5
        %v2475 = vsel %vm784, %v2473, %v2474
        %v2476 = vrot.slane %v2474, 4
        %v2477 = vrot.slane %v2044, 5
        %v2478 = vsel %vm784, %v2476, %v2477
        %v2479 = vrot.slane %v2411, 5
        %v2480 = vrot.slane %v2479, 4
        %v2481 = vrot.slane %v2046, 5
        %v2482 = vsel %vm784, %v2480, %v2481
        %v2483 = vrot.slane %v2481, 4
        %v2484 = vrot.slane %v2047, 5
        %v2485 = vsel %vm784, %v2483, %v2484
        %v2486 = vrot.slane %v2412, 5
        %v2487 = vrot.slane %v2486, 4
        %v2488 = vrot.slane %v2049, 5
        %v2489 = vsel %vm784, %v2487, %v2488
        %v2490 = vrot.slane %v2488, 4
        %v2491 = vrot.slane %v2050, 5
        %v2492 = vsel %vm784, %v2490, %v2491
        %s2493 = scalar_lea.vmem [#allocation2], 512
        %v2494 = vld [vmem:[%s2493] sm:$0xf]
        %v2495 = vld [vmem:[%s2493 + $0x4] sm:$0xf]
        %v2496 = vld [vmem:[%s2493 + $0x8] sm:$0xf]
        %v2497 = vld [vmem:[%s2493 + $0xc] sm:$0xf]
        %v2498 = vld [vmem:[%s2493 + $0x10] sm:$0xf]
        %v2499 = vld [vmem:[%s2493 + $0x14] sm:$0xf]
        %v2500 = vld [vmem:[%s2493 + $0x18] sm:$0xf]
        %v2501 = vld [vmem:[%s2493 + $0x1c] sm:$0xf]
        %v2502 = vld [vmem:[%s2493 + $0x20] sm:$0xf]
        %v2503 = vld [vmem:[%s2493 + $0x24] sm:$0xf]
        %v2504 = vld [vmem:[%s2493 + $0x28] sm:$0xf]
        %v2505 = vld [vmem:[%s2493 + $0x2c] sm:$0xf]
        %v2506 = vld [vmem:[%s2493 + $0x30] sm:$0xf]
        %v2507 = vld [vmem:[%s2493 + $0x34] sm:$0xf]
        %v2508 = vld [vmem:[%s2493 + $0x38] sm:$0xf]
        %v2509 = vld [vmem:[%s2493 + $0x3c] sm:$0xf]
        %v2510 = vunpack.c.l.b16 %v2440
        %v2511 = vunpack.c.l.b16 %v2443
        %v2512 = vunpack.c.l.b16 %v2447
        %v2513 = vunpack.c.l.b16 %v2450
        %v2514 = vunpack.c.l.b16 %v2454
        %v2515 = vunpack.c.l.b16 %v2457
        %v2516 = vunpack.c.l.b16 %v2461
        %v2517 = vunpack.c.l.b16 %v2464
        %v2518 = vunpack.c.l.b16 %v2468
        %v2519 = vunpack.c.l.b16 %v2471
        %v2520 = vunpack.c.l.b16 %v2475
        %v2521 = vunpack.c.l.b16 %v2478
        %v2522 = vunpack.c.l.b16 %v2482
        %v2523 = vunpack.c.l.b16 %v2485
        %v2524 = vunpack.c.l.b16 %v2489
        %v2525 = vunpack.c.l.b16 %v2492
        %v2526 = vpack.c.b16 %v2511, %v2510
        %v2527 = vpack.c.b16 %v2513, %v2512
        %v2528 = vpack.c.b16 %v2515, %v2514
        %v2529 = vpack.c.b16 %v2517, %v2516
        %v2530 = vpack.c.b16 %v2519, %v2518
        %v2531 = vpack.c.b16 %v2521, %v2520
        %v2532 = vpack.c.b16 %v2523, %v2522
        %v2533 = vpack.c.b16 %v2525, %v2524
        %v2558 = vunpack.c.l.b16 %v2494
        %v2559 = vunpack.c.l.b16 %v2495
        %v2560 = vunpack.c.l.b16 %v2496
        %v2561 = vunpack.c.l.b16 %v2497
        %v2562 = vunpack.c.l.b16 %v2498
        %v2563 = vunpack.c.l.b16 %v2499
        %v2564 = vunpack.c.l.b16 %v2500
        %v2565 = vunpack.c.l.b16 %v2501
        %v2566 = vunpack.c.l.b16 %v2502
        %v2567 = vunpack.c.l.b16 %v2503
        %v2568 = vunpack.c.l.b16 %v2504
        %v2569 = vunpack.c.l.b16 %v2505
        %v2570 = vunpack.c.l.b16 %v2506
        %v2571 = vunpack.c.l.b16 %v2507
        %v2572 = vunpack.c.l.b16 %v2508
        %v2573 = vunpack.c.l.b16 %v2509
        %v2574 = vpack.c.b16 %v2559, %v2558
        %v2575 = vpack.c.b16 %v2561, %v2560
        %v2576 = vpack.c.b16 %v2563, %v2562
        %v2577 = vpack.c.b16 %v2565, %v2564
        %v2578 = vpack.c.b16 %v2567, %v2566
        %v2579 = vpack.c.b16 %v2569, %v2568
        %v2580 = vpack.c.b16 %v2571, %v2570
        %v2581 = vpack.c.b16 %v2573, %v2572
        %2590 = vmatpush.bf16.msra.mxu0 %v2581
        %2591 = vmatpush.bf16.msra.mxu0 %v2580
        %2592 = vmatpush.bf16.msra.mxu0 %v2579
        %2593 = vmatpush.bf16.msra.mxu0 %v2578
        %2594 = vmatpush.bf16.msra.mxu0 %v2577
        %2595 = vmatpush.bf16.msra.mxu0 %v2576
        %2596 = vmatpush.bf16.msra.mxu0 %v2575
        %2597 = vmatpush.bf16.msra.mxu0 %v2574
        %2598 = vmatmul.bf16.gmra.mxu0 %v2526
        %v2599 = vpop.f32.mrf.mxu0
        %v2600 = vadd.f32 0.0, %v2599
        %v2601 = vpop.f32.mrf.mxu0
        %v2602 = vadd.f32 0.0, %v2601
        %2603 = vmatmul.bf16.gmra.mxu0 %v2527
        %v2604 = vpop.f32.mrf.mxu0
        %v2605 = vadd.f32 0.0, %v2604
        %v2606 = vpop.f32.mrf.mxu0
        %v2607 = vadd.f32 0.0, %v2606
        %2608 = vmatmul.bf16.gmra.mxu0 %v2528
        %v2609 = vpop.f32.mrf.mxu0
        %v2610 = vadd.f32 0.0, %v2609
        %v2611 = vpop.f32.mrf.mxu0
        %v2612 = vadd.f32 0.0, %v2611
        %2613 = vmatmul.bf16.gmra.mxu0 %v2529
        %v2614 = vpop.f32.mrf.mxu0
        %v2615 = vadd.f32 0.0, %v2614
        %v2616 = vpop.f32.mrf.mxu0
        %v2617 = vadd.f32 0.0, %v2616
        %2618 = vmatmul.bf16.gmra.mxu0 %v2530
        %v2619 = vpop.f32.mrf.mxu0
        %v2620 = vadd.f32 0.0, %v2619
        %v2621 = vpop.f32.mrf.mxu0
        %v2622 = vadd.f32 0.0, %v2621
        %2623 = vmatmul.bf16.gmra.mxu0 %v2531
        %v2624 = vpop.f32.mrf.mxu0
        %v2625 = vadd.f32 0.0, %v2624
        %v2626 = vpop.f32.mrf.mxu0
        %v2627 = vadd.f32 0.0, %v2626
        %2628 = vmatmul.bf16.gmra.mxu0 %v2532
        %v2629 = vpop.f32.mrf.mxu0
        %v2630 = vadd.f32 0.0, %v2629
        %v2631 = vpop.f32.mrf.mxu0
        %v2632 = vadd.f32 0.0, %v2631
        %2633 = vmatmul.bf16.gmra.mxu0 %v2533
        %v2634 = vpop.f32.mrf.mxu0
        %v2635 = vadd.f32 0.0, %v2634
        %v2636 = vpop.f32.mrf.mxu0
        %v2637 = vadd.f32 0.0, %v2636
        %2638 = vdwg.mxu0
        %v2639 = vadd.f32 %v2389, %v2600
        %v2640 = vadd.f32 %v2390, %v2602
        %v2641 = vadd.f32 %v2391, %v2605
        %v2642 = vadd.f32 %v2392, %v2607
        %v2643 = vadd.f32 %v2393, %v2610
        %v2644 = vadd.f32 %v2394, %v2612
        %v2645 = vadd.f32 %v2395, %v2615
        %v2646 = vadd.f32 %v2396, %v2617
        %v2647 = vadd.f32 %v2397, %v2620
        %v2648 = vadd.f32 %v2398, %v2622
        %v2649 = vadd.f32 %v2399, %v2625
        %v2650 = vadd.f32 %v2400, %v2627
        %v2651 = vadd.f32 %v2401, %v2630
        %v2652 = vadd.f32 %v2402, %v2632
        %v2653 = vadd.f32 %v2403, %v2635
        %v2654 = vadd.f32 %v2404, %v2637
        %v2655 = vld [vmem:[#allocation4] sm:$0x1]
        %v2656 = vunpack.c.l.bf16 %v2655
        %v2657 = vperm.slane %v2656, 0
        %v2658 = vadd.f32 %v2639, %v2657
        %v2659 = vadd.f32 %v2640, %v2657
        %v2660 = vadd.f32 %v2641, %v2657
        %v2661 = vadd.f32 %v2642, %v2657
        %v2662 = vadd.f32 %v2643, %v2657
        %v2663 = vadd.f32 %v2644, %v2657
        %v2664 = vadd.f32 %v2645, %v2657
        %v2665 = vadd.f32 %v2646, %v2657
        %v2666 = vadd.f32 %v2647, %v2657
        %v2667 = vadd.f32 %v2648, %v2657
        %v2668 = vadd.f32 %v2649, %v2657
        %v2669 = vadd.f32 %v2650, %v2657
        %v2670 = vadd.f32 %v2651, %v2657
        %v2671 = vadd.f32 %v2652, %v2657
        %v2672 = vadd.f32 %v2653, %v2657
        %v2673 = vadd.f32 %v2654, %v2657
        %v2674 = vmax.f32 %v2658, 0.0
        %v2675 = vmax.f32 %v2659, 0.0
        %v2676 = vmax.f32 %v2660, 0.0
        %v2677 = vmax.f32 %v2661, 0.0
        %v2678 = vmax.f32 %v2662, 0.0
        %v2679 = vmax.f32 %v2663, 0.0
        %v2680 = vmax.f32 %v2664, 0.0
        %v2681 = vmax.f32 %v2665, 0.0
        %v2682 = vmax.f32 %v2666, 0.0
        %v2683 = vmax.f32 %v2667, 0.0
        %v2684 = vmax.f32 %v2668, 0.0
        %v2685 = vmax.f32 %v2669, 0.0
        %v2686 = vmax.f32 %v2670, 0.0
        %v2687 = vmax.f32 %v2671, 0.0
        %v2688 = vmax.f32 %v2672, 0.0
        %v2689 = vmax.f32 %v2673, 0.0
        %v2690 = vpack.c.bf16 %v2674, %v2674
        %v2691 = vpack.c.bf16 %v2675, %v2675
        %v2692 = vpack.c.bf16 %v2676, %v2676
        %v2693 = vpack.c.bf16 %v2677, %v2677
        %v2694 = vpack.c.bf16 %v2678, %v2678
        %v2695 = vpack.c.bf16 %v2679, %v2679
        %v2696 = vpack.c.bf16 %v2680, %v2680
        %v2697 = vpack.c.bf16 %v2681, %v2681
        %v2698 = vpack.c.bf16 %v2682, %v2682
        %v2699 = vpack.c.bf16 %v2683, %v2683
        %v2700 = vpack.c.bf16 %v2684, %v2684
        %v2701 = vpack.c.bf16 %v2685, %v2685
        %v2702 = vpack.c.bf16 %v2686, %v2686
        %v2703 = vpack.c.bf16 %v2687, %v2687
        %v2704 = vpack.c.bf16 %v2688, %v2688
        %v2705 = vpack.c.bf16 %v2689, %v2689
        %2706 = vst [vmem:[%s226] sm:$0xf] %v2690
        %2707 = vst [vmem:[%s226 + $0x4] sm:$0xf] %v2691
        %2708 = vst [vmem:[%s226 + $0x8] sm:$0xf] %v2692
        %2709 = vst [vmem:[%s226 + $0xc] sm:$0xf] %v2693
        %2710 = vst [vmem:[%s226 + $0x10] sm:$0xf] %v2694
        %2711 = vst [vmem:[%s226 + $0x14] sm:$0xf] %v2695
        %2712 = vst [vmem:[%s226 + $0x18] sm:$0xf] %v2696
        %2713 = vst [vmem:[%s226 + $0x1c] sm:$0xf] %v2697
        %2714 = vst [vmem:[%s226 + $0x20] sm:$0xf] %v2698
        %2715 = vst [vmem:[%s226 + $0x24] sm:$0xf] %v2699
        %2716 = vst [vmem:[%s226 + $0x28] sm:$0xf] %v2700
        %2717 = vst [vmem:[%s226 + $0x2c] sm:$0xf] %v2701
        %2718 = vst [vmem:[%s226 + $0x30] sm:$0xf] %v2702
        %2719 = vst [vmem:[%s226 + $0x34] sm:$0xf] %v2703
        %2720 = vst [vmem:[%s226 + $0x38] sm:$0xf] %v2704
        %2721 = vst [vmem:[%s226 + $0x3c] sm:$0xf] %v2705
        %s2722 = smul.u32 8, %s21
        %p2723 = scmp.lt.s32.totalorder %s20, 1
        %s2724 = scalar_select %p2723, %s20, 1
        %p2725 = scmp.lt.s32.totalorder %s2722, 15
        %s2726 = scalar_select %p2725, %s2722, 15
        %s2727 = smul.addr %s2726, 2
        %s2728 = smul.addr %s2724, 32
        %s2729 = sadd.s32 %s2727, %s2728
        %s2730 = smul.addr %s2729, 4
        %s2731 = scalar_lea.vmem %s3, %s2730
        // Predicated region
        $region41: #{vgg16_block_forward.6} parent=31 // pred_check
          %p2732 = pneg %p116
        $region42: #{vgg16_block_forward.6} parent=31 // pred_check_branch
          %2734 = sbr.rel (%p2732) target = $region44
        $region43: #{vgg16_block_forward.6} parent=31 // pred_region
          %s2735 = smul.u32 8, %s21
        $region44: #{vgg16_block_forward.6} parent=31 // pred_fallthru
          _
      $region32: #{vgg16_block_forward.6} parent=5 // pred_fallthru
        _
      %p2736 = scmp.le.s32.totalorder 2, %s11
      // Predicated region
      $region45: #{vgg16_block_forward.6} parent=5 // pred_check
        %p2737 = pneg %p2736
      $region46: #{vgg16_block_forward.6} parent=5 // pred_check_branch
        %2739 = sbr.rel (%p2737) target = $region48
      $region47: #{vgg16_block_forward.6} parent=5 // pred_region
        %s2740 = ssub.s32 %s11, 2
        // Predicated region
        $region49: #{vgg16_block_forward.6} parent=47 // pred_check
          %p2741 = pneg %p122
        $region50: #{vgg16_block_forward.6} parent=47 // pred_check_branch
          %2743 = sbr.rel (%p2741) target = $region52
        $region51: #{vgg16_block_forward.6} parent=47 // pred_region
          %s2744 = smul.u32 8, %s23
          %p2745 = scmp.lt.s32.totalorder %s22, 1
          %s2746 = scalar_select %p2745, %s22, 1
          %p2747 = scmp.lt.s32.totalorder %s2744, 15
          %s2748 = scalar_select %p2747, %s2744, 15
          %s2749 = smul.addr %s2748, 2
          %s2750 = smul.addr %s2746, 32
          %s2751 = sadd.s32 %s2749, %s2750
          %s2752 = smul.addr %s2751, 4
          %s2753 = scalar_lea.vmem %s3, %s2752
        $region52: #{vgg16_block_forward.6} parent=47 // pred_fallthru
          _
      $region48: #{vgg16_block_forward.6} parent=5 // pred_fallthru
        _
    $region6: #{vgg16_block_forward.6} parent=1 // loop_footer
      %s15 = sadd.s32 1, %s11
    $region7: #{vgg16_block_forward.6} parent=1 // loop_footer_branch
      %10 = sbr.rel target = $region3
    $region8: #{vgg16_block_forward.6} parent=1 // loop_exit
      _
    %2754 = vsyncpa [#allocation3], 1
    %s2755 = scalar_lea.sflag [#allocation3], 1
    %2756 = vsyncpa %s2755, 1
    %2757 = vsyncpa [#allocation5], 1

// kernel: vgg16_block_forward.8
$region0: #{vgg16_block_forward.8}
  #allocation0 [shape = 'u32[]', space=smem, size = 0x4, offset = 0x4, fixed_abs, tag = 'smem constant byte address 0x4 - core index']
  #allocation1 [shape = 'u32[72,128]{1,0:T(1,128)}', space=vmem, size = 0x9000, scoped, tag = 'internal scratch']
  #allocation2 [shape = 'f32[16,128]{1,0:T(8,128)}', space=vmem, size = 0x2000, scoped, tag = 'scratch operand']
  %s0 = inlined_call_operand.vmem [shape: bf16[16,8192], index: 0, kind: input, shape index: {}]
  %s1 = inlined_call_operand.hbm [shape: bf16[8192,128], index: 1, kind: input, shape index: {}]
  %s2 = inlined_call_operand.hbm [shape: bf16[1,128], index: 2, kind: input, shape index: {}]
  %s3 = inlined_call_operand.vmem [shape: bf16[16,128], index: 3, kind: output, shape index: {}]
  %s4 = sld [smem:[#allocation0]]
  $region84: #{vgg16_block_forward.8} parent=0
    _
  %s6 = ssub.s32 1, %s4
  %s7 = scalar_select 0, %s6, %s4
  $region1: #{vgg16_block_forward.8} parent=0
    #allocation3 [shape = 'u8[131072]{0}', space=vmem, size = 0x20000, scoped, tag = 'input window, operand 0']
    #allocation4 [shape = 'u8[1048576]{0}', space=vmem, size = 0x100000, scoped, tag = 'input window, operand 1']
    #allocation5 [shape = 's32[2]{0}', space=sflag, size = 0x8, scoped, tag = 'scoped memory for vgg16_block_forward.8']
    #allocation6 [shape = 'u8[512]{0}', space=vmem, size = 0x400, scoped, tag = 'input window, operand 2, single buffered']
    #allocation7 [shape = 's32[1]{0}', space=sflag, size = 0x4, scoped, tag = 'scoped memory for vgg16_block_forward.8']
    %8 = vsyncpa [#allocation5], 0
    %s9 = scalar_lea.sflag [#allocation5], 1
    %10 = vsyncpa %s9, 0
    %11 = vsyncpa [#allocation7], 0
    loop: start=0, step=1, limit=6
    $region2: #{vgg16_block_forward.8} parent=1 // loop_pre_header
      _
    $region3: #{vgg16_block_forward.8} parent=1 // loop_header
      %s13 = sphi 0, %s17
      %p14 = scmp.ge.s32.totalorder %s13, 6
      %s20 = sphi 0, %s39
      %s21 = sphi 0, %s35
      %s22 = sphi 0, %s31
      %s23 = sphi 0, %s20
      %s24 = sphi 0, %s21
      %s25 = sphi 0, %s22
      %s26 = sphi 0, %s23
      %s27 = sphi 0, %s24
      %s28 = sphi 0, %s25
      %s44 = sphi 0, %s46
      %s47 = sphi 0, %s44
      %s48 = sphi 0, %s47
      %s64 = sphi 0, %s48
      %s72 = sphi 0, %s74
      %s75 = sphi 0, %s72
      %s76 = sphi 0, %s75
      %s92 = sphi 0, %s76
      %s98 = sphi 0, %s100
      %s101 = sphi 0, %s98
      %s102 = sphi 0, %s101
      %s118 = sphi 0, %s102
      %s126 = sphi 0, %s128
      %s129 = sphi 0, %s126
      %s130 = sphi 0, %s129
      %s146 = sphi 0, %s130
    $region4: #{vgg16_block_forward.8} parent=1 // loop_header_branch
      %16 = sbr.rel (%p14) target = $region8
    $region5: #{vgg16_block_forward.8} parent=1 // loop_body
      %s18 = ssub.s32 %s13, 1
      %s19 = ssub.s32 %s13, 2
      %s29 = sadd.s32 1, %s22
      %p30 = scmp.ge.s32.totalorder %s29, 4
      %s31 = scalar_select %p30, 0, %s29
      %s32 = sadd.s32 1, %s21
      %s33 = scalar_select %p30, %s32, %s21
      %p34 = scmp.ge.s32.totalorder %s33, 1
      %s35 = scalar_select %p34, 0, %s33
      %s36 = sadd.s32 1, %s20
      %s37 = scalar_select %p34, %s36, %s20
      %p38 = scmp.ge.s32.totalorder %s37, 1
      %s39 = scalar_select %p38, 0, %s37
      %s40 = ssub.s32 %s20, %s39
      %s41 = ssub.s32 %s22, %s31
      %s42 = sor.u32 %s40, %s41
      %p43 = scmp.eq.s32.totalorder %s42, 0
      %s45 = sadd.s32 %s44, 1
      %s46 = scalar_select %p43, %s44, %s45
      %p49 = pneg %p43
      %p50 = scmp.eq.s32.totalorder %s13, 3
      %p51 = por %p49, %p50
      %p52 = scmp.ne.s32.totalorder %s44, %s47
      %p53 = scmp.eq.s32.totalorder %s13, 0
      %p54 = por %p52, %p53
      %p55 = scmp.ne.s32.totalorder %s44, %s47
      %p56 = scmp.eq.s32.totalorder %s18, 3
      %p57 = por %p55, %p56
      %p58 = scmp.ne.s32.totalorder %s47, %s48
      %p59 = scmp.eq.s32.totalorder %s18, 0
      %p60 = por %p58, %p59
      %p61 = scmp.ne.s32.totalorder %s47, %s48
      %p62 = scmp.eq.s32.totalorder %s19, 3
      %p63 = por %p61, %p62
      %p65 = scmp.ne.s32.totalorder %s48, %s64
      %p66 = scmp.eq.s32.totalorder %s19, 0
      %p67 = por %p65, %p66
      %s68 = ssub.s32 %s22, %s31
      %s69 = ssub.s32 %s21, %s35
      %s70 = sor.u32 %s68, %s69
      %p71 = scmp.eq.s32.totalorder %s70, 0
      %s73 = sadd.s32 %s72, 1
      %s74 = scalar_select %p71, %s72, %s73
      %p77 = pneg %p71
      %p78 = scmp.eq.s32.totalorder %s13, 3
      %p79 = por %p77, %p78
      %p80 = scmp.ne.s32.totalorder %s72, %s75
      %p81 = scmp.eq.s32.totalorder %s13, 0
      %p82 = por %p80, %p81
      %p83 = scmp.ne.s32.totalorder %s72, %s75
      %p84 = scmp.eq.s32.totalorder %s18, 3
      %p85 = por %p83, %p84
      %p86 = scmp.ne.s32.totalorder %s75, %s76
      %p87 = scmp.eq.s32.totalorder %s18, 0
      %p88 = por %p86, %p87
      %p89 = scmp.ne.s32.totalorder %s75, %s76
      %p90 = scmp.eq.s32.totalorder %s19, 3
      %p91 = por %p89, %p90
      %p93 = scmp.ne.s32.totalorder %s76, %s92
      %p94 = scmp.eq.s32.totalorder %s19, 0
      %p95 = por %p93, %p94
      %s96 = ssub.s32 %s21, %s35
      %p97 = scmp.eq.s32.totalorder %s96, 0
      %s99 = sadd.s32 %s98, 1
      %s100 = scalar_select %p97, %s98, %s99
      %p103 = pneg %p97
      %p104 = scmp.eq.s32.totalorder %s13, 3
      %p105 = por %p103, %p104
      %p106 = scmp.ne.s32.totalorder %s98, %s101
      %p107 = scmp.eq.s32.totalorder %s13, 0
      %p108 = por %p106, %p107
      %p109 = scmp.ne.s32.totalorder %s98, %s101
      %p110 = scmp.eq.s32.totalorder %s18, 3
      %p111 = por %p109, %p110
      %p112 = scmp.ne.s32.totalorder %s101, %s102
      %p113 = scmp.eq.s32.totalorder %s18, 0
      %p114 = por %p112, %p113
      %p115 = scmp.ne.s32.totalorder %s101, %s102
      %p116 = scmp.eq.s32.totalorder %s19, 3
      %p117 = por %p115, %p116
      %p119 = scmp.ne.s32.totalorder %s102, %s118
      %p120 = scmp.eq.s32.totalorder %s19, 0
      %p121 = por %p119, %p120
      %s122 = ssub.s32 %s20, %s39
      %s123 = ssub.s32 %s21, %s35
      %s124 = sor.u32 %s122, %s123
      %p125 = scmp.eq.s32.totalorder %s124, 0
      %s127 = sadd.s32 %s126, 1
      %s128 = scalar_select %p125, %s126, %s127
      %p131 = pneg %p125
      %p132 = scmp.eq.s32.totalorder %s13, 3
      %p133 = por %p131, %p132
      %p134 = scmp.ne.s32.totalorder %s126, %s129
      %p135 = scmp.eq.s32.totalorder %s13, 0
      %p136 = por %p134, %p135
      %p137 = scmp.ne.s32.totalorder %s126, %s129
      %p138 = scmp.eq.s32.totalorder %s18, 3
      %p139 = por %p137, %p138
      %p140 = scmp.ne.s32.totalorder %s129, %s130
      %p141 = scmp.eq.s32.totalorder %s18, 0
      %p142 = por %p140, %p141
      %p143 = scmp.ne.s32.totalorder %s129, %s130
      %p144 = scmp.eq.s32.totalorder %s19, 3
      %p145 = por %p143, %p144
      %p147 = scmp.ne.s32.totalorder %s130, %s146
      %p148 = scmp.eq.s32.totalorder %s19, 0
      %p149 = por %p147, %p148
      %p150 = scmp.le.s32.totalorder 1, %s13
      %p151 = scmp.lt.s32.totalorder %s13, 5
      %p152 = pnand %p150, %p151
      %p153 = pneg %p152
      // Predicated region
      $region9: #{vgg16_block_forward.8} parent=5 // pred_check
        _
      $region10: #{vgg16_block_forward.8} parent=5 // pred_check_branch
        %155 = sbr.rel (%p152) target = $region12
      $region11: #{vgg16_block_forward.8} parent=5 // pred_region
        %s156 = ssub.s32 %s13, 1
        // Predicated region
        $region13: #{vgg16_block_forward.8} parent=11 // pred_check
          %p157 = pneg %p114
        $region14: #{vgg16_block_forward.8} parent=11 // pred_check_branch
          %159 = sbr.rel (%p157) target = $region16
        $region15: #{vgg16_block_forward.8} parent=11 // pred_region
          %161 = vsyncadd [#allocation7], 0
          %s162 = scalar_lea.hbm %s2, %s24
          %s164 = sshll.u32 %s162, 4
          %s165 = int_to_ptr.hbm [resolvable:$true] %s164
          %s166 = sshll.u32 [#allocation6], 4
          %s167 = int_to_ptr.vmem [resolvable:$true] %s166
          %169 = dma.hbm_to_vmem [thread:$0]  %s165, 16, %s167, [#allocation7]
        $region16: #{vgg16_block_forward.8} parent=11 // pred_fallthru
          _
      $region12: #{vgg16_block_forward.8} parent=5 // pred_fallthru
        _
      %p170 = scmp.lt.s32.totalorder %s13, 4
      // Predicated region
      $region17: #{vgg16_block_forward.8} parent=5 // pred_check
        %p171 = pneg %p170
      $region18: #{vgg16_block_forward.8} parent=5 // pred_check_branch
        %173 = sbr.rel (%p171) target = $region20
      $region19: #{vgg16_block_forward.8} parent=5 // pred_region
        // Predicated region
        $region21: #{vgg16_block_forward.8} parent=19 // pred_check
          %p174 = pneg %p54
        $region22: #{vgg16_block_forward.8} parent=19 // pred_check_branch
          %176 = sbr.rel (%p174) target = $region24
        $region23: #{vgg16_block_forward.8} parent=19 // pred_region
          %s177 = sand.u32 %s44, 1
          %s178 = sand.u32 %s44, 1
          %s179 = smul.addr %s178, 128
          %s180 = scalar_lea.vmem [#allocation3], %s179
          %s181 = smul.u32 2, %s20
          %s182 = smul.u32 16, %s22
          %s183 = smul.addr %s181, 64
          %s184 = sadd.s32 %s182, %s183
          %s185 = smul.addr %s184, 4
          %s186 = scalar_lea.vmem %s0, %s185
          // Predicated region
          $region25: #{vgg16_block_forward.8} parent=23 // pred_check
            _
          $region26: #{vgg16_block_forward.8} parent=23 // pred_check_branch
            %188 = sbr.rel (0) target = $region28
          $region27: #{vgg16_block_forward.8} parent=23 // pred_region
            // Predicated region
            $region29: #{vgg16_block_forward.8} parent=27 // pred_check
              _
            $region30: #{vgg16_block_forward.8} parent=27 // pred_check_branch
              %190 = sbr.rel (0) target = $region32
            $region31: #{vgg16_block_forward.8} parent=27 // pred_region
              loop: start=0, step=1, limit=1
              $region33: #{vgg16_block_forward.8} parent=31 // loop_pre_header
                _
              $region34: #{vgg16_block_forward.8} parent=31 // loop_header
                %s192 = sphi 0, %s196
                %p193 = scmp.ge.s32.totalorder %s192, 1
                %s197 = sphi %s186, %s186
                %s198 = sphi %s180, %s180
              $region35: #{vgg16_block_forward.8} parent=31 // loop_header_branch
                %195 = sbr.rel (%p193) target = $region39
              $region36: #{vgg16_block_forward.8} parent=31 // loop_body
                %v199 = vld [vmem:[%s197] sm:$0xff]
                %200 = vst [vmem:[%s198] sm:$0xff] %v199
                %v201 = vld [vmem:[%s197 + $0x8] sm:$0xff]
                %202 = vst [vmem:[%s198 + $0x8] sm:$0xff] %v201
                %v203 = vld [vmem:[%s197 + $0x10] sm:$0xff]
                %204 = vst [vmem:[%s198 + $0x10] sm:$0xff] %v203
                %v205 = vld [vmem:[%s197 + $0x18] sm:$0xff]
                %206 = vst [vmem:[%s198 + $0x18] sm:$0xff] %v205
                %v207 = vld [vmem:[%s197 + $0x20] sm:$0xff]
                %208 = vst [vmem:[%s198 + $0x20] sm:$0xff] %v207
                %v209 = vld [vmem:[%s197 + $0x28] sm:$0xff]
                %210 = vst [vmem:[%s198 + $0x28] sm:$0xff] %v209
                %v211 = vld [vmem:[%s197 + $0x30] sm:$0xff]
                %212 = vst [vmem:[%s198 + $0x30] sm:$0xff] %v211
                %v213 = vld [vmem:[%s197 + $0x38] sm:$0xff]
                %214 = vst [vmem:[%s198 + $0x38] sm:$0xff] %v213
                %v215 = vld [vmem:[%s197 + $0x100] sm:$0xff]
                %216 = vst [vmem:[%s198 + $0x40] sm:$0xff] %v215
                %v217 = vld [vmem:[%s197 + $0x108] sm:$0xff]
                %218 = vst [vmem:[%s198 + $0x48] sm:$0xff] %v217
                %v219 = vld [vmem:[%s197 + $0x110] sm:$0xff]
                %220 = vst [vmem:[%s198 + $0x50] sm:$0xff] %v219
                %v221 = vld [vmem:[%s197 + $0x118] sm:$0xff]
                %222 = vst [vmem:[%s198 + $0x58] sm:$0xff] %v221
                %v223 = vld [vmem:[%s197 + $0x120] sm:$0xff]
                %224 = vst [vmem:[%s198 + $0x60] sm:$0xff] %v223
                %v225 = vld [vmem:[%s197 + $0x128] sm:$0xff]
                %226 = vst [vmem:[%s198 + $0x68] sm:$0xff] %v225
                %v227 = vld [vmem:[%s197 + $0x130] sm:$0xff]
                %228 = vst [vmem:[%s198 + $0x70] sm:$0xff] %v227
                %v229 = vld [vmem:[%s197 + $0x138] sm:$0xff]
                %230 = vst [vmem:[%s198 + $0x78] sm:$0xff] %v229
              $region37: #{vgg16_block_forward.8} parent=31 // loop_footer
                %s196 = sadd.s32 1, %s192
              $region38: #{vgg16_block_forward.8} parent=31 // loop_footer_branch
                %191 = sbr.rel target = $region34
              $region39: #{vgg16_block_forward.8} parent=31 // loop_exit
                _
            $region32: #{vgg16_block_forward.8} parent=27 // pred_fallthru
              _
            // Predicated region
            $region40: #{vgg16_block_forward.8} parent=27 // pred_check
              _
            $region41: #{vgg16_block_forward.8} parent=27 // pred_check_branch
              %232 = sbr.rel target = $region43
            $region42: #{vgg16_block_forward.8} parent=27 // pred_region
              _
            $region43: #{vgg16_block_forward.8} parent=27 // pred_fallthru
              _
          $region28: #{vgg16_block_forward.8} parent=23 // pred_fallthru
            _
          %233 = vnop
        $region24: #{vgg16_block_forward.8} parent=19 // pred_fallthru
          _
        // Predicated region
        $region44: #{vgg16_block_forward.8} parent=19 // pred_check
          %p234 = pneg %p82
        $region45: #{vgg16_block_forward.8} parent=19 // pred_check_branch
          %236 = sbr.rel (%p234) target = $region47
        $region46: #{vgg16_block_forward.8} parent=19 // pred_region
          %s237 = sand.u32 %s72, 1
          %s238 = scalar_lea.sflag [#allocation5], %s237
          %s239 = sand.u32 %s72, 1
          %s240 = smul.addr %s239, 1024
          %s241 = scalar_lea.vmem [#allocation4], %s240
          %s242 = smul.u32 256, %s22
          %244 = vsyncadd %s238, 0
          %s245 = sadd.s32 %s21, %s242
          %s246 = smul.addr %s245, 4
          %s247 = scalar_lea.hbm %s1, %s246
          %s248 = sshll.u32 %s247, 4
          %s249 = int_to_ptr.hbm [resolvable:$true] %s248
          %s250 = sshll.u32 %s241, 4
          %s251 = int_to_ptr.vmem [resolvable:$true] %s250
          %256 = dma.hbm_to_vmem [thread:$0]  %s249, 16384, %s251, %s238, 64, 64, 4
        $region47: #{vgg16_block_forward.8} parent=19 // pred_fallthru
          _
      $region20: #{vgg16_block_forward.8} parent=5 // pred_fallthru
        _
      %p257 = scmp.le.s32.totalorder 1, %s13
      %p258 = scmp.lt.s32.totalorder %s13, 5
      %p259 = pnand %p257, %p258
      %p260 = pneg %p259
      // Predicated region
      $region48: #{vgg16_block_forward.8} parent=5 // pred_check
        _
      $region49: #{vgg16_block_forward.8} parent=5 // pred_check_branch
        %262 = sbr.rel (%p259) target = $region51
      $region50: #{vgg16_block_forward.8} parent=5 // pred_region
        %s263 = ssub.s32 %s13, 1
        %s264 = sand.u32 %s47, 1
        %s265 = sand.u32 %s47, 1
        %s266 = smul.addr %s265, 128
        %s267 = scalar_lea.vmem [#allocation3], %s266
        // Predicated region
        $region52: #{vgg16_block_forward.8} parent=50 // pred_check
          %p268 = pneg %p60
        $region53: #{vgg16_block_forward.8} parent=50 // pred_check_branch
          %270 = sbr.rel (%p268) target = $region55
        $region54: #{vgg16_block_forward.8} parent=50 // pred_region
          _
        $region55: #{vgg16_block_forward.8} parent=50 // pred_fallthru
          _
        %s271 = sand.u32 %s75, 1
        %s272 = scalar_lea.sflag [#allocation5], %s271
        %s273 = sand.u32 %s75, 1
        %s274 = smul.addr %s273, 1024
        %s275 = scalar_lea.vmem [#allocation4], %s274
        // Predicated region
        $region56: #{vgg16_block_forward.8} parent=50 // pred_check
          %p276 = pneg %p88
        $region57: #{vgg16_block_forward.8} parent=50 // pred_check_branch
          %278 = sbr.rel (%p276) target = $region59
        $region58: #{vgg16_block_forward.8} parent=50 // pred_region
          %280 = dma.done %s272, 16384
        $region59: #{vgg16_block_forward.8} parent=50 // pred_fallthru
          _
        // Predicated region
        $region60: #{vgg16_block_forward.8} parent=50 // pred_check
          %p281 = pneg %p114
        $region61: #{vgg16_block_forward.8} parent=50 // pred_check_branch
          %283 = sbr.rel (%p281) target = $region63
        $region62: #{vgg16_block_forward.8} parent=50 // pred_region
          %285 = dma.done [#allocation7], 16
        $region63: #{vgg16_block_forward.8} parent=50 // pred_fallthru
          _
        %s286 = sand.u32 %s47, 1
        %s287 = sand.u32 %s47, 1
        %s288 = smul.addr %s287, 128
        %s289 = scalar_lea.vmem [#allocation3], %s288
        %p290 = pneg %p60
        %p291 = pneg %p57
        %s292 = sand.u32 %s75, 1
        %s293 = scalar_lea.sflag [#allocation5], %s292
        %s294 = sand.u32 %s75, 1
        %s295 = smul.addr %s294, 1024
        %s296 = scalar_lea.vmem [#allocation4], %s295
        %p297 = pneg %p88
        %p298 = pneg %p85
        %p299 = pneg %p114
        %p300 = pneg %p111
        %p301 = pneg %p142
        %p302 = pneg %p139
        %s303 = smul.u32 2, %s23
        %p304 = scmp.lt.s32.totalorder %s303, 1
        %s305 = scalar_select %p304, %s303, 1
        %p306 = scmp.lt.s32.totalorder %s24, 0
        %s307 = scalar_select %p306, %s24, 0
        %s308 = sadd.s32 %s307, %s305
        %s309 = smul.addr %s308, 4
        %s310 = scalar_lea.vmem %s3, %s309
        %s311 = smul.u32 2, %s23
        %s312 = smul.u32 16, %s25
        %s313 = smul.u32 256, %s25
        %s314 = smul.u32 2, %s23
        %p315 = scmp.lt.s32.totalorder %s314, 1
        %s316 = scalar_select %p315, %s314, 1
        %p317 = scmp.lt.s32.totalorder %s24, 0
        %s318 = scalar_select %p317, %s24, 0
        %s319 = sadd.s32 %s318, %s316
        %s320 = smul.addr %s319, 4
        %s321 = scalar_lea.vmem %s3, %s320
        %s322 = smul.u32 2, %s23
        %p323 = scmp.eq.s32.totalorder %s25, 0
        // Predicated region
        $region64: #{vgg16_block_forward.8} parent=50 // pred_check
          %p324 = pneg %p323
        $region65: #{vgg16_block_forward.8} parent=50 // pred_check_branch
          %326 = sbr.rel (%p324) target = $region67
        $region66: #{vgg16_block_forward.8} parent=50 // pred_region
          %327 = vst [vmem:[#allocation2] sm:$0xff] 0.0
          %328 = vst [vmem:[#allocation2 + $0x8] sm:$0xff] 0.0
        $region67: #{vgg16_block_forward.8} parent=50 // pred_fallthru
          _
        %v329 = vld [vmem:[#allocation2] sm:$0xff]
        %v330 = vld [vmem:[#allocation2 + $0x8] sm:$0xff]
        %v331 = vld [vmem:[%s267] sm:$0xff]
        %v332 = vld [vmem:[%s267 + $0x8] sm:$0xff]
        %v333 = vld [vmem:[%s267 + $0x10] sm:$0xff]
        %v334 = vld [vmem:[%s267 + $0x18] sm:$0xff]
        %v335 = vld [vmem:[%s267 + $0x20] sm:$0xff]
        %v336 = vld [vmem:[%s267 + $0x28] sm:$0xff]
        %v337 = vld [vmem:[%s267 + $0x30] sm:$0xff]
        %v338 = vld [vmem:[%s267 + $0x38] sm:$0xff]
        %v339 = vld [vmem:[%s267 + $0x40] sm:$0xff]
        %v340 = vld [vmem:[%s267 + $0x48] sm:$0xff]
        %v341 = vld [vmem:[%s267 + $0x50] sm:$0xff]
        %v342 = vld [vmem:[%s267 + $0x58] sm:$0xff]
        %v343 = vld [vmem:[%s267 + $0x60] sm:$0xff]
        %v344 = vld [vmem:[%s267 + $0x68] sm:$0xff]
        %v345 = vld [vmem:[%s267 + $0x70] sm:$0xff]
        %v346 = vld [vmem:[%s267 + $0x78] sm:$0xff]
        %v347 = vld [vmem:[%s275] sm:$0xf]
        %v348 = vld [vmem:[%s275 + $0x4] sm:$0xf]
        %v349 = vld [vmem:[%s275 + $0x8] sm:$0xf]
        %v350 = vld [vmem:[%s275 + $0xc] sm:$0xf]
        %v351 = vld [vmem:[%s275 + $0x10] sm:$0xf]
        %v352 = vld [vmem:[%s275 + $0x14] sm:$0xf]
        %v353 = vld [vmem:[%s275 + $0x18] sm:$0xf]
        %v354 = vld [vmem:[%s275 + $0x1c] sm:$0xf]
        %v355 = vld [vmem:[%s275 + $0x20] sm:$0xf]
        %v356 = vld [vmem:[%s275 + $0x24] sm:$0xf]
        %v357 = vld [vmem:[%s275 + $0x28] sm:$0xf]
        %v358 = vld [vmem:[%s275 + $0x2c] sm:$0xf]
        %v359 = vld [vmem:[%s275 + $0x30] sm:$0xf]
        %v360 = vld [vmem:[%s275 + $0x34] sm:$0xf]
        %v361 = vld [vmem:[%s275 + $0x38] sm:$0xf]
        %v362 = vld [vmem:[%s275 + $0x3c] sm:$0xf]
        %v363 = vld [vmem:[%s275 + $0x40] sm:$0xf]
        %v364 = vld [vmem:[%s275 + $0x44] sm:$0xf]
        %v365 = vld [vmem:[%s275 + $0x48] sm:$0xf]
        %v366 = vld [vmem:[%s275 + $0x4c] sm:$0xf]
        %v367 = vld [vmem:[%s275 + $0x50] sm:$0xf]
        %v368 = vld [vmem:[%s275 + $0x54] sm:$0xf]
        %v369 = vld [vmem:[%s275 + $0x58] sm:$0xf]
        %v370 = vld [vmem:[%s275 + $0x5c] sm:$0xf]
        %v371 = vld [vmem:[%s275 + $0x60] sm:$0xf]
        %v372 = vld [vmem:[%s275 + $0x64] sm:$0xf]
        %v373 = vld [vmem:[%s275 + $0x68] sm:$0xf]
        %v374 = vld [vmem:[%s275 + $0x6c] sm:$0xf]
        %v375 = vld [vmem:[%s275 + $0x70] sm:$0xf]
        %v376 = vld [vmem:[%s275 + $0x74] sm:$0xf]
        %v377 = vld [vmem:[%s275 + $0x78] sm:$0xf]
        %v378 = vld [vmem:[%s275 + $0x7c] sm:$0xf]
        %v379 = vld [vmem:[%s275 + $0x80] sm:$0xf]
        %v380 = vld [vmem:[%s275 + $0x84] sm:$0xf]
        %v381 = vld [vmem:[%s275 + $0x88] sm:$0xf]
        %v382 = vld [vmem:[%s275 + $0x8c] sm:$0xf]
        %v383 = vld [vmem:[%s275 + $0x90] sm:$0xf]
        %v384 = vld [vmem:[%s275 + $0x94] sm:$0xf]
        %v385 = vld [vmem:[%s275 + $0x98] sm:$0xf]
        %v386 = vld [vmem:[%s275 + $0x9c] sm:$0xf]
        %v387 = vld [vmem:[%s275 + $0xa0] sm:$0xf]
        %v388 = vld [vmem:[%s275 + $0xa4] sm:$0xf]
        %v389 = vld [vmem:[%s275 + $0xa8] sm:$0xf]
        %v390 = vld [vmem:[%s275 + $0xac] sm:$0xf]
        %v391 = vld [vmem:[%s275 + $0xb0] sm:$0xf]
        %v392 = vld [vmem:[%s275 + $0xb4] sm:$0xf]
        %v393 = vld [vmem:[%s275 + $0xb8] sm:$0xf]
        %v394 = vld [vmem:[%s275 + $0xbc] sm:$0xf]
        %v395 = vld [vmem:[%s275 + $0xc0] sm:$0xf]
        %v396 = vld [vmem:[%s275 + $0xc4] sm:$0xf]
        %v397 = vld [vmem:[%s275 + $0xc8] sm:$0xf]
        %v398 = vld [vmem:[%s275 + $0xcc] sm:$0xf]
        %v399 = vld [vmem:[%s275 + $0xd0] sm:$0xf]
        %v400 = vld [vmem:[%s275 + $0xd4] sm:$0xf]
        %v401 = vld [vmem:[%s275 + $0xd8] sm:$0xf]
        %v402 = vld [vmem:[%s275 + $0xdc] sm:$0xf]
        %v403 = vld [vmem:[%s275 + $0xe0] sm:$0xf]
        %v404 = vld [vmem:[%s275 + $0xe4] sm:$0xf]
        %v405 = vld [vmem:[%s275 + $0xe8] sm:$0xf]
        %v406 = vld [vmem:[%s275 + $0xec] sm:$0xf]
        %v407 = vld [vmem:[%s275 + $0xf0] sm:$0xf]
        %v408 = vld [vmem:[%s275 + $0xf4] sm:$0xf]
        %v409 = vld [vmem:[%s275 + $0xf8] sm:$0xf]
        %v410 = vld [vmem:[%s275 + $0xfc] sm:$0xf]
        %v411 = vld [vmem:[%s275 + $0x100] sm:$0xf]
        %v412 = vld [vmem:[%s275 + $0x104] sm:$0xf]
        %v413 = vld [vmem:[%s275 + $0x108] sm:$0xf]
        %v414 = vld [vmem:[%s275 + $0x10c] sm:$0xf]
        %v415 = vld [vmem:[%s275 + $0x110] sm:$0xf]
        %v416 = vld [vmem:[%s275 + $0x114] sm:$0xf]
        %v417 = vld [vmem:[%s275 + $0x118] sm:$0xf]
        %v418 = vld [vmem:[%s275 + $0x11c] sm:$0xf]
        %v419 = vld [vmem:[%s275 + $0x120] sm:$0xf]
        %v420 = vld [vmem:[%s275 + $0x124] sm:$0xf]
        %v421 = vld [vmem:[%s275 + $0x128] sm:$0xf]
        %v422 = vld [vmem:[%s275 + $0x12c] sm:$0xf]
        %v423 = vld [vmem:[%s275 + $0x130] sm:$0xf]
        %v424 = vld [vmem:[%s275 + $0x134] sm:$0xf]
        %v425 = vld [vmem:[%s275 + $0x138] sm:$0xf]
        %v426 = vld [vmem:[%s275 + $0x13c] sm:$0xf]
        %v427 = vld [vmem:[%s275 + $0x140] sm:$0xf]
        %v428 = vld [vmem:[%s275 + $0x144] sm:$0xf]
        %v429 = vld [vmem:[%s275 + $0x148] sm:$0xf]
        %v430 = vld [vmem:[%s275 + $0x14c] sm:$0xf]
        %v431 = vld [vmem:[%s275 + $0x150] sm:$0xf]
        %v432 = vld [vmem:[%s275 + $0x154] sm:$0xf]
        %v433 = vld [vmem:[%s275 + $0x158] sm:$0xf]
        %v434 = vld [vmem:[%s275 + $0x15c] sm:$0xf]
        %v435 = vld [vmem:[%s275 + $0x160] sm:$0xf]
        %v436 = vld [vmem:[%s275 + $0x164] sm:$0xf]
        %v437 = vld [vmem:[%s275 + $0x168] sm:$0xf]
        %v438 = vld [vmem:[%s275 + $0x16c] sm:$0xf]
        %v439 = vld [vmem:[%s275 + $0x170] sm:$0xf]
        %v440 = vld [vmem:[%s275 + $0x174] sm:$0xf]
        %v441 = vld [vmem:[%s275 + $0x178] sm:$0xf]
        %v442 = vld [vmem:[%s275 + $0x17c] sm:$0xf]
        %v443 = vld [vmem:[%s275 + $0x180] sm:$0xf]
        %v444 = vld [vmem:[%s275 + $0x184] sm:$0xf]
        %v445 = vld [vmem:[%s275 + $0x188] sm:$0xf]
        %v446 = vld [vmem:[%s275 + $0x18c] sm:$0xf]
        %v447 = vld [vmem:[%s275 + $0x190] sm:$0xf]
        %v448 = vld [vmem:[%s275 + $0x194] sm:$0xf]
        %v449 = vld [vmem:[%s275 + $0x198] sm:$0xf]
        %v450 = vld [vmem:[%s275 + $0x19c] sm:$0xf]
        %v451 = vld [vmem:[%s275 + $0x1a0] sm:$0xf]
        %v452 = vld [vmem:[%s275 + $0x1a4] sm:$0xf]
        %v453 = vld [vmem:[%s275 + $0x1a8] sm:$0xf]
        %v454 = vld [vmem:[%s275 + $0x1ac] sm:$0xf]
        %v455 = vld [vmem:[%s275 + $0x1b0] sm:$0xf]
        %v456 = vld [vmem:[%s275 + $0x1b4] sm:$0xf]
        %v457 = vld [vmem:[%s275 + $0x1b8] sm:$0xf]
        %v458 = vld [vmem:[%s275 + $0x1bc] sm:$0xf]
        %v459 = vld [vmem:[%s275 + $0x1c0] sm:$0xf]
        %v460 = vld [vmem:[%s275 + $0x1c4] sm:$0xf]
        %v461 = vld [vmem:[%s275 + $0x1c8] sm:$0xf]
        %v462 = vld [vmem:[%s275 + $0x1cc] sm:$0xf]
        %v463 = vld [vmem:[%s275 + $0x1d0] sm:$0xf]
        %v464 = vld [vmem:[%s275 + $0x1d4] sm:$0xf]
        %v465 = vld [vmem:[%s275 + $0x1d8] sm:$0xf]
        %v466 = vld [vmem:[%s275 + $0x1dc] sm:$0xf]
        %v467 = vld [vmem:[%s275 + $0x1e0] sm:$0xf]
        %v468 = vld [vmem:[%s275 + $0x1e4] sm:$0xf]
        %v469 = vld [vmem:[%s275 + $0x1e8] sm:$0xf]
        %v470 = vld [vmem:[%s275 + $0x1ec] sm:$0xf]
        %v471 = vld [vmem:[%s275 + $0x1f0] sm:$0xf]
        %v472 = vld [vmem:[%s275 + $0x1f4] sm:$0xf]
        %v473 = vld [vmem:[%s275 + $0x1f8] sm:$0xf]
        %v474 = vld [vmem:[%s275 + $0x1fc] sm:$0xf]
        %v475 = vld [vmem:[%s275 + $0x200] sm:$0xf]
        %v476 = vld [vmem:[%s275 + $0x204] sm:$0xf]
        %v477 = vld [vmem:[%s275 + $0x208] sm:$0xf]
        %v478 = vld [vmem:[%s275 + $0x20c] sm:$0xf]
        %v479 = vld [vmem:[%s275 + $0x210] sm:$0xf]
        %v480 = vld [vmem:[%s275 + $0x214] sm:$0xf]
        %v481 = vld [vmem:[%s275 + $0x218] sm:$0xf]
        %v482 = vld [vmem:[%s275 + $0x21c] sm:$0xf]
        %v483 = vld [vmem:[%s275 + $0x220] sm:$0xf]
        %v484 = vld [vmem:[%s275 + $0x224] sm:$0xf]
        %v485 = vld [vmem:[%s275 + $0x228] sm:$0xf]
        %v486 = vld [vmem:[%s275 + $0x22c] sm:$0xf]
        %v487 = vld [vmem:[%s275 + $0x230] sm:$0xf]
        %v488 = vld [vmem:[%s275 + $0x234] sm:$0xf]
        %v489 = vld [vmem:[%s275 + $0x238] sm:$0xf]
        %v490 = vld [vmem:[%s275 + $0x23c] sm:$0xf]
        %v491 = vld [vmem:[%s275 + $0x240] sm:$0xf]
        %v492 = vld [vmem:[%s275 + $0x244] sm:$0xf]
        %v493 = vld [vmem:[%s275 + $0x248] sm:$0xf]
        %v494 = vld [vmem:[%s275 + $0x24c] sm:$0xf]
        %v495 = vld [vmem:[%s275 + $0x250] sm:$0xf]
        %v496 = vld [vmem:[%s275 + $0x254] sm:$0xf]
        %v497 = vld [vmem:[%s275 + $0x258] sm:$0xf]
        %v498 = vld [vmem:[%s275 + $0x25c] sm:$0xf]
        %v499 = vld [vmem:[%s275 + $0x260] sm:$0xf]
        %v500 = vld [vmem:[%s275 + $0x264] sm:$0xf]
        %v501 = vld [vmem:[%s275 + $0x268] sm:$0xf]
        %v502 = vld [vmem:[%s275 + $0x26c] sm:$0xf]
        %v503 = vld [vmem:[%s275 + $0x270] sm:$0xf]
        %v504 = vld [vmem:[%s275 + $0x274] sm:$0xf]
        %v505 = vld [vmem:[%s275 + $0x278] sm:$0xf]
        %v506 = vld [vmem:[%s275 + $0x27c] sm:$0xf]
        %v507 = vld [vmem:[%s275 + $0x280] sm:$0xf]
        %v508 = vld [vmem:[%s275 + $0x284] sm:$0xf]
        %v509 = vld [vmem:[%s275 + $0x288] sm:$0xf]
        %v510 = vld [vmem:[%s275 + $0x28c] sm:$0xf]
        %v511 = vld [vmem:[%s275 + $0x290] sm:$0xf]
        %v512 = vld [vmem:[%s275 + $0x294] sm:$0xf]
        %v513 = vld [vmem:[%s275 + $0x298] sm:$0xf]
        %v514 = vld [vmem:[%s275 + $0x29c] sm:$0xf]
        %v515 = vld [vmem:[%s275 + $0x2a0] sm:$0xf]
        %v516 = vld [vmem:[%s275 + $0x2a4] sm:$0xf]
        %v517 = vld [vmem:[%s275 + $0x2a8] sm:$0xf]
        %v518 = vld [vmem:[%s275 + $0x2ac] sm:$0xf]
        %v519 = vld [vmem:[%s275 + $0x2b0] sm:$0xf]
        %v520 = vld [vmem:[%s275 + $0x2b4] sm:$0xf]
        %v521 = vld [vmem:[%s275 + $0x2b8] sm:$0xf]
        %v522 = vld [vmem:[%s275 + $0x2bc] sm:$0xf]
        %v523 = vld [vmem:[%s275 + $0x2c0] sm:$0xf]
        %v524 = vld [vmem:[%s275 + $0x2c4] sm:$0xf]
        %v525 = vld [vmem:[%s275 + $0x2c8] sm:$0xf]
        %v526 = vld [vmem:[%s275 + $0x2cc] sm:$0xf]
        %v527 = vld [vmem:[%s275 + $0x2d0] sm:$0xf]
        %v528 = vld [vmem:[%s275 + $0x2d4] sm:$0xf]
        %v529 = vld [vmem:[%s275 + $0x2d8] sm:$0xf]
        %v530 = vld [vmem:[%s275 + $0x2dc] sm:$0xf]
        %v531 = vld [vmem:[%s275 + $0x2e0] sm:$0xf]
        %v532 = vld [vmem:[%s275 + $0x2e4] sm:$0xf]
        %v533 = vld [vmem:[%s275 + $0x2e8] sm:$0xf]
        %v534 = vld [vmem:[%s275 + $0x2ec] sm:$0xf]
        %v535 = vld [vmem:[%s275 + $0x2f0] sm:$0xf]
        %v536 = vld [vmem:[%s275 + $0x2f4] sm:$0xf]
        %v537 = vld [vmem:[%s275 + $0x2f8] sm:$0xf]
        %v538 = vld [vmem:[%s275 + $0x2fc] sm:$0xf]
        %v539 = vld [vmem:[%s275 + $0x300] sm:$0xf]
        %v540 = vld [vmem:[%s275 + $0x304] sm:$0xf]
        %v541 = vld [vmem:[%s275 + $0x308] sm:$0xf]
        %v542 = vld [vmem:[%s275 + $0x30c] sm:$0xf]
        %v543 = vld [vmem:[%s275 + $0x310] sm:$0xf]
        %v544 = vld [vmem:[%s275 + $0x314] sm:$0xf]
        %v545 = vld [vmem:[%s275 + $0x318] sm:$0xf]
        %v546 = vld [vmem:[%s275 + $0x31c] sm:$0xf]
        %v547 = vld [vmem:[%s275 + $0x320] sm:$0xf]
        %v548 = vld [vmem:[%s275 + $0x324] sm:$0xf]
        %v549 = vld [vmem:[%s275 + $0x328] sm:$0xf]
        %v550 = vld [vmem:[%s275 + $0x32c] sm:$0xf]
        %v551 = vld [vmem:[%s275 + $0x330] sm:$0xf]
        %v552 = vld [vmem:[%s275 + $0x334] sm:$0xf]
        %v553 = vld [vmem:[%s275 + $0x338] sm:$0xf]
        %v554 = vld [vmem:[%s275 + $0x33c] sm:$0xf]
        %v555 = vld [vmem:[%s275 + $0x340] sm:$0xf]
        %v556 = vld [vmem:[%s275 + $0x344] sm:$0xf]
        %v557 = vld [vmem:[%s275 + $0x348] sm:$0xf]
        %v558 = vld [vmem:[%s275 + $0x34c] sm:$0xf]
        %v559 = vld [vmem:[%s275 + $0x350] sm:$0xf]
        %v560 = vld [vmem:[%s275 + $0x354] sm:$0xf]
        %v561 = vld [vmem:[%s275 + $0x358] sm:$0xf]
        %v562 = vld [vmem:[%s275 + $0x35c] sm:$0xf]
        %v563 = vld [vmem:[%s275 + $0x360] sm:$0xf]
        %v564 = vld [vmem:[%s275 + $0x364] sm:$0xf]
        %v565 = vld [vmem:[%s275 + $0x368] sm:$0xf]
        %v566 = vld [vmem:[%s275 + $0x36c] sm:$0xf]
        %v567 = vld [vmem:[%s275 + $0x370] sm:$0xf]
        %v568 = vld [vmem:[%s275 + $0x374] sm:$0xf]
        %v569 = vld [vmem:[%s275 + $0x378] sm:$0xf]
        %v570 = vld [vmem:[%s275 + $0x37c] sm:$0xf]
        %v571 = vld [vmem:[%s275 + $0x380] sm:$0xf]
        %v572 = vld [vmem:[%s275 + $0x384] sm:$0xf]
        %v573 = vld [vmem:[%s275 + $0x388] sm:$0xf]
        %v574 = vld [vmem:[%s275 + $0x38c] sm:$0xf]
        %v575 = vld [vmem:[%s275 + $0x390] sm:$0xf]
        %v576 = vld [vmem:[%s275 + $0x394] sm:$0xf]
        %v577 = vld [vmem:[%s275 + $0x398] sm:$0xf]
        %v578 = vld [vmem:[%s275 + $0x39c] sm:$0xf]
        %v579 = vld [vmem:[%s275 + $0x3a0] sm:$0xf]
        %v580 = vld [vmem:[%s275 + $0x3a4] sm:$0xf]
        %v581 = vld [vmem:[%s275 + $0x3a8] sm:$0xf]
        %v582 = vld [vmem:[%s275 + $0x3ac] sm:$0xf]
        %v583 = vld [vmem:[%s275 + $0x3b0] sm:$0xf]
        %v584 = vld [vmem:[%s275 + $0x3b4] sm:$0xf]
        %v585 = vld [vmem:[%s275 + $0x3b8] sm:$0xf]
        %v586 = vld [vmem:[%s275 + $0x3bc] sm:$0xf]
        %v587 = vld [vmem:[%s275 + $0x3c0] sm:$0xf]
        %v588 = vld [vmem:[%s275 + $0x3c4] sm:$0xf]
        %v589 = vld [vmem:[%s275 + $0x3c8] sm:$0xf]
        %v590 = vld [vmem:[%s275 + $0x3cc] sm:$0xf]
        %v591 = vld [vmem:[%s275 + $0x3d0] sm:$0xf]
        %v592 = vld [vmem:[%s275 + $0x3d4] sm:$0xf]
        %v593 = vld [vmem:[%s275 + $0x3d8] sm:$0xf]
        %v594 = vld [vmem:[%s275 + $0x3dc] sm:$0xf]
        %v595 = vld [vmem:[%s275 + $0x3e0] sm:$0xf]
        %v596 = vld [vmem:[%s275 + $0x3e4] sm:$0xf]
        %v597 = vld [vmem:[%s275 + $0x3e8] sm:$0xf]
        %v598 = vld [vmem:[%s275 + $0x3ec] sm:$0xf]
        %v599 = vld [vmem:[%s275 + $0x3f0] sm:$0xf]
        %v600 = vld [vmem:[%s275 + $0x3f4] sm:$0xf]
        %v601 = vld [vmem:[%s275 + $0x3f8] sm:$0xf]
        %v602 = vld [vmem:[%s275 + $0x3fc] sm:$0xf]
        %v619 = vunpack.c.l.b16 %v331
        %v620 = vunpack.c.h.b16 %v331
        %v621 = vunpack.c.l.b16 %v332
        %v622 = vunpack.c.h.b16 %v332
        %v623 = vunpack.c.l.b16 %v333
        %v624 = vunpack.c.h.b16 %v333
        %v625 = vunpack.c.l.b16 %v334
        %v626 = vunpack.c.h.b16 %v334
        %v627 = vunpack.c.l.b16 %v335
        %v628 = vunpack.c.h.b16 %v335
        %v629 = vunpack.c.l.b16 %v336
        %v630 = vunpack.c.h.b16 %v336
        %v631 = vunpack.c.l.b16 %v337
        %v632 = vunpack.c.h.b16 %v337
        %v633 = vunpack.c.l.b16 %v338
        %v634 = vunpack.c.h.b16 %v338
        %v635 = vunpack.c.l.b16 %v339
        %v636 = vunpack.c.h.b16 %v339
        %v637 = vunpack.c.l.b16 %v340
        %v638 = vunpack.c.h.b16 %v340
        %v639 = vunpack.c.l.b16 %v341
        %v640 = vunpack.c.h.b16 %v341
        %v641 = vunpack.c.l.b16 %v342
        %v642 = vunpack.c.h.b16 %v342
        %v643 = vunpack.c.l.b16 %v343
        %v644 = vunpack.c.h.b16 %v343
        %v645 = vunpack.c.l.b16 %v344
        %v646 = vunpack.c.h.b16 %v344
        %v647 = vunpack.c.l.b16 %v345
        %v648 = vunpack.c.h.b16 %v345
        %v649 = vunpack.c.l.b16 %v346
        %v650 = vunpack.c.h.b16 %v346
        %v651 = vpack.c.b16 %v635, %v619
        %v652 = vpack.c.b16 %v636, %v620
        %v653 = vpack.c.b16 %v637, %v621
        %v654 = vpack.c.b16 %v638, %v622
        %v655 = vpack.c.b16 %v639, %v623
        %v656 = vpack.c.b16 %v640, %v624
        %v657 = vpack.c.b16 %v641, %v625
        %v658 = vpack.c.b16 %v642, %v626
        %v659 = vpack.c.b16 %v643, %v627
        %v660 = vpack.c.b16 %v644, %v628
        %v661 = vpack.c.b16 %v645, %v629
        %v662 = vpack.c.b16 %v646, %v630
        %v663 = vpack.c.b16 %v647, %v631
        %v664 = vpack.c.b16 %v648, %v632
        %v665 = vpack.c.b16 %v649, %v633
        %v666 = vpack.c.b16 %v650, %v634
        %v939 = vunpack.c.l.b16 %v347
        %v940 = vunpack.c.l.b16 %v348
        %v941 = vunpack.c.l.b16 %v349
        %v942 = vunpack.c.l.b16 %v350
        %v943 = vunpack.c.l.b16 %v351
        %v944 = vunpack.c.l.b16 %v352
        %v945 = vunpack.c.l.b16 %v353
        %v946 = vunpack.c.l.b16 %v354
        %v947 = vunpack.c.l.b16 %v355
        %v948 = vunpack.c.l.b16 %v356
        %v949 = vunpack.c.l.b16 %v357
        %v950 = vunpack.c.l.b16 %v358
        %v951 = vunpack.c.l.b16 %v359
        %v952 = vunpack.c.l.b16 %v360
        %v953 = vunpack.c.l.b16 %v361
        %v954 = vunpack.c.l.b16 %v362
        %v955 = vunpack.c.l.b16 %v363
        %v956 = vunpack.c.l.b16 %v364
        %v957 = vunpack.c.l.b16 %v365
        %v958 = vunpack.c.l.b16 %v366
        %v959 = vunpack.c.l.b16 %v367
        %v960 = vunpack.c.l.b16 %v368
        %v961 = vunpack.c.l.b16 %v369
        %v962 = vunpack.c.l.b16 %v370
        %v963 = vunpack.c.l.b16 %v371
        %v964 = vunpack.c.l.b16 %v372
        %v965 = vunpack.c.l.b16 %v373
        %v966 = vunpack.c.l.b16 %v374
        %v967 = vunpack.c.l.b16 %v375
        %v968 = vunpack.c.l.b16 %v376
        %v969 = vunpack.c.l.b16 %v377
        %v970 = vunpack.c.l.b16 %v378
        %v971 = vunpack.c.l.b16 %v379
        %v972 = vunpack.c.l.b16 %v380
        %v973 = vunpack.c.l.b16 %v381
        %v974 = vunpack.c.l.b16 %v382
        %v975 = vunpack.c.l.b16 %v383
        %v976 = vunpack.c.l.b16 %v384
        %v977 = vunpack.c.l.b16 %v385
        %v978 = vunpack.c.l.b16 %v386
        %v979 = vunpack.c.l.b16 %v387
        %v980 = vunpack.c.l.b16 %v388
        %v981 = vunpack.c.l.b16 %v389
        %v982 = vunpack.c.l.b16 %v390
        %v983 = vunpack.c.l.b16 %v391
        %v984 = vunpack.c.l.b16 %v392
        %v985 = vunpack.c.l.b16 %v393
        %v986 = vunpack.c.l.b16 %v394
        %v987 = vunpack.c.l.b16 %v395
        %v988 = vunpack.c.l.b16 %v396
        %v989 = vunpack.c.l.b16 %v397
        %v990 = vunpack.c.l.b16 %v398
        %v991 = vunpack.c.l.b16 %v399
        %v992 = vunpack.c.l.b16 %v400
        %v993 = vunpack.c.l.b16 %v401
        %v994 = vunpack.c.l.b16 %v402
        %v995 = vunpack.c.l.b16 %v403
        %v996 = vunpack.c.l.b16 %v404
        %v997 = vunpack.c.l.b16 %v405
        %v998 = vunpack.c.l.b16 %v406
        %v999 = vunpack.c.l.b16 %v407
        %v1000 = vunpack.c.l.b16 %v408
        %v1001 = vunpack.c.l.b16 %v409
        %v1002 = vunpack.c.l.b16 %v410
        %v1003 = vunpack.c.l.b16 %v411
        %v1004 = vunpack.c.l.b16 %v412
        %v1005 = vunpack.c.l.b16 %v413
        %v1006 = vunpack.c.l.b16 %v414
        %v1007 = vunpack.c.l.b16 %v415
        %v1008 = vunpack.c.l.b16 %v416
        %v1009 = vunpack.c.l.b16 %v417
        %v1010 = vunpack.c.l.b16 %v418
        %v1011 = vunpack.c.l.b16 %v419
        %v1012 = vunpack.c.l.b16 %v420
        %v1013 = vunpack.c.l.b16 %v421
        %v1014 = vunpack.c.l.b16 %v422
        %v1015 = vunpack.c.l.b16 %v423
        %v1016 = vunpack.c.l.b16 %v424
        %v1017 = vunpack.c.l.b16 %v425
        %v1018 = vunpack.c.l.b16 %v426
        %v1019 = vunpack.c.l.b16 %v427
        %v1020 = vunpack.c.l.b16 %v428
        %v1021 = vunpack.c.l.b16 %v429
        %v1022 = vunpack.c.l.b16 %v430
        %v1023 = vunpack.c.l.b16 %v431
        %v1024 = vunpack.c.l.b16 %v432
        %v1025 = vunpack.c.l.b16 %v433
        %v1026 = vunpack.c.l.b16 %v434
        %v1027 = vunpack.c.l.b16 %v435
        %v1028 = vunpack.c.l.b16 %v436
        %v1029 = vunpack.c.l.b16 %v437
        %v1030 = vunpack.c.l.b16 %v438
        %v1031 = vunpack.c.l.b16 %v439
        %v1032 = vunpack.c.l.b16 %v440
        %v1033 = vunpack.c.l.b16 %v441
        %v1034 = vunpack.c.l.b16 %v442
        %v1035 = vunpack.c.l.b16 %v443
        %v1036 = vunpack.c.l.b16 %v444
        %v1037 = vunpack.c.l.b16 %v445
        %v1038 = vunpack.c.l.b16 %v446
        %v1039 = vunpack.c.l.b16 %v447
        %v1040 = vunpack.c.l.b16 %v448
        %v1041 = vunpack.c.l.b16 %v449
        %v1042 = vunpack.c.l.b16 %v450
        %v1043 = vunpack.c.l.b16 %v451
        %v1044 = vunpack.c.l.b16 %v452
        %v1045 = vunpack.c.l.b16 %v453
        %v1046 = vunpack.c.l.b16 %v454
        %v1047 = vunpack.c.l.b16 %v455
        %v1048 = vunpack.c.l.b16 %v456
        %v1049 = vunpack.c.l.b16 %v457
        %v1050 = vunpack.c.l.b16 %v458
        %v1051 = vunpack.c.l.b16 %v459
        %v1052 = vunpack.c.l.b16 %v460
        %v1053 = vunpack.c.l.b16 %v461
        %v1054 = vunpack.c.l.b16 %v462
        %v1055 = vunpack.c.l.b16 %v463
        %v1056 = vunpack.c.l.b16 %v464
        %v1057 = vunpack.c.l.b16 %v465
        %v1058 = vunpack.c.l.b16 %v466
        %v1059 = vunpack.c.l.b16 %v467
        %v1060 = vunpack.c.l.b16 %v468
        %v1061 = vunpack.c.l.b16 %v469
        %v1062 = vunpack.c.l.b16 %v470
        %v1063 = vunpack.c.l.b16 %v471
        %v1064 = vunpack.c.l.b16 %v472
        %v1065 = vunpack.c.l.b16 %v473
        %v1066 = vunpack.c.l.b16 %v474
        %v1067 = vunpack.c.l.b16 %v475
        %v1068 = vunpack.c.l.b16 %v476
        %v1069 = vunpack.c.l.b16 %v477
        %v1070 = vunpack.c.l.b16 %v478
        %v1071 = vunpack.c.l.b16 %v479
        %v1072 = vunpack.c.l.b16 %v480
        %v1073 = vunpack.c.l.b16 %v481
        %v1074 = vunpack.c.l.b16 %v482
        %v1075 = vunpack.c.l.b16 %v483
        %v1076 = vunpack.c.l.b16 %v484
        %v1077 = vunpack.c.l.b16 %v485
        %v1078 = vunpack.c.l.b16 %v486
        %v1079 = vunpack.c.l.b16 %v487
        %v1080 = vunpack.c.l.b16 %v488
        %v1081 = vunpack.c.l.b16 %v489
        %v1082 = vunpack.c.l.b16 %v490
        %v1083 = vunpack.c.l.b16 %v491
        %v1084 = vunpack.c.l.b16 %v492
        %v1085 = vunpack.c.l.b16 %v493
        %v1086 = vunpack.c.l.b16 %v494
        %v1087 = vunpack.c.l.b16 %v495
        %v1088 = vunpack.c.l.b16 %v496
        %v1089 = vunpack.c.l.b16 %v497
        %v1090 = vunpack.c.l.b16 %v498
        %v1091 = vunpack.c.l.b16 %v499
        %v1092 = vunpack.c.l.b16 %v500
        %v1093 = vunpack.c.l.b16 %v501
        %v1094 = vunpack.c.l.b16 %v502
        %v1095 = vunpack.c.l.b16 %v503
        %v1096 = vunpack.c.l.b16 %v504
        %v1097 = vunpack.c.l.b16 %v505
        %v1098 = vunpack.c.l.b16 %v506
        %v1099 = vunpack.c.l.b16 %v507
        %v1100 = vunpack.c.l.b16 %v508
        %v1101 = vunpack.c.l.b16 %v509
        %v1102 = vunpack.c.l.b16 %v510
        %v1103 = vunpack.c.l.b16 %v511
        %v1104 = vunpack.c.l.b16 %v512
        %v1105 = vunpack.c.l.b16 %v513
        %v1106 = vunpack.c.l.b16 %v514
        %v1107 = vunpack.c.l.b16 %v515
        %v1108 = vunpack.c.l.b16 %v516
        %v1109 = vunpack.c.l.b16 %v517
        %v1110 = vunpack.c.l.b16 %v518
        %v1111 = vunpack.c.l.b16 %v519
        %v1112 = vunpack.c.l.b16 %v520
        %v1113 = vunpack.c.l.b16 %v521
        %v1114 = vunpack.c.l.b16 %v522
        %v1115 = vunpack.c.l.b16 %v523
        %v1116 = vunpack.c.l.b16 %v524
        %v1117 = vunpack.c.l.b16 %v525
        %v1118 = vunpack.c.l.b16 %v526
        %v1119 = vunpack.c.l.b16 %v527
        %v1120 = vunpack.c.l.b16 %v528
        %v1121 = vunpack.c.l.b16 %v529
        %v1122 = vunpack.c.l.b16 %v530
        %v1123 = vunpack.c.l.b16 %v531
        %v1124 = vunpack.c.l.b16 %v532
        %v1125 = vunpack.c.l.b16 %v533
        %v1126 = vunpack.c.l.b16 %v534
        %v1127 = vunpack.c.l.b16 %v535
        %v1128 = vunpack.c.l.b16 %v536
        %v1129 = vunpack.c.l.b16 %v537
        %v1130 = vunpack.c.l.b16 %v538
        %v1131 = vunpack.c.l.b16 %v539
        %v1132 = vunpack.c.l.b16 %v540
        %v1133 = vunpack.c.l.b16 %v541
        %v1134 = vunpack.c.l.b16 %v542
        %v1135 = vunpack.c.l.b16 %v543
        %v1136 = vunpack.c.l.b16 %v544
        %v1137 = vunpack.c.l.b16 %v545
        %v1138 = vunpack.c.l.b16 %v546
        %v1139 = vunpack.c.l.b16 %v547
        %v1140 = vunpack.c.l.b16 %v548
        %v1141 = vunpack.c.l.b16 %v549
        %v1142 = vunpack.c.l.b16 %v550
        %v1143 = vunpack.c.l.b16 %v551
        %v1144 = vunpack.c.l.b16 %v552
        %v1145 = vunpack.c.l.b16 %v553
        %v1146 = vunpack.c.l.b16 %v554
        %v1147 = vunpack.c.l.b16 %v555
        %v1148 = vunpack.c.l.b16 %v556
        %v1149 = vunpack.c.l.b16 %v557
        %v1150 = vunpack.c.l.b16 %v558
        %v1151 = vunpack.c.l.b16 %v559
        %v1152 = vunpack.c.l.b16 %v560
        %v1153 = vunpack.c.l.b16 %v561
        %v1154 = vunpack.c.l.b16 %v562
        %v1155 = vunpack.c.l.b16 %v563
        %v1156 = vunpack.c.l.b16 %v564
        %v1157 = vunpack.c.l.b16 %v565
        %v1158 = vunpack.c.l.b16 %v566
        %v1159 = vunpack.c.l.b16 %v567
        %v1160 = vunpack.c.l.b16 %v568
        %v1161 = vunpack.c.l.b16 %v569
        %v1162 = vunpack.c.l.b16 %v570
        %v1163 = vunpack.c.l.b16 %v571
        %v1164 = vunpack.c.l.b16 %v572
        %v1165 = vunpack.c.l.b16 %v573
        %v1166 = vunpack.c.l.b16 %v574
        %v1167 = vunpack.c.l.b16 %v575
        %v1168 = vunpack.c.l.b16 %v576
        %v1169 = vunpack.c.l.b16 %v577
        %v1170 = vunpack.c.l.b16 %v578
        %v1171 = vunpack.c.l.b16 %v579
        %v1172 = vunpack.c.l.b16 %v580
        %v1173 = vunpack.c.l.b16 %v581
        %v1174 = vunpack.c.l.b16 %v582
        %v1175 = vunpack.c.l.b16 %v583
        %v1176 = vunpack.c.l.b16 %v584
        %v1177 = vunpack.c.l.b16 %v585
        %v1178 = vunpack.c.l.b16 %v586
        %v1179 = vunpack.c.l.b16 %v587
        %v1180 = vunpack.c.l.b16 %v588
        %v1181 = vunpack.c.l.b16 %v589
        %v1182 = vunpack.c.l.b16 %v590
        %v1183 = vunpack.c.l.b16 %v591
        %v1184 = vunpack.c.l.b16 %v592
        %v1185 = vunpack.c.l.b16 %v593
        %v1186 = vunpack.c.l.b16 %v594
        %v1187 = vunpack.c.l.b16 %v595
        %v1188 = vunpack.c.l.b16 %v596
        %v1189 = vunpack.c.l.b16 %v597
        %v1190 = vunpack.c.l.b16 %v598
        %v1191 = vunpack.c.l.b16 %v599
        %v1192 = vunpack.c.l.b16 %v600
        %v1193 = vunpack.c.l.b16 %v601
        %v1194 = vunpack.c.l.b16 %v602
        %v1195 = vpack.c.b16 %v940, %v939
        %v1196 = vpack.c.b16 %v942, %v941
        %v1197 = vpack.c.b16 %v944, %v943
        %v1198 = vpack.c.b16 %v946, %v945
        %v1199 = vpack.c.b16 %v948, %v947
        %v1200 = vpack.c.b16 %v950, %v949
        %v1201 = vpack.c.b16 %v952, %v951
        %v1202 = vpack.c.b16 %v954, %v953
        %v1203 = vpack.c.b16 %v956, %v955
        %v1204 = vpack.c.b16 %v958, %v957
        %v1205 = vpack.c.b16 %v960, %v959
        %v1206 = vpack.c.b16 %v962, %v961
        %v1207 = vpack.c.b16 %v964, %v963
        %v1208 = vpack.c.b16 %v966, %v965
        %v1209 = vpack.c.b16 %v968, %v967
        %v1210 = vpack.c.b16 %v970, %v969
        %v1211 = vpack.c.b16 %v972, %v971
        %v1212 = vpack.c.b16 %v974, %v973
        %v1213 = vpack.c.b16 %v976, %v975
        %v1214 = vpack.c.b16 %v978, %v977
        %v1215 = vpack.c.b16 %v980, %v979
        %v1216 = vpack.c.b16 %v982, %v981
        %v1217 = vpack.c.b16 %v984, %v983
        %v1218 = vpack.c.b16 %v986, %v985
        %v1219 = vpack.c.b16 %v988, %v987
        %v1220 = vpack.c.b16 %v990, %v989
        %v1221 = vpack.c.b16 %v992, %v991
        %v1222 = vpack.c.b16 %v994, %v993
        %v1223 = vpack.c.b16 %v996, %v995
        %v1224 = vpack.c.b16 %v998, %v997
        %v1225 = vpack.c.b16 %v1000, %v999
        %v1226 = vpack.c.b16 %v1002, %v1001
        %v1227 = vpack.c.b16 %v1004, %v1003
        %v1228 = vpack.c.b16 %v1006, %v1005
        %v1229 = vpack.c.b16 %v1008, %v1007
        %v1230 = vpack.c.b16 %v1010, %v1009
        %v1231 = vpack.c.b16 %v1012, %v1011
        %v1232 = vpack.c.b16 %v1014, %v1013
        %v1233 = vpack.c.b16 %v1016, %v1015
        %v1234 = vpack.c.b16 %v1018, %v1017
        %v1235 = vpack.c.b16 %v1020, %v1019
        %v1236 = vpack.c.b16 %v1022, %v1021
        %v1237 = vpack.c.b16 %v1024, %v1023
        %v1238 = vpack.c.b16 %v1026, %v1025
        %v1239 = vpack.c.b16 %v1028, %v1027
        %v1240 = vpack.c.b16 %v1030, %v1029
        %v1241 = vpack.c.b16 %v1032, %v1031
        %v1242 = vpack.c.b16 %v1034, %v1033
        %v1243 = vpack.c.b16 %v1036, %v1035
        %v1244 = vpack.c.b16 %v1038, %v1037
        %v1245 = vpack.c.b16 %v1040, %v1039
        %v1246 = vpack.c.b16 %v1042, %v1041
        %v1247 = vpack.c.b16 %v1044, %v1043
        %v1248 = vpack.c.b16 %v1046, %v1045
        %v1249 = vpack.c.b16 %v1048, %v1047
        %v1250 = vpack.c.b16 %v1050, %v1049
        %v1251 = vpack.c.b16 %v1052, %v1051
        %v1252 = vpack.c.b16 %v1054, %v1053
        %v1253 = vpack.c.b16 %v1056, %v1055
        %v1254 = vpack.c.b16 %v1058, %v1057
        %v1255 = vpack.c.b16 %v1060, %v1059
        %v1256 = vpack.c.b16 %v1062, %v1061
        %v1257 = vpack.c.b16 %v1064, %v1063
        %v1258 = vpack.c.b16 %v1066, %v1065
        %v1259 = vpack.c.b16 %v1068, %v1067
        %v1260 = vpack.c.b16 %v1070, %v1069
        %v1261 = vpack.c.b16 %v1072, %v1071
        %v1262 = vpack.c.b16 %v1074, %v1073
        %v1263 = vpack.c.b16 %v1076, %v1075
        %v1264 = vpack.c.b16 %v1078, %v1077
        %v1265 = vpack.c.b16 %v1080, %v1079
        %v1266 = vpack.c.b16 %v1082, %v1081
        %v1267 = vpack.c.b16 %v1084, %v1083
        %v1268 = vpack.c.b16 %v1086, %v1085
        %v1269 = vpack.c.b16 %v1088, %v1087
        %v1270 = vpack.c.b16 %v1090, %v1089
        %v1271 = vpack.c.b16 %v1092, %v1091
        %v1272 = vpack.c.b16 %v1094, %v1093
        %v1273 = vpack.c.b16 %v1096, %v1095
        %v1274 = vpack.c.b16 %v1098, %v1097
        %v1275 = vpack.c.b16 %v1100, %v1099
        %v1276 = vpack.c.b16 %v1102, %v1101
        %v1277 = vpack.c.b16 %v1104, %v1103
        %v1278 = vpack.c.b16 %v1106, %v1105
        %v1279 = vpack.c.b16 %v1108, %v1107
        %v1280 = vpack.c.b16 %v1110, %v1109
        %v1281 = vpack.c.b16 %v1112, %v1111
        %v1282 = vpack.c.b16 %v1114, %v1113
        %v1283 = vpack.c.b16 %v1116, %v1115
        %v1284 = vpack.c.b16 %v1118, %v1117
        %v1285 = vpack.c.b16 %v1120, %v1119
        %v1286 = vpack.c.b16 %v1122, %v1121
        %v1287 = vpack.c.b16 %v1124, %v1123
        %v1288 = vpack.c.b16 %v1126, %v1125
        %v1289 = vpack.c.b16 %v1128, %v1127
        %v1290 = vpack.c.b16 %v1130, %v1129
        %v1291 = vpack.c.b16 %v1132, %v1131
        %v1292 = vpack.c.b16 %v1134, %v1133
        %v1293 = vpack.c.b16 %v1136, %v1135
        %v1294 = vpack.c.b16 %v1138, %v1137
        %v1295 = vpack.c.b16 %v1140, %v1139
        %v1296 = vpack.c.b16 %v1142, %v1141
        %v1297 = vpack.c.b16 %v1144, %v1143
        %v1298 = vpack.c.b16 %v1146, %v1145
        %v1299 = vpack.c.b16 %v1148, %v1147
        %v1300 = vpack.c.b16 %v1150, %v1149
        %v1301 = vpack.c.b16 %v1152, %v1151
        %v1302 = vpack.c.b16 %v1154, %v1153
        %v1303 = vpack.c.b16 %v1156, %v1155
        %v1304 = vpack.c.b16 %v1158, %v1157
        %v1305 = vpack.c.b16 %v1160, %v1159
        %v1306 = vpack.c.b16 %v1162, %v1161
        %v1307 = vpack.c.b16 %v1164, %v1163
        %v1308 = vpack.c.b16 %v1166, %v1165
        %v1309 = vpack.c.b16 %v1168, %v1167
        %v1310 = vpack.c.b16 %v1170, %v1169
        %v1311 = vpack.c.b16 %v1172, %v1171
        %v1312 = vpack.c.b16 %v1174, %v1173
        %v1313 = vpack.c.b16 %v1176, %v1175
        %v1314 = vpack.c.b16 %v1178, %v1177
        %v1315 = vpack.c.b16 %v1180, %v1179
        %v1316 = vpack.c.b16 %v1182, %v1181
        %v1317 = vpack.c.b16 %v1184, %v1183
        %v1318 = vpack.c.b16 %v1186, %v1185
        %v1319 = vpack.c.b16 %v1188, %v1187
        %v1320 = vpack.c.b16 %v1190, %v1189
        %v1321 = vpack.c.b16 %v1192, %v1191
        %v1322 = vpack.c.b16 %v1194, %v1193
        %1451 = vmatpush.bf16.msra.mxu0 %v1202
        %1452 = vmatpush.bf16.msra.mxu0 %v1201
        %1453 = vmatpush.bf16.msra.mxu0 %v1200
        %1454 = vmatpush.bf16.msra.mxu0 %v1199
        %1455 = vmatpush.bf16.msra.mxu0 %v1198
        %1456 = vmatpush.bf16.msra.mxu0 %v1197
        %1457 = vmatpush.bf16.msra.mxu0 %v1196
        %1458 = vmatpush.bf16.msra.mxu0 %v1195
        %1459 = vmatmul.bf16.gmra.mxu0 %v651
        %v1460 = vpop.f32.mrf.mxu0
        %v1461 = vadd.f32 0.0, %v1460
        %v1462 = vpop.f32.mrf.mxu0
        %v1463 = vadd.f32 0.0, %v1462
        %1464 = vdwg.mxu0
        %1465 = vmatpush.bf16.msra.mxu0 %v1210
        %1466 = vmatpush.bf16.msra.mxu0 %v1209
        %1467 = vmatpush.bf16.msra.mxu0 %v1208
        %1468 = vmatpush.bf16.msra.mxu0 %v1207
        %1469 = vmatpush.bf16.msra.mxu0 %v1206
        %1470 = vmatpush.bf16.msra.mxu0 %v1205
        %1471 = vmatpush.bf16.msra.mxu0 %v1204
        %1472 = vmatpush.bf16.msra.mxu0 %v1203
        %1473 = vmatmul.bf16.gmra.mxu0 %v652
        %v1474 = vpop.f32.mrf.mxu0
        %v1475 = vadd.f32 %v1461, %v1474
        %v1476 = vpop.f32.mrf.mxu0
        %v1477 = vadd.f32 %v1463, %v1476
        %1478 = vdwg.mxu0
        %1479 = vmatpush.bf16.msra.mxu0 %v1218
        %1480 = vmatpush.bf16.msra.mxu0 %v1217
        %1481 = vmatpush.bf16.msra.mxu0 %v1216
        %1482 = vmatpush.bf16.msra.mxu0 %v1215
        %1483 = vmatpush.bf16.msra.mxu0 %v1214
        %1484 = vmatpush.bf16.msra.mxu0 %v1213
        %1485 = vmatpush.bf16.msra.mxu0 %v1212
        %1486 = vmatpush.bf16.msra.mxu0 %v1211
        %1487 = vmatmul.bf16.gmra.mxu0 %v653
        %v1488 = vpop.f32.mrf.mxu0
        %v1489 = vadd.f32 %v1475, %v1488
        %v1490 = vpop.f32.mrf.mxu0
        %v1491 = vadd.f32 %v1477, %v1490
        %1492 = vdwg.mxu0
        %1493 = vmatpush.bf16.msra.mxu0 %v1226
        %1494 = vmatpush.bf16.msra.mxu0 %v1225
        %1495 = vmatpush.bf16.msra.mxu0 %v1224
        %1496 = vmatpush.bf16.msra.mxu0 %v1223
        %1497 = vmatpush.bf16.msra.mxu0 %v1222
        %1498 = vmatpush.bf16.msra.mxu0 %v1221
        %1499 = vmatpush.bf16.msra.mxu0 %v1220
        %1500 = vmatpush.bf16.msra.mxu0 %v1219
        %1501 = vmatmul.bf16.gmra.mxu0 %v654
        %v1502 = vpop.f32.mrf.mxu0
        %v1503 = vadd.f32 %v1489, %v1502
        %v1504 = vpop.f32.mrf.mxu0
        %v1505 = vadd.f32 %v1491, %v1504
        %1506 = vdwg.mxu0
        %1507 = vmatpush.bf16.msra.mxu0 %v1234
        %1508 = vmatpush.bf16.msra.mxu0 %v1233
        %1509 = vmatpush.bf16.msra.mxu0 %v1232
        %1510 = vmatpush.bf16.msra.mxu0 %v1231
        %1511 = vmatpush.bf16.msra.mxu0 %v1230
        %1512 = vmatpush.bf16.msra.mxu0 %v1229
        %1513 = vmatpush.bf16.msra.mxu0 %v1228
        %1514 = vmatpush.bf16.msra.mxu0 %v1227
        %1515 = vmatmul.bf16.gmra.mxu0 %v655
        %v1516 = vpop.f32.mrf.mxu0
        %v1517 = vadd.f32 %v1503, %v1516
        %v1518 = vpop.f32.mrf.mxu0
        %v1519 = vadd.f32 %v1505, %v1518
        %1520 = vdwg.mxu0
        %1521 = vmatpush.bf16.msra.mxu0 %v1242
        %1522 = vmatpush.bf16.msra.mxu0 %v1241
        %1523 = vmatpush.bf16.msra.mxu0 %v1240
        %1524 = vmatpush.bf16.msra.mxu0 %v1239
        %1525 = vmatpush.bf16.msra.mxu0 %v1238
        %1526 = vmatpush.bf16.msra.mxu0 %v1237
        %1527 = vmatpush.bf16.msra.mxu0 %v1236
        %1528 = vmatpush.bf16.msra.mxu0 %v1235
        %1529 = vmatmul.bf16.gmra.mxu0 %v656
        %v1530 = vpop.f32.mrf.mxu0
        %v1531 = vadd.f32 %v1517, %v1530
        %v1532 = vpop.f32.mrf.mxu0
        %v1533 = vadd.f32 %v1519, %v1532
        %1534 = vdwg.mxu0
        %1535 = vmatpush.bf16.msra.mxu0 %v1250
        %1536 = vmatpush.bf16.msra.mxu0 %v1249
        %1537 = vmatpush.bf16.msra.mxu0 %v1248
        %1538 = vmatpush.bf16.msra.mxu0 %v1247
        %1539 = vmatpush.bf16.msra.mxu0 %v1246
        %1540 = vmatpush.bf16.msra.mxu0 %v1245
        %1541 = vmatpush.bf16.msra.mxu0 %v1244
        %1542 = vmatpush.bf16.msra.mxu0 %v1243
        %1543 = vmatmul.bf16.gmra.mxu0 %v657
        %v1544 = vpop.f32.mrf.mxu0
        %v1545 = vadd.f32 %v1531, %v1544
        %v1546 = vpop.f32.mrf.mxu0
        %v1547 = vadd.f32 %v1533, %v1546
        %1548 = vdwg.mxu0
        %1549 = vmatpush.bf16.msra.mxu0 %v1258
        %1550 = vmatpush.bf16.msra.mxu0 %v1257
        %1551 = vmatpush.bf16.msra.mxu0 %v1256
        %1552 = vmatpush.bf16.msra.mxu0 %v1255
        %1553 = vmatpush.bf16.msra.mxu0 %v1254
        %1554 = vmatpush.bf16.msra.mxu0 %v1253
        %1555 = vmatpush.bf16.msra.mxu0 %v1252
        %1556 = vmatpush.bf16.msra.mxu0 %v1251
        %1557 = vmatmul.bf16.gmra.mxu0 %v658
        %v1558 = vpop.f32.mrf.mxu0
        %v1559 = vadd.f32 %v1545, %v1558
        %v1560 = vpop.f32.mrf.mxu0
        %v1561 = vadd.f32 %v1547, %v1560
        %1562 = vdwg.mxu0
        %1563 = vmatpush.bf16.msra.mxu0 %v1266
        %1564 = vmatpush.bf16.msra.mxu0 %v1265
        %1565 = vmatpush.bf16.msra.mxu0 %v1264
        %1566 = vmatpush.bf16.msra.mxu0 %v1263
        %1567 = vmatpush.bf16.msra.mxu0 %v1262
        %1568 = vmatpush.bf16.msra.mxu0 %v1261
        %1569 = vmatpush.bf16.msra.mxu0 %v1260
        %1570 = vmatpush.bf16.msra.mxu0 %v1259
        %1571 = vmatmul.bf16.gmra.mxu0 %v659
        %v1572 = vpop.f32.mrf.mxu0
        %v1573 = vadd.f32 %v1559, %v1572
        %v1574 = vpop.f32.mrf.mxu0
        %v1575 = vadd.f32 %v1561, %v1574
        %1576 = vdwg.mxu0
        %1577 = vmatpush.bf16.msra.mxu0 %v1274
        %1578 = vmatpush.bf16.msra.mxu0 %v1273
        %1579 = vmatpush.bf16.msra.mxu0 %v1272
        %1580 = vmatpush.bf16.msra.mxu0 %v1271
        %1581 = vmatpush.bf16.msra.mxu0 %v1270
        %1582 = vmatpush.bf16.msra.mxu0 %v1269
        %1583 = vmatpush.bf16.msra.mxu0 %v1268
        %1584 = vmatpush.bf16.msra.mxu0 %v1267
        %1585 = vmatmul.bf16.gmra.mxu0 %v660
        %v1586 = vpop.f32.mrf.mxu0
        %v1587 = vadd.f32 %v1573, %v1586
        %v1588 = vpop.f32.mrf.mxu0
        %v1589 = vadd.f32 %v1575, %v1588
        %1590 = vdwg.mxu0
        %1591 = vmatpush.bf16.msra.mxu0 %v1282
        %1592 = vmatpush.bf16.msra.mxu0 %v1281
        %1593 = vmatpush.bf16.msra.mxu0 %v1280
        %1594 = vmatpush.bf16.msra.mxu0 %v1279
        %1595 = vmatpush.bf16.msra.mxu0 %v1278
        %1596 = vmatpush.bf16.msra.mxu0 %v1277
        %1597 = vmatpush.bf16.msra.mxu0 %v1276
        %1598 = vmatpush.bf16.msra.mxu0 %v1275
        %1599 = vmatmul.bf16.gmra.mxu0 %v661
        %v1600 = vpop.f32.mrf.mxu0
        %v1601 = vadd.f32 %v1587, %v1600
        %v1602 = vpop.f32.mrf.mxu0
        %v1603 = vadd.f32 %v1589, %v1602
        %1604 = vdwg.mxu0
        %1605 = vmatpush.bf16.msra.mxu0 %v1290
        %1606 = vmatpush.bf16.msra.mxu0 %v1289
        %1607 = vmatpush.bf16.msra.mxu0 %v1288
        %1608 = vmatpush.bf16.msra.mxu0 %v1287
        %1609 = vmatpush.bf16.msra.mxu0 %v1286
        %1610 = vmatpush.bf16.msra.mxu0 %v1285
        %1611 = vmatpush.bf16.msra.mxu0 %v1284
        %1612 = vmatpush.bf16.msra.mxu0 %v1283
        %1613 = vmatmul.bf16.gmra.mxu0 %v662
        %v1614 = vpop.f32.mrf.mxu0
        %v1615 = vadd.f32 %v1601, %v1614
        %v1616 = vpop.f32.mrf.mxu0
        %v1617 = vadd.f32 %v1603, %v1616
        %1618 = vdwg.mxu0
        %1619 = vmatpush.bf16.msra.mxu0 %v1298
        %1620 = vmatpush.bf16.msra.mxu0 %v1297
        %1621 = vmatpush.bf16.msra.mxu0 %v1296
        %1622 = vmatpush.bf16.msra.mxu0 %v1295
        %1623 = vmatpush.bf16.msra.mxu0 %v1294
        %1624 = vmatpush.bf16.msra.mxu0 %v1293
        %1625 = vmatpush.bf16.msra.mxu0 %v1292
        %1626 = vmatpush.bf16.msra.mxu0 %v1291
        %1627 = vmatmul.bf16.gmra.mxu0 %v663
        %v1628 = vpop.f32.mrf.mxu0
        %v1629 = vadd.f32 %v1615, %v1628
        %v1630 = vpop.f32.mrf.mxu0
        %v1631 = vadd.f32 %v1617, %v1630
        %1632 = vdwg.mxu0
        %1633 = vmatpush.bf16.msra.mxu0 %v1306
        %1634 = vmatpush.bf16.msra.mxu0 %v1305
        %1635 = vmatpush.bf16.msra.mxu0 %v1304
        %1636 = vmatpush.bf16.msra.mxu0 %v1303
        %1637 = vmatpush.bf16.msra.mxu0 %v1302
        %1638 = vmatpush.bf16.msra.mxu0 %v1301
        %1639 = vmatpush.bf16.msra.mxu0 %v1300
        %1640 = vmatpush.bf16.msra.mxu0 %v1299
        %1641 = vmatmul.bf16.gmra.mxu0 %v664
        %v1642 = vpop.f32.mrf.mxu0
        %v1643 = vadd.f32 %v1629, %v1642
        %v1644 = vpop.f32.mrf.mxu0
        %v1645 = vadd.f32 %v1631, %v1644
        %1646 = vdwg.mxu0
        %1647 = vmatpush.bf16.msra.mxu0 %v1314
        %1648 = vmatpush.bf16.msra.mxu0 %v1313
        %1649 = vmatpush.bf16.msra.mxu0 %v1312
        %1650 = vmatpush.bf16.msra.mxu0 %v1311
        %1651 = vmatpush.bf16.msra.mxu0 %v1310
        %1652 = vmatpush.bf16.msra.mxu0 %v1309
        %1653 = vmatpush.bf16.msra.mxu0 %v1308
        %1654 = vmatpush.bf16.msra.mxu0 %v1307
        %1655 = vmatmul.bf16.gmra.mxu0 %v665
        %v1656 = vpop.f32.mrf.mxu0
        %v1657 = vadd.f32 %v1643, %v1656
        %v1658 = vpop.f32.mrf.mxu0
        %v1659 = vadd.f32 %v1645, %v1658
        %1660 = vdwg.mxu0
        %1661 = vmatpush.bf16.msra.mxu0 %v1322
        %1662 = vmatpush.bf16.msra.mxu0 %v1321
        %1663 = vmatpush.bf16.msra.mxu0 %v1320
        %1664 = vmatpush.bf16.msra.mxu0 %v1319
        %1665 = vmatpush.bf16.msra.mxu0 %v1318
        %1666 = vmatpush.bf16.msra.mxu0 %v1317
        %1667 = vmatpush.bf16.msra.mxu0 %v1316
        %1668 = vmatpush.bf16.msra.mxu0 %v1315
        %1669 = vmatmul.bf16.gmra.mxu0 %v666
        %v1670 = vpop.f32.mrf.mxu0
        %v1671 = vadd.f32 %v1657, %v1670
        %v1672 = vpop.f32.mrf.mxu0
        %v1673 = vadd.f32 %v1659, %v1672
        %1674 = vdwg.mxu0
        %v1675 = vadd.f32 %v329, %v1671
        %v1676 = vadd.f32 %v330, %v1673
        %1677 = vst [vmem:[#allocation2] sm:$0xff] %v1675
        %1678 = vst [vmem:[#allocation2 + $0x8] sm:$0xff] %v1676
        %p1679 = scmp.eq.s32.totalorder %s25, 3
        // Predicated region
        $region68: #{vgg16_block_forward.8} parent=50 // pred_check
          %p1680 = pneg %p1679
        $region69: #{vgg16_block_forward.8} parent=50 // pred_check_branch
          %1682 = sbr.rel (%p1680) target = $region71
        $region70: #{vgg16_block_forward.8} parent=50 // pred_region
          %v1683 = vld [vmem:[#allocation2] sm:$0xff]
          %v1684 = vld [vmem:[#allocation2 + $0x8] sm:$0xff]
          %v1685 = vld [vmem:[#allocation6] sm:$0x1]
          %v1686 = vunpack.c.l.bf16 %v1685
          %v1687 = vperm.slane %v1686, 0
          %v1688 = vadd.f32 %v1683, %v1687
          %v1689 = vadd.f32 %v1684, %v1687
          %v1690 = vmax.f32 %v1688, 0.0
          %v1691 = vmax.f32 %v1689, 0.0
          %v1692 = vpack.c.bf16 %v1690, %v1690
          %v1693 = vpack.c.bf16 %v1691, %v1691
          %1694 = vst [vmem:[%s321] sm:$0xf] %v1692
          %1695 = vst [vmem:[%s321 + $0x4] sm:$0xf] %v1693
        $region71: #{vgg16_block_forward.8} parent=50 // pred_fallthru
          _
        %s1696 = smul.u32 2, %s23
        %p1697 = scmp.lt.s32.totalorder %s1696, 1
        %s1698 = scalar_select %p1697, %s1696, 1
        %p1699 = scmp.lt.s32.totalorder %s24, 0
        %s1700 = scalar_select %p1699, %s24, 0
        %s1701 = sadd.s32 %s1700, %s1698
        %s1702 = smul.addr %s1701, 4
        %s1703 = scalar_lea.vmem %s3, %s1702
        // Predicated region
        $region72: #{vgg16_block_forward.8} parent=50 // pred_check
          %p1704 = pneg %p139
        $region73: #{vgg16_block_forward.8} parent=50 // pred_check_branch
          %1706 = sbr.rel (%p1704) target = $region75
        $region74: #{vgg16_block_forward.8} parent=50 // pred_region
          %s1707 = smul.u32 2, %s23
        $region75: #{vgg16_block_forward.8} parent=50 // pred_fallthru
          _
        // Predicated region
        $region76: #{vgg16_block_forward.8} parent=50 // pred_check
          %p1708 = pneg %p139
        $region77: #{vgg16_block_forward.8} parent=50 // pred_check_branch
          %1710 = sbr.rel (%p1708) target = $region79
        $region78: #{vgg16_block_forward.8} parent=50 // pred_region
          %s1711 = smul.u32 2, %s23
          %p1712 = scmp.lt.s32.totalorder %s1711, 1
          %s1713 = scalar_select %p1712, %s1711, 1
          %p1714 = scmp.lt.s32.totalorder %s24, 0
          %s1715 = scalar_select %p1714, %s24, 0
          %s1716 = sadd.s32 %s1715, %s1713
          %s1717 = smul.addr %s1716, 4
          %s1718 = scalar_lea.vmem %s3, %s1717
        $region79: #{vgg16_block_forward.8} parent=50 // pred_fallthru
          _
      $region51: #{vgg16_block_forward.8} parent=5 // pred_fallthru
        _
      %p1719 = scmp.le.s32.totalorder 2, %s13
      // Predicated region
      $region80: #{vgg16_block_forward.8} parent=5 // pred_check
        %p1720 = pneg %p1719
      $region81: #{vgg16_block_forward.8} parent=5 // pred_check_branch
        %1722 = sbr.rel (%p1720) target = $region83
      $region82: #{vgg16_block_forward.8} parent=5 // pred_region
        %s1723 = ssub.s32 %s13, 2
      $region83: #{vgg16_block_forward.8} parent=5 // pred_fallthru
        _
    $region6: #{vgg16_block_forward.8} parent=1 // loop_footer
      %s17 = sadd.s32 1, %s13
    $region7: #{vgg16_block_forward.8} parent=1 // loop_footer_branch
      %12 = sbr.rel target = $region3
    $region8: #{vgg16_block_forward.8} parent=1 // loop_exit
      _
    %1724 = vsyncpa [#allocation5], 1
    %s1725 = scalar_lea.sflag [#allocation5], 1
    %1726 = vsyncpa %s1725, 1
    %1727 = vsyncpa [#allocation7], 1

</llo_original>
